<compile_context>
chip_gen: v6e
topology: v6e:2x2x1
jax: 0.10.0
libtpu: 0.0.40
codegen_flags: <defaults>
</compile_context>

<pallas_src>
import math

import jax
import jax.numpy as jnp
from jax.experimental import pallas as pl

D_MODEL = 32
N_HEADS = 4
D_HEAD = D_MODEL // N_HEADS
D_FF = 64
N_LAYERS = 2
EPS = 1e-6
_NEG_INF = -1e9


# ---------------------------------------------------------------------------
# fused kernel: all decoder layers + final LayerNorm
# ---------------------------------------------------------------------------
def _fused_decoder_kernel(x_ref, mem_ref, tgt_mask_ref, src_mask_ref,
                          self_wqkv_ref, self_bqkv_ref, self_wo_ref, self_bo_ref,
                          src_wq_ref, src_bq_ref, src_wkv_ref, src_bkv_ref,
                          src_wo_ref, src_bo_ref,
                          ff_w1_ref, ff_b1_ref, ff_w2_ref, ff_b2_ref,
                          norm_a_ref, norm_b_ref, final_a_ref, final_b_ref,
                          out_ref):
    B, T, _ = tgt_mask_ref.shape
    S = src_mask_ref.shape[-1]
    D = x_ref.shape[-1]
    L = norm_a_ref.shape[0]
    H = N_HEADS
    dk = D // H
    scale = jnp.float32(1.0 / math.sqrt(dk))
    neg = jnp.float32(_NEG_INF)

    x = x_ref[...].astype(jnp.float32)            # (B*T, D) rows, VMEM-resident
    mem = mem_ref[...].astype(jnp.float32)        # (B*S, D)

    # Additive attention bias hoisted ONCE (0 = attend, -1e9 = masked);
    # reused by every layer / head so the inner loop only does an add.
    tgt_bias = jnp.where(tgt_mask_ref[...] > 0, 0.0, neg)                    # (B,T,T)
    src_bias = jnp.where(jnp.broadcast_to(src_mask_ref[...], (B, T, S)) > 0,
                         0.0, neg)                                           # (B,T,S)

    def layernorm(z, a, b):
        # Annotated-Transformer LayerNorm: unbiased std, eps added outside sqrt.
        mean = jnp.mean(z, axis=-1, keepdims=True)
        var = jnp.sum((z - mean) ** 2, axis=-1, keepdims=True) * (1.0 / (D - 1))
        inv = pl.reciprocal(jnp.sqrt(var) + EPS, approx=True)
        return a * (z - mean) * inv + b

    def attend_project(q, k, v, bias, wo):
        # q: (B*Tq, D), k/v: (B*Sk, D), bias: (B, Tq, Sk), wo: (D, D)
        # Batched over B via 3-D einsums; heads are a short static loop with the
        # output projection folded in (no lane-axis concatenate).
        Tq, Sk = bias.shape[1], bias.shape[2]
        q3 = (q * scale).reshape(B, Tq, D)         # 1/sqrt(dk) folded into q once
        k3 = k.reshape(B, Sk, D)
        v3 = v.reshape(B, Sk, D)
        acc = jnp.zeros((B * Tq, D), jnp.float32)
        for h in range(H):                         # static, fully unrolled
            sl = slice(h * dk, (h + 1) * dk)
            s = jnp.einsum('btd,bsd->bts', q3[:, :, sl], k3[:, :, sl],
                           preferred_element_type=jnp.float32) + bias
            s = s - jnp.max(s, axis=-1, keepdims=True)
            p = jnp.exp(s)
            p = p * pl.reciprocal(jnp.sum(p, axis=-1, keepdims=True), approx=True)
            o_h = jnp.einsum('bts,bsd->btd', p, v3[:, :, sl],
                             preferred_element_type=jnp.float32)
            acc = acc + jnp.dot(o_h.reshape(B * Tq, dk), wo[sl, :],
                                preferred_element_type=jnp.float32)
        return acc

    for l in range(L):                             # static, fully unrolled
        na = norm_a_ref[l]                         # (3, D)
        nb = norm_b_ref[l]

        # Sublayer 1: x + SelfAttn(LN(x), tgt_mask)     (dropout = identity)
        xn = layernorm(x, na[0:1, :], nb[0:1, :])
        qkv = jnp.dot(xn, self_wqkv_ref[l],
                      preferred_element_type=jnp.float32) + self_bqkv_ref[l]
        attn = attend_project(qkv[:, 0:D], qkv[:, D:2 * D], qkv[:, 2 * D:3 * D],
                              tgt_bias, self_wo_ref[l])
        x = x + attn + self_bo_ref[l]

        # Sublayer 2: x + CrossAttn(LN(x), memory, src_mask)
        xn = layernorm(x, na[1:2, :], nb[1:2, :])
        q = jnp.dot(xn, src_wq_ref[l],
                    preferred_element_type=jnp.float32) + src_bq_ref[l]
        kv = jnp.dot(mem, src_wkv_ref[l],
                     preferred_element_type=jnp.float32) + src_bkv_ref[l]
        attn = attend_project(q, kv[:, 0:D], kv[:, D:2 * D], src_bias, src_wo_ref[l])
        x = x + attn + src_bo_ref[l]

        # Sublayer 3: x + FFN(LN(x))
        xn = layernorm(x, na[2:3, :], nb[2:3, :])
        h1 = jnp.maximum(jnp.dot(xn, ff_w1_ref[l],
                                 preferred_element_type=jnp.float32)
                         + ff_b1_ref[l], 0.0)
        x = x + jnp.dot(h1, ff_w2_ref[l],
                        preferred_element_type=jnp.float32) + ff_b2_ref[l]

    # Final LayerNorm (`self.norm(x)` of the reference Decoder).
    y = layernorm(x, final_a_ref[...], final_b_ref[...])
    out_ref[...] = y.astype(out_ref.dtype)


# ---------------------------------------------------------------------------
# wrapper
# ---------------------------------------------------------------------------
def decoder_forward(x, memory, src_mask, tgt_mask, params, final_a, final_b):
    """params: stacked per-layer weights (see init_stacked_params)."""
    B, T, D = x.shape
    S = memory.shape[1]
    x2 = x.reshape(B * T, D)          # row-slab layout for projections / FFN
    mem2 = memory.reshape(B * S, D)
    # Single pallas_call, no grid: the whole (tiny) working set lives in VMEM.
    out = pl.pallas_call(
        _fused_decoder_kernel,
        out_shape=jax.ShapeDtypeStruct((B * T, D), x.dtype),
    )(x2, mem2, tgt_mask, src_mask, *params, final_a, final_b)
    return out.reshape(B, T, D)


# ---------------------------------------------------------------------------
# pure-JAX reference (mirrors the PyTorch module in eval mode)
# ---------------------------------------------------------------------------
def decoder_reference(x, memory, src_mask, tgt_mask, params, final_a, final_b):
    (self_wqkv, self_bqkv, self_wo, self_bo,
     src_wq, src_bq, src_wkv, src_bkv, src_wo, src_bo,
     ff_w1, ff_b1, ff_w2, ff_b2, norm_a, norm_b) = params
    B, T, D = x.shape
    S = memory.shape[1]
    H, dk = N_HEADS, D // N_HEADS

    def ln(z, a, b):
        mean = jnp.mean(z, axis=-1, keepdims=True)
        std = jnp.sqrt(jnp.sum((z - mean) ** 2, axis=-1, keepdims=True) / (D - 1))
        return a * (z - mean) / (std + EPS) + b

    def mha(q, k, v, mask, wo, bo):
        Tq, Sk = q.shape[1], k.shape[1]
        qh = q.reshape(B, Tq, H, dk).transpose(0, 2, 1, 3)
        kh = k.reshape(B, Sk, H, dk).transpose(0, 2, 1, 3)
        vh = v.reshape(B, Sk, H, dk).transpose(0, 2, 1, 3)
        s = jnp.einsum('bhtd,bhsd->bhts', qh, kh) / math.sqrt(dk)
        s = jnp.where(mask[:, None, :, :] > 0, s, _NEG_INF)
        p = jax.nn.softmax(s, axis=-1)
        o = jnp.einsum('bhts,bhsd->bhtd', p, vh)
        o = o.transpose(0, 2, 1, 3).reshape(B, Tq, D)
        return o @ wo + bo

    for l in range(N_LAYERS):
        xn = ln(x, norm_a[l, 0], norm_b[l, 0])
        qkv = xn @ self_wqkv[l] + self_bqkv[l]
        x = x + mha(qkv[..., 0:D], qkv[..., D:2 * D], qkv[..., 2 * D:3 * D],
                    tgt_mask, self_wo[l], self_bo[l])
        xn = ln(x, norm_a[l, 1], norm_b[l, 1])
        q = xn @ src_wq[l] + src_bq[l]
        kv = memory @ src_wkv[l] + src_bkv[l]
        x = x + mha(q, kv[..., 0:D], kv[..., D:2 * D],
                    jnp.broadcast_to(src_mask, (B, T, S)), src_wo[l], src_bo[l])
        xn = ln(x, norm_a[l, 2], norm_b[l, 2])
        x = x + jnp.maximum(xn @ ff_w1[l] + ff_b1[l], 0.0) @ ff_w2[l] + ff_b2[l]
    return ln(x, final_a[0], final_b[0])


# ---------------------------------------------------------------------------
# deterministic parameter init (synthetic weights, stacked over layers)
# ---------------------------------------------------------------------------
def init_stacked_params(key, n_layers, d, dff):
    keys = jax.random.split(key, 7)
    sc = 0.05
    self_wqkv = sc * jax.random.normal(keys[0], (n_layers, d, 3 * d), jnp.float32)
    self_bqkv = jnp.zeros((n_layers, 1, 3 * d), jnp.float32)
    self_wo = sc * jax.random.normal(keys[1], (n_layers, d, d), jnp.float32)
    self_bo = jnp.zeros((n_layers, 1, d), jnp.float32)
    src_wq = sc * jax.random.normal(keys[2], (n_layers, d, d), jnp.float32)
    src_bq = jnp.zeros((n_layers, 1, d), jnp.float32)
    src_wkv = sc * jax.random.normal(keys[3], (n_layers, d, 2 * d), jnp.float32)
    src_bkv = jnp.zeros((n_layers, 1, 2 * d), jnp.float32)
    src_wo = sc * jax.random.normal(keys[4], (n_layers, d, d), jnp.float32)
    src_bo = jnp.zeros((n_layers, 1, d), jnp.float32)
    ff_w1 = sc * jax.random.normal(keys[5], (n_layers, d, dff), jnp.float32)
    ff_b1 = jnp.zeros((n_layers, 1, dff), jnp.float32)
    ff_w2 = sc * jax.random.normal(keys[6], (n_layers, dff, d), jnp.float32)
    ff_b2 = jnp.zeros((n_layers, 1, d), jnp.float32)
    norm_a = jnp.ones((n_layers, 3, d), jnp.float32)   # LayerNorm a_2 init = ones
    norm_b = jnp.zeros((n_layers, 3, d), jnp.float32)  # LayerNorm b_2 init = zeros
    return (self_wqkv, self_bqkv, self_wo, self_bo,
            src_wq, src_bq, src_wkv, src_bkv, src_wo, src_bo,
            ff_w1, ff_b1, ff_w2, ff_b2, norm_a, norm_b)


if __name__ == "__main__":
    key = jax.random.PRNGKey(0)
    kx, kmem, kp = jax.random.split(key, 3)

    B, T, S, D = 2, 8, 8, D_MODEL
    x = jax.random.normal(kx, (B, T, D), jnp.float32)
    memory = jax.random.normal(kmem, (B, S, D), jnp.float32)

    # causal target mask + all-ones source mask (1 = attend)
    tgt_mask = jnp.tile(jnp.tril(jnp.ones((T, T), jnp.float32))[None], (B, 1, 1))
    src_mask = jnp.ones((B, 1, S), jnp.float32)

    params = init_stacked_params(kp, N_LAYERS, D, D_FF)
    final_a = jnp.ones((1, D), jnp.float32)
    final_b = jnp.zeros((1, D), jnp.float32)

    fwd = jax.jit(decoder_forward)
    out = jax.block_until_ready(
        fwd(x, memory, src_mask, tgt_mask, params, final_a, final_b))
    assert out.shape == (B, T, D)
    assert bool(jnp.all(jnp.isfinite(out)))

    ref = decoder_reference(x, memory, src_mask, tgt_mask, params, final_a, final_b)
    max_err = float(jnp.max(jnp.abs(out - ref)))
    assert max_err < 5e-2, f"mismatch vs reference: max_err={max_err}"
    print("KERNEL_OK")
</pallas_src>

<mosaic_0001>
module attributes {stable_mosaic.version = 11 : i64} {
  func.func @_fused_decoder_kernel(%arg0: memref<16x32xf32, #tpu.memory_space<vmem>>, %arg1: memref<16x32xf32, #tpu.memory_space<vmem>>, %arg2: memref<2x8x8xf32, #tpu.memory_space<vmem>>, %arg3: memref<2x1x8xf32, #tpu.memory_space<vmem>>, %arg4: memref<2x32x96xf32, #tpu.memory_space<vmem>>, %arg5: memref<2x1x96xf32, #tpu.memory_space<vmem>>, %arg6: memref<2x32x32xf32, #tpu.memory_space<vmem>>, %arg7: memref<2x1x32xf32, #tpu.memory_space<vmem>>, %arg8: memref<2x32x32xf32, #tpu.memory_space<vmem>>, %arg9: memref<2x1x32xf32, #tpu.memory_space<vmem>>, %arg10: memref<2x32x64xf32, #tpu.memory_space<vmem>>, %arg11: memref<2x1x64xf32, #tpu.memory_space<vmem>>, %arg12: memref<2x32x32xf32, #tpu.memory_space<vmem>>, %arg13: memref<2x1x32xf32, #tpu.memory_space<vmem>>, %arg14: memref<2x32x64xf32, #tpu.memory_space<vmem>>, %arg15: memref<2x1x64xf32, #tpu.memory_space<vmem>>, %arg16: memref<2x64x32xf32, #tpu.memory_space<vmem>>, %arg17: memref<2x1x32xf32, #tpu.memory_space<vmem>>, %arg18: memref<2x3x32xf32, #tpu.memory_space<vmem>>, %arg19: memref<2x3x32xf32, #tpu.memory_space<vmem>>, %arg20: memref<1x32xf32, #tpu.memory_space<vmem>>, %arg21: memref<1x32xf32, #tpu.memory_space<vmem>>, %arg22: memref<16x32xf32, #tpu.memory_space<vmem>>) attributes {dimension_semantics = [], scalar_prefetch = 0 : i64, scratch_operands = 0 : i64, tpu.core_type = #tpu.core_type<tc>} {
    %c0 = arith.constant 0 : index
    %c0_0 = arith.constant 0 : index
    %0 = vector.load %arg0[%c0, %c0_0] : memref<16x32xf32, #tpu.memory_space<vmem>>, vector<16x32xf32>
    %c0_1 = arith.constant 0 : index
    %c0_2 = arith.constant 0 : index
    %1 = vector.load %arg1[%c0_1, %c0_2] : memref<16x32xf32, #tpu.memory_space<vmem>>, vector<16x32xf32>
    %c0_3 = arith.constant 0 : index
    %c0_4 = arith.constant 0 : index
    %c0_5 = arith.constant 0 : index
    %2 = vector.load %arg2[%c0_3, %c0_4, %c0_5] : memref<2x8x8xf32, #tpu.memory_space<vmem>>, vector<2x8x8xf32>
    %cst = arith.constant 0.000000e+00 : f32
    %3 = vector.broadcast %cst : f32 to vector<2x8x8xf32>
    %4 = arith.cmpf ogt, %2, %3 : vector<2x8x8xf32>
    %cst_6 = arith.constant 0.000000e+00 : f32
    %cst_7 = arith.constant -1.000000e+09 : f32
    %5 = vector.broadcast %cst_6 : f32 to vector<2x8x8xf32>
    %6 = vector.broadcast %cst_7 : f32 to vector<2x8x8xf32>
    %7 = arith.select %4, %5, %6 : vector<2x8x8xi1>, vector<2x8x8xf32>
    %c0_8 = arith.constant 0 : index
    %c0_9 = arith.constant 0 : index
    %c0_10 = arith.constant 0 : index
    %8 = vector.load %arg3[%c0_8, %c0_9, %c0_10] : memref<2x1x8xf32, #tpu.memory_space<vmem>>, vector<2x1x8xf32>
    %9 = vector.shape_cast %8 : vector<2x1x8xf32> to vector<2x1x8xf32>
    %10 = vector.broadcast %9 : vector<2x1x8xf32> to vector<2x8x8xf32>
    %cst_11 = arith.constant 0.000000e+00 : f32
    %11 = vector.broadcast %cst_11 : f32 to vector<2x8x8xf32>
    %12 = arith.cmpf ogt, %10, %11 : vector<2x8x8xf32>
    %cst_12 = arith.constant 0.000000e+00 : f32
    %cst_13 = arith.constant -1.000000e+09 : f32
    %13 = vector.broadcast %cst_12 : f32 to vector<2x8x8xf32>
    %14 = vector.broadcast %cst_13 : f32 to vector<2x8x8xf32>
    %15 = arith.select %12, %13, %14 : vector<2x8x8xi1>, vector<2x8x8xf32>
    %c0_14 = arith.constant 0 : index
    %c0_15 = arith.constant 0 : index
    %c0_16 = arith.constant 0 : index
    %16 = vector.load %arg18[%c0_14, %c0_15, %c0_16] : memref<2x3x32xf32, #tpu.memory_space<vmem>>, vector<1x3x32xf32>
    %17 = vector.shape_cast %16 : vector<1x3x32xf32> to vector<3x32xf32>
    %c0_17 = arith.constant 0 : index
    %c0_18 = arith.constant 0 : index
    %c0_19 = arith.constant 0 : index
    %18 = vector.load %arg19[%c0_17, %c0_18, %c0_19] : memref<2x3x32xf32, #tpu.memory_space<vmem>>, vector<1x3x32xf32>
    %19 = vector.shape_cast %18 : vector<1x3x32xf32> to vector<3x32xf32>
    %20 = vector.extract_strided_slice %17 {offsets = [0, 0], sizes = [1, 32], strides = [1, 1]} : vector<3x32xf32> to vector<1x32xf32>
    %21 = vector.extract_strided_slice %19 {offsets = [0, 0], sizes = [1, 32], strides = [1, 1]} : vector<3x32xf32> to vector<1x32xf32>
    %cst_20 = arith.constant dense<0.000000e+00> : vector<16xf32>
    %22 = vector.multi_reduction <add>, %0, %cst_20 [1] : vector<16x32xf32> to vector<16xf32>
    %23 = vector.shape_cast %22 : vector<16xf32> to vector<16x1xf32>
    %cst_21 = arith.constant 3.200000e+01 : f32
    %24 = vector.broadcast %cst_21 : f32 to vector<16x1xf32>
    %25 = arith.divf %23, %24 : vector<16x1xf32>
    %26 = vector.broadcast %25 : vector<16x1xf32> to vector<16x32xf32>
    %27 = arith.subf %0, %26 : vector<16x32xf32>
    %28 = arith.mulf %27, %27 : vector<16x32xf32>
    %cst_22 = arith.constant dense<0.000000e+00> : vector<16xf32>
    %29 = vector.multi_reduction <add>, %28, %cst_22 [1] : vector<16x32xf32> to vector<16xf32>
    %30 = vector.shape_cast %29 : vector<16xf32> to vector<16x1xf32>
    %cst_23 = arith.constant 0.0322580636 : f32
    %31 = vector.broadcast %cst_23 : f32 to vector<16x1xf32>
    %32 = arith.mulf %30, %31 : vector<16x1xf32>
    %33 = math.sqrt %32 : vector<16x1xf32>
    %cst_24 = arith.constant 9.99999997E-7 : f32
    %34 = vector.broadcast %cst_24 : f32 to vector<16x1xf32>
    %35 = arith.addf %33, %34 : vector<16x1xf32>
    %36 = tpu.reciprocal %35 {approx = true} : vector<16x1xf32> -> vector<16x1xf32>
    %37 = vector.broadcast %25 : vector<16x1xf32> to vector<16x32xf32>
    %38 = arith.subf %0, %37 : vector<16x32xf32>
    %39 = vector.broadcast %20 : vector<1x32xf32> to vector<16x32xf32>
    %40 = arith.mulf %39, %38 : vector<16x32xf32>
    %41 = vector.broadcast %36 : vector<16x1xf32> to vector<16x32xf32>
    %42 = arith.mulf %40, %41 : vector<16x32xf32>
    %43 = vector.broadcast %21 : vector<1x32xf32> to vector<16x32xf32>
    %44 = arith.addf %42, %43 : vector<16x32xf32>
    %c0_25 = arith.constant 0 : index
    %c0_26 = arith.constant 0 : index
    %c0_27 = arith.constant 0 : index
    %45 = vector.load %arg4[%c0_25, %c0_26, %c0_27] : memref<2x32x96xf32, #tpu.memory_space<vmem>>, vector<1x32x96xf32>
    %46 = vector.shape_cast %45 : vector<1x32x96xf32> to vector<32x96xf32>
    %cst_28 = arith.constant dense<0.000000e+00> : vector<16x96xf32>
    %47 = tpu.matmul %44, %46, %cst_28 {dimension_numbers = #tpu.dot_dimension_numbers<[1], [0], [0], [1], [0, 0, 1, 1], [], []>} : vector<16x32xf32>, vector<32x96xf32>, vector<16x96xf32> -> vector<16x96xf32>
    %c0_29 = arith.constant 0 : index
    %c0_30 = arith.constant 0 : index
    %c0_31 = arith.constant 0 : index
    %48 = vector.load %arg5[%c0_29, %c0_30, %c0_31] : memref<2x1x96xf32, #tpu.memory_space<vmem>>, vector<1x1x96xf32>
    %49 = vector.shape_cast %48 : vector<1x1x96xf32> to vector<1x96xf32>
    %50 = vector.broadcast %49 : vector<1x96xf32> to vector<16x96xf32>
    %51 = arith.addf %47, %50 : vector<16x96xf32>
    %52 = vector.extract_strided_slice %51 {offsets = [0, 0], sizes = [16, 32], strides = [1, 1]} : vector<16x96xf32> to vector<16x32xf32>
    %53 = vector.extract_strided_slice %51 {offsets = [0, 32], sizes = [16, 32], strides = [1, 1]} : vector<16x96xf32> to vector<16x32xf32>
    %54 = vector.extract_strided_slice %51 {offsets = [0, 64], sizes = [16, 32], strides = [1, 1]} : vector<16x96xf32> to vector<16x32xf32>
    %c0_32 = arith.constant 0 : index
    %c0_33 = arith.constant 0 : index
    %c0_34 = arith.constant 0 : index
    %55 = vector.load %arg6[%c0_32, %c0_33, %c0_34] : memref<2x32x32xf32, #tpu.memory_space<vmem>>, vector<1x32x32xf32>
    %56 = vector.shape_cast %55 : vector<1x32x32xf32> to vector<32x32xf32>
    %cst_35 = arith.constant 0.353553385 : f32
    %57 = vector.broadcast %cst_35 : f32 to vector<16x32xf32>
    %58 = arith.mulf %52, %57 : vector<16x32xf32>
    %59 = vector.shape_cast %58 : vector<16x32xf32> to vector<2x8x32xf32>
    %60 = vector.shape_cast %53 : vector<16x32xf32> to vector<2x8x32xf32>
    %61 = vector.shape_cast %54 : vector<16x32xf32> to vector<2x8x32xf32>
    %cst_36 = arith.constant 0.000000e+00 : f32
    %62 = vector.broadcast %cst_36 : f32 to vector<16x32xf32>
    %63 = vector.extract_strided_slice %59 {offsets = [0, 0, 0], sizes = [2, 8, 8], strides = [1, 1, 1]} : vector<2x8x32xf32> to vector<2x8x8xf32>
    %64 = vector.extract_strided_slice %60 {offsets = [0, 0, 0], sizes = [2, 8, 8], strides = [1, 1, 1]} : vector<2x8x32xf32> to vector<2x8x8xf32>
    "tpu.trace_start"() <{level = 10 : i32, message = "btd,bsd->bts"}> : () -> ()
    %cst_37 = arith.constant dense<0.000000e+00> : vector<2x8x8xf32>
    %65 = tpu.matmul %63, %64, %cst_37 {dimension_numbers = #tpu.dot_dimension_numbers<[2], [2], [1], [1], [0, 0, 0, 1, 1, 1], [0], [0]>} : vector<2x8x8xf32>, vector<2x8x8xf32>, vector<2x8x8xf32> -> vector<2x8x8xf32>
    "tpu.trace_stop"() : () -> ()
    %66 = arith.addf %65, %7 : vector<2x8x8xf32>
    %cst_38 = arith.constant dense<0xFF800000> : vector<2x8xf32>
    %67 = vector.multi_reduction <maximumf>, %66, %cst_38 [2] : vector<2x8x8xf32> to vector<2x8xf32>
    %68 = vector.shape_cast %67 : vector<2x8xf32> to vector<2x8x1xf32>
    %69 = vector.broadcast %68 : vector<2x8x1xf32> to vector<2x8x8xf32>
    %70 = arith.subf %66, %69 : vector<2x8x8xf32>
    %71 = math.exp %70 : vector<2x8x8xf32>
    %cst_39 = arith.constant dense<0.000000e+00> : vector<2x8xf32>
    %72 = vector.multi_reduction <add>, %71, %cst_39 [2] : vector<2x8x8xf32> to vector<2x8xf32>
    %73 = vector.shape_cast %72 : vector<2x8xf32> to vector<2x8x1xf32>
    %74 = tpu.reciprocal %73 {approx = true} : vector<2x8x1xf32> -> vector<2x8x1xf32>
    %75 = vector.broadcast %74 : vector<2x8x1xf32> to vector<2x8x8xf32>
    %76 = arith.mulf %71, %75 : vector<2x8x8xf32>
    %77 = vector.extract_strided_slice %61 {offsets = [0, 0, 0], sizes = [2, 8, 8], strides = [1, 1, 1]} : vector<2x8x32xf32> to vector<2x8x8xf32>
    "tpu.trace_start"() <{level = 10 : i32, message = "bts,bsd->btd"}> : () -> ()
    %cst_40 = arith.constant dense<0.000000e+00> : vector<2x8x8xf32>
    %78 = tpu.matmul %76, %77, %cst_40 {dimension_numbers = #tpu.dot_dimension_numbers<[2], [1], [1], [2], [0, 0, 0, 1, 1, 2], [0], [0]>} : vector<2x8x8xf32>, vector<2x8x8xf32>, vector<2x8x8xf32> -> vector<2x8x8xf32>
    "tpu.trace_stop"() : () -> ()
    %79 = vector.shape_cast %78 : vector<2x8x8xf32> to vector<16x8xf32>
    %80 = vector.extract_strided_slice %56 {offsets = [0, 0], sizes = [8, 32], strides = [1, 1]} : vector<32x32xf32> to vector<8x32xf32>
    %cst_41 = arith.constant dense<0.000000e+00> : vector<16x32xf32>
    %81 = tpu.matmul %79, %80, %cst_41 {dimension_numbers = #tpu.dot_dimension_numbers<[1], [0], [0], [1], [0, 0, 1, 1], [], []>} : vector<16x8xf32>, vector<8x32xf32>, vector<16x32xf32> -> vector<16x32xf32>
    %82 = arith.addf %62, %81 : vector<16x32xf32>
    %83 = vector.extract_strided_slice %59 {offsets = [0, 0, 8], sizes = [2, 8, 8], strides = [1, 1, 1]} : vector<2x8x32xf32> to vector<2x8x8xf32>
    %84 = vector.extract_strided_slice %60 {offsets = [0, 0, 8], sizes = [2, 8, 8], strides = [1, 1, 1]} : vector<2x8x32xf32> to vector<2x8x8xf32>
    "tpu.trace_start"() <{level = 10 : i32, message = "btd,bsd->bts"}> : () -> ()
    %cst_42 = arith.constant dense<0.000000e+00> : vector<2x8x8xf32>
    %85 = tpu.matmul %83, %84, %cst_42 {dimension_numbers = #tpu.dot_dimension_numbers<[2], [2], [1], [1], [0, 0, 0, 1, 1, 1], [0], [0]>} : vector<2x8x8xf32>, vector<2x8x8xf32>, vector<2x8x8xf32> -> vector<2x8x8xf32>
    "tpu.trace_stop"() : () -> ()
    %86 = arith.addf %85, %7 : vector<2x8x8xf32>
    %cst_43 = arith.constant dense<0xFF800000> : vector<2x8xf32>
    %87 = vector.multi_reduction <maximumf>, %86, %cst_43 [2] : vector<2x8x8xf32> to vector<2x8xf32>
    %88 = vector.shape_cast %87 : vector<2x8xf32> to vector<2x8x1xf32>
    %89 = vector.broadcast %88 : vector<2x8x1xf32> to vector<2x8x8xf32>
    %90 = arith.subf %86, %89 : vector<2x8x8xf32>
    %91 = math.exp %90 : vector<2x8x8xf32>
    %cst_44 = arith.constant dense<0.000000e+00> : vector<2x8xf32>
    %92 = vector.multi_reduction <add>, %91, %cst_44 [2] : vector<2x8x8xf32> to vector<2x8xf32>
    %93 = vector.shape_cast %92 : vector<2x8xf32> to vector<2x8x1xf32>
    %94 = tpu.reciprocal %93 {approx = true} : vector<2x8x1xf32> -> vector<2x8x1xf32>
    %95 = vector.broadcast %94 : vector<2x8x1xf32> to vector<2x8x8xf32>
    %96 = arith.mulf %91, %95 : vector<2x8x8xf32>
    %97 = vector.extract_strided_slice %61 {offsets = [0, 0, 8], sizes = [2, 8, 8], strides = [1, 1, 1]} : vector<2x8x32xf32> to vector<2x8x8xf32>
    "tpu.trace_start"() <{level = 10 : i32, message = "bts,bsd->btd"}> : () -> ()
    %cst_45 = arith.constant dense<0.000000e+00> : vector<2x8x8xf32>
    %98 = tpu.matmul %96, %97, %cst_45 {dimension_numbers = #tpu.dot_dimension_numbers<[2], [1], [1], [2], [0, 0, 0, 1, 1, 2], [0], [0]>} : vector<2x8x8xf32>, vector<2x8x8xf32>, vector<2x8x8xf32> -> vector<2x8x8xf32>
    "tpu.trace_stop"() : () -> ()
    %99 = vector.shape_cast %98 : vector<2x8x8xf32> to vector<16x8xf32>
    %100 = vector.extract_strided_slice %56 {offsets = [8, 0], sizes = [8, 32], strides = [1, 1]} : vector<32x32xf32> to vector<8x32xf32>
    %cst_46 = arith.constant dense<0.000000e+00> : vector<16x32xf32>
    %101 = tpu.matmul %99, %100, %cst_46 {dimension_numbers = #tpu.dot_dimension_numbers<[1], [0], [0], [1], [0, 0, 1, 1], [], []>} : vector<16x8xf32>, vector<8x32xf32>, vector<16x32xf32> -> vector<16x32xf32>
    %102 = arith.addf %82, %101 : vector<16x32xf32>
    %103 = vector.extract_strided_slice %59 {offsets = [0, 0, 16], sizes = [2, 8, 8], strides = [1, 1, 1]} : vector<2x8x32xf32> to vector<2x8x8xf32>
    %104 = vector.extract_strided_slice %60 {offsets = [0, 0, 16], sizes = [2, 8, 8], strides = [1, 1, 1]} : vector<2x8x32xf32> to vector<2x8x8xf32>
    "tpu.trace_start"() <{level = 10 : i32, message = "btd,bsd->bts"}> : () -> ()
    %cst_47 = arith.constant dense<0.000000e+00> : vector<2x8x8xf32>
    %105 = tpu.matmul %103, %104, %cst_47 {dimension_numbers = #tpu.dot_dimension_numbers<[2], [2], [1], [1], [0, 0, 0, 1, 1, 1], [0], [0]>} : vector<2x8x8xf32>, vector<2x8x8xf32>, vector<2x8x8xf32> -> vector<2x8x8xf32>
    "tpu.trace_stop"() : () -> ()
    %106 = arith.addf %105, %7 : vector<2x8x8xf32>
    %cst_48 = arith.constant dense<0xFF800000> : vector<2x8xf32>
    %107 = vector.multi_reduction <maximumf>, %106, %cst_48 [2] : vector<2x8x8xf32> to vector<2x8xf32>
    %108 = vector.shape_cast %107 : vector<2x8xf32> to vector<2x8x1xf32>
    %109 = vector.broadcast %108 : vector<2x8x1xf32> to vector<2x8x8xf32>
    %110 = arith.subf %106, %109 : vector<2x8x8xf32>
    %111 = math.exp %110 : vector<2x8x8xf32>
    %cst_49 = arith.constant dense<0.000000e+00> : vector<2x8xf32>
    %112 = vector.multi_reduction <add>, %111, %cst_49 [2] : vector<2x8x8xf32> to vector<2x8xf32>
    %113 = vector.shape_cast %112 : vector<2x8xf32> to vector<2x8x1xf32>
    %114 = tpu.reciprocal %113 {approx = true} : vector<2x8x1xf32> -> vector<2x8x1xf32>
    %115 = vector.broadcast %114 : vector<2x8x1xf32> to vector<2x8x8xf32>
    %116 = arith.mulf %111, %115 : vector<2x8x8xf32>
    %117 = vector.extract_strided_slice %61 {offsets = [0, 0, 16], sizes = [2, 8, 8], strides = [1, 1, 1]} : vector<2x8x32xf32> to vector<2x8x8xf32>
    "tpu.trace_start"() <{level = 10 : i32, message = "bts,bsd->btd"}> : () -> ()
    %cst_50 = arith.constant dense<0.000000e+00> : vector<2x8x8xf32>
    %118 = tpu.matmul %116, %117, %cst_50 {dimension_numbers = #tpu.dot_dimension_numbers<[2], [1], [1], [2], [0, 0, 0, 1, 1, 2], [0], [0]>} : vector<2x8x8xf32>, vector<2x8x8xf32>, vector<2x8x8xf32> -> vector<2x8x8xf32>
    "tpu.trace_stop"() : () -> ()
    %119 = vector.shape_cast %118 : vector<2x8x8xf32> to vector<16x8xf32>
    %120 = vector.extract_strided_slice %56 {offsets = [16, 0], sizes = [8, 32], strides = [1, 1]} : vector<32x32xf32> to vector<8x32xf32>
    %cst_51 = arith.constant dense<0.000000e+00> : vector<16x32xf32>
    %121 = tpu.matmul %119, %120, %cst_51 {dimension_numbers = #tpu.dot_dimension_numbers<[1], [0], [0], [1], [0, 0, 1, 1], [], []>} : vector<16x8xf32>, vector<8x32xf32>, vector<16x32xf32> -> vector<16x32xf32>
    %122 = arith.addf %102, %121 : vector<16x32xf32>
    %123 = vector.extract_strided_slice %59 {offsets = [0, 0, 24], sizes = [2, 8, 8], strides = [1, 1, 1]} : vector<2x8x32xf32> to vector<2x8x8xf32>
    %124 = vector.extract_strided_slice %60 {offsets = [0, 0, 24], sizes = [2, 8, 8], strides = [1, 1, 1]} : vector<2x8x32xf32> to vector<2x8x8xf32>
    "tpu.trace_start"() <{level = 10 : i32, message = "btd,bsd->bts"}> : () -> ()
    %cst_52 = arith.constant dense<0.000000e+00> : vector<2x8x8xf32>
    %125 = tpu.matmul %123, %124, %cst_52 {dimension_numbers = #tpu.dot_dimension_numbers<[2], [2], [1], [1], [0, 0, 0, 1, 1, 1], [0], [0]>} : vector<2x8x8xf32>, vector<2x8x8xf32>, vector<2x8x8xf32> -> vector<2x8x8xf32>
    "tpu.trace_stop"() : () -> ()
    %126 = arith.addf %125, %7 : vector<2x8x8xf32>
    %cst_53 = arith.constant dense<0xFF800000> : vector<2x8xf32>
    %127 = vector.multi_reduction <maximumf>, %126, %cst_53 [2] : vector<2x8x8xf32> to vector<2x8xf32>
    %128 = vector.shape_cast %127 : vector<2x8xf32> to vector<2x8x1xf32>
    %129 = vector.broadcast %128 : vector<2x8x1xf32> to vector<2x8x8xf32>
    %130 = arith.subf %126, %129 : vector<2x8x8xf32>
    %131 = math.exp %130 : vector<2x8x8xf32>
    %cst_54 = arith.constant dense<0.000000e+00> : vector<2x8xf32>
    %132 = vector.multi_reduction <add>, %131, %cst_54 [2] : vector<2x8x8xf32> to vector<2x8xf32>
    %133 = vector.shape_cast %132 : vector<2x8xf32> to vector<2x8x1xf32>
    %134 = tpu.reciprocal %133 {approx = true} : vector<2x8x1xf32> -> vector<2x8x1xf32>
    %135 = vector.broadcast %134 : vector<2x8x1xf32> to vector<2x8x8xf32>
    %136 = arith.mulf %131, %135 : vector<2x8x8xf32>
    %137 = vector.extract_strided_slice %61 {offsets = [0, 0, 24], sizes = [2, 8, 8], strides = [1, 1, 1]} : vector<2x8x32xf32> to vector<2x8x8xf32>
    "tpu.trace_start"() <{level = 10 : i32, message = "bts,bsd->btd"}> : () -> ()
    %cst_55 = arith.constant dense<0.000000e+00> : vector<2x8x8xf32>
    %138 = tpu.matmul %136, %137, %cst_55 {dimension_numbers = #tpu.dot_dimension_numbers<[2], [1], [1], [2], [0, 0, 0, 1, 1, 2], [0], [0]>} : vector<2x8x8xf32>, vector<2x8x8xf32>, vector<2x8x8xf32> -> vector<2x8x8xf32>
    "tpu.trace_stop"() : () -> ()
    %139 = vector.shape_cast %138 : vector<2x8x8xf32> to vector<16x8xf32>
    %140 = vector.extract_strided_slice %56 {offsets = [24, 0], sizes = [8, 32], strides = [1, 1]} : vector<32x32xf32> to vector<8x32xf32>
    %cst_56 = arith.constant dense<0.000000e+00> : vector<16x32xf32>
    %141 = tpu.matmul %139, %140, %cst_56 {dimension_numbers = #tpu.dot_dimension_numbers<[1], [0], [0], [1], [0, 0, 1, 1], [], []>} : vector<16x8xf32>, vector<8x32xf32>, vector<16x32xf32> -> vector<16x32xf32>
    %142 = arith.addf %122, %141 : vector<16x32xf32>
    %143 = arith.addf %0, %142 : vector<16x32xf32>
    %c0_57 = arith.constant 0 : index
    %c0_58 = arith.constant 0 : index
    %c0_59 = arith.constant 0 : index
    %144 = vector.load %arg7[%c0_57, %c0_58, %c0_59] : memref<2x1x32xf32, #tpu.memory_space<vmem>>, vector<1x1x32xf32>
    %145 = vector.shape_cast %144 : vector<1x1x32xf32> to vector<1x32xf32>
    %146 = vector.broadcast %145 : vector<1x32xf32> to vector<16x32xf32>
    %147 = arith.addf %143, %146 : vector<16x32xf32>
    %148 = vector.extract_strided_slice %17 {offsets = [1, 0], sizes = [1, 32], strides = [1, 1]} : vector<3x32xf32> to vector<1x32xf32>
    %149 = vector.extract_strided_slice %19 {offsets = [1, 0], sizes = [1, 32], strides = [1, 1]} : vector<3x32xf32> to vector<1x32xf32>
    %cst_60 = arith.constant dense<0.000000e+00> : vector<16xf32>
    %150 = vector.multi_reduction <add>, %147, %cst_60 [1] : vector<16x32xf32> to vector<16xf32>
    %151 = vector.shape_cast %150 : vector<16xf32> to vector<16x1xf32>
    %cst_61 = arith.constant 3.200000e+01 : f32
    %152 = vector.broadcast %cst_61 : f32 to vector<16x1xf32>
    %153 = arith.divf %151, %152 : vector<16x1xf32>
    %154 = vector.broadcast %153 : vector<16x1xf32> to vector<16x32xf32>
    %155 = arith.subf %147, %154 : vector<16x32xf32>
    %156 = arith.mulf %155, %155 : vector<16x32xf32>
    %cst_62 = arith.constant dense<0.000000e+00> : vector<16xf32>
    %157 = vector.multi_reduction <add>, %156, %cst_62 [1] : vector<16x32xf32> to vector<16xf32>
    %158 = vector.shape_cast %157 : vector<16xf32> to vector<16x1xf32>
    %cst_63 = arith.constant 0.0322580636 : f32
    %159 = vector.broadcast %cst_63 : f32 to vector<16x1xf32>
    %160 = arith.mulf %158, %159 : vector<16x1xf32>
    %161 = math.sqrt %160 : vector<16x1xf32>
    %cst_64 = arith.constant 9.99999997E-7 : f32
    %162 = vector.broadcast %cst_64 : f32 to vector<16x1xf32>
    %163 = arith.addf %161, %162 : vector<16x1xf32>
    %164 = tpu.reciprocal %163 {approx = true} : vector<16x1xf32> -> vector<16x1xf32>
    %165 = vector.broadcast %153 : vector<16x1xf32> to vector<16x32xf32>
    %166 = arith.subf %147, %165 : vector<16x32xf32>
    %167 = vector.broadcast %148 : vector<1x32xf32> to vector<16x32xf32>
    %168 = arith.mulf %167, %166 : vector<16x32xf32>
    %169 = vector.broadcast %164 : vector<16x1xf32> to vector<16x32xf32>
    %170 = arith.mulf %168, %169 : vector<16x32xf32>
    %171 = vector.broadcast %149 : vector<1x32xf32> to vector<16x32xf32>
    %172 = arith.addf %170, %171 : vector<16x32xf32>
    %c0_65 = arith.constant 0 : index
    %c0_66 = arith.constant 0 : index
    %c0_67 = arith.constant 0 : index
    %173 = vector.load %arg8[%c0_65, %c0_66, %c0_67] : memref<2x32x32xf32, #tpu.memory_space<vmem>>, vector<1x32x32xf32>
    %174 = vector.shape_cast %173 : vector<1x32x32xf32> to vector<32x32xf32>
    %cst_68 = arith.constant dense<0.000000e+00> : vector<16x32xf32>
    %175 = tpu.matmul %172, %174, %cst_68 {dimension_numbers = #tpu.dot_dimension_numbers<[1], [0], [0], [1], [0, 0, 1, 1], [], []>} : vector<16x32xf32>, vector<32x32xf32>, vector<16x32xf32> -> vector<16x32xf32>
    %c0_69 = arith.constant 0 : index
    %c0_70 = arith.constant 0 : index
    %c0_71 = arith.constant 0 : index
    %176 = vector.load %arg9[%c0_69, %c0_70, %c0_71] : memref<2x1x32xf32, #tpu.memory_space<vmem>>, vector<1x1x32xf32>
    %177 = vector.shape_cast %176 : vector<1x1x32xf32> to vector<1x32xf32>
    %178 = vector.broadcast %177 : vector<1x32xf32> to vector<16x32xf32>
    %179 = arith.addf %175, %178 : vector<16x32xf32>
    %c0_72 = arith.constant 0 : index
    %c0_73 = arith.constant 0 : index
    %c0_74 = arith.constant 0 : index
    %180 = vector.load %arg10[%c0_72, %c0_73, %c0_74] : memref<2x32x64xf32, #tpu.memory_space<vmem>>, vector<1x32x64xf32>
    %181 = vector.shape_cast %180 : vector<1x32x64xf32> to vector<32x64xf32>
    %cst_75 = arith.constant dense<0.000000e+00> : vector<16x64xf32>
    %182 = tpu.matmul %1, %181, %cst_75 {dimension_numbers = #tpu.dot_dimension_numbers<[1], [0], [0], [1], [0, 0, 1, 1], [], []>} : vector<16x32xf32>, vector<32x64xf32>, vector<16x64xf32> -> vector<16x64xf32>
    %c0_76 = arith.constant 0 : index
    %c0_77 = arith.constant 0 : index
    %c0_78 = arith.constant 0 : index
    %183 = vector.load %arg11[%c0_76, %c0_77, %c0_78] : memref<2x1x64xf32, #tpu.memory_space<vmem>>, vector<1x1x64xf32>
    %184 = vector.shape_cast %183 : vector<1x1x64xf32> to vector<1x64xf32>
    %185 = vector.broadcast %184 : vector<1x64xf32> to vector<16x64xf32>
    %186 = arith.addf %182, %185 : vector<16x64xf32>
    %187 = vector.extract_strided_slice %186 {offsets = [0, 0], sizes = [16, 32], strides = [1, 1]} : vector<16x64xf32> to vector<16x32xf32>
    %188 = vector.extract_strided_slice %186 {offsets = [0, 32], sizes = [16, 32], strides = [1, 1]} : vector<16x64xf32> to vector<16x32xf32>
    %c0_79 = arith.constant 0 : index
    %c0_80 = arith.constant 0 : index
    %c0_81 = arith.constant 0 : index
    %189 = vector.load %arg12[%c0_79, %c0_80, %c0_81] : memref<2x32x32xf32, #tpu.memory_space<vmem>>, vector<1x32x32xf32>
    %190 = vector.shape_cast %189 : vector<1x32x32xf32> to vector<32x32xf32>
    %cst_82 = arith.constant 0.353553385 : f32
    %191 = vector.broadcast %cst_82 : f32 to vector<16x32xf32>
    %192 = arith.mulf %179, %191 : vector<16x32xf32>
    %193 = vector.shape_cast %192 : vector<16x32xf32> to vector<2x8x32xf32>
    %194 = vector.shape_cast %187 : vector<16x32xf32> to vector<2x8x32xf32>
    %195 = vector.shape_cast %188 : vector<16x32xf32> to vector<2x8x32xf32>
    %cst_83 = arith.constant 0.000000e+00 : f32
    %196 = vector.broadcast %cst_83 : f32 to vector<16x32xf32>
    %197 = vector.extract_strided_slice %193 {offsets = [0, 0, 0], sizes = [2, 8, 8], strides = [1, 1, 1]} : vector<2x8x32xf32> to vector<2x8x8xf32>
    %198 = vector.extract_strided_slice %194 {offsets = [0, 0, 0], sizes = [2, 8, 8], strides = [1, 1, 1]} : vector<2x8x32xf32> to vector<2x8x8xf32>
    "tpu.trace_start"() <{level = 10 : i32, message = "btd,bsd->bts"}> : () -> ()
    %cst_84 = arith.constant dense<0.000000e+00> : vector<2x8x8xf32>
    %199 = tpu.matmul %197, %198, %cst_84 {dimension_numbers = #tpu.dot_dimension_numbers<[2], [2], [1], [1], [0, 0, 0, 1, 1, 1], [0], [0]>} : vector<2x8x8xf32>, vector<2x8x8xf32>, vector<2x8x8xf32> -> vector<2x8x8xf32>
    "tpu.trace_stop"() : () -> ()
    %200 = arith.addf %199, %15 : vector<2x8x8xf32>
    %cst_85 = arith.constant dense<0xFF800000> : vector<2x8xf32>
    %201 = vector.multi_reduction <maximumf>, %200, %cst_85 [2] : vector<2x8x8xf32> to vector<2x8xf32>
    %202 = vector.shape_cast %201 : vector<2x8xf32> to vector<2x8x1xf32>
    %203 = vector.broadcast %202 : vector<2x8x1xf32> to vector<2x8x8xf32>
    %204 = arith.subf %200, %203 : vector<2x8x8xf32>
    %205 = math.exp %204 : vector<2x8x8xf32>
    %cst_86 = arith.constant dense<0.000000e+00> : vector<2x8xf32>
    %206 = vector.multi_reduction <add>, %205, %cst_86 [2] : vector<2x8x8xf32> to vector<2x8xf32>
    %207 = vector.shape_cast %206 : vector<2x8xf32> to vector<2x8x1xf32>
    %208 = tpu.reciprocal %207 {approx = true} : vector<2x8x1xf32> -> vector<2x8x1xf32>
    %209 = vector.broadcast %208 : vector<2x8x1xf32> to vector<2x8x8xf32>
    %210 = arith.mulf %205, %209 : vector<2x8x8xf32>
    %211 = vector.extract_strided_slice %195 {offsets = [0, 0, 0], sizes = [2, 8, 8], strides = [1, 1, 1]} : vector<2x8x32xf32> to vector<2x8x8xf32>
    "tpu.trace_start"() <{level = 10 : i32, message = "bts,bsd->btd"}> : () -> ()
    %cst_87 = arith.constant dense<0.000000e+00> : vector<2x8x8xf32>
    %212 = tpu.matmul %210, %211, %cst_87 {dimension_numbers = #tpu.dot_dimension_numbers<[2], [1], [1], [2], [0, 0, 0, 1, 1, 2], [0], [0]>} : vector<2x8x8xf32>, vector<2x8x8xf32>, vector<2x8x8xf32> -> vector<2x8x8xf32>
    "tpu.trace_stop"() : () -> ()
    %213 = vector.shape_cast %212 : vector<2x8x8xf32> to vector<16x8xf32>
    %214 = vector.extract_strided_slice %190 {offsets = [0, 0], sizes = [8, 32], strides = [1, 1]} : vector<32x32xf32> to vector<8x32xf32>
    %cst_88 = arith.constant dense<0.000000e+00> : vector<16x32xf32>
    %215 = tpu.matmul %213, %214, %cst_88 {dimension_numbers = #tpu.dot_dimension_numbers<[1], [0], [0], [1], [0, 0, 1, 1], [], []>} : vector<16x8xf32>, vector<8x32xf32>, vector<16x32xf32> -> vector<16x32xf32>
    %216 = arith.addf %196, %215 : vector<16x32xf32>
    %217 = vector.extract_strided_slice %193 {offsets = [0, 0, 8], sizes = [2, 8, 8], strides = [1, 1, 1]} : vector<2x8x32xf32> to vector<2x8x8xf32>
    %218 = vector.extract_strided_slice %194 {offsets = [0, 0, 8], sizes = [2, 8, 8], strides = [1, 1, 1]} : vector<2x8x32xf32> to vector<2x8x8xf32>
    "tpu.trace_start"() <{level = 10 : i32, message = "btd,bsd->bts"}> : () -> ()
    %cst_89 = arith.constant dense<0.000000e+00> : vector<2x8x8xf32>
    %219 = tpu.matmul %217, %218, %cst_89 {dimension_numbers = #tpu.dot_dimension_numbers<[2], [2], [1], [1], [0, 0, 0, 1, 1, 1], [0], [0]>} : vector<2x8x8xf32>, vector<2x8x8xf32>, vector<2x8x8xf32> -> vector<2x8x8xf32>
    "tpu.trace_stop"() : () -> ()
    %220 = arith.addf %219, %15 : vector<2x8x8xf32>
    %cst_90 = arith.constant dense<0xFF800000> : vector<2x8xf32>
    %221 = vector.multi_reduction <maximumf>, %220, %cst_90 [2] : vector<2x8x8xf32> to vector<2x8xf32>
    %222 = vector.shape_cast %221 : vector<2x8xf32> to vector<2x8x1xf32>
    %223 = vector.broadcast %222 : vector<2x8x1xf32> to vector<2x8x8xf32>
    %224 = arith.subf %220, %223 : vector<2x8x8xf32>
    %225 = math.exp %224 : vector<2x8x8xf32>
    %cst_91 = arith.constant dense<0.000000e+00> : vector<2x8xf32>
    %226 = vector.multi_reduction <add>, %225, %cst_91 [2] : vector<2x8x8xf32> to vector<2x8xf32>
    %227 = vector.shape_cast %226 : vector<2x8xf32> to vector<2x8x1xf32>
    %228 = tpu.reciprocal %227 {approx = true} : vector<2x8x1xf32> -> vector<2x8x1xf32>
    %229 = vector.broadcast %228 : vector<2x8x1xf32> to vector<2x8x8xf32>
    %230 = arith.mulf %225, %229 : vector<2x8x8xf32>
    %231 = vector.extract_strided_slice %195 {offsets = [0, 0, 8], sizes = [2, 8, 8], strides = [1, 1, 1]} : vector<2x8x32xf32> to vector<2x8x8xf32>
    "tpu.trace_start"() <{level = 10 : i32, message = "bts,bsd->btd"}> : () -> ()
    %cst_92 = arith.constant dense<0.000000e+00> : vector<2x8x8xf32>
    %232 = tpu.matmul %230, %231, %cst_92 {dimension_numbers = #tpu.dot_dimension_numbers<[2], [1], [1], [2], [0, 0, 0, 1, 1, 2], [0], [0]>} : vector<2x8x8xf32>, vector<2x8x8xf32>, vector<2x8x8xf32> -> vector<2x8x8xf32>
    "tpu.trace_stop"() : () -> ()
    %233 = vector.shape_cast %232 : vector<2x8x8xf32> to vector<16x8xf32>
    %234 = vector.extract_strided_slice %190 {offsets = [8, 0], sizes = [8, 32], strides = [1, 1]} : vector<32x32xf32> to vector<8x32xf32>
    %cst_93 = arith.constant dense<0.000000e+00> : vector<16x32xf32>
    %235 = tpu.matmul %233, %234, %cst_93 {dimension_numbers = #tpu.dot_dimension_numbers<[1], [0], [0], [1], [0, 0, 1, 1], [], []>} : vector<16x8xf32>, vector<8x32xf32>, vector<16x32xf32> -> vector<16x32xf32>
    %236 = arith.addf %216, %235 : vector<16x32xf32>
    %237 = vector.extract_strided_slice %193 {offsets = [0, 0, 16], sizes = [2, 8, 8], strides = [1, 1, 1]} : vector<2x8x32xf32> to vector<2x8x8xf32>
    %238 = vector.extract_strided_slice %194 {offsets = [0, 0, 16], sizes = [2, 8, 8], strides = [1, 1, 1]} : vector<2x8x32xf32> to vector<2x8x8xf32>
    "tpu.trace_start"() <{level = 10 : i32, message = "btd,bsd->bts"}> : () -> ()
    %cst_94 = arith.constant dense<0.000000e+00> : vector<2x8x8xf32>
    %239 = tpu.matmul %237, %238, %cst_94 {dimension_numbers = #tpu.dot_dimension_numbers<[2], [2], [1], [1], [0, 0, 0, 1, 1, 1], [0], [0]>} : vector<2x8x8xf32>, vector<2x8x8xf32>, vector<2x8x8xf32> -> vector<2x8x8xf32>
    "tpu.trace_stop"() : () -> ()
    %240 = arith.addf %239, %15 : vector<2x8x8xf32>
    %cst_95 = arith.constant dense<0xFF800000> : vector<2x8xf32>
    %241 = vector.multi_reduction <maximumf>, %240, %cst_95 [2] : vector<2x8x8xf32> to vector<2x8xf32>
    %242 = vector.shape_cast %241 : vector<2x8xf32> to vector<2x8x1xf32>
    %243 = vector.broadcast %242 : vector<2x8x1xf32> to vector<2x8x8xf32>
    %244 = arith.subf %240, %243 : vector<2x8x8xf32>
    %245 = math.exp %244 : vector<2x8x8xf32>
    %cst_96 = arith.constant dense<0.000000e+00> : vector<2x8xf32>
    %246 = vector.multi_reduction <add>, %245, %cst_96 [2] : vector<2x8x8xf32> to vector<2x8xf32>
    %247 = vector.shape_cast %246 : vector<2x8xf32> to vector<2x8x1xf32>
    %248 = tpu.reciprocal %247 {approx = true} : vector<2x8x1xf32> -> vector<2x8x1xf32>
    %249 = vector.broadcast %248 : vector<2x8x1xf32> to vector<2x8x8xf32>
    %250 = arith.mulf %245, %249 : vector<2x8x8xf32>
    %251 = vector.extract_strided_slice %195 {offsets = [0, 0, 16], sizes = [2, 8, 8], strides = [1, 1, 1]} : vector<2x8x32xf32> to vector<2x8x8xf32>
    "tpu.trace_start"() <{level = 10 : i32, message = "bts,bsd->btd"}> : () -> ()
    %cst_97 = arith.constant dense<0.000000e+00> : vector<2x8x8xf32>
    %252 = tpu.matmul %250, %251, %cst_97 {dimension_numbers = #tpu.dot_dimension_numbers<[2], [1], [1], [2], [0, 0, 0, 1, 1, 2], [0], [0]>} : vector<2x8x8xf32>, vector<2x8x8xf32>, vector<2x8x8xf32> -> vector<2x8x8xf32>
    "tpu.trace_stop"() : () -> ()
    %253 = vector.shape_cast %252 : vector<2x8x8xf32> to vector<16x8xf32>
    %254 = vector.extract_strided_slice %190 {offsets = [16, 0], sizes = [8, 32], strides = [1, 1]} : vector<32x32xf32> to vector<8x32xf32>
    %cst_98 = arith.constant dense<0.000000e+00> : vector<16x32xf32>
    %255 = tpu.matmul %253, %254, %cst_98 {dimension_numbers = #tpu.dot_dimension_numbers<[1], [0], [0], [1], [0, 0, 1, 1], [], []>} : vector<16x8xf32>, vector<8x32xf32>, vector<16x32xf32> -> vector<16x32xf32>
    %256 = arith.addf %236, %255 : vector<16x32xf32>
    %257 = vector.extract_strided_slice %193 {offsets = [0, 0, 24], sizes = [2, 8, 8], strides = [1, 1, 1]} : vector<2x8x32xf32> to vector<2x8x8xf32>
    %258 = vector.extract_strided_slice %194 {offsets = [0, 0, 24], sizes = [2, 8, 8], strides = [1, 1, 1]} : vector<2x8x32xf32> to vector<2x8x8xf32>
    "tpu.trace_start"() <{level = 10 : i32, message = "btd,bsd->bts"}> : () -> ()
    %cst_99 = arith.constant dense<0.000000e+00> : vector<2x8x8xf32>
    %259 = tpu.matmul %257, %258, %cst_99 {dimension_numbers = #tpu.dot_dimension_numbers<[2], [2], [1], [1], [0, 0, 0, 1, 1, 1], [0], [0]>} : vector<2x8x8xf32>, vector<2x8x8xf32>, vector<2x8x8xf32> -> vector<2x8x8xf32>
    "tpu.trace_stop"() : () -> ()
    %260 = arith.addf %259, %15 : vector<2x8x8xf32>
    %cst_100 = arith.constant dense<0xFF800000> : vector<2x8xf32>
    %261 = vector.multi_reduction <maximumf>, %260, %cst_100 [2] : vector<2x8x8xf32> to vector<2x8xf32>
    %262 = vector.shape_cast %261 : vector<2x8xf32> to vector<2x8x1xf32>
    %263 = vector.broadcast %262 : vector<2x8x1xf32> to vector<2x8x8xf32>
    %264 = arith.subf %260, %263 : vector<2x8x8xf32>
    %265 = math.exp %264 : vector<2x8x8xf32>
    %cst_101 = arith.constant dense<0.000000e+00> : vector<2x8xf32>
    %266 = vector.multi_reduction <add>, %265, %cst_101 [2] : vector<2x8x8xf32> to vector<2x8xf32>
    %267 = vector.shape_cast %266 : vector<2x8xf32> to vector<2x8x1xf32>
    %268 = tpu.reciprocal %267 {approx = true} : vector<2x8x1xf32> -> vector<2x8x1xf32>
    %269 = vector.broadcast %268 : vector<2x8x1xf32> to vector<2x8x8xf32>
    %270 = arith.mulf %265, %269 : vector<2x8x8xf32>
    %271 = vector.extract_strided_slice %195 {offsets = [0, 0, 24], sizes = [2, 8, 8], strides = [1, 1, 1]} : vector<2x8x32xf32> to vector<2x8x8xf32>
    "tpu.trace_start"() <{level = 10 : i32, message = "bts,bsd->btd"}> : () -> ()
    %cst_102 = arith.constant dense<0.000000e+00> : vector<2x8x8xf32>
    %272 = tpu.matmul %270, %271, %cst_102 {dimension_numbers = #tpu.dot_dimension_numbers<[2], [1], [1], [2], [0, 0, 0, 1, 1, 2], [0], [0]>} : vector<2x8x8xf32>, vector<2x8x8xf32>, vector<2x8x8xf32> -> vector<2x8x8xf32>
    "tpu.trace_stop"() : () -> ()
    %273 = vector.shape_cast %272 : vector<2x8x8xf32> to vector<16x8xf32>
    %274 = vector.extract_strided_slice %190 {offsets = [24, 0], sizes = [8, 32], strides = [1, 1]} : vector<32x32xf32> to vector<8x32xf32>
    %cst_103 = arith.constant dense<0.000000e+00> : vector<16x32xf32>
    %275 = tpu.matmul %273, %274, %cst_103 {dimension_numbers = #tpu.dot_dimension_numbers<[1], [0], [0], [1], [0, 0, 1, 1], [], []>} : vector<16x8xf32>, vector<8x32xf32>, vector<16x32xf32> -> vector<16x32xf32>
    %276 = arith.addf %256, %275 : vector<16x32xf32>
    %277 = arith.addf %147, %276 : vector<16x32xf32>
    %c0_104 = arith.constant 0 : index
    %c0_105 = arith.constant 0 : index
    %c0_106 = arith.constant 0 : index
    %278 = vector.load %arg13[%c0_104, %c0_105, %c0_106] : memref<2x1x32xf32, #tpu.memory_space<vmem>>, vector<1x1x32xf32>
    %279 = vector.shape_cast %278 : vector<1x1x32xf32> to vector<1x32xf32>
    %280 = vector.broadcast %279 : vector<1x32xf32> to vector<16x32xf32>
    %281 = arith.addf %277, %280 : vector<16x32xf32>
    %282 = vector.extract_strided_slice %17 {offsets = [2, 0], sizes = [1, 32], strides = [1, 1]} : vector<3x32xf32> to vector<1x32xf32>
    %283 = vector.extract_strided_slice %19 {offsets = [2, 0], sizes = [1, 32], strides = [1, 1]} : vector<3x32xf32> to vector<1x32xf32>
    %cst_107 = arith.constant dense<0.000000e+00> : vector<16xf32>
    %284 = vector.multi_reduction <add>, %281, %cst_107 [1] : vector<16x32xf32> to vector<16xf32>
    %285 = vector.shape_cast %284 : vector<16xf32> to vector<16x1xf32>
    %cst_108 = arith.constant 3.200000e+01 : f32
    %286 = vector.broadcast %cst_108 : f32 to vector<16x1xf32>
    %287 = arith.divf %285, %286 : vector<16x1xf32>
    %288 = vector.broadcast %287 : vector<16x1xf32> to vector<16x32xf32>
    %289 = arith.subf %281, %288 : vector<16x32xf32>
    %290 = arith.mulf %289, %289 : vector<16x32xf32>
    %cst_109 = arith.constant dense<0.000000e+00> : vector<16xf32>
    %291 = vector.multi_reduction <add>, %290, %cst_109 [1] : vector<16x32xf32> to vector<16xf32>
    %292 = vector.shape_cast %291 : vector<16xf32> to vector<16x1xf32>
    %cst_110 = arith.constant 0.0322580636 : f32
    %293 = vector.broadcast %cst_110 : f32 to vector<16x1xf32>
    %294 = arith.mulf %292, %293 : vector<16x1xf32>
    %295 = math.sqrt %294 : vector<16x1xf32>
    %cst_111 = arith.constant 9.99999997E-7 : f32
    %296 = vector.broadcast %cst_111 : f32 to vector<16x1xf32>
    %297 = arith.addf %295, %296 : vector<16x1xf32>
    %298 = tpu.reciprocal %297 {approx = true} : vector<16x1xf32> -> vector<16x1xf32>
    %299 = vector.broadcast %287 : vector<16x1xf32> to vector<16x32xf32>
    %300 = arith.subf %281, %299 : vector<16x32xf32>
    %301 = vector.broadcast %282 : vector<1x32xf32> to vector<16x32xf32>
    %302 = arith.mulf %301, %300 : vector<16x32xf32>
    %303 = vector.broadcast %298 : vector<16x1xf32> to vector<16x32xf32>
    %304 = arith.mulf %302, %303 : vector<16x32xf32>
    %305 = vector.broadcast %283 : vector<1x32xf32> to vector<16x32xf32>
    %306 = arith.addf %304, %305 : vector<16x32xf32>
    %c0_112 = arith.constant 0 : index
    %c0_113 = arith.constant 0 : index
    %c0_114 = arith.constant 0 : index
    %307 = vector.load %arg14[%c0_112, %c0_113, %c0_114] : memref<2x32x64xf32, #tpu.memory_space<vmem>>, vector<1x32x64xf32>
    %308 = vector.shape_cast %307 : vector<1x32x64xf32> to vector<32x64xf32>
    %cst_115 = arith.constant dense<0.000000e+00> : vector<16x64xf32>
    %309 = tpu.matmul %306, %308, %cst_115 {dimension_numbers = #tpu.dot_dimension_numbers<[1], [0], [0], [1], [0, 0, 1, 1], [], []>} : vector<16x32xf32>, vector<32x64xf32>, vector<16x64xf32> -> vector<16x64xf32>
    %c0_116 = arith.constant 0 : index
    %c0_117 = arith.constant 0 : index
    %c0_118 = arith.constant 0 : index
    %310 = vector.load %arg15[%c0_116, %c0_117, %c0_118] : memref<2x1x64xf32, #tpu.memory_space<vmem>>, vector<1x1x64xf32>
    %311 = vector.shape_cast %310 : vector<1x1x64xf32> to vector<1x64xf32>
    %312 = vector.broadcast %311 : vector<1x64xf32> to vector<16x64xf32>
    %313 = arith.addf %309, %312 : vector<16x64xf32>
    %cst_119 = arith.constant 0.000000e+00 : f32
    %314 = vector.broadcast %cst_119 : f32 to vector<16x64xf32>
    %315 = arith.maximumf %313, %314 : vector<16x64xf32>
    %c0_120 = arith.constant 0 : index
    %c0_121 = arith.constant 0 : index
    %c0_122 = arith.constant 0 : index
    %316 = vector.load %arg16[%c0_120, %c0_121, %c0_122] : memref<2x64x32xf32, #tpu.memory_space<vmem>>, vector<1x64x32xf32>
    %317 = vector.shape_cast %316 : vector<1x64x32xf32> to vector<64x32xf32>
    %cst_123 = arith.constant dense<0.000000e+00> : vector<16x32xf32>
    %318 = tpu.matmul %315, %317, %cst_123 {dimension_numbers = #tpu.dot_dimension_numbers<[1], [0], [0], [1], [0, 0, 1, 1], [], []>} : vector<16x64xf32>, vector<64x32xf32>, vector<16x32xf32> -> vector<16x32xf32>
    %319 = arith.addf %281, %318 : vector<16x32xf32>
    %c0_124 = arith.constant 0 : index
    %c0_125 = arith.constant 0 : index
    %c0_126 = arith.constant 0 : index
    %320 = vector.load %arg17[%c0_124, %c0_125, %c0_126] : memref<2x1x32xf32, #tpu.memory_space<vmem>>, vector<1x1x32xf32>
    %321 = vector.shape_cast %320 : vector<1x1x32xf32> to vector<1x32xf32>
    %322 = vector.broadcast %321 : vector<1x32xf32> to vector<16x32xf32>
    %323 = arith.addf %319, %322 : vector<16x32xf32>
    %c1 = arith.constant 1 : index
    %c0_127 = arith.constant 0 : index
    %c0_128 = arith.constant 0 : index
    %324 = vector.load %arg18[%c1, %c0_127, %c0_128] : memref<2x3x32xf32, #tpu.memory_space<vmem>>, vector<1x3x32xf32>
    %325 = vector.shape_cast %324 : vector<1x3x32xf32> to vector<3x32xf32>
    %c1_129 = arith.constant 1 : index
    %c0_130 = arith.constant 0 : index
    %c0_131 = arith.constant 0 : index
    %326 = vector.load %arg19[%c1_129, %c0_130, %c0_131] : memref<2x3x32xf32, #tpu.memory_space<vmem>>, vector<1x3x32xf32>
    %327 = vector.shape_cast %326 : vector<1x3x32xf32> to vector<3x32xf32>
    %328 = vector.extract_strided_slice %325 {offsets = [0, 0], sizes = [1, 32], strides = [1, 1]} : vector<3x32xf32> to vector<1x32xf32>
    %329 = vector.extract_strided_slice %327 {offsets = [0, 0], sizes = [1, 32], strides = [1, 1]} : vector<3x32xf32> to vector<1x32xf32>
    %cst_132 = arith.constant dense<0.000000e+00> : vector<16xf32>
    %330 = vector.multi_reduction <add>, %323, %cst_132 [1] : vector<16x32xf32> to vector<16xf32>
    %331 = vector.shape_cast %330 : vector<16xf32> to vector<16x1xf32>
    %cst_133 = arith.constant 3.200000e+01 : f32
    %332 = vector.broadcast %cst_133 : f32 to vector<16x1xf32>
    %333 = arith.divf %331, %332 : vector<16x1xf32>
    %334 = vector.broadcast %333 : vector<16x1xf32> to vector<16x32xf32>
    %335 = arith.subf %323, %334 : vector<16x32xf32>
    %336 = arith.mulf %335, %335 : vector<16x32xf32>
    %cst_134 = arith.constant dense<0.000000e+00> : vector<16xf32>
    %337 = vector.multi_reduction <add>, %336, %cst_134 [1] : vector<16x32xf32> to vector<16xf32>
    %338 = vector.shape_cast %337 : vector<16xf32> to vector<16x1xf32>
    %cst_135 = arith.constant 0.0322580636 : f32
    %339 = vector.broadcast %cst_135 : f32 to vector<16x1xf32>
    %340 = arith.mulf %338, %339 : vector<16x1xf32>
    %341 = math.sqrt %340 : vector<16x1xf32>
    %cst_136 = arith.constant 9.99999997E-7 : f32
    %342 = vector.broadcast %cst_136 : f32 to vector<16x1xf32>
    %343 = arith.addf %341, %342 : vector<16x1xf32>
    %344 = tpu.reciprocal %343 {approx = true} : vector<16x1xf32> -> vector<16x1xf32>
    %345 = vector.broadcast %333 : vector<16x1xf32> to vector<16x32xf32>
    %346 = arith.subf %323, %345 : vector<16x32xf32>
    %347 = vector.broadcast %328 : vector<1x32xf32> to vector<16x32xf32>
    %348 = arith.mulf %347, %346 : vector<16x32xf32>
    %349 = vector.broadcast %344 : vector<16x1xf32> to vector<16x32xf32>
    %350 = arith.mulf %348, %349 : vector<16x32xf32>
    %351 = vector.broadcast %329 : vector<1x32xf32> to vector<16x32xf32>
    %352 = arith.addf %350, %351 : vector<16x32xf32>
    %c1_137 = arith.constant 1 : index
    %c0_138 = arith.constant 0 : index
    %c0_139 = arith.constant 0 : index
    %353 = vector.load %arg4[%c1_137, %c0_138, %c0_139] : memref<2x32x96xf32, #tpu.memory_space<vmem>>, vector<1x32x96xf32>
    %354 = vector.shape_cast %353 : vector<1x32x96xf32> to vector<32x96xf32>
    %cst_140 = arith.constant dense<0.000000e+00> : vector<16x96xf32>
    %355 = tpu.matmul %352, %354, %cst_140 {dimension_numbers = #tpu.dot_dimension_numbers<[1], [0], [0], [1], [0, 0, 1, 1], [], []>} : vector<16x32xf32>, vector<32x96xf32>, vector<16x96xf32> -> vector<16x96xf32>
    %c1_141 = arith.constant 1 : index
    %c0_142 = arith.constant 0 : index
    %c0_143 = arith.constant 0 : index
    %356 = vector.load %arg5[%c1_141, %c0_142, %c0_143] : memref<2x1x96xf32, #tpu.memory_space<vmem>>, vector<1x1x96xf32>
    %357 = vector.shape_cast %356 : vector<1x1x96xf32> to vector<1x96xf32>
    %358 = vector.broadcast %357 : vector<1x96xf32> to vector<16x96xf32>
    %359 = arith.addf %355, %358 : vector<16x96xf32>
    %360 = vector.extract_strided_slice %359 {offsets = [0, 0], sizes = [16, 32], strides = [1, 1]} : vector<16x96xf32> to vector<16x32xf32>
    %361 = vector.extract_strided_slice %359 {offsets = [0, 32], sizes = [16, 32], strides = [1, 1]} : vector<16x96xf32> to vector<16x32xf32>
    %362 = vector.extract_strided_slice %359 {offsets = [0, 64], sizes = [16, 32], strides = [1, 1]} : vector<16x96xf32> to vector<16x32xf32>
    %c1_144 = arith.constant 1 : index
    %c0_145 = arith.constant 0 : index
    %c0_146 = arith.constant 0 : index
    %363 = vector.load %arg6[%c1_144, %c0_145, %c0_146] : memref<2x32x32xf32, #tpu.memory_space<vmem>>, vector<1x32x32xf32>
    %364 = vector.shape_cast %363 : vector<1x32x32xf32> to vector<32x32xf32>
    %cst_147 = arith.constant 0.353553385 : f32
    %365 = vector.broadcast %cst_147 : f32 to vector<16x32xf32>
    %366 = arith.mulf %360, %365 : vector<16x32xf32>
    %367 = vector.shape_cast %366 : vector<16x32xf32> to vector<2x8x32xf32>
    %368 = vector.shape_cast %361 : vector<16x32xf32> to vector<2x8x32xf32>
    %369 = vector.shape_cast %362 : vector<16x32xf32> to vector<2x8x32xf32>
    %cst_148 = arith.constant 0.000000e+00 : f32
    %370 = vector.broadcast %cst_148 : f32 to vector<16x32xf32>
    %371 = vector.extract_strided_slice %367 {offsets = [0, 0, 0], sizes = [2, 8, 8], strides = [1, 1, 1]} : vector<2x8x32xf32> to vector<2x8x8xf32>
    %372 = vector.extract_strided_slice %368 {offsets = [0, 0, 0], sizes = [2, 8, 8], strides = [1, 1, 1]} : vector<2x8x32xf32> to vector<2x8x8xf32>
    "tpu.trace_start"() <{level = 10 : i32, message = "btd,bsd->bts"}> : () -> ()
    %cst_149 = arith.constant dense<0.000000e+00> : vector<2x8x8xf32>
    %373 = tpu.matmul %371, %372, %cst_149 {dimension_numbers = #tpu.dot_dimension_numbers<[2], [2], [1], [1], [0, 0, 0, 1, 1, 1], [0], [0]>} : vector<2x8x8xf32>, vector<2x8x8xf32>, vector<2x8x8xf32> -> vector<2x8x8xf32>
    "tpu.trace_stop"() : () -> ()
    %374 = arith.addf %373, %7 : vector<2x8x8xf32>
    %cst_150 = arith.constant dense<0xFF800000> : vector<2x8xf32>
    %375 = vector.multi_reduction <maximumf>, %374, %cst_150 [2] : vector<2x8x8xf32> to vector<2x8xf32>
    %376 = vector.shape_cast %375 : vector<2x8xf32> to vector<2x8x1xf32>
    %377 = vector.broadcast %376 : vector<2x8x1xf32> to vector<2x8x8xf32>
    %378 = arith.subf %374, %377 : vector<2x8x8xf32>
    %379 = math.exp %378 : vector<2x8x8xf32>
    %cst_151 = arith.constant dense<0.000000e+00> : vector<2x8xf32>
    %380 = vector.multi_reduction <add>, %379, %cst_151 [2] : vector<2x8x8xf32> to vector<2x8xf32>
    %381 = vector.shape_cast %380 : vector<2x8xf32> to vector<2x8x1xf32>
    %382 = tpu.reciprocal %381 {approx = true} : vector<2x8x1xf32> -> vector<2x8x1xf32>
    %383 = vector.broadcast %382 : vector<2x8x1xf32> to vector<2x8x8xf32>
    %384 = arith.mulf %379, %383 : vector<2x8x8xf32>
    %385 = vector.extract_strided_slice %369 {offsets = [0, 0, 0], sizes = [2, 8, 8], strides = [1, 1, 1]} : vector<2x8x32xf32> to vector<2x8x8xf32>
    "tpu.trace_start"() <{level = 10 : i32, message = "bts,bsd->btd"}> : () -> ()
    %cst_152 = arith.constant dense<0.000000e+00> : vector<2x8x8xf32>
    %386 = tpu.matmul %384, %385, %cst_152 {dimension_numbers = #tpu.dot_dimension_numbers<[2], [1], [1], [2], [0, 0, 0, 1, 1, 2], [0], [0]>} : vector<2x8x8xf32>, vector<2x8x8xf32>, vector<2x8x8xf32> -> vector<2x8x8xf32>
    "tpu.trace_stop"() : () -> ()
    %387 = vector.shape_cast %386 : vector<2x8x8xf32> to vector<16x8xf32>
    %388 = vector.extract_strided_slice %364 {offsets = [0, 0], sizes = [8, 32], strides = [1, 1]} : vector<32x32xf32> to vector<8x32xf32>
    %cst_153 = arith.constant dense<0.000000e+00> : vector<16x32xf32>
    %389 = tpu.matmul %387, %388, %cst_153 {dimension_numbers = #tpu.dot_dimension_numbers<[1], [0], [0], [1], [0, 0, 1, 1], [], []>} : vector<16x8xf32>, vector<8x32xf32>, vector<16x32xf32> -> vector<16x32xf32>
    %390 = arith.addf %370, %389 : vector<16x32xf32>
    %391 = vector.extract_strided_slice %367 {offsets = [0, 0, 8], sizes = [2, 8, 8], strides = [1, 1, 1]} : vector<2x8x32xf32> to vector<2x8x8xf32>
    %392 = vector.extract_strided_slice %368 {offsets = [0, 0, 8], sizes = [2, 8, 8], strides = [1, 1, 1]} : vector<2x8x32xf32> to vector<2x8x8xf32>
    "tpu.trace_start"() <{level = 10 : i32, message = "btd,bsd->bts"}> : () -> ()
    %cst_154 = arith.constant dense<0.000000e+00> : vector<2x8x8xf32>
    %393 = tpu.matmul %391, %392, %cst_154 {dimension_numbers = #tpu.dot_dimension_numbers<[2], [2], [1], [1], [0, 0, 0, 1, 1, 1], [0], [0]>} : vector<2x8x8xf32>, vector<2x8x8xf32>, vector<2x8x8xf32> -> vector<2x8x8xf32>
    "tpu.trace_stop"() : () -> ()
    %394 = arith.addf %393, %7 : vector<2x8x8xf32>
    %cst_155 = arith.constant dense<0xFF800000> : vector<2x8xf32>
    %395 = vector.multi_reduction <maximumf>, %394, %cst_155 [2] : vector<2x8x8xf32> to vector<2x8xf32>
    %396 = vector.shape_cast %395 : vector<2x8xf32> to vector<2x8x1xf32>
    %397 = vector.broadcast %396 : vector<2x8x1xf32> to vector<2x8x8xf32>
    %398 = arith.subf %394, %397 : vector<2x8x8xf32>
    %399 = math.exp %398 : vector<2x8x8xf32>
    %cst_156 = arith.constant dense<0.000000e+00> : vector<2x8xf32>
    %400 = vector.multi_reduction <add>, %399, %cst_156 [2] : vector<2x8x8xf32> to vector<2x8xf32>
    %401 = vector.shape_cast %400 : vector<2x8xf32> to vector<2x8x1xf32>
    %402 = tpu.reciprocal %401 {approx = true} : vector<2x8x1xf32> -> vector<2x8x1xf32>
    %403 = vector.broadcast %402 : vector<2x8x1xf32> to vector<2x8x8xf32>
    %404 = arith.mulf %399, %403 : vector<2x8x8xf32>
    %405 = vector.extract_strided_slice %369 {offsets = [0, 0, 8], sizes = [2, 8, 8], strides = [1, 1, 1]} : vector<2x8x32xf32> to vector<2x8x8xf32>
    "tpu.trace_start"() <{level = 10 : i32, message = "bts,bsd->btd"}> : () -> ()
    %cst_157 = arith.constant dense<0.000000e+00> : vector<2x8x8xf32>
    %406 = tpu.matmul %404, %405, %cst_157 {dimension_numbers = #tpu.dot_dimension_numbers<[2], [1], [1], [2], [0, 0, 0, 1, 1, 2], [0], [0]>} : vector<2x8x8xf32>, vector<2x8x8xf32>, vector<2x8x8xf32> -> vector<2x8x8xf32>
    "tpu.trace_stop"() : () -> ()
    %407 = vector.shape_cast %406 : vector<2x8x8xf32> to vector<16x8xf32>
    %408 = vector.extract_strided_slice %364 {offsets = [8, 0], sizes = [8, 32], strides = [1, 1]} : vector<32x32xf32> to vector<8x32xf32>
    %cst_158 = arith.constant dense<0.000000e+00> : vector<16x32xf32>
    %409 = tpu.matmul %407, %408, %cst_158 {dimension_numbers = #tpu.dot_dimension_numbers<[1], [0], [0], [1], [0, 0, 1, 1], [], []>} : vector<16x8xf32>, vector<8x32xf32>, vector<16x32xf32> -> vector<16x32xf32>
    %410 = arith.addf %390, %409 : vector<16x32xf32>
    %411 = vector.extract_strided_slice %367 {offsets = [0, 0, 16], sizes = [2, 8, 8], strides = [1, 1, 1]} : vector<2x8x32xf32> to vector<2x8x8xf32>
    %412 = vector.extract_strided_slice %368 {offsets = [0, 0, 16], sizes = [2, 8, 8], strides = [1, 1, 1]} : vector<2x8x32xf32> to vector<2x8x8xf32>
    "tpu.trace_start"() <{level = 10 : i32, message = "btd,bsd->bts"}> : () -> ()
    %cst_159 = arith.constant dense<0.000000e+00> : vector<2x8x8xf32>
    %413 = tpu.matmul %411, %412, %cst_159 {dimension_numbers = #tpu.dot_dimension_numbers<[2], [2], [1], [1], [0, 0, 0, 1, 1, 1], [0], [0]>} : vector<2x8x8xf32>, vector<2x8x8xf32>, vector<2x8x8xf32> -> vector<2x8x8xf32>
    "tpu.trace_stop"() : () -> ()
    %414 = arith.addf %413, %7 : vector<2x8x8xf32>
    %cst_160 = arith.constant dense<0xFF800000> : vector<2x8xf32>
    %415 = vector.multi_reduction <maximumf>, %414, %cst_160 [2] : vector<2x8x8xf32> to vector<2x8xf32>
    %416 = vector.shape_cast %415 : vector<2x8xf32> to vector<2x8x1xf32>
    %417 = vector.broadcast %416 : vector<2x8x1xf32> to vector<2x8x8xf32>
    %418 = arith.subf %414, %417 : vector<2x8x8xf32>
    %419 = math.exp %418 : vector<2x8x8xf32>
    %cst_161 = arith.constant dense<0.000000e+00> : vector<2x8xf32>
    %420 = vector.multi_reduction <add>, %419, %cst_161 [2] : vector<2x8x8xf32> to vector<2x8xf32>
    %421 = vector.shape_cast %420 : vector<2x8xf32> to vector<2x8x1xf32>
    %422 = tpu.reciprocal %421 {approx = true} : vector<2x8x1xf32> -> vector<2x8x1xf32>
    %423 = vector.broadcast %422 : vector<2x8x1xf32> to vector<2x8x8xf32>
    %424 = arith.mulf %419, %423 : vector<2x8x8xf32>
    %425 = vector.extract_strided_slice %369 {offsets = [0, 0, 16], sizes = [2, 8, 8], strides = [1, 1, 1]} : vector<2x8x32xf32> to vector<2x8x8xf32>
    "tpu.trace_start"() <{level = 10 : i32, message = "bts,bsd->btd"}> : () -> ()
    %cst_162 = arith.constant dense<0.000000e+00> : vector<2x8x8xf32>
    %426 = tpu.matmul %424, %425, %cst_162 {dimension_numbers = #tpu.dot_dimension_numbers<[2], [1], [1], [2], [0, 0, 0, 1, 1, 2], [0], [0]>} : vector<2x8x8xf32>, vector<2x8x8xf32>, vector<2x8x8xf32> -> vector<2x8x8xf32>
    "tpu.trace_stop"() : () -> ()
    %427 = vector.shape_cast %426 : vector<2x8x8xf32> to vector<16x8xf32>
    %428 = vector.extract_strided_slice %364 {offsets = [16, 0], sizes = [8, 32], strides = [1, 1]} : vector<32x32xf32> to vector<8x32xf32>
    %cst_163 = arith.constant dense<0.000000e+00> : vector<16x32xf32>
    %429 = tpu.matmul %427, %428, %cst_163 {dimension_numbers = #tpu.dot_dimension_numbers<[1], [0], [0], [1], [0, 0, 1, 1], [], []>} : vector<16x8xf32>, vector<8x32xf32>, vector<16x32xf32> -> vector<16x32xf32>
    %430 = arith.addf %410, %429 : vector<16x32xf32>
    %431 = vector.extract_strided_slice %367 {offsets = [0, 0, 24], sizes = [2, 8, 8], strides = [1, 1, 1]} : vector<2x8x32xf32> to vector<2x8x8xf32>
    %432 = vector.extract_strided_slice %368 {offsets = [0, 0, 24], sizes = [2, 8, 8], strides = [1, 1, 1]} : vector<2x8x32xf32> to vector<2x8x8xf32>
    "tpu.trace_start"() <{level = 10 : i32, message = "btd,bsd->bts"}> : () -> ()
    %cst_164 = arith.constant dense<0.000000e+00> : vector<2x8x8xf32>
    %433 = tpu.matmul %431, %432, %cst_164 {dimension_numbers = #tpu.dot_dimension_numbers<[2], [2], [1], [1], [0, 0, 0, 1, 1, 1], [0], [0]>} : vector<2x8x8xf32>, vector<2x8x8xf32>, vector<2x8x8xf32> -> vector<2x8x8xf32>
    "tpu.trace_stop"() : () -> ()
    %434 = arith.addf %433, %7 : vector<2x8x8xf32>
    %cst_165 = arith.constant dense<0xFF800000> : vector<2x8xf32>
    %435 = vector.multi_reduction <maximumf>, %434, %cst_165 [2] : vector<2x8x8xf32> to vector<2x8xf32>
    %436 = vector.shape_cast %435 : vector<2x8xf32> to vector<2x8x1xf32>
    %437 = vector.broadcast %436 : vector<2x8x1xf32> to vector<2x8x8xf32>
    %438 = arith.subf %434, %437 : vector<2x8x8xf32>
    %439 = math.exp %438 : vector<2x8x8xf32>
    %cst_166 = arith.constant dense<0.000000e+00> : vector<2x8xf32>
    %440 = vector.multi_reduction <add>, %439, %cst_166 [2] : vector<2x8x8xf32> to vector<2x8xf32>
    %441 = vector.shape_cast %440 : vector<2x8xf32> to vector<2x8x1xf32>
    %442 = tpu.reciprocal %441 {approx = true} : vector<2x8x1xf32> -> vector<2x8x1xf32>
    %443 = vector.broadcast %442 : vector<2x8x1xf32> to vector<2x8x8xf32>
    %444 = arith.mulf %439, %443 : vector<2x8x8xf32>
    %445 = vector.extract_strided_slice %369 {offsets = [0, 0, 24], sizes = [2, 8, 8], strides = [1, 1, 1]} : vector<2x8x32xf32> to vector<2x8x8xf32>
    "tpu.trace_start"() <{level = 10 : i32, message = "bts,bsd->btd"}> : () -> ()
    %cst_167 = arith.constant dense<0.000000e+00> : vector<2x8x8xf32>
    %446 = tpu.matmul %444, %445, %cst_167 {dimension_numbers = #tpu.dot_dimension_numbers<[2], [1], [1], [2], [0, 0, 0, 1, 1, 2], [0], [0]>} : vector<2x8x8xf32>, vector<2x8x8xf32>, vector<2x8x8xf32> -> vector<2x8x8xf32>
    "tpu.trace_stop"() : () -> ()
    %447 = vector.shape_cast %446 : vector<2x8x8xf32> to vector<16x8xf32>
    %448 = vector.extract_strided_slice %364 {offsets = [24, 0], sizes = [8, 32], strides = [1, 1]} : vector<32x32xf32> to vector<8x32xf32>
    %cst_168 = arith.constant dense<0.000000e+00> : vector<16x32xf32>
    %449 = tpu.matmul %447, %448, %cst_168 {dimension_numbers = #tpu.dot_dimension_numbers<[1], [0], [0], [1], [0, 0, 1, 1], [], []>} : vector<16x8xf32>, vector<8x32xf32>, vector<16x32xf32> -> vector<16x32xf32>
    %450 = arith.addf %430, %449 : vector<16x32xf32>
    %451 = arith.addf %323, %450 : vector<16x32xf32>
    %c1_169 = arith.constant 1 : index
    %c0_170 = arith.constant 0 : index
    %c0_171 = arith.constant 0 : index
    %452 = vector.load %arg7[%c1_169, %c0_170, %c0_171] : memref<2x1x32xf32, #tpu.memory_space<vmem>>, vector<1x1x32xf32>
    %453 = vector.shape_cast %452 : vector<1x1x32xf32> to vector<1x32xf32>
    %454 = vector.broadcast %453 : vector<1x32xf32> to vector<16x32xf32>
    %455 = arith.addf %451, %454 : vector<16x32xf32>
    %456 = vector.extract_strided_slice %325 {offsets = [1, 0], sizes = [1, 32], strides = [1, 1]} : vector<3x32xf32> to vector<1x32xf32>
    %457 = vector.extract_strided_slice %327 {offsets = [1, 0], sizes = [1, 32], strides = [1, 1]} : vector<3x32xf32> to vector<1x32xf32>
    %cst_172 = arith.constant dense<0.000000e+00> : vector<16xf32>
    %458 = vector.multi_reduction <add>, %455, %cst_172 [1] : vector<16x32xf32> to vector<16xf32>
    %459 = vector.shape_cast %458 : vector<16xf32> to vector<16x1xf32>
    %cst_173 = arith.constant 3.200000e+01 : f32
    %460 = vector.broadcast %cst_173 : f32 to vector<16x1xf32>
    %461 = arith.divf %459, %460 : vector<16x1xf32>
    %462 = vector.broadcast %461 : vector<16x1xf32> to vector<16x32xf32>
    %463 = arith.subf %455, %462 : vector<16x32xf32>
    %464 = arith.mulf %463, %463 : vector<16x32xf32>
    %cst_174 = arith.constant dense<0.000000e+00> : vector<16xf32>
    %465 = vector.multi_reduction <add>, %464, %cst_174 [1] : vector<16x32xf32> to vector<16xf32>
    %466 = vector.shape_cast %465 : vector<16xf32> to vector<16x1xf32>
    %cst_175 = arith.constant 0.0322580636 : f32
    %467 = vector.broadcast %cst_175 : f32 to vector<16x1xf32>
    %468 = arith.mulf %466, %467 : vector<16x1xf32>
    %469 = math.sqrt %468 : vector<16x1xf32>
    %cst_176 = arith.constant 9.99999997E-7 : f32
    %470 = vector.broadcast %cst_176 : f32 to vector<16x1xf32>
    %471 = arith.addf %469, %470 : vector<16x1xf32>
    %472 = tpu.reciprocal %471 {approx = true} : vector<16x1xf32> -> vector<16x1xf32>
    %473 = vector.broadcast %461 : vector<16x1xf32> to vector<16x32xf32>
    %474 = arith.subf %455, %473 : vector<16x32xf32>
    %475 = vector.broadcast %456 : vector<1x32xf32> to vector<16x32xf32>
    %476 = arith.mulf %475, %474 : vector<16x32xf32>
    %477 = vector.broadcast %472 : vector<16x1xf32> to vector<16x32xf32>
    %478 = arith.mulf %476, %477 : vector<16x32xf32>
    %479 = vector.broadcast %457 : vector<1x32xf32> to vector<16x32xf32>
    %480 = arith.addf %478, %479 : vector<16x32xf32>
    %c1_177 = arith.constant 1 : index
    %c0_178 = arith.constant 0 : index
    %c0_179 = arith.constant 0 : index
    %481 = vector.load %arg8[%c1_177, %c0_178, %c0_179] : memref<2x32x32xf32, #tpu.memory_space<vmem>>, vector<1x32x32xf32>
    %482 = vector.shape_cast %481 : vector<1x32x32xf32> to vector<32x32xf32>
    %cst_180 = arith.constant dense<0.000000e+00> : vector<16x32xf32>
    %483 = tpu.matmul %480, %482, %cst_180 {dimension_numbers = #tpu.dot_dimension_numbers<[1], [0], [0], [1], [0, 0, 1, 1], [], []>} : vector<16x32xf32>, vector<32x32xf32>, vector<16x32xf32> -> vector<16x32xf32>
    %c1_181 = arith.constant 1 : index
    %c0_182 = arith.constant 0 : index
    %c0_183 = arith.constant 0 : index
    %484 = vector.load %arg9[%c1_181, %c0_182, %c0_183] : memref<2x1x32xf32, #tpu.memory_space<vmem>>, vector<1x1x32xf32>
    %485 = vector.shape_cast %484 : vector<1x1x32xf32> to vector<1x32xf32>
    %486 = vector.broadcast %485 : vector<1x32xf32> to vector<16x32xf32>
    %487 = arith.addf %483, %486 : vector<16x32xf32>
    %c1_184 = arith.constant 1 : index
    %c0_185 = arith.constant 0 : index
    %c0_186 = arith.constant 0 : index
    %488 = vector.load %arg10[%c1_184, %c0_185, %c0_186] : memref<2x32x64xf32, #tpu.memory_space<vmem>>, vector<1x32x64xf32>
    %489 = vector.shape_cast %488 : vector<1x32x64xf32> to vector<32x64xf32>
    %cst_187 = arith.constant dense<0.000000e+00> : vector<16x64xf32>
    %490 = tpu.matmul %1, %489, %cst_187 {dimension_numbers = #tpu.dot_dimension_numbers<[1], [0], [0], [1], [0, 0, 1, 1], [], []>} : vector<16x32xf32>, vector<32x64xf32>, vector<16x64xf32> -> vector<16x64xf32>
    %c1_188 = arith.constant 1 : index
    %c0_189 = arith.constant 0 : index
    %c0_190 = arith.constant 0 : index
    %491 = vector.load %arg11[%c1_188, %c0_189, %c0_190] : memref<2x1x64xf32, #tpu.memory_space<vmem>>, vector<1x1x64xf32>
    %492 = vector.shape_cast %491 : vector<1x1x64xf32> to vector<1x64xf32>
    %493 = vector.broadcast %492 : vector<1x64xf32> to vector<16x64xf32>
    %494 = arith.addf %490, %493 : vector<16x64xf32>
    %495 = vector.extract_strided_slice %494 {offsets = [0, 0], sizes = [16, 32], strides = [1, 1]} : vector<16x64xf32> to vector<16x32xf32>
    %496 = vector.extract_strided_slice %494 {offsets = [0, 32], sizes = [16, 32], strides = [1, 1]} : vector<16x64xf32> to vector<16x32xf32>
    %c1_191 = arith.constant 1 : index
    %c0_192 = arith.constant 0 : index
    %c0_193 = arith.constant 0 : index
    %497 = vector.load %arg12[%c1_191, %c0_192, %c0_193] : memref<2x32x32xf32, #tpu.memory_space<vmem>>, vector<1x32x32xf32>
    %498 = vector.shape_cast %497 : vector<1x32x32xf32> to vector<32x32xf32>
    %cst_194 = arith.constant 0.353553385 : f32
    %499 = vector.broadcast %cst_194 : f32 to vector<16x32xf32>
    %500 = arith.mulf %487, %499 : vector<16x32xf32>
    %501 = vector.shape_cast %500 : vector<16x32xf32> to vector<2x8x32xf32>
    %502 = vector.shape_cast %495 : vector<16x32xf32> to vector<2x8x32xf32>
    %503 = vector.shape_cast %496 : vector<16x32xf32> to vector<2x8x32xf32>
    %cst_195 = arith.constant 0.000000e+00 : f32
    %504 = vector.broadcast %cst_195 : f32 to vector<16x32xf32>
    %505 = vector.extract_strided_slice %501 {offsets = [0, 0, 0], sizes = [2, 8, 8], strides = [1, 1, 1]} : vector<2x8x32xf32> to vector<2x8x8xf32>
    %506 = vector.extract_strided_slice %502 {offsets = [0, 0, 0], sizes = [2, 8, 8], strides = [1, 1, 1]} : vector<2x8x32xf32> to vector<2x8x8xf32>
    "tpu.trace_start"() <{level = 10 : i32, message = "btd,bsd->bts"}> : () -> ()
    %cst_196 = arith.constant dense<0.000000e+00> : vector<2x8x8xf32>
    %507 = tpu.matmul %505, %506, %cst_196 {dimension_numbers = #tpu.dot_dimension_numbers<[2], [2], [1], [1], [0, 0, 0, 1, 1, 1], [0], [0]>} : vector<2x8x8xf32>, vector<2x8x8xf32>, vector<2x8x8xf32> -> vector<2x8x8xf32>
    "tpu.trace_stop"() : () -> ()
    %508 = arith.addf %507, %15 : vector<2x8x8xf32>
    %cst_197 = arith.constant dense<0xFF800000> : vector<2x8xf32>
    %509 = vector.multi_reduction <maximumf>, %508, %cst_197 [2] : vector<2x8x8xf32> to vector<2x8xf32>
    %510 = vector.shape_cast %509 : vector<2x8xf32> to vector<2x8x1xf32>
    %511 = vector.broadcast %510 : vector<2x8x1xf32> to vector<2x8x8xf32>
    %512 = arith.subf %508, %511 : vector<2x8x8xf32>
    %513 = math.exp %512 : vector<2x8x8xf32>
    %cst_198 = arith.constant dense<0.000000e+00> : vector<2x8xf32>
    %514 = vector.multi_reduction <add>, %513, %cst_198 [2] : vector<2x8x8xf32> to vector<2x8xf32>
    %515 = vector.shape_cast %514 : vector<2x8xf32> to vector<2x8x1xf32>
    %516 = tpu.reciprocal %515 {approx = true} : vector<2x8x1xf32> -> vector<2x8x1xf32>
    %517 = vector.broadcast %516 : vector<2x8x1xf32> to vector<2x8x8xf32>
    %518 = arith.mulf %513, %517 : vector<2x8x8xf32>
    %519 = vector.extract_strided_slice %503 {offsets = [0, 0, 0], sizes = [2, 8, 8], strides = [1, 1, 1]} : vector<2x8x32xf32> to vector<2x8x8xf32>
    "tpu.trace_start"() <{level = 10 : i32, message = "bts,bsd->btd"}> : () -> ()
    %cst_199 = arith.constant dense<0.000000e+00> : vector<2x8x8xf32>
    %520 = tpu.matmul %518, %519, %cst_199 {dimension_numbers = #tpu.dot_dimension_numbers<[2], [1], [1], [2], [0, 0, 0, 1, 1, 2], [0], [0]>} : vector<2x8x8xf32>, vector<2x8x8xf32>, vector<2x8x8xf32> -> vector<2x8x8xf32>
    "tpu.trace_stop"() : () -> ()
    %521 = vector.shape_cast %520 : vector<2x8x8xf32> to vector<16x8xf32>
    %522 = vector.extract_strided_slice %498 {offsets = [0, 0], sizes = [8, 32], strides = [1, 1]} : vector<32x32xf32> to vector<8x32xf32>
    %cst_200 = arith.constant dense<0.000000e+00> : vector<16x32xf32>
    %523 = tpu.matmul %521, %522, %cst_200 {dimension_numbers = #tpu.dot_dimension_numbers<[1], [0], [0], [1], [0, 0, 1, 1], [], []>} : vector<16x8xf32>, vector<8x32xf32>, vector<16x32xf32> -> vector<16x32xf32>
    %524 = arith.addf %504, %523 : vector<16x32xf32>
    %525 = vector.extract_strided_slice %501 {offsets = [0, 0, 8], sizes = [2, 8, 8], strides = [1, 1, 1]} : vector<2x8x32xf32> to vector<2x8x8xf32>
    %526 = vector.extract_strided_slice %502 {offsets = [0, 0, 8], sizes = [2, 8, 8], strides = [1, 1, 1]} : vector<2x8x32xf32> to vector<2x8x8xf32>
    "tpu.trace_start"() <{level = 10 : i32, message = "btd,bsd->bts"}> : () -> ()
    %cst_201 = arith.constant dense<0.000000e+00> : vector<2x8x8xf32>
    %527 = tpu.matmul %525, %526, %cst_201 {dimension_numbers = #tpu.dot_dimension_numbers<[2], [2], [1], [1], [0, 0, 0, 1, 1, 1], [0], [0]>} : vector<2x8x8xf32>, vector<2x8x8xf32>, vector<2x8x8xf32> -> vector<2x8x8xf32>
    "tpu.trace_stop"() : () -> ()
    %528 = arith.addf %527, %15 : vector<2x8x8xf32>
    %cst_202 = arith.constant dense<0xFF800000> : vector<2x8xf32>
    %529 = vector.multi_reduction <maximumf>, %528, %cst_202 [2] : vector<2x8x8xf32> to vector<2x8xf32>
    %530 = vector.shape_cast %529 : vector<2x8xf32> to vector<2x8x1xf32>
    %531 = vector.broadcast %530 : vector<2x8x1xf32> to vector<2x8x8xf32>
    %532 = arith.subf %528, %531 : vector<2x8x8xf32>
    %533 = math.exp %532 : vector<2x8x8xf32>
    %cst_203 = arith.constant dense<0.000000e+00> : vector<2x8xf32>
    %534 = vector.multi_reduction <add>, %533, %cst_203 [2] : vector<2x8x8xf32> to vector<2x8xf32>
    %535 = vector.shape_cast %534 : vector<2x8xf32> to vector<2x8x1xf32>
    %536 = tpu.reciprocal %535 {approx = true} : vector<2x8x1xf32> -> vector<2x8x1xf32>
    %537 = vector.broadcast %536 : vector<2x8x1xf32> to vector<2x8x8xf32>
    %538 = arith.mulf %533, %537 : vector<2x8x8xf32>
    %539 = vector.extract_strided_slice %503 {offsets = [0, 0, 8], sizes = [2, 8, 8], strides = [1, 1, 1]} : vector<2x8x32xf32> to vector<2x8x8xf32>
    "tpu.trace_start"() <{level = 10 : i32, message = "bts,bsd->btd"}> : () -> ()
    %cst_204 = arith.constant dense<0.000000e+00> : vector<2x8x8xf32>
    %540 = tpu.matmul %538, %539, %cst_204 {dimension_numbers = #tpu.dot_dimension_numbers<[2], [1], [1], [2], [0, 0, 0, 1, 1, 2], [0], [0]>} : vector<2x8x8xf32>, vector<2x8x8xf32>, vector<2x8x8xf32> -> vector<2x8x8xf32>
    "tpu.trace_stop"() : () -> ()
    %541 = vector.shape_cast %540 : vector<2x8x8xf32> to vector<16x8xf32>
    %542 = vector.extract_strided_slice %498 {offsets = [8, 0], sizes = [8, 32], strides = [1, 1]} : vector<32x32xf32> to vector<8x32xf32>
    %cst_205 = arith.constant dense<0.000000e+00> : vector<16x32xf32>
    %543 = tpu.matmul %541, %542, %cst_205 {dimension_numbers = #tpu.dot_dimension_numbers<[1], [0], [0], [1], [0, 0, 1, 1], [], []>} : vector<16x8xf32>, vector<8x32xf32>, vector<16x32xf32> -> vector<16x32xf32>
    %544 = arith.addf %524, %543 : vector<16x32xf32>
    %545 = vector.extract_strided_slice %501 {offsets = [0, 0, 16], sizes = [2, 8, 8], strides = [1, 1, 1]} : vector<2x8x32xf32> to vector<2x8x8xf32>
    %546 = vector.extract_strided_slice %502 {offsets = [0, 0, 16], sizes = [2, 8, 8], strides = [1, 1, 1]} : vector<2x8x32xf32> to vector<2x8x8xf32>
    "tpu.trace_start"() <{level = 10 : i32, message = "btd,bsd->bts"}> : () -> ()
    %cst_206 = arith.constant dense<0.000000e+00> : vector<2x8x8xf32>
    %547 = tpu.matmul %545, %546, %cst_206 {dimension_numbers = #tpu.dot_dimension_numbers<[2], [2], [1], [1], [0, 0, 0, 1, 1, 1], [0], [0]>} : vector<2x8x8xf32>, vector<2x8x8xf32>, vector<2x8x8xf32> -> vector<2x8x8xf32>
    "tpu.trace_stop"() : () -> ()
    %548 = arith.addf %547, %15 : vector<2x8x8xf32>
    %cst_207 = arith.constant dense<0xFF800000> : vector<2x8xf32>
    %549 = vector.multi_reduction <maximumf>, %548, %cst_207 [2] : vector<2x8x8xf32> to vector<2x8xf32>
    %550 = vector.shape_cast %549 : vector<2x8xf32> to vector<2x8x1xf32>
    %551 = vector.broadcast %550 : vector<2x8x1xf32> to vector<2x8x8xf32>
    %552 = arith.subf %548, %551 : vector<2x8x8xf32>
    %553 = math.exp %552 : vector<2x8x8xf32>
    %cst_208 = arith.constant dense<0.000000e+00> : vector<2x8xf32>
    %554 = vector.multi_reduction <add>, %553, %cst_208 [2] : vector<2x8x8xf32> to vector<2x8xf32>
    %555 = vector.shape_cast %554 : vector<2x8xf32> to vector<2x8x1xf32>
    %556 = tpu.reciprocal %555 {approx = true} : vector<2x8x1xf32> -> vector<2x8x1xf32>
    %557 = vector.broadcast %556 : vector<2x8x1xf32> to vector<2x8x8xf32>
    %558 = arith.mulf %553, %557 : vector<2x8x8xf32>
    %559 = vector.extract_strided_slice %503 {offsets = [0, 0, 16], sizes = [2, 8, 8], strides = [1, 1, 1]} : vector<2x8x32xf32> to vector<2x8x8xf32>
    "tpu.trace_start"() <{level = 10 : i32, message = "bts,bsd->btd"}> : () -> ()
    %cst_209 = arith.constant dense<0.000000e+00> : vector<2x8x8xf32>
    %560 = tpu.matmul %558, %559, %cst_209 {dimension_numbers = #tpu.dot_dimension_numbers<[2], [1], [1], [2], [0, 0, 0, 1, 1, 2], [0], [0]>} : vector<2x8x8xf32>, vector<2x8x8xf32>, vector<2x8x8xf32> -> vector<2x8x8xf32>
    "tpu.trace_stop"() : () -> ()
    %561 = vector.shape_cast %560 : vector<2x8x8xf32> to vector<16x8xf32>
    %562 = vector.extract_strided_slice %498 {offsets = [16, 0], sizes = [8, 32], strides = [1, 1]} : vector<32x32xf32> to vector<8x32xf32>
    %cst_210 = arith.constant dense<0.000000e+00> : vector<16x32xf32>
    %563 = tpu.matmul %561, %562, %cst_210 {dimension_numbers = #tpu.dot_dimension_numbers<[1], [0], [0], [1], [0, 0, 1, 1], [], []>} : vector<16x8xf32>, vector<8x32xf32>, vector<16x32xf32> -> vector<16x32xf32>
    %564 = arith.addf %544, %563 : vector<16x32xf32>
    %565 = vector.extract_strided_slice %501 {offsets = [0, 0, 24], sizes = [2, 8, 8], strides = [1, 1, 1]} : vector<2x8x32xf32> to vector<2x8x8xf32>
    %566 = vector.extract_strided_slice %502 {offsets = [0, 0, 24], sizes = [2, 8, 8], strides = [1, 1, 1]} : vector<2x8x32xf32> to vector<2x8x8xf32>
    "tpu.trace_start"() <{level = 10 : i32, message = "btd,bsd->bts"}> : () -> ()
    %cst_211 = arith.constant dense<0.000000e+00> : vector<2x8x8xf32>
    %567 = tpu.matmul %565, %566, %cst_211 {dimension_numbers = #tpu.dot_dimension_numbers<[2], [2], [1], [1], [0, 0, 0, 1, 1, 1], [0], [0]>} : vector<2x8x8xf32>, vector<2x8x8xf32>, vector<2x8x8xf32> -> vector<2x8x8xf32>
    "tpu.trace_stop"() : () -> ()
    %568 = arith.addf %567, %15 : vector<2x8x8xf32>
    %cst_212 = arith.constant dense<0xFF800000> : vector<2x8xf32>
    %569 = vector.multi_reduction <maximumf>, %568, %cst_212 [2] : vector<2x8x8xf32> to vector<2x8xf32>
    %570 = vector.shape_cast %569 : vector<2x8xf32> to vector<2x8x1xf32>
    %571 = vector.broadcast %570 : vector<2x8x1xf32> to vector<2x8x8xf32>
    %572 = arith.subf %568, %571 : vector<2x8x8xf32>
    %573 = math.exp %572 : vector<2x8x8xf32>
    %cst_213 = arith.constant dense<0.000000e+00> : vector<2x8xf32>
    %574 = vector.multi_reduction <add>, %573, %cst_213 [2] : vector<2x8x8xf32> to vector<2x8xf32>
    %575 = vector.shape_cast %574 : vector<2x8xf32> to vector<2x8x1xf32>
    %576 = tpu.reciprocal %575 {approx = true} : vector<2x8x1xf32> -> vector<2x8x1xf32>
    %577 = vector.broadcast %576 : vector<2x8x1xf32> to vector<2x8x8xf32>
    %578 = arith.mulf %573, %577 : vector<2x8x8xf32>
    %579 = vector.extract_strided_slice %503 {offsets = [0, 0, 24], sizes = [2, 8, 8], strides = [1, 1, 1]} : vector<2x8x32xf32> to vector<2x8x8xf32>
    "tpu.trace_start"() <{level = 10 : i32, message = "bts,bsd->btd"}> : () -> ()
    %cst_214 = arith.constant dense<0.000000e+00> : vector<2x8x8xf32>
    %580 = tpu.matmul %578, %579, %cst_214 {dimension_numbers = #tpu.dot_dimension_numbers<[2], [1], [1], [2], [0, 0, 0, 1, 1, 2], [0], [0]>} : vector<2x8x8xf32>, vector<2x8x8xf32>, vector<2x8x8xf32> -> vector<2x8x8xf32>
    "tpu.trace_stop"() : () -> ()
    %581 = vector.shape_cast %580 : vector<2x8x8xf32> to vector<16x8xf32>
    %582 = vector.extract_strided_slice %498 {offsets = [24, 0], sizes = [8, 32], strides = [1, 1]} : vector<32x32xf32> to vector<8x32xf32>
    %cst_215 = arith.constant dense<0.000000e+00> : vector<16x32xf32>
    %583 = tpu.matmul %581, %582, %cst_215 {dimension_numbers = #tpu.dot_dimension_numbers<[1], [0], [0], [1], [0, 0, 1, 1], [], []>} : vector<16x8xf32>, vector<8x32xf32>, vector<16x32xf32> -> vector<16x32xf32>
    %584 = arith.addf %564, %583 : vector<16x32xf32>
    %585 = arith.addf %455, %584 : vector<16x32xf32>
    %c1_216 = arith.constant 1 : index
    %c0_217 = arith.constant 0 : index
    %c0_218 = arith.constant 0 : index
    %586 = vector.load %arg13[%c1_216, %c0_217, %c0_218] : memref<2x1x32xf32, #tpu.memory_space<vmem>>, vector<1x1x32xf32>
    %587 = vector.shape_cast %586 : vector<1x1x32xf32> to vector<1x32xf32>
    %588 = vector.broadcast %587 : vector<1x32xf32> to vector<16x32xf32>
    %589 = arith.addf %585, %588 : vector<16x32xf32>
    %590 = vector.extract_strided_slice %325 {offsets = [2, 0], sizes = [1, 32], strides = [1, 1]} : vector<3x32xf32> to vector<1x32xf32>
    %591 = vector.extract_strided_slice %327 {offsets = [2, 0], sizes = [1, 32], strides = [1, 1]} : vector<3x32xf32> to vector<1x32xf32>
    %cst_219 = arith.constant dense<0.000000e+00> : vector<16xf32>
    %592 = vector.multi_reduction <add>, %589, %cst_219 [1] : vector<16x32xf32> to vector<16xf32>
    %593 = vector.shape_cast %592 : vector<16xf32> to vector<16x1xf32>
    %cst_220 = arith.constant 3.200000e+01 : f32
    %594 = vector.broadcast %cst_220 : f32 to vector<16x1xf32>
    %595 = arith.divf %593, %594 : vector<16x1xf32>
    %596 = vector.broadcast %595 : vector<16x1xf32> to vector<16x32xf32>
    %597 = arith.subf %589, %596 : vector<16x32xf32>
    %598 = arith.mulf %597, %597 : vector<16x32xf32>
    %cst_221 = arith.constant dense<0.000000e+00> : vector<16xf32>
    %599 = vector.multi_reduction <add>, %598, %cst_221 [1] : vector<16x32xf32> to vector<16xf32>
    %600 = vector.shape_cast %599 : vector<16xf32> to vector<16x1xf32>
    %cst_222 = arith.constant 0.0322580636 : f32
    %601 = vector.broadcast %cst_222 : f32 to vector<16x1xf32>
    %602 = arith.mulf %600, %601 : vector<16x1xf32>
    %603 = math.sqrt %602 : vector<16x1xf32>
    %cst_223 = arith.constant 9.99999997E-7 : f32
    %604 = vector.broadcast %cst_223 : f32 to vector<16x1xf32>
    %605 = arith.addf %603, %604 : vector<16x1xf32>
    %606 = tpu.reciprocal %605 {approx = true} : vector<16x1xf32> -> vector<16x1xf32>
    %607 = vector.broadcast %595 : vector<16x1xf32> to vector<16x32xf32>
    %608 = arith.subf %589, %607 : vector<16x32xf32>
    %609 = vector.broadcast %590 : vector<1x32xf32> to vector<16x32xf32>
    %610 = arith.mulf %609, %608 : vector<16x32xf32>
    %611 = vector.broadcast %606 : vector<16x1xf32> to vector<16x32xf32>
    %612 = arith.mulf %610, %611 : vector<16x32xf32>
    %613 = vector.broadcast %591 : vector<1x32xf32> to vector<16x32xf32>
    %614 = arith.addf %612, %613 : vector<16x32xf32>
    %c1_224 = arith.constant 1 : index
    %c0_225 = arith.constant 0 : index
    %c0_226 = arith.constant 0 : index
    %615 = vector.load %arg14[%c1_224, %c0_225, %c0_226] : memref<2x32x64xf32, #tpu.memory_space<vmem>>, vector<1x32x64xf32>
    %616 = vector.shape_cast %615 : vector<1x32x64xf32> to vector<32x64xf32>
    %cst_227 = arith.constant dense<0.000000e+00> : vector<16x64xf32>
    %617 = tpu.matmul %614, %616, %cst_227 {dimension_numbers = #tpu.dot_dimension_numbers<[1], [0], [0], [1], [0, 0, 1, 1], [], []>} : vector<16x32xf32>, vector<32x64xf32>, vector<16x64xf32> -> vector<16x64xf32>
    %c1_228 = arith.constant 1 : index
    %c0_229 = arith.constant 0 : index
    %c0_230 = arith.constant 0 : index
    %618 = vector.load %arg15[%c1_228, %c0_229, %c0_230] : memref<2x1x64xf32, #tpu.memory_space<vmem>>, vector<1x1x64xf32>
    %619 = vector.shape_cast %618 : vector<1x1x64xf32> to vector<1x64xf32>
    %620 = vector.broadcast %619 : vector<1x64xf32> to vector<16x64xf32>
    %621 = arith.addf %617, %620 : vector<16x64xf32>
    %cst_231 = arith.constant 0.000000e+00 : f32
    %622 = vector.broadcast %cst_231 : f32 to vector<16x64xf32>
    %623 = arith.maximumf %621, %622 : vector<16x64xf32>
    %c1_232 = arith.constant 1 : index
    %c0_233 = arith.constant 0 : index
    %c0_234 = arith.constant 0 : index
    %624 = vector.load %arg16[%c1_232, %c0_233, %c0_234] : memref<2x64x32xf32, #tpu.memory_space<vmem>>, vector<1x64x32xf32>
    %625 = vector.shape_cast %624 : vector<1x64x32xf32> to vector<64x32xf32>
    %cst_235 = arith.constant dense<0.000000e+00> : vector<16x32xf32>
    %626 = tpu.matmul %623, %625, %cst_235 {dimension_numbers = #tpu.dot_dimension_numbers<[1], [0], [0], [1], [0, 0, 1, 1], [], []>} : vector<16x64xf32>, vector<64x32xf32>, vector<16x32xf32> -> vector<16x32xf32>
    %627 = arith.addf %589, %626 : vector<16x32xf32>
    %c1_236 = arith.constant 1 : index
    %c0_237 = arith.constant 0 : index
    %c0_238 = arith.constant 0 : index
    %628 = vector.load %arg17[%c1_236, %c0_237, %c0_238] : memref<2x1x32xf32, #tpu.memory_space<vmem>>, vector<1x1x32xf32>
    %629 = vector.shape_cast %628 : vector<1x1x32xf32> to vector<1x32xf32>
    %630 = vector.broadcast %629 : vector<1x32xf32> to vector<16x32xf32>
    %631 = arith.addf %627, %630 : vector<16x32xf32>
    %c0_239 = arith.constant 0 : index
    %c0_240 = arith.constant 0 : index
    %632 = vector.load %arg20[%c0_239, %c0_240] : memref<1x32xf32, #tpu.memory_space<vmem>>, vector<1x32xf32>
    %c0_241 = arith.constant 0 : index
    %c0_242 = arith.constant 0 : index
    %633 = vector.load %arg21[%c0_241, %c0_242] : memref<1x32xf32, #tpu.memory_space<vmem>>, vector<1x32xf32>
    %cst_243 = arith.constant dense<0.000000e+00> : vector<16xf32>
    %634 = vector.multi_reduction <add>, %631, %cst_243 [1] : vector<16x32xf32> to vector<16xf32>
    %635 = vector.shape_cast %634 : vector<16xf32> to vector<16x1xf32>
    %cst_244 = arith.constant 3.200000e+01 : f32
    %636 = vector.broadcast %cst_244 : f32 to vector<16x1xf32>
    %637 = arith.divf %635, %636 : vector<16x1xf32>
    %638 = vector.broadcast %637 : vector<16x1xf32> to vector<16x32xf32>
    %639 = arith.subf %631, %638 : vector<16x32xf32>
    %640 = arith.mulf %639, %639 : vector<16x32xf32>
    %cst_245 = arith.constant dense<0.000000e+00> : vector<16xf32>
    %641 = vector.multi_reduction <add>, %640, %cst_245 [1] : vector<16x32xf32> to vector<16xf32>
    %642 = vector.shape_cast %641 : vector<16xf32> to vector<16x1xf32>
    %cst_246 = arith.constant 0.0322580636 : f32
    %643 = vector.broadcast %cst_246 : f32 to vector<16x1xf32>
    %644 = arith.mulf %642, %643 : vector<16x1xf32>
    %645 = math.sqrt %644 : vector<16x1xf32>
    %cst_247 = arith.constant 9.99999997E-7 : f32
    %646 = vector.broadcast %cst_247 : f32 to vector<16x1xf32>
    %647 = arith.addf %645, %646 : vector<16x1xf32>
    %648 = tpu.reciprocal %647 {approx = true} : vector<16x1xf32> -> vector<16x1xf32>
    %649 = vector.broadcast %637 : vector<16x1xf32> to vector<16x32xf32>
    %650 = arith.subf %631, %649 : vector<16x32xf32>
    %651 = vector.broadcast %632 : vector<1x32xf32> to vector<16x32xf32>
    %652 = arith.mulf %651, %650 : vector<16x32xf32>
    %653 = vector.broadcast %648 : vector<16x1xf32> to vector<16x32xf32>
    %654 = arith.mulf %652, %653 : vector<16x32xf32>
    %655 = vector.broadcast %633 : vector<1x32xf32> to vector<16x32xf32>
    %656 = arith.addf %654, %655 : vector<16x32xf32>
    %c0_248 = arith.constant 0 : index
    %c0_249 = arith.constant 0 : index
    %657 = vector.load %arg22[%c0_248, %c0_249] : memref<16x32xf32, #tpu.memory_space<vmem>>, vector<16x32xf32>
    tpu.vector_store %arg22[%c0_248, %c0_249], %656 {strides = array<i32>} : memref<16x32xf32, #tpu.memory_space<vmem>>, vector<16x32xf32>,
    return
  }
}

</mosaic_0001>

<llo_original>
// kernel: decoder_forward.1
$region0: #{decoder_forward.1}
  #allocation0 [shape = 'u32[]', space=smem, size = 0x4, offset = 0x4, fixed_abs, tag = 'smem constant byte address 0x4 - core index']
  #allocation1 [shape = 'u32[144,128]{1,0:T(1,128)}', space=vmem, size = 0x12000, scoped, tag = 'internal scratch']
  %s0 = inlined_call_operand.vmem [shape: f32[16,32], index: 0, kind: input, shape index: {}]
  %s1 = inlined_call_operand.hbm [shape: f32[16,32], index: 1, kind: input, shape index: {}]
  %s2 = inlined_call_operand.vmem [shape: f32[2,8,8], index: 2, kind: input, shape index: {}]
  %s3 = inlined_call_operand.hbm [shape: f32[2,1,8], index: 3, kind: input, shape index: {}]
  %s4 = inlined_call_operand.vmem [shape: f32[2,32,96], index: 4, kind: input, shape index: {}]
  %s5 = inlined_call_operand.hbm [shape: f32[2,1,96], index: 5, kind: input, shape index: {}]
  %s6 = inlined_call_operand.vmem [shape: f32[2,32,32], index: 6, kind: input, shape index: {}]
  %s7 = inlined_call_operand.hbm [shape: f32[2,1,32], index: 7, kind: input, shape index: {}]
  %s8 = inlined_call_operand.vmem [shape: f32[2,32,32], index: 8, kind: input, shape index: {}]
  %s9 = inlined_call_operand.vmem [shape: f32[2,1,32], index: 9, kind: input, shape index: {}]
  %s10 = inlined_call_operand.hbm [shape: f32[2,32,64], index: 10, kind: input, shape index: {}]
  %s11 = inlined_call_operand.vmem [shape: f32[2,1,64], index: 11, kind: input, shape index: {}]
  %s12 = inlined_call_operand.hbm [shape: f32[2,32,32], index: 12, kind: input, shape index: {}]
  %s13 = inlined_call_operand.vmem [shape: f32[2,1,32], index: 13, kind: input, shape index: {}]
  %s14 = inlined_call_operand.hbm [shape: f32[2,32,64], index: 14, kind: input, shape index: {}]
  %s15 = inlined_call_operand.vmem [shape: f32[2,1,64], index: 15, kind: input, shape index: {}]
  %s16 = inlined_call_operand.vmem [shape: f32[2,64,32], index: 16, kind: input, shape index: {}]
  %s17 = inlined_call_operand.vmem [shape: f32[2,1,32], index: 17, kind: input, shape index: {}]
  %s18 = inlined_call_operand.vmem [shape: f32[2,3,32], index: 18, kind: input, shape index: {}]
  %s19 = inlined_call_operand.vmem [shape: f32[2,3,32], index: 19, kind: input, shape index: {}]
  %s20 = inlined_call_operand.vmem [shape: f32[1,32], index: 20, kind: input, shape index: {}]
  %s21 = inlined_call_operand.vmem [shape: f32[1,32], index: 21, kind: input, shape index: {}]
  %s22 = inlined_call_operand.hbm [shape: f32[16,32], index: 22, kind: output, shape index: {}]
  %s23 = sld [smem:[#allocation0]]
  $region126: #{decoder_forward.1} parent=0
    _
  %s25 = ssub.s32 1, %s23
  %s26 = scalar_select 0, %s25, %s23
  $region1: #{decoder_forward.1} parent=0
    #allocation2 [shape = 'u8[8192]{0}', space=vmem, size = 0x2000, scoped, tag = 'input window, operand 1, single buffered']
    #allocation3 [shape = 's32[1]{0}', space=sflag, size = 0x4, scoped, tag = 'scoped memory for decoder_forward.1']
    #allocation4 [shape = 's32[1]{0}', space=sflag, size = 0x4, scoped, tag = 'scoped memory for decoder_forward.1']
    #allocation5 [shape = 'u8[1024]{0}', space=vmem, size = 0x400, scoped, tag = 'input window, operand 3, single buffered']
    #allocation6 [shape = 's32[1]{0}', space=sflag, size = 0x4, scoped, tag = 'scoped memory for decoder_forward.1']
    #allocation7 [shape = 'u8[1024]{0}', space=vmem, size = 0x400, scoped, tag = 'input window, operand 5, single buffered']
    #allocation8 [shape = 'u8[1024]{0}', space=vmem, size = 0x400, scoped, tag = 'input window, operand 7, single buffered']
    #allocation9 [shape = 's32[1]{0}', space=sflag, size = 0x4, scoped, tag = 'scoped memory for decoder_forward.1']
    #allocation10 [shape = 'u8[32768]{0}', space=vmem, size = 0x8000, scoped, tag = 'input window, operand 10, single buffered']
    #allocation11 [shape = 'u8[32768]{0}', space=vmem, size = 0x8000, scoped, tag = 'input window, operand 12, single buffered']
    #allocation12 [shape = 's32[1]{0}', space=sflag, size = 0x4, scoped, tag = 'scoped memory for decoder_forward.1']
    #allocation13 [shape = 'u8[32768]{0}', space=vmem, size = 0x8000, scoped, tag = 'input window, operand 14, single buffered']
    #allocation14 [shape = 'u8[8192]{0}', space=vmem, size = 0x2000, scoped, tag = 'output window, operand 0, single buffered']
    %27 = vsyncpa [#allocation3], 0
    %28 = vsyncpa [#allocation6], 0
    %29 = vsyncpa [#allocation9], 0
    %30 = vsyncpa [#allocation12], 0
    %31 = vsyncpa [#allocation4], 0
    // Predicated region
    $region2: #{decoder_forward.1} parent=1 // pred_check
      _
    $region3: #{decoder_forward.1} parent=1 // pred_check_branch
      %33 = sbr.rel (0) target = $region5
    $region4: #{decoder_forward.1} parent=1 // pred_region
      _
    $region5: #{decoder_forward.1} parent=1 // pred_fallthru
      _
    // Predicated region
    $region6: #{decoder_forward.1} parent=1 // pred_check
      _
    $region7: #{decoder_forward.1} parent=1 // pred_check_branch
      %35 = sbr.rel (0) target = $region9
    $region8: #{decoder_forward.1} parent=1 // pred_region
      %s37 = ssub.s32 256, 256
      %38 = vsyncadd [#allocation3], %s37
      %s39 = sshll.u32 [#allocation2], 4
      %s40 = int_to_ptr.vmem [resolvable:$true] %s39
      %45 = dma.hbm_to_vmem [thread:$0]  %s1, 256, %s40, [#allocation3], 128, 128, 8
    $region9: #{decoder_forward.1} parent=1 // pred_fallthru
      _
    // Predicated region
    $region10: #{decoder_forward.1} parent=1 // pred_check
      _
    $region11: #{decoder_forward.1} parent=1 // pred_check_branch
      %47 = sbr.rel (0) target = $region13
    $region12: #{decoder_forward.1} parent=1 // pred_region
      _
    $region13: #{decoder_forward.1} parent=1 // pred_fallthru
      _
    // Predicated region
    $region14: #{decoder_forward.1} parent=1 // pred_check
      _
    $region15: #{decoder_forward.1} parent=1 // pred_check_branch
      %49 = sbr.rel (0) target = $region17
    $region16: #{decoder_forward.1} parent=1 // pred_region
      %s51 = ssub.s32 32, 32
      %52 = vsyncadd [#allocation6], %s51
      %s53 = sshll.u32 [#allocation5], 4
      %s54 = int_to_ptr.vmem [resolvable:$true] %s53
      %59 = dma.hbm_to_vmem [thread:$0]  %s3, 32, %s54, [#allocation6], 16, 16, 1
    $region17: #{decoder_forward.1} parent=1 // pred_fallthru
      _
    // Predicated region
    $region18: #{decoder_forward.1} parent=1 // pred_check
      _
    $region19: #{decoder_forward.1} parent=1 // pred_check_branch
      %61 = sbr.rel (0) target = $region21
    $region20: #{decoder_forward.1} parent=1 // pred_region
      _
    $region21: #{decoder_forward.1} parent=1 // pred_fallthru
      _
    // Predicated region
    $region22: #{decoder_forward.1} parent=1 // pred_check
      _
    $region23: #{decoder_forward.1} parent=1 // pred_check_branch
      %63 = sbr.rel (0) target = $region25
    $region24: #{decoder_forward.1} parent=1 // pred_region
      %s65 = ssub.s32 32, 32
      %66 = vsyncadd [#allocation6], %s65
      %s67 = sshll.u32 [#allocation7], 4
      %s68 = int_to_ptr.vmem [resolvable:$true] %s67
      %73 = dma.hbm_to_vmem [thread:$0]  %s5, 32, %s68, [#allocation6], 16, 16, 1
    $region25: #{decoder_forward.1} parent=1 // pred_fallthru
      _
    // Predicated region
    $region26: #{decoder_forward.1} parent=1 // pred_check
      _
    $region27: #{decoder_forward.1} parent=1 // pred_check_branch
      %75 = sbr.rel (0) target = $region29
    $region28: #{decoder_forward.1} parent=1 // pred_region
      _
    $region29: #{decoder_forward.1} parent=1 // pred_fallthru
      _
    // Predicated region
    $region30: #{decoder_forward.1} parent=1 // pred_check
      _
    $region31: #{decoder_forward.1} parent=1 // pred_check_branch
      %77 = sbr.rel (0) target = $region33
    $region32: #{decoder_forward.1} parent=1 // pred_region
      %s79 = ssub.s32 32, 32
      %80 = vsyncadd [#allocation9], %s79
      %s81 = sshll.u32 [#allocation8], 4
      %s82 = int_to_ptr.vmem [resolvable:$true] %s81
      %87 = dma.hbm_to_vmem [thread:$0]  %s7, 32, %s82, [#allocation9], 16, 16, 1
    $region33: #{decoder_forward.1} parent=1 // pred_fallthru
      _
    // Predicated region
    $region34: #{decoder_forward.1} parent=1 // pred_check
      _
    $region35: #{decoder_forward.1} parent=1 // pred_check_branch
      %89 = sbr.rel (0) target = $region37
    $region36: #{decoder_forward.1} parent=1 // pred_region
      _
    $region37: #{decoder_forward.1} parent=1 // pred_fallthru
      _
    // Predicated region
    $region38: #{decoder_forward.1} parent=1 // pred_check
      _
    $region39: #{decoder_forward.1} parent=1 // pred_check_branch
      %91 = sbr.rel (0) target = $region41
    $region40: #{decoder_forward.1} parent=1 // pred_region
      _
    $region41: #{decoder_forward.1} parent=1 // pred_fallthru
      _
    // Predicated region
    $region42: #{decoder_forward.1} parent=1 // pred_check
      _
    $region43: #{decoder_forward.1} parent=1 // pred_check_branch
      %93 = sbr.rel (0) target = $region45
    $region44: #{decoder_forward.1} parent=1 // pred_region
      %s95 = ssub.s32 1024, 1024
      %96 = vsyncadd [#allocation9], %s95
      %s97 = sshll.u32 [#allocation10], 4
      %s98 = int_to_ptr.vmem [resolvable:$true] %s97
      %103 = dma.hbm_to_vmem [thread:$0]  %s10, 1024, %s98, [#allocation9], 128, 128, 8
    $region45: #{decoder_forward.1} parent=1 // pred_fallthru
      _
    // Predicated region
    $region46: #{decoder_forward.1} parent=1 // pred_check
      _
    $region47: #{decoder_forward.1} parent=1 // pred_check_branch
      %105 = sbr.rel (0) target = $region49
    $region48: #{decoder_forward.1} parent=1 // pred_region
      _
    $region49: #{decoder_forward.1} parent=1 // pred_fallthru
      _
    // Predicated region
    $region50: #{decoder_forward.1} parent=1 // pred_check
      _
    $region51: #{decoder_forward.1} parent=1 // pred_check_branch
      %107 = sbr.rel (0) target = $region53
    $region52: #{decoder_forward.1} parent=1 // pred_region
      %s109 = ssub.s32 1024, 1024
      %110 = vsyncadd [#allocation12], %s109
      %s111 = sshll.u32 [#allocation11], 4
      %s112 = int_to_ptr.vmem [resolvable:$true] %s111
      %117 = dma.hbm_to_vmem [thread:$0]  %s12, 1024, %s112, [#allocation12], 128, 128, 8
    $region53: #{decoder_forward.1} parent=1 // pred_fallthru
      _
    // Predicated region
    $region54: #{decoder_forward.1} parent=1 // pred_check
      _
    $region55: #{decoder_forward.1} parent=1 // pred_check_branch
      %119 = sbr.rel (0) target = $region57
    $region56: #{decoder_forward.1} parent=1 // pred_region
      _
    $region57: #{decoder_forward.1} parent=1 // pred_fallthru
      _
    // Predicated region
    $region58: #{decoder_forward.1} parent=1 // pred_check
      _
    $region59: #{decoder_forward.1} parent=1 // pred_check_branch
      %121 = sbr.rel (0) target = $region61
    $region60: #{decoder_forward.1} parent=1 // pred_region
      %s123 = ssub.s32 1024, 1024
      %124 = vsyncadd [#allocation12], %s123
      %s125 = sshll.u32 [#allocation13], 4
      %s126 = int_to_ptr.vmem [resolvable:$true] %s125
      %131 = dma.hbm_to_vmem [thread:$0]  %s14, 1024, %s126, [#allocation12], 128, 128, 8
    $region61: #{decoder_forward.1} parent=1 // pred_fallthru
      _
    // Predicated region
    $region62: #{decoder_forward.1} parent=1 // pred_check
      _
    $region63: #{decoder_forward.1} parent=1 // pred_check_branch
      %133 = sbr.rel (0) target = $region65
    $region64: #{decoder_forward.1} parent=1 // pred_region
      _
    $region65: #{decoder_forward.1} parent=1 // pred_fallthru
      _
    // Predicated region
    $region66: #{decoder_forward.1} parent=1 // pred_check
      _
    $region67: #{decoder_forward.1} parent=1 // pred_check_branch
      %135 = sbr.rel (0) target = $region69
    $region68: #{decoder_forward.1} parent=1 // pred_region
      _
    $region69: #{decoder_forward.1} parent=1 // pred_fallthru
      _
    // Predicated region
    $region70: #{decoder_forward.1} parent=1 // pred_check
      _
    $region71: #{decoder_forward.1} parent=1 // pred_check_branch
      %137 = sbr.rel (0) target = $region73
    $region72: #{decoder_forward.1} parent=1 // pred_region
      _
    $region73: #{decoder_forward.1} parent=1 // pred_fallthru
      _
    // Predicated region
    $region74: #{decoder_forward.1} parent=1 // pred_check
      _
    $region75: #{decoder_forward.1} parent=1 // pred_check_branch
      %139 = sbr.rel (0) target = $region77
    $region76: #{decoder_forward.1} parent=1 // pred_region
      _
    $region77: #{decoder_forward.1} parent=1 // pred_fallthru
      _
    // Predicated region
    $region78: #{decoder_forward.1} parent=1 // pred_check
      _
    $region79: #{decoder_forward.1} parent=1 // pred_check_branch
      %141 = sbr.rel (0) target = $region81
    $region80: #{decoder_forward.1} parent=1 // pred_region
      _
    $region81: #{decoder_forward.1} parent=1 // pred_fallthru
      _
    // Predicated region
    $region82: #{decoder_forward.1} parent=1 // pred_check
      _
    $region83: #{decoder_forward.1} parent=1 // pred_check_branch
      %143 = sbr.rel (0) target = $region85
    $region84: #{decoder_forward.1} parent=1 // pred_region
      _
    $region85: #{decoder_forward.1} parent=1 // pred_fallthru
      _
    // Predicated region
    $region86: #{decoder_forward.1} parent=1 // pred_check
      _
    $region87: #{decoder_forward.1} parent=1 // pred_check_branch
      %145 = sbr.rel (0) target = $region89
    $region88: #{decoder_forward.1} parent=1 // pred_region
      _
    $region89: #{decoder_forward.1} parent=1 // pred_fallthru
      _
    // Predicated region
    $region90: #{decoder_forward.1} parent=1 // pred_check
      _
    $region91: #{decoder_forward.1} parent=1 // pred_check_branch
      %147 = sbr.rel (0) target = $region93
    $region92: #{decoder_forward.1} parent=1 // pred_region
      %148 = dma.done [#allocation3], 256
    $region93: #{decoder_forward.1} parent=1 // pred_fallthru
      _
    // Predicated region
    $region94: #{decoder_forward.1} parent=1 // pred_check
      _
    $region95: #{decoder_forward.1} parent=1 // pred_check_branch
      %150 = sbr.rel (0) target = $region97
    $region96: #{decoder_forward.1} parent=1 // pred_region
      %151 = dma.done [#allocation6], 32
    $region97: #{decoder_forward.1} parent=1 // pred_fallthru
      _
    // Predicated region
    $region98: #{decoder_forward.1} parent=1 // pred_check
      _
    $region99: #{decoder_forward.1} parent=1 // pred_check_branch
      %153 = sbr.rel (0) target = $region101
    $region100: #{decoder_forward.1} parent=1 // pred_region
      %154 = dma.done [#allocation6], 32
    $region101: #{decoder_forward.1} parent=1 // pred_fallthru
      _
    // Predicated region
    $region102: #{decoder_forward.1} parent=1 // pred_check
      _
    $region103: #{decoder_forward.1} parent=1 // pred_check_branch
      %156 = sbr.rel (0) target = $region105
    $region104: #{decoder_forward.1} parent=1 // pred_region
      %157 = dma.done [#allocation9], 32
    $region105: #{decoder_forward.1} parent=1 // pred_fallthru
      _
    // Predicated region
    $region106: #{decoder_forward.1} parent=1 // pred_check
      _
    $region107: #{decoder_forward.1} parent=1 // pred_check_branch
      %159 = sbr.rel (0) target = $region109
    $region108: #{decoder_forward.1} parent=1 // pred_region
      %160 = dma.done [#allocation9], 1024
    $region109: #{decoder_forward.1} parent=1 // pred_fallthru
      _
    // Predicated region
    $region110: #{decoder_forward.1} parent=1 // pred_check
      _
    $region111: #{decoder_forward.1} parent=1 // pred_check_branch
      %162 = sbr.rel (0) target = $region113
    $region112: #{decoder_forward.1} parent=1 // pred_region
      %163 = dma.done [#allocation12], 1024
    $region113: #{decoder_forward.1} parent=1 // pred_fallthru
      _
    // Predicated region
    $region114: #{decoder_forward.1} parent=1 // pred_check
      _
    $region115: #{decoder_forward.1} parent=1 // pred_check_branch
      %165 = sbr.rel (0) target = $region117
    $region116: #{decoder_forward.1} parent=1 // pred_region
      %166 = dma.done [#allocation12], 1024
    $region117: #{decoder_forward.1} parent=1 // pred_fallthru
      _
    %v167 = vld [vmem:[%s0] sm:$0xff]
    %v168 = vld [vmem:[%s0 + $0x8] sm:$0xff]
    %v169 = vld [vmem:[#allocation2] sm:$0xff]
    %v170 = vld [vmem:[#allocation2 + $0x8] sm:$0xff]
    %v171 = vld [vmem:[%s2] sm:$0xff]
    %v172 = vld [vmem:[%s2 + $0x8] sm:$0xff]
    %vm173 = vcmp.gt.f32.partialorder %v171, 0.0
    %vm174 = vcmp.gt.f32.partialorder %v172, 0.0
    %v175 = vsel %vm173, 0.0, -1e+09
    %v176 = vsel %vm174, 0.0, -1e+09
    %v177 = vld [vmem:[#allocation5] sm:$0x1]
    %v178 = vld [vmem:[#allocation5 + $0x1] sm:$0x1]
    %v181 = vlaneseq
    %v182 = vshrl.u32 %v181, 7
    %v183 = vsub.s32 0, %v182
    %v184 = vrot.slane %v177, %v183
    %v185 = vlaneseq
    %v186 = vshrl.u32 %v185, 7
    %v187 = vsub.s32 0, %v186
    %v188 = vrot.slane %v178, %v187
    %vm191 = vcmp.gt.f32.partialorder %v184, 0.0
    %vm192 = vcmp.gt.f32.partialorder %v188, 0.0
    %v193 = vsel %vm191, 0.0, -1e+09
    %v194 = vsel %vm192, 0.0, -1e+09
    %v195 = vld [vmem:[%s18] sm:$0x7]
    %v196 = vld [vmem:[%s19] sm:$0x7]
    %vm197 = vcmask 261120
    %v198 = vsel %vm197, %v167, 0.0
    %199 = vadd.xlane.f32.xlu0 %v198
    %v200 = vpop.xlane.xlu0 %199
    %v201 = vsel %vm197, %v168, 0.0
    %202 = vadd.xlane.f32.xlu0 %v201
    %v203 = vpop.xlane.xlu0 %202
    %v204 = vrcp.pop 32.0
    %v205 = vmul.f32 %v200, %v204
    %v206 = vmul.f32 %v203, %v204
    %v207 = vsub.f32 %v167, %v205
    %v208 = vsub.f32 %v168, %v206
    %v209 = vmul.f32 %v207, %v207
    %v210 = vmul.f32 %v208, %v208
    %v211 = vsel %vm197, %v209, 0.0
    %212 = vadd.xlane.f32.xlu0 %v211
    %v213 = vpop.xlane.xlu0 %212
    %v214 = vsel %vm197, %v210, 0.0
    %215 = vadd.xlane.f32.xlu0 %v214
    %v216 = vpop.xlane.xlu0 %215
    %v217 = vmul.f32 %v213, 0.032258064
    %v218 = vmul.f32 %v216, 0.032258064
    %v219 = vrsqrt.pop %v217
    %v220 = vmul.f32 %v217, %v219
    %vm221 = vcmp.eq.f32.partialorder %v217, inf
    %v222 = vsel %vm221, %v217, %v220
    %vm223 = vcmp.eq.f32.partialorder %v217, 0.0
    %v224 = vand.u32 %v217, 2147483648
    %v225 = vsel %vm223, %v224, %v222
    %v226 = vrsqrt.pop %v218
    %v227 = vmul.f32 %v218, %v226
    %vm228 = vcmp.eq.f32.partialorder %v218, inf
    %v229 = vsel %vm228, %v218, %v227
    %vm230 = vcmp.eq.f32.partialorder %v218, 0.0
    %v231 = vand.u32 %v218, 2147483648
    %v232 = vsel %vm230, %v231, %v229
    %v233 = vadd.f32 %v225, 1e-06
    %v234 = vadd.f32 %v232, 1e-06
    %v235 = vrcp.pop %v233
    %v236 = vrcp.pop %v234
    %v237 = vlaneseq
    %v238 = vshrl.u32 %v237, 7
    %v239 = vsub.s32 0, %v238
    %v240 = vrot.slane %v195, %v239
    %v241 = vmul.f32 %v240, %v207
    %v242 = vmul.f32 %v240, %v208
    %v243 = vmul.f32 %v241, %v235
    %v244 = vmul.f32 %v242, %v236
    %v245 = vlaneseq
    %v246 = vshrl.u32 %v245, 7
    %v247 = vsub.s32 0, %v246
    %v248 = vrot.slane %v196, %v247
    %v249 = vadd.f32 %v243, %v248
    %v250 = vadd.f32 %v244, %v248
    %v251 = vld [vmem:[%s4] sm:$0xff]
    %v252 = vld [vmem:[%s4 + $0x8] sm:$0xff]
    %v253 = vld [vmem:[%s4 + $0x10] sm:$0xff]
    %v254 = vld [vmem:[%s4 + $0x18] sm:$0xff]
    %v255 = vld [vmem:[#allocation7] sm:$0x1]
    %v257 = vlaneseq
    %v258 = vshrl.u32 %v257, 7
    %v259 = vsub.s32 0, %v258
    %v260 = vrot.slane %v255, %v259
    %v263 = vsel %vm197, %v249, 0
    %v266 = vsel %vm197, %v250, 0
    %268 = vmatprep.subr.mxu0 0.0
    %269 = vmatpush1.msra.mxu0 0.0
    %270 = vmatprep.subr.mxu0 0.0
    %271 = vmatpush1.msra.mxu0 0.0
    %272 = vmatprep.subr.mxu0 0.0
    %273 = vmatpush1.msra.mxu0 0.0
    %274 = vmatprep.subr.mxu0 0.0
    %275 = vmatpush1.msra.mxu0 0.0
    %276 = vmatprep.subr.mxu0 0.0
    %277 = vmatpush1.msra.mxu0 0.0
    %278 = vmatprep.subr.mxu0 0.0
    %279 = vmatpush1.msra.mxu0 0.0
    %280 = vmatprep.subr.mxu0 0.0
    %281 = vmatpush1.msra.mxu0 0.0
    %282 = vmatprep.subr.mxu0 0.0
    %283 = vmatpush1.msra.mxu0 0.0
    %284 = vmatprep.subr.mxu0 0.0
    %285 = vmatpush1.msra.mxu0 0.0
    %286 = vmatprep.subr.mxu0 0.0
    %287 = vmatpush1.msra.mxu0 0.0
    %288 = vmatprep.subr.mxu0 0.0
    %289 = vmatpush1.msra.mxu0 0.0
    %290 = vmatprep.subr.mxu0 0.0
    %291 = vmatpush1.msra.mxu0 0.0
    %292 = vmatprep.subr.mxu0 0.0
    %293 = vmatpush1.msra.mxu0 %v254
    %294 = vmatprep.subr.mxu0 0.0
    %295 = vmatpush1.msra.mxu0 %v253
    %296 = vmatprep.subr.mxu0 0.0
    %297 = vmatpush1.msra.mxu0 %v252
    %298 = vmatprep.subr.mxu0 0.0
    %299 = vmatpush1.msra.mxu0 %v251
    %300 = vmatprep.subr.mxu0 0.0
    %301 = vmatpush2.msra.mxu0 0.0
    %302 = vmatprep.subr.mxu0 0.0
    %303 = vmatpush2.msra.mxu0 0.0
    %304 = vmatprep.subr.mxu0 0.0
    %305 = vmatpush2.msra.mxu0 0.0
    %306 = vmatprep.subr.mxu0 0.0
    %307 = vmatpush2.msra.mxu0 0.0
    %308 = vmatprep.subr.mxu0 0.0
    %309 = vmatpush2.msra.mxu0 0.0
    %310 = vmatprep.subr.mxu0 0.0
    %311 = vmatpush2.msra.mxu0 0.0
    %312 = vmatprep.subr.mxu0 0.0
    %313 = vmatpush2.msra.mxu0 0.0
    %314 = vmatprep.subr.mxu0 0.0
    %315 = vmatpush2.msra.mxu0 0.0
    %316 = vmatprep.subr.mxu0 0.0
    %317 = vmatpush2.msra.mxu0 0.0
    %318 = vmatprep.subr.mxu0 0.0
    %319 = vmatpush2.msra.mxu0 0.0
    %320 = vmatprep.subr.mxu0 0.0
    %321 = vmatpush2.msra.mxu0 0.0
    %322 = vmatprep.subr.mxu0 0.0
    %323 = vmatpush2.msra.mxu0 0.0
    %324 = vmatprep.subr.mxu0 0.0
    %325 = vmatpush2.msra.mxu0 0.0
    %326 = vmatprep.subr.mxu0 0.0
    %327 = vmatpush2.msra.mxu0 0.0
    %328 = vmatprep.subr.mxu0 0.0
    %329 = vmatpush2.msra.mxu0 0.0
    %330 = vmatprep.subr.mxu0 0.0
    %331 = vmatpush2.msra.mxu0 0.0
    %332 = vmatprep.mubr.f32.mxu0 0.0
    %333 = vmatmul.mubr.f32.gmra.mxu0 %v263
    %v334 = vpop.f32.mrf.mxu0
    %v335 = vadd.f32 %v260, %v334
    %v336 = vpop.f32.mrf.mxu0
    %337 = vmatprep.mubr.f32.mxu0 0.0
    %338 = vmatmul.mubr.f32.gmra.mxu0 %v266
    %v339 = vpop.f32.mrf.mxu0
    %v340 = vadd.f32 %v260, %v339
    %v341 = vpop.f32.mrf.mxu0
    %342 = vdwg.mxu0
    %v343 = vld [vmem:[%s6] sm:$0xff]
    %v344 = vld [vmem:[%s6 + $0x8] sm:$0xff]
    %v345 = vld [vmem:[%s6 + $0x10] sm:$0xff]
    %v346 = vld [vmem:[%s6 + $0x18] sm:$0xff]
    %v347 = vmul.f32 %v335, 0.35355338
    %v348 = vmul.f32 %v340, 0.35355338
    %350 = vrot.lane.b32.xlu0 %v335, 96
    %v351 = vpop.permute.xlu0 %350
    %vm352 = vcmask 64512
    %v354 = vsel %vm352, %v347, 0
    %v356 = vsel %vm352, %v351, 0
    %358 = vmatprep.subr.mxu0 0.0
    %359 = vmatpush1.xpose.msra.mxu0 0.0
    %360 = vmatprep.subr.mxu0 0.0
    %361 = vmatpush1.xpose.msra.mxu0 0.0
    %362 = vmatprep.subr.mxu0 0.0
    %363 = vmatpush1.xpose.msra.mxu0 0.0
    %364 = vmatprep.subr.mxu0 0.0
    %365 = vmatpush1.xpose.msra.mxu0 0.0
    %366 = vmatprep.subr.mxu0 0.0
    %367 = vmatpush1.xpose.msra.mxu0 0.0
    %368 = vmatprep.subr.mxu0 0.0
    %369 = vmatpush1.xpose.msra.mxu0 0.0
    %370 = vmatprep.subr.mxu0 0.0
    %371 = vmatpush1.xpose.msra.mxu0 0.0
    %372 = vmatprep.subr.mxu0 0.0
    %373 = vmatpush1.xpose.msra.mxu0 0.0
    %374 = vmatprep.subr.mxu0 0.0
    %375 = vmatpush1.xpose.msra.mxu0 0.0
    %376 = vmatprep.subr.mxu0 0.0
    %377 = vmatpush1.xpose.msra.mxu0 0.0
    %378 = vmatprep.subr.mxu0 0.0
    %379 = vmatpush1.xpose.msra.mxu0 0.0
    %380 = vmatprep.subr.mxu0 0.0
    %381 = vmatpush1.xpose.msra.mxu0 0.0
    %382 = vmatprep.subr.mxu0 0.0
    %383 = vmatpush1.xpose.msra.mxu0 0.0
    %384 = vmatprep.subr.mxu0 0.0
    %385 = vmatpush1.xpose.msra.mxu0 0.0
    %386 = vmatprep.subr.mxu0 0.0
    %387 = vmatpush1.xpose.msra.mxu0 0.0
    %388 = vmatprep.subr.mxu0 0.0
    %389 = vmatpush1.xpose.msra.mxu0 %v356
    %390 = vmatprep.subr.mxu0 0.0
    %391 = vmatpush2.xpose.msra.mxu0 0.0
    %392 = vmatprep.subr.mxu0 0.0
    %393 = vmatpush2.xpose.msra.mxu0 0.0
    %394 = vmatprep.subr.mxu0 0.0
    %395 = vmatpush2.xpose.msra.mxu0 0.0
    %396 = vmatprep.subr.mxu0 0.0
    %397 = vmatpush2.xpose.msra.mxu0 0.0
    %398 = vmatprep.subr.mxu0 0.0
    %399 = vmatpush2.xpose.msra.mxu0 0.0
    %400 = vmatprep.subr.mxu0 0.0
    %401 = vmatpush2.xpose.msra.mxu0 0.0
    %402 = vmatprep.subr.mxu0 0.0
    %403 = vmatpush2.xpose.msra.mxu0 0.0
    %404 = vmatprep.subr.mxu0 0.0
    %405 = vmatpush2.xpose.msra.mxu0 0.0
    %406 = vmatprep.subr.mxu0 0.0
    %407 = vmatpush2.xpose.msra.mxu0 0.0
    %408 = vmatprep.subr.mxu0 0.0
    %409 = vmatpush2.xpose.msra.mxu0 0.0
    %410 = vmatprep.subr.mxu0 0.0
    %411 = vmatpush2.xpose.msra.mxu0 0.0
    %412 = vmatprep.subr.mxu0 0.0
    %413 = vmatpush2.xpose.msra.mxu0 0.0
    %414 = vmatprep.subr.mxu0 0.0
    %415 = vmatpush2.xpose.msra.mxu0 0.0
    %416 = vmatprep.subr.mxu0 0.0
    %417 = vmatpush2.xpose.msra.mxu0 0.0
    %418 = vmatprep.subr.mxu0 0.0
    %419 = vmatpush2.xpose.msra.mxu0 0.0
    %420 = vmatprep.subr.mxu0 0.0
    %421 = vmatpush2.xpose.msra.mxu0 0.0
    %422 = vmatprep.mubr.f32.mxu0 0.0
    %423 = vmatmul.mubr.f32.gmra.mxu0 %v354
    %v424 = vpop.f32.mrf.mxu0
    %v425 = vadd.f32 %v175, %v424
    %v426 = vpop.f32.mrf.mxu0
    %427 = vdwg.mxu0
    %429 = vrot.lane.b32.xlu0 %v340, 96
    %v430 = vpop.permute.xlu0 %429
    %v432 = vsel %vm352, %v348, 0
    %v434 = vsel %vm352, %v430, 0
    %436 = vmatprep.subr.mxu0 0.0
    %437 = vmatpush1.xpose.msra.mxu0 0.0
    %438 = vmatprep.subr.mxu0 0.0
    %439 = vmatpush1.xpose.msra.mxu0 0.0
    %440 = vmatprep.subr.mxu0 0.0
    %441 = vmatpush1.xpose.msra.mxu0 0.0
    %442 = vmatprep.subr.mxu0 0.0
    %443 = vmatpush1.xpose.msra.mxu0 0.0
    %444 = vmatprep.subr.mxu0 0.0
    %445 = vmatpush1.xpose.msra.mxu0 0.0
    %446 = vmatprep.subr.mxu0 0.0
    %447 = vmatpush1.xpose.msra.mxu0 0.0
    %448 = vmatprep.subr.mxu0 0.0
    %449 = vmatpush1.xpose.msra.mxu0 0.0
    %450 = vmatprep.subr.mxu0 0.0
    %451 = vmatpush1.xpose.msra.mxu0 0.0
    %452 = vmatprep.subr.mxu0 0.0
    %453 = vmatpush1.xpose.msra.mxu0 0.0
    %454 = vmatprep.subr.mxu0 0.0
    %455 = vmatpush1.xpose.msra.mxu0 0.0
    %456 = vmatprep.subr.mxu0 0.0
    %457 = vmatpush1.xpose.msra.mxu0 0.0
    %458 = vmatprep.subr.mxu0 0.0
    %459 = vmatpush1.xpose.msra.mxu0 0.0
    %460 = vmatprep.subr.mxu0 0.0
    %461 = vmatpush1.xpose.msra.mxu0 0.0
    %462 = vmatprep.subr.mxu0 0.0
    %463 = vmatpush1.xpose.msra.mxu0 0.0
    %464 = vmatprep.subr.mxu0 0.0
    %465 = vmatpush1.xpose.msra.mxu0 0.0
    %466 = vmatprep.subr.mxu0 0.0
    %467 = vmatpush1.xpose.msra.mxu0 %v434
    %468 = vmatprep.subr.mxu0 0.0
    %469 = vmatpush2.xpose.msra.mxu0 0.0
    %470 = vmatprep.subr.mxu0 0.0
    %471 = vmatpush2.xpose.msra.mxu0 0.0
    %472 = vmatprep.subr.mxu0 0.0
    %473 = vmatpush2.xpose.msra.mxu0 0.0
    %474 = vmatprep.subr.mxu0 0.0
    %475 = vmatpush2.xpose.msra.mxu0 0.0
    %476 = vmatprep.subr.mxu0 0.0
    %477 = vmatpush2.xpose.msra.mxu0 0.0
    %478 = vmatprep.subr.mxu0 0.0
    %479 = vmatpush2.xpose.msra.mxu0 0.0
    %480 = vmatprep.subr.mxu0 0.0
    %481 = vmatpush2.xpose.msra.mxu0 0.0
    %482 = vmatprep.subr.mxu0 0.0
    %483 = vmatpush2.xpose.msra.mxu0 0.0
    %484 = vmatprep.subr.mxu0 0.0
    %485 = vmatpush2.xpose.msra.mxu0 0.0
    %486 = vmatprep.subr.mxu0 0.0
    %487 = vmatpush2.xpose.msra.mxu0 0.0
    %488 = vmatprep.subr.mxu0 0.0
    %489 = vmatpush2.xpose.msra.mxu0 0.0
    %490 = vmatprep.subr.mxu0 0.0
    %491 = vmatpush2.xpose.msra.mxu0 0.0
    %492 = vmatprep.subr.mxu0 0.0
    %493 = vmatpush2.xpose.msra.mxu0 0.0
    %494 = vmatprep.subr.mxu0 0.0
    %495 = vmatpush2.xpose.msra.mxu0 0.0
    %496 = vmatprep.subr.mxu0 0.0
    %497 = vmatpush2.xpose.msra.mxu0 0.0
    %498 = vmatprep.subr.mxu0 0.0
    %499 = vmatpush2.xpose.msra.mxu0 0.0
    %500 = vmatprep.mubr.f32.mxu0 0.0
    %501 = vmatmul.mubr.f32.gmra.mxu0 %v432
    %v502 = vpop.f32.mrf.mxu0
    %v503 = vadd.f32 %v176, %v502
    %v504 = vpop.f32.mrf.mxu0
    %505 = vdwg.mxu0
    %v506 = vsel %vm352, %v425, -inf
    %507 = vmax.xlane.f32.xlu0 %v506
    %v508 = vpop.xlane.xlu0 %507
    %v509 = vsel %vm352, %v503, -inf
    %510 = vmax.xlane.f32.xlu0 %v509
    %v511 = vpop.xlane.xlu0 %510
    %v512 = vsub.f32 %v425, %v508
    %v513 = vsub.f32 %v503, %v511
    %v514 = vmul.f32 %v512, 1.442695
    %v515 = vpow.pop %v514
    %v516 = vmul.f32 %v513, 1.442695
    %v517 = vpow.pop %v516
    %v518 = vsel %vm352, %v515, 0.0
    %519 = vadd.xlane.f32.xlu0 %v518
    %v520 = vpop.xlane.xlu0 %519
    %v521 = vsel %vm352, %v517, 0.0
    %522 = vadd.xlane.f32.xlu0 %v521
    %v523 = vpop.xlane.xlu0 %522
    %v524 = vrcp.pop %v520
    %v525 = vrcp.pop %v523
    %v526 = vmul.f32 %v515, %v524
    %v527 = vmul.f32 %v517, %v525
    %528 = vrot.lane.b32.xlu0 %v335, 64
    %v529 = vpop.permute.xlu0 %528
    %v532 = vsel %vm352, %v526, 0
    %534 = vmatprep.subr.mxu0 0.0
    %535 = vmatpush1.msra.mxu0 0.0
    %536 = vmatprep.subr.mxu0 0.0
    %537 = vmatpush1.msra.mxu0 0.0
    %538 = vmatprep.subr.mxu0 0.0
    %539 = vmatpush1.msra.mxu0 0.0
    %540 = vmatprep.subr.mxu0 0.0
    %541 = vmatpush1.msra.mxu0 0.0
    %542 = vmatprep.subr.mxu0 0.0
    %543 = vmatpush1.msra.mxu0 0.0
    %544 = vmatprep.subr.mxu0 0.0
    %545 = vmatpush1.msra.mxu0 0.0
    %546 = vmatprep.subr.mxu0 0.0
    %547 = vmatpush1.msra.mxu0 0.0
    %548 = vmatprep.subr.mxu0 0.0
    %549 = vmatpush1.msra.mxu0 0.0
    %550 = vmatprep.subr.mxu0 0.0
    %551 = vmatpush1.msra.mxu0 0.0
    %552 = vmatprep.subr.mxu0 0.0
    %553 = vmatpush1.msra.mxu0 0.0
    %554 = vmatprep.subr.mxu0 0.0
    %555 = vmatpush1.msra.mxu0 0.0
    %556 = vmatprep.subr.mxu0 0.0
    %557 = vmatpush1.msra.mxu0 0.0
    %558 = vmatprep.subr.mxu0 0.0
    %559 = vmatpush1.msra.mxu0 0.0
    %560 = vmatprep.subr.mxu0 0.0
    %561 = vmatpush1.msra.mxu0 0.0
    %562 = vmatprep.subr.mxu0 0.0
    %563 = vmatpush1.msra.mxu0 0.0
    %564 = vmatprep.subr.mxu0 0.0
    %565 = vmatpush1.msra.mxu0 %v529
    %566 = vmatprep.subr.mxu0 0.0
    %567 = vmatpush2.msra.mxu0 0.0
    %568 = vmatprep.subr.mxu0 0.0
    %569 = vmatpush2.msra.mxu0 0.0
    %570 = vmatprep.subr.mxu0 0.0
    %571 = vmatpush2.msra.mxu0 0.0
    %572 = vmatprep.subr.mxu0 0.0
    %573 = vmatpush2.msra.mxu0 0.0
    %574 = vmatprep.subr.mxu0 0.0
    %575 = vmatpush2.msra.mxu0 0.0
    %576 = vmatprep.subr.mxu0 0.0
    %577 = vmatpush2.msra.mxu0 0.0
    %578 = vmatprep.subr.mxu0 0.0
    %579 = vmatpush2.msra.mxu0 0.0
    %580 = vmatprep.subr.mxu0 0.0
    %581 = vmatpush2.msra.mxu0 0.0
    %582 = vmatprep.subr.mxu0 0.0
    %583 = vmatpush2.msra.mxu0 0.0
    %584 = vmatprep.subr.mxu0 0.0
    %585 = vmatpush2.msra.mxu0 0.0
    %586 = vmatprep.subr.mxu0 0.0
    %587 = vmatpush2.msra.mxu0 0.0
    %588 = vmatprep.subr.mxu0 0.0
    %589 = vmatpush2.msra.mxu0 0.0
    %590 = vmatprep.subr.mxu0 0.0
    %591 = vmatpush2.msra.mxu0 0.0
    %592 = vmatprep.subr.mxu0 0.0
    %593 = vmatpush2.msra.mxu0 0.0
    %594 = vmatprep.subr.mxu0 0.0
    %595 = vmatpush2.msra.mxu0 0.0
    %596 = vmatprep.subr.mxu0 0.0
    %597 = vmatpush2.msra.mxu0 0.0
    %598 = vmatprep.mubr.f32.mxu0 0.0
    %599 = vmatmul.mubr.f32.gmra.mxu0 %v532
    %v600 = vpop.f32.mrf.mxu0
    %v601 = vadd.f32 0.0, %v600
    %v602 = vpop.f32.mrf.mxu0
    %603 = vdwg.mxu0
    %604 = vrot.lane.b32.xlu0 %v340, 64
    %v605 = vpop.permute.xlu0 %604
    %v608 = vsel %vm352, %v527, 0
    %610 = vmatprep.subr.mxu0 0.0
    %611 = vmatpush1.msra.mxu0 0.0
    %612 = vmatprep.subr.mxu0 0.0
    %613 = vmatpush1.msra.mxu0 0.0
    %614 = vmatprep.subr.mxu0 0.0
    %615 = vmatpush1.msra.mxu0 0.0
    %616 = vmatprep.subr.mxu0 0.0
    %617 = vmatpush1.msra.mxu0 0.0
    %618 = vmatprep.subr.mxu0 0.0
    %619 = vmatpush1.msra.mxu0 0.0
    %620 = vmatprep.subr.mxu0 0.0
    %621 = vmatpush1.msra.mxu0 0.0
    %622 = vmatprep.subr.mxu0 0.0
    %623 = vmatpush1.msra.mxu0 0.0
    %624 = vmatprep.subr.mxu0 0.0
    %625 = vmatpush1.msra.mxu0 0.0
    %626 = vmatprep.subr.mxu0 0.0
    %627 = vmatpush1.msra.mxu0 0.0
    %628 = vmatprep.subr.mxu0 0.0
    %629 = vmatpush1.msra.mxu0 0.0
    %630 = vmatprep.subr.mxu0 0.0
    %631 = vmatpush1.msra.mxu0 0.0
    %632 = vmatprep.subr.mxu0 0.0
    %633 = vmatpush1.msra.mxu0 0.0
    %634 = vmatprep.subr.mxu0 0.0
    %635 = vmatpush1.msra.mxu0 0.0
    %636 = vmatprep.subr.mxu0 0.0
    %637 = vmatpush1.msra.mxu0 0.0
    %638 = vmatprep.subr.mxu0 0.0
    %639 = vmatpush1.msra.mxu0 0.0
    %640 = vmatprep.subr.mxu0 0.0
    %641 = vmatpush1.msra.mxu0 %v605
    %642 = vmatprep.subr.mxu0 0.0
    %643 = vmatpush2.msra.mxu0 0.0
    %644 = vmatprep.subr.mxu0 0.0
    %645 = vmatpush2.msra.mxu0 0.0
    %646 = vmatprep.subr.mxu0 0.0
    %647 = vmatpush2.msra.mxu0 0.0
    %648 = vmatprep.subr.mxu0 0.0
    %649 = vmatpush2.msra.mxu0 0.0
    %650 = vmatprep.subr.mxu0 0.0
    %651 = vmatpush2.msra.mxu0 0.0
    %652 = vmatprep.subr.mxu0 0.0
    %653 = vmatpush2.msra.mxu0 0.0
    %654 = vmatprep.subr.mxu0 0.0
    %655 = vmatpush2.msra.mxu0 0.0
    %656 = vmatprep.subr.mxu0 0.0
    %657 = vmatpush2.msra.mxu0 0.0
    %658 = vmatprep.subr.mxu0 0.0
    %659 = vmatpush2.msra.mxu0 0.0
    %660 = vmatprep.subr.mxu0 0.0
    %661 = vmatpush2.msra.mxu0 0.0
    %662 = vmatprep.subr.mxu0 0.0
    %663 = vmatpush2.msra.mxu0 0.0
    %664 = vmatprep.subr.mxu0 0.0
    %665 = vmatpush2.msra.mxu0 0.0
    %666 = vmatprep.subr.mxu0 0.0
    %667 = vmatpush2.msra.mxu0 0.0
    %668 = vmatprep.subr.mxu0 0.0
    %669 = vmatpush2.msra.mxu0 0.0
    %670 = vmatprep.subr.mxu0 0.0
    %671 = vmatpush2.msra.mxu0 0.0
    %672 = vmatprep.subr.mxu0 0.0
    %673 = vmatpush2.msra.mxu0 0.0
    %674 = vmatprep.mubr.f32.mxu0 0.0
    %675 = vmatmul.mubr.f32.gmra.mxu0 %v608
    %v676 = vpop.f32.mrf.mxu0
    %v677 = vadd.f32 0.0, %v676
    %v678 = vpop.f32.mrf.mxu0
    %679 = vdwg.mxu0
    %680 = vrot.lane.b32.xlu0 %v347, 120
    %v681 = vpop.permute.xlu0 %680
    %682 = vrot.lane.b32.xlu0 %v335, 88
    %v683 = vpop.permute.xlu0 %682
    %v684 = vsel %vm352, %v681, 0
    %v686 = vsel %vm352, %v683, 0
    %688 = vmatprep.subr.mxu0 0.0
    %689 = vmatpush1.xpose.msra.mxu0 0.0
    %690 = vmatprep.subr.mxu0 0.0
    %691 = vmatpush1.xpose.msra.mxu0 0.0
    %692 = vmatprep.subr.mxu0 0.0
    %693 = vmatpush1.xpose.msra.mxu0 0.0
    %694 = vmatprep.subr.mxu0 0.0
    %695 = vmatpush1.xpose.msra.mxu0 0.0
    %696 = vmatprep.subr.mxu0 0.0
    %697 = vmatpush1.xpose.msra.mxu0 0.0
    %698 = vmatprep.subr.mxu0 0.0
    %699 = vmatpush1.xpose.msra.mxu0 0.0
    %700 = vmatprep.subr.mxu0 0.0
    %701 = vmatpush1.xpose.msra.mxu0 0.0
    %702 = vmatprep.subr.mxu0 0.0
    %703 = vmatpush1.xpose.msra.mxu0 0.0
    %704 = vmatprep.subr.mxu0 0.0
    %705 = vmatpush1.xpose.msra.mxu0 0.0
    %706 = vmatprep.subr.mxu0 0.0
    %707 = vmatpush1.xpose.msra.mxu0 0.0
    %708 = vmatprep.subr.mxu0 0.0
    %709 = vmatpush1.xpose.msra.mxu0 0.0
    %710 = vmatprep.subr.mxu0 0.0
    %711 = vmatpush1.xpose.msra.mxu0 0.0
    %712 = vmatprep.subr.mxu0 0.0
    %713 = vmatpush1.xpose.msra.mxu0 0.0
    %714 = vmatprep.subr.mxu0 0.0
    %715 = vmatpush1.xpose.msra.mxu0 0.0
    %716 = vmatprep.subr.mxu0 0.0
    %717 = vmatpush1.xpose.msra.mxu0 0.0
    %718 = vmatprep.subr.mxu0 0.0
    %719 = vmatpush1.xpose.msra.mxu0 %v686
    %720 = vmatprep.subr.mxu0 0.0
    %721 = vmatpush2.xpose.msra.mxu0 0.0
    %722 = vmatprep.subr.mxu0 0.0
    %723 = vmatpush2.xpose.msra.mxu0 0.0
    %724 = vmatprep.subr.mxu0 0.0
    %725 = vmatpush2.xpose.msra.mxu0 0.0
    %726 = vmatprep.subr.mxu0 0.0
    %727 = vmatpush2.xpose.msra.mxu0 0.0
    %728 = vmatprep.subr.mxu0 0.0
    %729 = vmatpush2.xpose.msra.mxu0 0.0
    %730 = vmatprep.subr.mxu0 0.0
    %731 = vmatpush2.xpose.msra.mxu0 0.0
    %732 = vmatprep.subr.mxu0 0.0
    %733 = vmatpush2.xpose.msra.mxu0 0.0
    %734 = vmatprep.subr.mxu0 0.0
    %735 = vmatpush2.xpose.msra.mxu0 0.0
    %736 = vmatprep.subr.mxu0 0.0
    %737 = vmatpush2.xpose.msra.mxu0 0.0
    %738 = vmatprep.subr.mxu0 0.0
    %739 = vmatpush2.xpose.msra.mxu0 0.0
    %740 = vmatprep.subr.mxu0 0.0
    %741 = vmatpush2.xpose.msra.mxu0 0.0
    %742 = vmatprep.subr.mxu0 0.0
    %743 = vmatpush2.xpose.msra.mxu0 0.0
    %744 = vmatprep.subr.mxu0 0.0
    %745 = vmatpush2.xpose.msra.mxu0 0.0
    %746 = vmatprep.subr.mxu0 0.0
    %747 = vmatpush2.xpose.msra.mxu0 0.0
    %748 = vmatprep.subr.mxu0 0.0
    %749 = vmatpush2.xpose.msra.mxu0 0.0
    %750 = vmatprep.subr.mxu0 0.0
    %751 = vmatpush2.xpose.msra.mxu0 0.0
    %752 = vmatprep.mubr.f32.mxu0 0.0
    %753 = vmatmul.mubr.f32.gmra.mxu0 %v684
    %v754 = vpop.f32.mrf.mxu0
    %v755 = vadd.f32 %v175, %v754
    %v756 = vpop.f32.mrf.mxu0
    %757 = vdwg.mxu0
    %758 = vrot.lane.b32.xlu0 %v348, 120
    %v759 = vpop.permute.xlu0 %758
    %760 = vrot.lane.b32.xlu0 %v340, 88
    %v761 = vpop.permute.xlu0 %760
    %v762 = vsel %vm352, %v759, 0
    %v764 = vsel %vm352, %v761, 0
    %766 = vmatprep.subr.mxu0 0.0
    %767 = vmatpush1.xpose.msra.mxu0 0.0
    %768 = vmatprep.subr.mxu0 0.0
    %769 = vmatpush1.xpose.msra.mxu0 0.0
    %770 = vmatprep.subr.mxu0 0.0
    %771 = vmatpush1.xpose.msra.mxu0 0.0
    %772 = vmatprep.subr.mxu0 0.0
    %773 = vmatpush1.xpose.msra.mxu0 0.0
    %774 = vmatprep.subr.mxu0 0.0
    %775 = vmatpush1.xpose.msra.mxu0 0.0
    %776 = vmatprep.subr.mxu0 0.0
    %777 = vmatpush1.xpose.msra.mxu0 0.0
    %778 = vmatprep.subr.mxu0 0.0
    %779 = vmatpush1.xpose.msra.mxu0 0.0
    %780 = vmatprep.subr.mxu0 0.0
    %781 = vmatpush1.xpose.msra.mxu0 0.0
    %782 = vmatprep.subr.mxu0 0.0
    %783 = vmatpush1.xpose.msra.mxu0 0.0
    %784 = vmatprep.subr.mxu0 0.0
    %785 = vmatpush1.xpose.msra.mxu0 0.0
    %786 = vmatprep.subr.mxu0 0.0
    %787 = vmatpush1.xpose.msra.mxu0 0.0
    %788 = vmatprep.subr.mxu0 0.0
    %789 = vmatpush1.xpose.msra.mxu0 0.0
    %790 = vmatprep.subr.mxu0 0.0
    %791 = vmatpush1.xpose.msra.mxu0 0.0
    %792 = vmatprep.subr.mxu0 0.0
    %793 = vmatpush1.xpose.msra.mxu0 0.0
    %794 = vmatprep.subr.mxu0 0.0
    %795 = vmatpush1.xpose.msra.mxu0 0.0
    %796 = vmatprep.subr.mxu0 0.0
    %797 = vmatpush1.xpose.msra.mxu0 %v764
    %798 = vmatprep.subr.mxu0 0.0
    %799 = vmatpush2.xpose.msra.mxu0 0.0
    %800 = vmatprep.subr.mxu0 0.0
    %801 = vmatpush2.xpose.msra.mxu0 0.0
    %802 = vmatprep.subr.mxu0 0.0
    %803 = vmatpush2.xpose.msra.mxu0 0.0
    %804 = vmatprep.subr.mxu0 0.0
    %805 = vmatpush2.xpose.msra.mxu0 0.0
    %806 = vmatprep.subr.mxu0 0.0
    %807 = vmatpush2.xpose.msra.mxu0 0.0
    %808 = vmatprep.subr.mxu0 0.0
    %809 = vmatpush2.xpose.msra.mxu0 0.0
    %810 = vmatprep.subr.mxu0 0.0
    %811 = vmatpush2.xpose.msra.mxu0 0.0
    %812 = vmatprep.subr.mxu0 0.0
    %813 = vmatpush2.xpose.msra.mxu0 0.0
    %814 = vmatprep.subr.mxu0 0.0
    %815 = vmatpush2.xpose.msra.mxu0 0.0
    %816 = vmatprep.subr.mxu0 0.0
    %817 = vmatpush2.xpose.msra.mxu0 0.0
    %818 = vmatprep.subr.mxu0 0.0
    %819 = vmatpush2.xpose.msra.mxu0 0.0
    %820 = vmatprep.subr.mxu0 0.0
    %821 = vmatpush2.xpose.msra.mxu0 0.0
    %822 = vmatprep.subr.mxu0 0.0
    %823 = vmatpush2.xpose.msra.mxu0 0.0
    %824 = vmatprep.subr.mxu0 0.0
    %825 = vmatpush2.xpose.msra.mxu0 0.0
    %826 = vmatprep.subr.mxu0 0.0
    %827 = vmatpush2.xpose.msra.mxu0 0.0
    %828 = vmatprep.subr.mxu0 0.0
    %829 = vmatpush2.xpose.msra.mxu0 0.0
    %830 = vmatprep.mubr.f32.mxu0 0.0
    %831 = vmatmul.mubr.f32.gmra.mxu0 %v762
    %v832 = vpop.f32.mrf.mxu0
    %v833 = vadd.f32 %v176, %v832
    %v834 = vpop.f32.mrf.mxu0
    %835 = vdwg.mxu0
    %v836 = vsel %vm352, %v755, -inf
    %837 = vmax.xlane.f32.xlu0 %v836
    %v838 = vpop.xlane.xlu0 %837
    %v839 = vsel %vm352, %v833, -inf
    %840 = vmax.xlane.f32.xlu0 %v839
    %v841 = vpop.xlane.xlu0 %840
    %v842 = vsub.f32 %v755, %v838
    %v843 = vsub.f32 %v833, %v841
    %v844 = vmul.f32 %v842, 1.442695
    %v845 = vpow.pop %v844
    %v846 = vmul.f32 %v843, 1.442695
    %v847 = vpow.pop %v846
    %v848 = vsel %vm352, %v845, 0.0
    %849 = vadd.xlane.f32.xlu0 %v848
    %v850 = vpop.xlane.xlu0 %849
    %v851 = vsel %vm352, %v847, 0.0
    %852 = vadd.xlane.f32.xlu0 %v851
    %v853 = vpop.xlane.xlu0 %852
    %v854 = vrcp.pop %v850
    %v855 = vrcp.pop %v853
    %v856 = vmul.f32 %v845, %v854
    %v857 = vmul.f32 %v847, %v855
    %858 = vrot.lane.b32.xlu0 %v335, 56
    %v859 = vpop.permute.xlu0 %858
    %v862 = vsel %vm352, %v856, 0
    %864 = vmatprep.subr.mxu0 0.0
    %865 = vmatpush1.msra.mxu0 0.0
    %866 = vmatprep.subr.mxu0 0.0
    %867 = vmatpush1.msra.mxu0 0.0
    %868 = vmatprep.subr.mxu0 0.0
    %869 = vmatpush1.msra.mxu0 0.0
    %870 = vmatprep.subr.mxu0 0.0
    %871 = vmatpush1.msra.mxu0 0.0
    %872 = vmatprep.subr.mxu0 0.0
    %873 = vmatpush1.msra.mxu0 0.0
    %874 = vmatprep.subr.mxu0 0.0
    %875 = vmatpush1.msra.mxu0 0.0
    %876 = vmatprep.subr.mxu0 0.0
    %877 = vmatpush1.msra.mxu0 0.0
    %878 = vmatprep.subr.mxu0 0.0
    %879 = vmatpush1.msra.mxu0 0.0
    %880 = vmatprep.subr.mxu0 0.0
    %881 = vmatpush1.msra.mxu0 0.0
    %882 = vmatprep.subr.mxu0 0.0
    %883 = vmatpush1.msra.mxu0 0.0
    %884 = vmatprep.subr.mxu0 0.0
    %885 = vmatpush1.msra.mxu0 0.0
    %886 = vmatprep.subr.mxu0 0.0
    %887 = vmatpush1.msra.mxu0 0.0
    %888 = vmatprep.subr.mxu0 0.0
    %889 = vmatpush1.msra.mxu0 0.0
    %890 = vmatprep.subr.mxu0 0.0
    %891 = vmatpush1.msra.mxu0 0.0
    %892 = vmatprep.subr.mxu0 0.0
    %893 = vmatpush1.msra.mxu0 0.0
    %894 = vmatprep.subr.mxu0 0.0
    %895 = vmatpush1.msra.mxu0 %v859
    %896 = vmatprep.subr.mxu0 0.0
    %897 = vmatpush2.msra.mxu0 0.0
    %898 = vmatprep.subr.mxu0 0.0
    %899 = vmatpush2.msra.mxu0 0.0
    %900 = vmatprep.subr.mxu0 0.0
    %901 = vmatpush2.msra.mxu0 0.0
    %902 = vmatprep.subr.mxu0 0.0
    %903 = vmatpush2.msra.mxu0 0.0
    %904 = vmatprep.subr.mxu0 0.0
    %905 = vmatpush2.msra.mxu0 0.0
    %906 = vmatprep.subr.mxu0 0.0
    %907 = vmatpush2.msra.mxu0 0.0
    %908 = vmatprep.subr.mxu0 0.0
    %909 = vmatpush2.msra.mxu0 0.0
    %910 = vmatprep.subr.mxu0 0.0
    %911 = vmatpush2.msra.mxu0 0.0
    %912 = vmatprep.subr.mxu0 0.0
    %913 = vmatpush2.msra.mxu0 0.0
    %914 = vmatprep.subr.mxu0 0.0
    %915 = vmatpush2.msra.mxu0 0.0
    %916 = vmatprep.subr.mxu0 0.0
    %917 = vmatpush2.msra.mxu0 0.0
    %918 = vmatprep.subr.mxu0 0.0
    %919 = vmatpush2.msra.mxu0 0.0
    %920 = vmatprep.subr.mxu0 0.0
    %921 = vmatpush2.msra.mxu0 0.0
    %922 = vmatprep.subr.mxu0 0.0
    %923 = vmatpush2.msra.mxu0 0.0
    %924 = vmatprep.subr.mxu0 0.0
    %925 = vmatpush2.msra.mxu0 0.0
    %926 = vmatprep.subr.mxu0 0.0
    %927 = vmatpush2.msra.mxu0 0.0
    %928 = vmatprep.mubr.f32.mxu0 0.0
    %929 = vmatmul.mubr.f32.gmra.mxu0 %v862
    %v930 = vpop.f32.mrf.mxu0
    %v931 = vadd.f32 0.0, %v930
    %v932 = vpop.f32.mrf.mxu0
    %933 = vdwg.mxu0
    %934 = vrot.lane.b32.xlu0 %v340, 56
    %v935 = vpop.permute.xlu0 %934
    %v938 = vsel %vm352, %v857, 0
    %940 = vmatprep.subr.mxu0 0.0
    %941 = vmatpush1.msra.mxu0 0.0
    %942 = vmatprep.subr.mxu0 0.0
    %943 = vmatpush1.msra.mxu0 0.0
    %944 = vmatprep.subr.mxu0 0.0
    %945 = vmatpush1.msra.mxu0 0.0
    %946 = vmatprep.subr.mxu0 0.0
    %947 = vmatpush1.msra.mxu0 0.0
    %948 = vmatprep.subr.mxu0 0.0
    %949 = vmatpush1.msra.mxu0 0.0
    %950 = vmatprep.subr.mxu0 0.0
    %951 = vmatpush1.msra.mxu0 0.0
    %952 = vmatprep.subr.mxu0 0.0
    %953 = vmatpush1.msra.mxu0 0.0
    %954 = vmatprep.subr.mxu0 0.0
    %955 = vmatpush1.msra.mxu0 0.0
    %956 = vmatprep.subr.mxu0 0.0
    %957 = vmatpush1.msra.mxu0 0.0
    %958 = vmatprep.subr.mxu0 0.0
    %959 = vmatpush1.msra.mxu0 0.0
    %960 = vmatprep.subr.mxu0 0.0
    %961 = vmatpush1.msra.mxu0 0.0
    %962 = vmatprep.subr.mxu0 0.0
    %963 = vmatpush1.msra.mxu0 0.0
    %964 = vmatprep.subr.mxu0 0.0
    %965 = vmatpush1.msra.mxu0 0.0
    %966 = vmatprep.subr.mxu0 0.0
    %967 = vmatpush1.msra.mxu0 0.0
    %968 = vmatprep.subr.mxu0 0.0
    %969 = vmatpush1.msra.mxu0 0.0
    %970 = vmatprep.subr.mxu0 0.0
    %971 = vmatpush1.msra.mxu0 %v935
    %972 = vmatprep.subr.mxu0 0.0
    %973 = vmatpush2.msra.mxu0 0.0
    %974 = vmatprep.subr.mxu0 0.0
    %975 = vmatpush2.msra.mxu0 0.0
    %976 = vmatprep.subr.mxu0 0.0
    %977 = vmatpush2.msra.mxu0 0.0
    %978 = vmatprep.subr.mxu0 0.0
    %979 = vmatpush2.msra.mxu0 0.0
    %980 = vmatprep.subr.mxu0 0.0
    %981 = vmatpush2.msra.mxu0 0.0
    %982 = vmatprep.subr.mxu0 0.0
    %983 = vmatpush2.msra.mxu0 0.0
    %984 = vmatprep.subr.mxu0 0.0
    %985 = vmatpush2.msra.mxu0 0.0
    %986 = vmatprep.subr.mxu0 0.0
    %987 = vmatpush2.msra.mxu0 0.0
    %988 = vmatprep.subr.mxu0 0.0
    %989 = vmatpush2.msra.mxu0 0.0
    %990 = vmatprep.subr.mxu0 0.0
    %991 = vmatpush2.msra.mxu0 0.0
    %992 = vmatprep.subr.mxu0 0.0
    %993 = vmatpush2.msra.mxu0 0.0
    %994 = vmatprep.subr.mxu0 0.0
    %995 = vmatpush2.msra.mxu0 0.0
    %996 = vmatprep.subr.mxu0 0.0
    %997 = vmatpush2.msra.mxu0 0.0
    %998 = vmatprep.subr.mxu0 0.0
    %999 = vmatpush2.msra.mxu0 0.0
    %1000 = vmatprep.subr.mxu0 0.0
    %1001 = vmatpush2.msra.mxu0 0.0
    %1002 = vmatprep.subr.mxu0 0.0
    %1003 = vmatpush2.msra.mxu0 0.0
    %1004 = vmatprep.mubr.f32.mxu0 0.0
    %1005 = vmatmul.mubr.f32.gmra.mxu0 %v938
    %v1006 = vpop.f32.mrf.mxu0
    %v1007 = vadd.f32 0.0, %v1006
    %v1008 = vpop.f32.mrf.mxu0
    %1009 = vdwg.mxu0
    %v1011 = vsel %vm352, %v931, 0
    %v1014 = vsel %vm352, %v1007, 0
    %1016 = vmatprep.subr.mxu0 0.0
    %1017 = vmatpush1.msra.mxu0 0.0
    %1018 = vmatprep.subr.mxu0 0.0
    %1019 = vmatpush1.msra.mxu0 0.0
    %1020 = vmatprep.subr.mxu0 0.0
    %1021 = vmatpush1.msra.mxu0 0.0
    %1022 = vmatprep.subr.mxu0 0.0
    %1023 = vmatpush1.msra.mxu0 0.0
    %1024 = vmatprep.subr.mxu0 0.0
    %1025 = vmatpush1.msra.mxu0 0.0
    %1026 = vmatprep.subr.mxu0 0.0
    %1027 = vmatpush1.msra.mxu0 0.0
    %1028 = vmatprep.subr.mxu0 0.0
    %1029 = vmatpush1.msra.mxu0 0.0
    %1030 = vmatprep.subr.mxu0 0.0
    %1031 = vmatpush1.msra.mxu0 0.0
    %1032 = vmatprep.subr.mxu0 0.0
    %1033 = vmatpush1.msra.mxu0 0.0
    %1034 = vmatprep.subr.mxu0 0.0
    %1035 = vmatpush1.msra.mxu0 0.0
    %1036 = vmatprep.subr.mxu0 0.0
    %1037 = vmatpush1.msra.mxu0 0.0
    %1038 = vmatprep.subr.mxu0 0.0
    %1039 = vmatpush1.msra.mxu0 0.0
    %1040 = vmatprep.subr.mxu0 0.0
    %1041 = vmatpush1.msra.mxu0 0.0
    %1042 = vmatprep.subr.mxu0 0.0
    %1043 = vmatpush1.msra.mxu0 0.0
    %1044 = vmatprep.subr.mxu0 0.0
    %1045 = vmatpush1.msra.mxu0 0.0
    %1046 = vmatprep.subr.mxu0 0.0
    %1047 = vmatpush1.msra.mxu0 %v344
    %1048 = vmatprep.subr.mxu0 0.0
    %1049 = vmatpush2.msra.mxu0 0.0
    %1050 = vmatprep.subr.mxu0 0.0
    %1051 = vmatpush2.msra.mxu0 0.0
    %1052 = vmatprep.subr.mxu0 0.0
    %1053 = vmatpush2.msra.mxu0 0.0
    %1054 = vmatprep.subr.mxu0 0.0
    %1055 = vmatpush2.msra.mxu0 0.0
    %1056 = vmatprep.subr.mxu0 0.0
    %1057 = vmatpush2.msra.mxu0 0.0
    %1058 = vmatprep.subr.mxu0 0.0
    %1059 = vmatpush2.msra.mxu0 0.0
    %1060 = vmatprep.subr.mxu0 0.0
    %1061 = vmatpush2.msra.mxu0 0.0
    %1062 = vmatprep.subr.mxu0 0.0
    %1063 = vmatpush2.msra.mxu0 0.0
    %1064 = vmatprep.subr.mxu0 0.0
    %1065 = vmatpush2.msra.mxu0 0.0
    %1066 = vmatprep.subr.mxu0 0.0
    %1067 = vmatpush2.msra.mxu0 0.0
    %1068 = vmatprep.subr.mxu0 0.0
    %1069 = vmatpush2.msra.mxu0 0.0
    %1070 = vmatprep.subr.mxu0 0.0
    %1071 = vmatpush2.msra.mxu0 0.0
    %1072 = vmatprep.subr.mxu0 0.0
    %1073 = vmatpush2.msra.mxu0 0.0
    %1074 = vmatprep.subr.mxu0 0.0
    %1075 = vmatpush2.msra.mxu0 0.0
    %1076 = vmatprep.subr.mxu0 0.0
    %1077 = vmatpush2.msra.mxu0 0.0
    %1078 = vmatprep.subr.mxu0 0.0
    %1079 = vmatpush2.msra.mxu0 0.0
    %1080 = vmatprep.mubr.f32.mxu0 0.0
    %1081 = vmatmul.mubr.f32.gmra.mxu0 %v1011
    %v1082 = vpop.f32.mrf.mxu0
    %v1083 = vadd.f32 0.0, %v1082
    %v1084 = vpop.f32.mrf.mxu0
    %1085 = vmatprep.mubr.f32.mxu0 0.0
    %1086 = vmatmul.mubr.f32.gmra.mxu0 %v1014
    %v1087 = vpop.f32.mrf.mxu0
    %v1088 = vadd.f32 0.0, %v1087
    %v1089 = vpop.f32.mrf.mxu0
    %1090 = vdwg.mxu0
    %v1092 = vsel %vm352, %v601, 0
    %v1095 = vsel %vm352, %v677, 0
    %1097 = vmatprep.subr.mxu0 0.0
    %1098 = vmatpush1.msra.mxu0 0.0
    %1099 = vmatprep.subr.mxu0 0.0
    %1100 = vmatpush1.msra.mxu0 0.0
    %1101 = vmatprep.subr.mxu0 0.0
    %1102 = vmatpush1.msra.mxu0 0.0
    %1103 = vmatprep.subr.mxu0 0.0
    %1104 = vmatpush1.msra.mxu0 0.0
    %1105 = vmatprep.subr.mxu0 0.0
    %1106 = vmatpush1.msra.mxu0 0.0
    %1107 = vmatprep.subr.mxu0 0.0
    %1108 = vmatpush1.msra.mxu0 0.0
    %1109 = vmatprep.subr.mxu0 0.0
    %1110 = vmatpush1.msra.mxu0 0.0
    %1111 = vmatprep.subr.mxu0 0.0
    %1112 = vmatpush1.msra.mxu0 0.0
    %1113 = vmatprep.subr.mxu0 0.0
    %1114 = vmatpush1.msra.mxu0 0.0
    %1115 = vmatprep.subr.mxu0 0.0
    %1116 = vmatpush1.msra.mxu0 0.0
    %1117 = vmatprep.subr.mxu0 0.0
    %1118 = vmatpush1.msra.mxu0 0.0
    %1119 = vmatprep.subr.mxu0 0.0
    %1120 = vmatpush1.msra.mxu0 0.0
    %1121 = vmatprep.subr.mxu0 0.0
    %1122 = vmatpush1.msra.mxu0 0.0
    %1123 = vmatprep.subr.mxu0 0.0
    %1124 = vmatpush1.msra.mxu0 0.0
    %1125 = vmatprep.subr.mxu0 0.0
    %1126 = vmatpush1.msra.mxu0 0.0
    %1127 = vmatprep.subr.mxu0 0.0
    %1128 = vmatpush1.msra.mxu0 %v343
    %1129 = vmatprep.subr.mxu0 0.0
    %1130 = vmatpush2.msra.mxu0 0.0
    %1131 = vmatprep.subr.mxu0 0.0
    %1132 = vmatpush2.msra.mxu0 0.0
    %1133 = vmatprep.subr.mxu0 0.0
    %1134 = vmatpush2.msra.mxu0 0.0
    %1135 = vmatprep.subr.mxu0 0.0
    %1136 = vmatpush2.msra.mxu0 0.0
    %1137 = vmatprep.subr.mxu0 0.0
    %1138 = vmatpush2.msra.mxu0 0.0
    %1139 = vmatprep.subr.mxu0 0.0
    %1140 = vmatpush2.msra.mxu0 0.0
    %1141 = vmatprep.subr.mxu0 0.0
    %1142 = vmatpush2.msra.mxu0 0.0
    %1143 = vmatprep.subr.mxu0 0.0
    %1144 = vmatpush2.msra.mxu0 0.0
    %1145 = vmatprep.subr.mxu0 0.0
    %1146 = vmatpush2.msra.mxu0 0.0
    %1147 = vmatprep.subr.mxu0 0.0
    %1148 = vmatpush2.msra.mxu0 0.0
    %1149 = vmatprep.subr.mxu0 0.0
    %1150 = vmatpush2.msra.mxu0 0.0
    %1151 = vmatprep.subr.mxu0 0.0
    %1152 = vmatpush2.msra.mxu0 0.0
    %1153 = vmatprep.subr.mxu0 0.0
    %1154 = vmatpush2.msra.mxu0 0.0
    %1155 = vmatprep.subr.mxu0 0.0
    %1156 = vmatpush2.msra.mxu0 0.0
    %1157 = vmatprep.subr.mxu0 0.0
    %1158 = vmatpush2.msra.mxu0 0.0
    %1159 = vmatprep.subr.mxu0 0.0
    %1160 = vmatpush2.msra.mxu0 0.0
    %1161 = vmatprep.mubr.f32.mxu0 0.0
    %1162 = vmatmul.mubr.f32.gmra.mxu0 %v1092
    %v1163 = vpop.f32.mrf.mxu0
    %v1164 = vadd.f32 %v1083, %v1163
    %v1165 = vpop.f32.mrf.mxu0
    %1166 = vmatprep.mubr.f32.mxu0 0.0
    %1167 = vmatmul.mubr.f32.gmra.mxu0 %v1095
    %v1168 = vpop.f32.mrf.mxu0
    %v1169 = vadd.f32 %v1088, %v1168
    %v1170 = vpop.f32.mrf.mxu0
    %1171 = vdwg.mxu0
    %1172 = vrot.lane.b32.xlu0 %v347, 112
    %v1173 = vpop.permute.xlu0 %1172
    %1174 = vrot.lane.b32.xlu0 %v335, 80
    %v1175 = vpop.permute.xlu0 %1174
    %v1176 = vsel %vm352, %v1173, 0
    %v1178 = vsel %vm352, %v1175, 0
    %1180 = vmatprep.subr.mxu0 0.0
    %1181 = vmatpush1.xpose.msra.mxu0 0.0
    %1182 = vmatprep.subr.mxu0 0.0
    %1183 = vmatpush1.xpose.msra.mxu0 0.0
    %1184 = vmatprep.subr.mxu0 0.0
    %1185 = vmatpush1.xpose.msra.mxu0 0.0
    %1186 = vmatprep.subr.mxu0 0.0
    %1187 = vmatpush1.xpose.msra.mxu0 0.0
    %1188 = vmatprep.subr.mxu0 0.0
    %1189 = vmatpush1.xpose.msra.mxu0 0.0
    %1190 = vmatprep.subr.mxu0 0.0
    %1191 = vmatpush1.xpose.msra.mxu0 0.0
    %1192 = vmatprep.subr.mxu0 0.0
    %1193 = vmatpush1.xpose.msra.mxu0 0.0
    %1194 = vmatprep.subr.mxu0 0.0
    %1195 = vmatpush1.xpose.msra.mxu0 0.0
    %1196 = vmatprep.subr.mxu0 0.0
    %1197 = vmatpush1.xpose.msra.mxu0 0.0
    %1198 = vmatprep.subr.mxu0 0.0
    %1199 = vmatpush1.xpose.msra.mxu0 0.0
    %1200 = vmatprep.subr.mxu0 0.0
    %1201 = vmatpush1.xpose.msra.mxu0 0.0
    %1202 = vmatprep.subr.mxu0 0.0
    %1203 = vmatpush1.xpose.msra.mxu0 0.0
    %1204 = vmatprep.subr.mxu0 0.0
    %1205 = vmatpush1.xpose.msra.mxu0 0.0
    %1206 = vmatprep.subr.mxu0 0.0
    %1207 = vmatpush1.xpose.msra.mxu0 0.0
    %1208 = vmatprep.subr.mxu0 0.0
    %1209 = vmatpush1.xpose.msra.mxu0 0.0
    %1210 = vmatprep.subr.mxu0 0.0
    %1211 = vmatpush1.xpose.msra.mxu0 %v1178
    %1212 = vmatprep.subr.mxu0 0.0
    %1213 = vmatpush2.xpose.msra.mxu0 0.0
    %1214 = vmatprep.subr.mxu0 0.0
    %1215 = vmatpush2.xpose.msra.mxu0 0.0
    %1216 = vmatprep.subr.mxu0 0.0
    %1217 = vmatpush2.xpose.msra.mxu0 0.0
    %1218 = vmatprep.subr.mxu0 0.0
    %1219 = vmatpush2.xpose.msra.mxu0 0.0
    %1220 = vmatprep.subr.mxu0 0.0
    %1221 = vmatpush2.xpose.msra.mxu0 0.0
    %1222 = vmatprep.subr.mxu0 0.0
    %1223 = vmatpush2.xpose.msra.mxu0 0.0
    %1224 = vmatprep.subr.mxu0 0.0
    %1225 = vmatpush2.xpose.msra.mxu0 0.0
    %1226 = vmatprep.subr.mxu0 0.0
    %1227 = vmatpush2.xpose.msra.mxu0 0.0
    %1228 = vmatprep.subr.mxu0 0.0
    %1229 = vmatpush2.xpose.msra.mxu0 0.0
    %1230 = vmatprep.subr.mxu0 0.0
    %1231 = vmatpush2.xpose.msra.mxu0 0.0
    %1232 = vmatprep.subr.mxu0 0.0
    %1233 = vmatpush2.xpose.msra.mxu0 0.0
    %1234 = vmatprep.subr.mxu0 0.0
    %1235 = vmatpush2.xpose.msra.mxu0 0.0
    %1236 = vmatprep.subr.mxu0 0.0
    %1237 = vmatpush2.xpose.msra.mxu0 0.0
    %1238 = vmatprep.subr.mxu0 0.0
    %1239 = vmatpush2.xpose.msra.mxu0 0.0
    %1240 = vmatprep.subr.mxu0 0.0
    %1241 = vmatpush2.xpose.msra.mxu0 0.0
    %1242 = vmatprep.subr.mxu0 0.0
    %1243 = vmatpush2.xpose.msra.mxu0 0.0
    %1244 = vmatprep.mubr.f32.mxu0 0.0
    %1245 = vmatmul.mubr.f32.gmra.mxu0 %v1176
    %v1246 = vpop.f32.mrf.mxu0
    %v1247 = vadd.f32 %v175, %v1246
    %v1248 = vpop.f32.mrf.mxu0
    %1249 = vdwg.mxu0
    %1250 = vrot.lane.b32.xlu0 %v348, 112
    %v1251 = vpop.permute.xlu0 %1250
    %1252 = vrot.lane.b32.xlu0 %v340, 80
    %v1253 = vpop.permute.xlu0 %1252
    %v1254 = vsel %vm352, %v1251, 0
    %v1256 = vsel %vm352, %v1253, 0
    %1258 = vmatprep.subr.mxu0 0.0
    %1259 = vmatpush1.xpose.msra.mxu0 0.0
    %1260 = vmatprep.subr.mxu0 0.0
    %1261 = vmatpush1.xpose.msra.mxu0 0.0
    %1262 = vmatprep.subr.mxu0 0.0
    %1263 = vmatpush1.xpose.msra.mxu0 0.0
    %1264 = vmatprep.subr.mxu0 0.0
    %1265 = vmatpush1.xpose.msra.mxu0 0.0
    %1266 = vmatprep.subr.mxu0 0.0
    %1267 = vmatpush1.xpose.msra.mxu0 0.0
    %1268 = vmatprep.subr.mxu0 0.0
    %1269 = vmatpush1.xpose.msra.mxu0 0.0
    %1270 = vmatprep.subr.mxu0 0.0
    %1271 = vmatpush1.xpose.msra.mxu0 0.0
    %1272 = vmatprep.subr.mxu0 0.0
    %1273 = vmatpush1.xpose.msra.mxu0 0.0
    %1274 = vmatprep.subr.mxu0 0.0
    %1275 = vmatpush1.xpose.msra.mxu0 0.0
    %1276 = vmatprep.subr.mxu0 0.0
    %1277 = vmatpush1.xpose.msra.mxu0 0.0
    %1278 = vmatprep.subr.mxu0 0.0
    %1279 = vmatpush1.xpose.msra.mxu0 0.0
    %1280 = vmatprep.subr.mxu0 0.0
    %1281 = vmatpush1.xpose.msra.mxu0 0.0
    %1282 = vmatprep.subr.mxu0 0.0
    %1283 = vmatpush1.xpose.msra.mxu0 0.0
    %1284 = vmatprep.subr.mxu0 0.0
    %1285 = vmatpush1.xpose.msra.mxu0 0.0
    %1286 = vmatprep.subr.mxu0 0.0
    %1287 = vmatpush1.xpose.msra.mxu0 0.0
    %1288 = vmatprep.subr.mxu0 0.0
    %1289 = vmatpush1.xpose.msra.mxu0 %v1256
    %1290 = vmatprep.subr.mxu0 0.0
    %1291 = vmatpush2.xpose.msra.mxu0 0.0
    %1292 = vmatprep.subr.mxu0 0.0
    %1293 = vmatpush2.xpose.msra.mxu0 0.0
    %1294 = vmatprep.subr.mxu0 0.0
    %1295 = vmatpush2.xpose.msra.mxu0 0.0
    %1296 = vmatprep.subr.mxu0 0.0
    %1297 = vmatpush2.xpose.msra.mxu0 0.0
    %1298 = vmatprep.subr.mxu0 0.0
    %1299 = vmatpush2.xpose.msra.mxu0 0.0
    %1300 = vmatprep.subr.mxu0 0.0
    %1301 = vmatpush2.xpose.msra.mxu0 0.0
    %1302 = vmatprep.subr.mxu0 0.0
    %1303 = vmatpush2.xpose.msra.mxu0 0.0
    %1304 = vmatprep.subr.mxu0 0.0
    %1305 = vmatpush2.xpose.msra.mxu0 0.0
    %1306 = vmatprep.subr.mxu0 0.0
    %1307 = vmatpush2.xpose.msra.mxu0 0.0
    %1308 = vmatprep.subr.mxu0 0.0
    %1309 = vmatpush2.xpose.msra.mxu0 0.0
    %1310 = vmatprep.subr.mxu0 0.0
    %1311 = vmatpush2.xpose.msra.mxu0 0.0
    %1312 = vmatprep.subr.mxu0 0.0
    %1313 = vmatpush2.xpose.msra.mxu0 0.0
    %1314 = vmatprep.subr.mxu0 0.0
    %1315 = vmatpush2.xpose.msra.mxu0 0.0
    %1316 = vmatprep.subr.mxu0 0.0
    %1317 = vmatpush2.xpose.msra.mxu0 0.0
    %1318 = vmatprep.subr.mxu0 0.0
    %1319 = vmatpush2.xpose.msra.mxu0 0.0
    %1320 = vmatprep.subr.mxu0 0.0
    %1321 = vmatpush2.xpose.msra.mxu0 0.0
    %1322 = vmatprep.mubr.f32.mxu0 0.0
    %1323 = vmatmul.mubr.f32.gmra.mxu0 %v1254
    %v1324 = vpop.f32.mrf.mxu0
    %v1325 = vadd.f32 %v176, %v1324
    %v1326 = vpop.f32.mrf.mxu0
    %1327 = vdwg.mxu0
    %v1328 = vsel %vm352, %v1247, -inf
    %1329 = vmax.xlane.f32.xlu0 %v1328
    %v1330 = vpop.xlane.xlu0 %1329
    %v1331 = vsel %vm352, %v1325, -inf
    %1332 = vmax.xlane.f32.xlu0 %v1331
    %v1333 = vpop.xlane.xlu0 %1332
    %v1334 = vsub.f32 %v1247, %v1330
    %v1335 = vsub.f32 %v1325, %v1333
    %v1336 = vmul.f32 %v1334, 1.442695
    %v1337 = vpow.pop %v1336
    %v1338 = vmul.f32 %v1335, 1.442695
    %v1339 = vpow.pop %v1338
    %v1340 = vsel %vm352, %v1337, 0.0
    %1341 = vadd.xlane.f32.xlu0 %v1340
    %v1342 = vpop.xlane.xlu0 %1341
    %v1343 = vsel %vm352, %v1339, 0.0
    %1344 = vadd.xlane.f32.xlu0 %v1343
    %v1345 = vpop.xlane.xlu0 %1344
    %v1346 = vrcp.pop %v1342
    %v1347 = vrcp.pop %v1345
    %v1348 = vmul.f32 %v1337, %v1346
    %v1349 = vmul.f32 %v1339, %v1347
    %1350 = vrot.lane.b32.xlu0 %v335, 48
    %v1351 = vpop.permute.xlu0 %1350
    %v1354 = vsel %vm352, %v1348, 0
    %1356 = vmatprep.subr.mxu0 0.0
    %1357 = vmatpush1.msra.mxu0 0.0
    %1358 = vmatprep.subr.mxu0 0.0
    %1359 = vmatpush1.msra.mxu0 0.0
    %1360 = vmatprep.subr.mxu0 0.0
    %1361 = vmatpush1.msra.mxu0 0.0
    %1362 = vmatprep.subr.mxu0 0.0
    %1363 = vmatpush1.msra.mxu0 0.0
    %1364 = vmatprep.subr.mxu0 0.0
    %1365 = vmatpush1.msra.mxu0 0.0
    %1366 = vmatprep.subr.mxu0 0.0
    %1367 = vmatpush1.msra.mxu0 0.0
    %1368 = vmatprep.subr.mxu0 0.0
    %1369 = vmatpush1.msra.mxu0 0.0
    %1370 = vmatprep.subr.mxu0 0.0
    %1371 = vmatpush1.msra.mxu0 0.0
    %1372 = vmatprep.subr.mxu0 0.0
    %1373 = vmatpush1.msra.mxu0 0.0
    %1374 = vmatprep.subr.mxu0 0.0
    %1375 = vmatpush1.msra.mxu0 0.0
    %1376 = vmatprep.subr.mxu0 0.0
    %1377 = vmatpush1.msra.mxu0 0.0
    %1378 = vmatprep.subr.mxu0 0.0
    %1379 = vmatpush1.msra.mxu0 0.0
    %1380 = vmatprep.subr.mxu0 0.0
    %1381 = vmatpush1.msra.mxu0 0.0
    %1382 = vmatprep.subr.mxu0 0.0
    %1383 = vmatpush1.msra.mxu0 0.0
    %1384 = vmatprep.subr.mxu0 0.0
    %1385 = vmatpush1.msra.mxu0 0.0
    %1386 = vmatprep.subr.mxu0 0.0
    %1387 = vmatpush1.msra.mxu0 %v1351
    %1388 = vmatprep.subr.mxu0 0.0
    %1389 = vmatpush2.msra.mxu0 0.0
    %1390 = vmatprep.subr.mxu0 0.0
    %1391 = vmatpush2.msra.mxu0 0.0
    %1392 = vmatprep.subr.mxu0 0.0
    %1393 = vmatpush2.msra.mxu0 0.0
    %1394 = vmatprep.subr.mxu0 0.0
    %1395 = vmatpush2.msra.mxu0 0.0
    %1396 = vmatprep.subr.mxu0 0.0
    %1397 = vmatpush2.msra.mxu0 0.0
    %1398 = vmatprep.subr.mxu0 0.0
    %1399 = vmatpush2.msra.mxu0 0.0
    %1400 = vmatprep.subr.mxu0 0.0
    %1401 = vmatpush2.msra.mxu0 0.0
    %1402 = vmatprep.subr.mxu0 0.0
    %1403 = vmatpush2.msra.mxu0 0.0
    %1404 = vmatprep.subr.mxu0 0.0
    %1405 = vmatpush2.msra.mxu0 0.0
    %1406 = vmatprep.subr.mxu0 0.0
    %1407 = vmatpush2.msra.mxu0 0.0
    %1408 = vmatprep.subr.mxu0 0.0
    %1409 = vmatpush2.msra.mxu0 0.0
    %1410 = vmatprep.subr.mxu0 0.0
    %1411 = vmatpush2.msra.mxu0 0.0
    %1412 = vmatprep.subr.mxu0 0.0
    %1413 = vmatpush2.msra.mxu0 0.0
    %1414 = vmatprep.subr.mxu0 0.0
    %1415 = vmatpush2.msra.mxu0 0.0
    %1416 = vmatprep.subr.mxu0 0.0
    %1417 = vmatpush2.msra.mxu0 0.0
    %1418 = vmatprep.subr.mxu0 0.0
    %1419 = vmatpush2.msra.mxu0 0.0
    %1420 = vmatprep.mubr.f32.mxu0 0.0
    %1421 = vmatmul.mubr.f32.gmra.mxu0 %v1354
    %v1422 = vpop.f32.mrf.mxu0
    %v1423 = vadd.f32 0.0, %v1422
    %v1424 = vpop.f32.mrf.mxu0
    %1425 = vdwg.mxu0
    %1426 = vrot.lane.b32.xlu0 %v340, 48
    %v1427 = vpop.permute.xlu0 %1426
    %v1430 = vsel %vm352, %v1349, 0
    %1432 = vmatprep.subr.mxu0 0.0
    %1433 = vmatpush1.msra.mxu0 0.0
    %1434 = vmatprep.subr.mxu0 0.0
    %1435 = vmatpush1.msra.mxu0 0.0
    %1436 = vmatprep.subr.mxu0 0.0
    %1437 = vmatpush1.msra.mxu0 0.0
    %1438 = vmatprep.subr.mxu0 0.0
    %1439 = vmatpush1.msra.mxu0 0.0
    %1440 = vmatprep.subr.mxu0 0.0
    %1441 = vmatpush1.msra.mxu0 0.0
    %1442 = vmatprep.subr.mxu0 0.0
    %1443 = vmatpush1.msra.mxu0 0.0
    %1444 = vmatprep.subr.mxu0 0.0
    %1445 = vmatpush1.msra.mxu0 0.0
    %1446 = vmatprep.subr.mxu0 0.0
    %1447 = vmatpush1.msra.mxu0 0.0
    %1448 = vmatprep.subr.mxu0 0.0
    %1449 = vmatpush1.msra.mxu0 0.0
    %1450 = vmatprep.subr.mxu0 0.0
    %1451 = vmatpush1.msra.mxu0 0.0
    %1452 = vmatprep.subr.mxu0 0.0
    %1453 = vmatpush1.msra.mxu0 0.0
    %1454 = vmatprep.subr.mxu0 0.0
    %1455 = vmatpush1.msra.mxu0 0.0
    %1456 = vmatprep.subr.mxu0 0.0
    %1457 = vmatpush1.msra.mxu0 0.0
    %1458 = vmatprep.subr.mxu0 0.0
    %1459 = vmatpush1.msra.mxu0 0.0
    %1460 = vmatprep.subr.mxu0 0.0
    %1461 = vmatpush1.msra.mxu0 0.0
    %1462 = vmatprep.subr.mxu0 0.0
    %1463 = vmatpush1.msra.mxu0 %v1427
    %1464 = vmatprep.subr.mxu0 0.0
    %1465 = vmatpush2.msra.mxu0 0.0
    %1466 = vmatprep.subr.mxu0 0.0
    %1467 = vmatpush2.msra.mxu0 0.0
    %1468 = vmatprep.subr.mxu0 0.0
    %1469 = vmatpush2.msra.mxu0 0.0
    %1470 = vmatprep.subr.mxu0 0.0
    %1471 = vmatpush2.msra.mxu0 0.0
    %1472 = vmatprep.subr.mxu0 0.0
    %1473 = vmatpush2.msra.mxu0 0.0
    %1474 = vmatprep.subr.mxu0 0.0
    %1475 = vmatpush2.msra.mxu0 0.0
    %1476 = vmatprep.subr.mxu0 0.0
    %1477 = vmatpush2.msra.mxu0 0.0
    %1478 = vmatprep.subr.mxu0 0.0
    %1479 = vmatpush2.msra.mxu0 0.0
    %1480 = vmatprep.subr.mxu0 0.0
    %1481 = vmatpush2.msra.mxu0 0.0
    %1482 = vmatprep.subr.mxu0 0.0
    %1483 = vmatpush2.msra.mxu0 0.0
    %1484 = vmatprep.subr.mxu0 0.0
    %1485 = vmatpush2.msra.mxu0 0.0
    %1486 = vmatprep.subr.mxu0 0.0
    %1487 = vmatpush2.msra.mxu0 0.0
    %1488 = vmatprep.subr.mxu0 0.0
    %1489 = vmatpush2.msra.mxu0 0.0
    %1490 = vmatprep.subr.mxu0 0.0
    %1491 = vmatpush2.msra.mxu0 0.0
    %1492 = vmatprep.subr.mxu0 0.0
    %1493 = vmatpush2.msra.mxu0 0.0
    %1494 = vmatprep.subr.mxu0 0.0
    %1495 = vmatpush2.msra.mxu0 0.0
    %1496 = vmatprep.mubr.f32.mxu0 0.0
    %1497 = vmatmul.mubr.f32.gmra.mxu0 %v1430
    %v1498 = vpop.f32.mrf.mxu0
    %v1499 = vadd.f32 0.0, %v1498
    %v1500 = vpop.f32.mrf.mxu0
    %1501 = vdwg.mxu0
    %v1503 = vsel %vm352, %v1423, 0
    %v1506 = vsel %vm352, %v1499, 0
    %1508 = vmatprep.subr.mxu0 0.0
    %1509 = vmatpush1.msra.mxu0 0.0
    %1510 = vmatprep.subr.mxu0 0.0
    %1511 = vmatpush1.msra.mxu0 0.0
    %1512 = vmatprep.subr.mxu0 0.0
    %1513 = vmatpush1.msra.mxu0 0.0
    %1514 = vmatprep.subr.mxu0 0.0
    %1515 = vmatpush1.msra.mxu0 0.0
    %1516 = vmatprep.subr.mxu0 0.0
    %1517 = vmatpush1.msra.mxu0 0.0
    %1518 = vmatprep.subr.mxu0 0.0
    %1519 = vmatpush1.msra.mxu0 0.0
    %1520 = vmatprep.subr.mxu0 0.0
    %1521 = vmatpush1.msra.mxu0 0.0
    %1522 = vmatprep.subr.mxu0 0.0
    %1523 = vmatpush1.msra.mxu0 0.0
    %1524 = vmatprep.subr.mxu0 0.0
    %1525 = vmatpush1.msra.mxu0 0.0
    %1526 = vmatprep.subr.mxu0 0.0
    %1527 = vmatpush1.msra.mxu0 0.0
    %1528 = vmatprep.subr.mxu0 0.0
    %1529 = vmatpush1.msra.mxu0 0.0
    %1530 = vmatprep.subr.mxu0 0.0
    %1531 = vmatpush1.msra.mxu0 0.0
    %1532 = vmatprep.subr.mxu0 0.0
    %1533 = vmatpush1.msra.mxu0 0.0
    %1534 = vmatprep.subr.mxu0 0.0
    %1535 = vmatpush1.msra.mxu0 0.0
    %1536 = vmatprep.subr.mxu0 0.0
    %1537 = vmatpush1.msra.mxu0 0.0
    %1538 = vmatprep.subr.mxu0 0.0
    %1539 = vmatpush1.msra.mxu0 %v345
    %1540 = vmatprep.subr.mxu0 0.0
    %1541 = vmatpush2.msra.mxu0 0.0
    %1542 = vmatprep.subr.mxu0 0.0
    %1543 = vmatpush2.msra.mxu0 0.0
    %1544 = vmatprep.subr.mxu0 0.0
    %1545 = vmatpush2.msra.mxu0 0.0
    %1546 = vmatprep.subr.mxu0 0.0
    %1547 = vmatpush2.msra.mxu0 0.0
    %1548 = vmatprep.subr.mxu0 0.0
    %1549 = vmatpush2.msra.mxu0 0.0
    %1550 = vmatprep.subr.mxu0 0.0
    %1551 = vmatpush2.msra.mxu0 0.0
    %1552 = vmatprep.subr.mxu0 0.0
    %1553 = vmatpush2.msra.mxu0 0.0
    %1554 = vmatprep.subr.mxu0 0.0
    %1555 = vmatpush2.msra.mxu0 0.0
    %1556 = vmatprep.subr.mxu0 0.0
    %1557 = vmatpush2.msra.mxu0 0.0
    %1558 = vmatprep.subr.mxu0 0.0
    %1559 = vmatpush2.msra.mxu0 0.0
    %1560 = vmatprep.subr.mxu0 0.0
    %1561 = vmatpush2.msra.mxu0 0.0
    %1562 = vmatprep.subr.mxu0 0.0
    %1563 = vmatpush2.msra.mxu0 0.0
    %1564 = vmatprep.subr.mxu0 0.0
    %1565 = vmatpush2.msra.mxu0 0.0
    %1566 = vmatprep.subr.mxu0 0.0
    %1567 = vmatpush2.msra.mxu0 0.0
    %1568 = vmatprep.subr.mxu0 0.0
    %1569 = vmatpush2.msra.mxu0 0.0
    %1570 = vmatprep.subr.mxu0 0.0
    %1571 = vmatpush2.msra.mxu0 0.0
    %1572 = vmatprep.mubr.f32.mxu0 0.0
    %1573 = vmatmul.mubr.f32.gmra.mxu0 %v1503
    %v1574 = vpop.f32.mrf.mxu0
    %v1575 = vadd.f32 0.0, %v1574
    %v1576 = vpop.f32.mrf.mxu0
    %1577 = vmatprep.mubr.f32.mxu0 0.0
    %1578 = vmatmul.mubr.f32.gmra.mxu0 %v1506
    %v1579 = vpop.f32.mrf.mxu0
    %v1580 = vadd.f32 0.0, %v1579
    %v1581 = vpop.f32.mrf.mxu0
    %1582 = vdwg.mxu0
    %v1583 = vadd.f32 %v1164, %v1575
    %v1584 = vadd.f32 %v1169, %v1580
    %1585 = vrot.lane.b32.xlu0 %v347, 104
    %v1586 = vpop.permute.xlu0 %1585
    %1587 = vrot.lane.b32.xlu0 %v335, 72
    %v1588 = vpop.permute.xlu0 %1587
    %v1589 = vsel %vm352, %v1586, 0
    %v1591 = vsel %vm352, %v1588, 0
    %1593 = vmatprep.subr.mxu0 0.0
    %1594 = vmatpush1.xpose.msra.mxu0 0.0
    %1595 = vmatprep.subr.mxu0 0.0
    %1596 = vmatpush1.xpose.msra.mxu0 0.0
    %1597 = vmatprep.subr.mxu0 0.0
    %1598 = vmatpush1.xpose.msra.mxu0 0.0
    %1599 = vmatprep.subr.mxu0 0.0
    %1600 = vmatpush1.xpose.msra.mxu0 0.0
    %1601 = vmatprep.subr.mxu0 0.0
    %1602 = vmatpush1.xpose.msra.mxu0 0.0
    %1603 = vmatprep.subr.mxu0 0.0
    %1604 = vmatpush1.xpose.msra.mxu0 0.0
    %1605 = vmatprep.subr.mxu0 0.0
    %1606 = vmatpush1.xpose.msra.mxu0 0.0
    %1607 = vmatprep.subr.mxu0 0.0
    %1608 = vmatpush1.xpose.msra.mxu0 0.0
    %1609 = vmatprep.subr.mxu0 0.0
    %1610 = vmatpush1.xpose.msra.mxu0 0.0
    %1611 = vmatprep.subr.mxu0 0.0
    %1612 = vmatpush1.xpose.msra.mxu0 0.0
    %1613 = vmatprep.subr.mxu0 0.0
    %1614 = vmatpush1.xpose.msra.mxu0 0.0
    %1615 = vmatprep.subr.mxu0 0.0
    %1616 = vmatpush1.xpose.msra.mxu0 0.0
    %1617 = vmatprep.subr.mxu0 0.0
    %1618 = vmatpush1.xpose.msra.mxu0 0.0
    %1619 = vmatprep.subr.mxu0 0.0
    %1620 = vmatpush1.xpose.msra.mxu0 0.0
    %1621 = vmatprep.subr.mxu0 0.0
    %1622 = vmatpush1.xpose.msra.mxu0 0.0
    %1623 = vmatprep.subr.mxu0 0.0
    %1624 = vmatpush1.xpose.msra.mxu0 %v1591
    %1625 = vmatprep.subr.mxu0 0.0
    %1626 = vmatpush2.xpose.msra.mxu0 0.0
    %1627 = vmatprep.subr.mxu0 0.0
    %1628 = vmatpush2.xpose.msra.mxu0 0.0
    %1629 = vmatprep.subr.mxu0 0.0
    %1630 = vmatpush2.xpose.msra.mxu0 0.0
    %1631 = vmatprep.subr.mxu0 0.0
    %1632 = vmatpush2.xpose.msra.mxu0 0.0
    %1633 = vmatprep.subr.mxu0 0.0
    %1634 = vmatpush2.xpose.msra.mxu0 0.0
    %1635 = vmatprep.subr.mxu0 0.0
    %1636 = vmatpush2.xpose.msra.mxu0 0.0
    %1637 = vmatprep.subr.mxu0 0.0
    %1638 = vmatpush2.xpose.msra.mxu0 0.0
    %1639 = vmatprep.subr.mxu0 0.0
    %1640 = vmatpush2.xpose.msra.mxu0 0.0
    %1641 = vmatprep.subr.mxu0 0.0
    %1642 = vmatpush2.xpose.msra.mxu0 0.0
    %1643 = vmatprep.subr.mxu0 0.0
    %1644 = vmatpush2.xpose.msra.mxu0 0.0
    %1645 = vmatprep.subr.mxu0 0.0
    %1646 = vmatpush2.xpose.msra.mxu0 0.0
    %1647 = vmatprep.subr.mxu0 0.0
    %1648 = vmatpush2.xpose.msra.mxu0 0.0
    %1649 = vmatprep.subr.mxu0 0.0
    %1650 = vmatpush2.xpose.msra.mxu0 0.0
    %1651 = vmatprep.subr.mxu0 0.0
    %1652 = vmatpush2.xpose.msra.mxu0 0.0
    %1653 = vmatprep.subr.mxu0 0.0
    %1654 = vmatpush2.xpose.msra.mxu0 0.0
    %1655 = vmatprep.subr.mxu0 0.0
    %1656 = vmatpush2.xpose.msra.mxu0 0.0
    %1657 = vmatprep.mubr.f32.mxu0 0.0
    %1658 = vmatmul.mubr.f32.gmra.mxu0 %v1589
    %v1659 = vpop.f32.mrf.mxu0
    %v1660 = vadd.f32 %v175, %v1659
    %v1661 = vpop.f32.mrf.mxu0
    %1662 = vdwg.mxu0
    %1663 = vrot.lane.b32.xlu0 %v348, 104
    %v1664 = vpop.permute.xlu0 %1663
    %1665 = vrot.lane.b32.xlu0 %v340, 72
    %v1666 = vpop.permute.xlu0 %1665
    %v1667 = vsel %vm352, %v1664, 0
    %v1669 = vsel %vm352, %v1666, 0
    %1671 = vmatprep.subr.mxu0 0.0
    %1672 = vmatpush1.xpose.msra.mxu0 0.0
    %1673 = vmatprep.subr.mxu0 0.0
    %1674 = vmatpush1.xpose.msra.mxu0 0.0
    %1675 = vmatprep.subr.mxu0 0.0
    %1676 = vmatpush1.xpose.msra.mxu0 0.0
    %1677 = vmatprep.subr.mxu0 0.0
    %1678 = vmatpush1.xpose.msra.mxu0 0.0
    %1679 = vmatprep.subr.mxu0 0.0
    %1680 = vmatpush1.xpose.msra.mxu0 0.0
    %1681 = vmatprep.subr.mxu0 0.0
    %1682 = vmatpush1.xpose.msra.mxu0 0.0
    %1683 = vmatprep.subr.mxu0 0.0
    %1684 = vmatpush1.xpose.msra.mxu0 0.0
    %1685 = vmatprep.subr.mxu0 0.0
    %1686 = vmatpush1.xpose.msra.mxu0 0.0
    %1687 = vmatprep.subr.mxu0 0.0
    %1688 = vmatpush1.xpose.msra.mxu0 0.0
    %1689 = vmatprep.subr.mxu0 0.0
    %1690 = vmatpush1.xpose.msra.mxu0 0.0
    %1691 = vmatprep.subr.mxu0 0.0
    %1692 = vmatpush1.xpose.msra.mxu0 0.0
    %1693 = vmatprep.subr.mxu0 0.0
    %1694 = vmatpush1.xpose.msra.mxu0 0.0
    %1695 = vmatprep.subr.mxu0 0.0
    %1696 = vmatpush1.xpose.msra.mxu0 0.0
    %1697 = vmatprep.subr.mxu0 0.0
    %1698 = vmatpush1.xpose.msra.mxu0 0.0
    %1699 = vmatprep.subr.mxu0 0.0
    %1700 = vmatpush1.xpose.msra.mxu0 0.0
    %1701 = vmatprep.subr.mxu0 0.0
    %1702 = vmatpush1.xpose.msra.mxu0 %v1669
    %1703 = vmatprep.subr.mxu0 0.0
    %1704 = vmatpush2.xpose.msra.mxu0 0.0
    %1705 = vmatprep.subr.mxu0 0.0
    %1706 = vmatpush2.xpose.msra.mxu0 0.0
    %1707 = vmatprep.subr.mxu0 0.0
    %1708 = vmatpush2.xpose.msra.mxu0 0.0
    %1709 = vmatprep.subr.mxu0 0.0
    %1710 = vmatpush2.xpose.msra.mxu0 0.0
    %1711 = vmatprep.subr.mxu0 0.0
    %1712 = vmatpush2.xpose.msra.mxu0 0.0
    %1713 = vmatprep.subr.mxu0 0.0
    %1714 = vmatpush2.xpose.msra.mxu0 0.0
    %1715 = vmatprep.subr.mxu0 0.0
    %1716 = vmatpush2.xpose.msra.mxu0 0.0
    %1717 = vmatprep.subr.mxu0 0.0
    %1718 = vmatpush2.xpose.msra.mxu0 0.0
    %1719 = vmatprep.subr.mxu0 0.0
    %1720 = vmatpush2.xpose.msra.mxu0 0.0
    %1721 = vmatprep.subr.mxu0 0.0
    %1722 = vmatpush2.xpose.msra.mxu0 0.0
    %1723 = vmatprep.subr.mxu0 0.0
    %1724 = vmatpush2.xpose.msra.mxu0 0.0
    %1725 = vmatprep.subr.mxu0 0.0
    %1726 = vmatpush2.xpose.msra.mxu0 0.0
    %1727 = vmatprep.subr.mxu0 0.0
    %1728 = vmatpush2.xpose.msra.mxu0 0.0
    %1729 = vmatprep.subr.mxu0 0.0
    %1730 = vmatpush2.xpose.msra.mxu0 0.0
    %1731 = vmatprep.subr.mxu0 0.0
    %1732 = vmatpush2.xpose.msra.mxu0 0.0
    %1733 = vmatprep.subr.mxu0 0.0
    %1734 = vmatpush2.xpose.msra.mxu0 0.0
    %1735 = vmatprep.mubr.f32.mxu0 0.0
    %1736 = vmatmul.mubr.f32.gmra.mxu0 %v1667
    %v1737 = vpop.f32.mrf.mxu0
    %v1738 = vadd.f32 %v176, %v1737
    %v1739 = vpop.f32.mrf.mxu0
    %1740 = vdwg.mxu0
    %v1741 = vsel %vm352, %v1660, -inf
    %1742 = vmax.xlane.f32.xlu0 %v1741
    %v1743 = vpop.xlane.xlu0 %1742
    %v1744 = vsel %vm352, %v1738, -inf
    %1745 = vmax.xlane.f32.xlu0 %v1744
    %v1746 = vpop.xlane.xlu0 %1745
    %v1747 = vsub.f32 %v1660, %v1743
    %v1748 = vsub.f32 %v1738, %v1746
    %v1749 = vmul.f32 %v1747, 1.442695
    %v1750 = vpow.pop %v1749
    %v1751 = vmul.f32 %v1748, 1.442695
    %v1752 = vpow.pop %v1751
    %v1753 = vsel %vm352, %v1750, 0.0
    %1754 = vadd.xlane.f32.xlu0 %v1753
    %v1755 = vpop.xlane.xlu0 %1754
    %v1756 = vsel %vm352, %v1752, 0.0
    %1757 = vadd.xlane.f32.xlu0 %v1756
    %v1758 = vpop.xlane.xlu0 %1757
    %v1759 = vrcp.pop %v1755
    %v1760 = vrcp.pop %v1758
    %v1761 = vmul.f32 %v1750, %v1759
    %v1762 = vmul.f32 %v1752, %v1760
    %1763 = vrot.lane.b32.xlu0 %v335, 40
    %v1764 = vpop.permute.xlu0 %1763
    %v1767 = vsel %vm352, %v1761, 0
    %1769 = vmatprep.subr.mxu0 0.0
    %1770 = vmatpush1.msra.mxu0 0.0
    %1771 = vmatprep.subr.mxu0 0.0
    %1772 = vmatpush1.msra.mxu0 0.0
    %1773 = vmatprep.subr.mxu0 0.0
    %1774 = vmatpush1.msra.mxu0 0.0
    %1775 = vmatprep.subr.mxu0 0.0
    %1776 = vmatpush1.msra.mxu0 0.0
    %1777 = vmatprep.subr.mxu0 0.0
    %1778 = vmatpush1.msra.mxu0 0.0
    %1779 = vmatprep.subr.mxu0 0.0
    %1780 = vmatpush1.msra.mxu0 0.0
    %1781 = vmatprep.subr.mxu0 0.0
    %1782 = vmatpush1.msra.mxu0 0.0
    %1783 = vmatprep.subr.mxu0 0.0
    %1784 = vmatpush1.msra.mxu0 0.0
    %1785 = vmatprep.subr.mxu0 0.0
    %1786 = vmatpush1.msra.mxu0 0.0
    %1787 = vmatprep.subr.mxu0 0.0
    %1788 = vmatpush1.msra.mxu0 0.0
    %1789 = vmatprep.subr.mxu0 0.0
    %1790 = vmatpush1.msra.mxu0 0.0
    %1791 = vmatprep.subr.mxu0 0.0
    %1792 = vmatpush1.msra.mxu0 0.0
    %1793 = vmatprep.subr.mxu0 0.0
    %1794 = vmatpush1.msra.mxu0 0.0
    %1795 = vmatprep.subr.mxu0 0.0
    %1796 = vmatpush1.msra.mxu0 0.0
    %1797 = vmatprep.subr.mxu0 0.0
    %1798 = vmatpush1.msra.mxu0 0.0
    %1799 = vmatprep.subr.mxu0 0.0
    %1800 = vmatpush1.msra.mxu0 %v1764
    %1801 = vmatprep.subr.mxu0 0.0
    %1802 = vmatpush2.msra.mxu0 0.0
    %1803 = vmatprep.subr.mxu0 0.0
    %1804 = vmatpush2.msra.mxu0 0.0
    %1805 = vmatprep.subr.mxu0 0.0
    %1806 = vmatpush2.msra.mxu0 0.0
    %1807 = vmatprep.subr.mxu0 0.0
    %1808 = vmatpush2.msra.mxu0 0.0
    %1809 = vmatprep.subr.mxu0 0.0
    %1810 = vmatpush2.msra.mxu0 0.0
    %1811 = vmatprep.subr.mxu0 0.0
    %1812 = vmatpush2.msra.mxu0 0.0
    %1813 = vmatprep.subr.mxu0 0.0
    %1814 = vmatpush2.msra.mxu0 0.0
    %1815 = vmatprep.subr.mxu0 0.0
    %1816 = vmatpush2.msra.mxu0 0.0
    %1817 = vmatprep.subr.mxu0 0.0
    %1818 = vmatpush2.msra.mxu0 0.0
    %1819 = vmatprep.subr.mxu0 0.0
    %1820 = vmatpush2.msra.mxu0 0.0
    %1821 = vmatprep.subr.mxu0 0.0
    %1822 = vmatpush2.msra.mxu0 0.0
    %1823 = vmatprep.subr.mxu0 0.0
    %1824 = vmatpush2.msra.mxu0 0.0
    %1825 = vmatprep.subr.mxu0 0.0
    %1826 = vmatpush2.msra.mxu0 0.0
    %1827 = vmatprep.subr.mxu0 0.0
    %1828 = vmatpush2.msra.mxu0 0.0
    %1829 = vmatprep.subr.mxu0 0.0
    %1830 = vmatpush2.msra.mxu0 0.0
    %1831 = vmatprep.subr.mxu0 0.0
    %1832 = vmatpush2.msra.mxu0 0.0
    %1833 = vmatprep.mubr.f32.mxu0 0.0
    %1834 = vmatmul.mubr.f32.gmra.mxu0 %v1767
    %v1835 = vpop.f32.mrf.mxu0
    %v1836 = vadd.f32 0.0, %v1835
    %v1837 = vpop.f32.mrf.mxu0
    %1838 = vdwg.mxu0
    %1839 = vrot.lane.b32.xlu0 %v340, 40
    %v1840 = vpop.permute.xlu0 %1839
    %v1843 = vsel %vm352, %v1762, 0
    %1845 = vmatprep.subr.mxu0 0.0
    %1846 = vmatpush1.msra.mxu0 0.0
    %1847 = vmatprep.subr.mxu0 0.0
    %1848 = vmatpush1.msra.mxu0 0.0
    %1849 = vmatprep.subr.mxu0 0.0
    %1850 = vmatpush1.msra.mxu0 0.0
    %1851 = vmatprep.subr.mxu0 0.0
    %1852 = vmatpush1.msra.mxu0 0.0
    %1853 = vmatprep.subr.mxu0 0.0
    %1854 = vmatpush1.msra.mxu0 0.0
    %1855 = vmatprep.subr.mxu0 0.0
    %1856 = vmatpush1.msra.mxu0 0.0
    %1857 = vmatprep.subr.mxu0 0.0
    %1858 = vmatpush1.msra.mxu0 0.0
    %1859 = vmatprep.subr.mxu0 0.0
    %1860 = vmatpush1.msra.mxu0 0.0
    %1861 = vmatprep.subr.mxu0 0.0
    %1862 = vmatpush1.msra.mxu0 0.0
    %1863 = vmatprep.subr.mxu0 0.0
    %1864 = vmatpush1.msra.mxu0 0.0
    %1865 = vmatprep.subr.mxu0 0.0
    %1866 = vmatpush1.msra.mxu0 0.0
    %1867 = vmatprep.subr.mxu0 0.0
    %1868 = vmatpush1.msra.mxu0 0.0
    %1869 = vmatprep.subr.mxu0 0.0
    %1870 = vmatpush1.msra.mxu0 0.0
    %1871 = vmatprep.subr.mxu0 0.0
    %1872 = vmatpush1.msra.mxu0 0.0
    %1873 = vmatprep.subr.mxu0 0.0
    %1874 = vmatpush1.msra.mxu0 0.0
    %1875 = vmatprep.subr.mxu0 0.0
    %1876 = vmatpush1.msra.mxu0 %v1840
    %1877 = vmatprep.subr.mxu0 0.0
    %1878 = vmatpush2.msra.mxu0 0.0
    %1879 = vmatprep.subr.mxu0 0.0
    %1880 = vmatpush2.msra.mxu0 0.0
    %1881 = vmatprep.subr.mxu0 0.0
    %1882 = vmatpush2.msra.mxu0 0.0
    %1883 = vmatprep.subr.mxu0 0.0
    %1884 = vmatpush2.msra.mxu0 0.0
    %1885 = vmatprep.subr.mxu0 0.0
    %1886 = vmatpush2.msra.mxu0 0.0
    %1887 = vmatprep.subr.mxu0 0.0
    %1888 = vmatpush2.msra.mxu0 0.0
    %1889 = vmatprep.subr.mxu0 0.0
    %1890 = vmatpush2.msra.mxu0 0.0
    %1891 = vmatprep.subr.mxu0 0.0
    %1892 = vmatpush2.msra.mxu0 0.0
    %1893 = vmatprep.subr.mxu0 0.0
    %1894 = vmatpush2.msra.mxu0 0.0
    %1895 = vmatprep.subr.mxu0 0.0
    %1896 = vmatpush2.msra.mxu0 0.0
    %1897 = vmatprep.subr.mxu0 0.0
    %1898 = vmatpush2.msra.mxu0 0.0
    %1899 = vmatprep.subr.mxu0 0.0
    %1900 = vmatpush2.msra.mxu0 0.0
    %1901 = vmatprep.subr.mxu0 0.0
    %1902 = vmatpush2.msra.mxu0 0.0
    %1903 = vmatprep.subr.mxu0 0.0
    %1904 = vmatpush2.msra.mxu0 0.0
    %1905 = vmatprep.subr.mxu0 0.0
    %1906 = vmatpush2.msra.mxu0 0.0
    %1907 = vmatprep.subr.mxu0 0.0
    %1908 = vmatpush2.msra.mxu0 0.0
    %1909 = vmatprep.mubr.f32.mxu0 0.0
    %1910 = vmatmul.mubr.f32.gmra.mxu0 %v1843
    %v1911 = vpop.f32.mrf.mxu0
    %v1912 = vadd.f32 0.0, %v1911
    %v1913 = vpop.f32.mrf.mxu0
    %1914 = vdwg.mxu0
    %v1916 = vsel %vm352, %v1836, 0
    %v1919 = vsel %vm352, %v1912, 0
    %1921 = vmatprep.subr.mxu0 0.0
    %1922 = vmatpush1.msra.mxu0 0.0
    %1923 = vmatprep.subr.mxu0 0.0
    %1924 = vmatpush1.msra.mxu0 0.0
    %1925 = vmatprep.subr.mxu0 0.0
    %1926 = vmatpush1.msra.mxu0 0.0
    %1927 = vmatprep.subr.mxu0 0.0
    %1928 = vmatpush1.msra.mxu0 0.0
    %1929 = vmatprep.subr.mxu0 0.0
    %1930 = vmatpush1.msra.mxu0 0.0
    %1931 = vmatprep.subr.mxu0 0.0
    %1932 = vmatpush1.msra.mxu0 0.0
    %1933 = vmatprep.subr.mxu0 0.0
    %1934 = vmatpush1.msra.mxu0 0.0
    %1935 = vmatprep.subr.mxu0 0.0
    %1936 = vmatpush1.msra.mxu0 0.0
    %1937 = vmatprep.subr.mxu0 0.0
    %1938 = vmatpush1.msra.mxu0 0.0
    %1939 = vmatprep.subr.mxu0 0.0
    %1940 = vmatpush1.msra.mxu0 0.0
    %1941 = vmatprep.subr.mxu0 0.0
    %1942 = vmatpush1.msra.mxu0 0.0
    %1943 = vmatprep.subr.mxu0 0.0
    %1944 = vmatpush1.msra.mxu0 0.0
    %1945 = vmatprep.subr.mxu0 0.0
    %1946 = vmatpush1.msra.mxu0 0.0
    %1947 = vmatprep.subr.mxu0 0.0
    %1948 = vmatpush1.msra.mxu0 0.0
    %1949 = vmatprep.subr.mxu0 0.0
    %1950 = vmatpush1.msra.mxu0 0.0
    %1951 = vmatprep.subr.mxu0 0.0
    %1952 = vmatpush1.msra.mxu0 %v346
    %1953 = vmatprep.subr.mxu0 0.0
    %1954 = vmatpush2.msra.mxu0 0.0
    %1955 = vmatprep.subr.mxu0 0.0
    %1956 = vmatpush2.msra.mxu0 0.0
    %1957 = vmatprep.subr.mxu0 0.0
    %1958 = vmatpush2.msra.mxu0 0.0
    %1959 = vmatprep.subr.mxu0 0.0
    %1960 = vmatpush2.msra.mxu0 0.0
    %1961 = vmatprep.subr.mxu0 0.0
    %1962 = vmatpush2.msra.mxu0 0.0
    %1963 = vmatprep.subr.mxu0 0.0
    %1964 = vmatpush2.msra.mxu0 0.0
    %1965 = vmatprep.subr.mxu0 0.0
    %1966 = vmatpush2.msra.mxu0 0.0
    %1967 = vmatprep.subr.mxu0 0.0
    %1968 = vmatpush2.msra.mxu0 0.0
    %1969 = vmatprep.subr.mxu0 0.0
    %1970 = vmatpush2.msra.mxu0 0.0
    %1971 = vmatprep.subr.mxu0 0.0
    %1972 = vmatpush2.msra.mxu0 0.0
    %1973 = vmatprep.subr.mxu0 0.0
    %1974 = vmatpush2.msra.mxu0 0.0
    %1975 = vmatprep.subr.mxu0 0.0
    %1976 = vmatpush2.msra.mxu0 0.0
    %1977 = vmatprep.subr.mxu0 0.0
    %1978 = vmatpush2.msra.mxu0 0.0
    %1979 = vmatprep.subr.mxu0 0.0
    %1980 = vmatpush2.msra.mxu0 0.0
    %1981 = vmatprep.subr.mxu0 0.0
    %1982 = vmatpush2.msra.mxu0 0.0
    %1983 = vmatprep.subr.mxu0 0.0
    %1984 = vmatpush2.msra.mxu0 0.0
    %1985 = vmatprep.mubr.f32.mxu0 0.0
    %1986 = vmatmul.mubr.f32.gmra.mxu0 %v1916
    %v1987 = vpop.f32.mrf.mxu0
    %v1988 = vadd.f32 0.0, %v1987
    %v1989 = vpop.f32.mrf.mxu0
    %1990 = vmatprep.mubr.f32.mxu0 0.0
    %1991 = vmatmul.mubr.f32.gmra.mxu0 %v1919
    %v1992 = vpop.f32.mrf.mxu0
    %v1993 = vadd.f32 0.0, %v1992
    %v1994 = vpop.f32.mrf.mxu0
    %1995 = vdwg.mxu0
    %v1996 = vadd.f32 %v1583, %v1988
    %v1997 = vadd.f32 %v1584, %v1993
    %v1998 = vadd.f32 %v167, %v1996
    %v1999 = vadd.f32 %v168, %v1997
    %v2000 = vld [vmem:[#allocation8] sm:$0x1]
    %v2002 = vlaneseq
    %v2003 = vshrl.u32 %v2002, 7
    %v2004 = vsub.s32 0, %v2003
    %v2005 = vrot.slane %v2000, %v2004
    %v2007 = vadd.f32 %v1998, %v2005
    %v2008 = vadd.f32 %v1999, %v2005
    %v2009 = vsel %vm197, %v2007, 0.0
    %2010 = vadd.xlane.f32.xlu0 %v2009
    %v2011 = vpop.xlane.xlu0 %2010
    %v2012 = vsel %vm197, %v2008, 0.0
    %2013 = vadd.xlane.f32.xlu0 %v2012
    %v2014 = vpop.xlane.xlu0 %2013
    %v2015 = vmul.f32 %v2011, %v204
    %v2016 = vmul.f32 %v2014, %v204
    %v2017 = vsub.f32 %v2007, %v2015
    %v2018 = vsub.f32 %v2008, %v2016
    %v2019 = vmul.f32 %v2017, %v2017
    %v2020 = vmul.f32 %v2018, %v2018
    %v2021 = vsel %vm197, %v2019, 0.0
    %2022 = vadd.xlane.f32.xlu0 %v2021
    %v2023 = vpop.xlane.xlu0 %2022
    %v2024 = vsel %vm197, %v2020, 0.0
    %2025 = vadd.xlane.f32.xlu0 %v2024
    %v2026 = vpop.xlane.xlu0 %2025
    %v2027 = vmul.f32 %v2023, 0.032258064
    %v2028 = vmul.f32 %v2026, 0.032258064
    %v2029 = vrsqrt.pop %v2027
    %v2030 = vmul.f32 %v2027, %v2029
    %vm2031 = vcmp.eq.f32.partialorder %v2027, inf
    %v2032 = vsel %vm2031, %v2027, %v2030
    %vm2033 = vcmp.eq.f32.partialorder %v2027, 0.0
    %v2034 = vand.u32 %v2027, 2147483648
    %v2035 = vsel %vm2033, %v2034, %v2032
    %v2036 = vrsqrt.pop %v2028
    %v2037 = vmul.f32 %v2028, %v2036
    %vm2038 = vcmp.eq.f32.partialorder %v2028, inf
    %v2039 = vsel %vm2038, %v2028, %v2037
    %vm2040 = vcmp.eq.f32.partialorder %v2028, 0.0
    %v2041 = vand.u32 %v2028, 2147483648
    %v2042 = vsel %vm2040, %v2041, %v2039
    %v2043 = vadd.f32 %v2035, 1e-06
    %v2044 = vadd.f32 %v2042, 1e-06
    %v2045 = vrcp.pop %v2043
    %v2046 = vrcp.pop %v2044
    %v2047 = vlaneseq
    %v2048 = vshrl.u32 %v2047, 7
    %v2049 = vsub.s32 1, %v2048
    %v2050 = vrot.slane %v195, %v2049
    %v2051 = vmul.f32 %v2050, %v2017
    %v2052 = vmul.f32 %v2050, %v2018
    %v2053 = vmul.f32 %v2051, %v2045
    %v2054 = vmul.f32 %v2052, %v2046
    %v2055 = vlaneseq
    %v2056 = vshrl.u32 %v2055, 7
    %v2057 = vsub.s32 1, %v2056
    %v2058 = vrot.slane %v196, %v2057
    %v2059 = vadd.f32 %v2053, %v2058
    %v2060 = vadd.f32 %v2054, %v2058
    %v2061 = vld [vmem:[%s8] sm:$0xff]
    %v2062 = vld [vmem:[%s8 + $0x8] sm:$0xff]
    %v2063 = vld [vmem:[%s8 + $0x10] sm:$0xff]
    %v2064 = vld [vmem:[%s8 + $0x18] sm:$0xff]
    %v2065 = vld [vmem:[%s9] sm:$0x1]
    %v2067 = vlaneseq
    %v2068 = vshrl.u32 %v2067, 7
    %v2069 = vsub.s32 0, %v2068
    %v2070 = vrot.slane %v2065, %v2069
    %v2073 = vsel %vm197, %v2059, 0
    %v2076 = vsel %vm197, %v2060, 0
    %2078 = vmatprep.subr.mxu0 0.0
    %2079 = vmatpush1.msra.mxu0 0.0
    %2080 = vmatprep.subr.mxu0 0.0
    %2081 = vmatpush1.msra.mxu0 0.0
    %2082 = vmatprep.subr.mxu0 0.0
    %2083 = vmatpush1.msra.mxu0 0.0
    %2084 = vmatprep.subr.mxu0 0.0
    %2085 = vmatpush1.msra.mxu0 0.0
    %2086 = vmatprep.subr.mxu0 0.0
    %2087 = vmatpush1.msra.mxu0 0.0
    %2088 = vmatprep.subr.mxu0 0.0
    %2089 = vmatpush1.msra.mxu0 0.0
    %2090 = vmatprep.subr.mxu0 0.0
    %2091 = vmatpush1.msra.mxu0 0.0
    %2092 = vmatprep.subr.mxu0 0.0
    %2093 = vmatpush1.msra.mxu0 0.0
    %2094 = vmatprep.subr.mxu0 0.0
    %2095 = vmatpush1.msra.mxu0 0.0
    %2096 = vmatprep.subr.mxu0 0.0
    %2097 = vmatpush1.msra.mxu0 0.0
    %2098 = vmatprep.subr.mxu0 0.0
    %2099 = vmatpush1.msra.mxu0 0.0
    %2100 = vmatprep.subr.mxu0 0.0
    %2101 = vmatpush1.msra.mxu0 0.0
    %2102 = vmatprep.subr.mxu0 0.0
    %2103 = vmatpush1.msra.mxu0 %v2064
    %2104 = vmatprep.subr.mxu0 0.0
    %2105 = vmatpush1.msra.mxu0 %v2063
    %2106 = vmatprep.subr.mxu0 0.0
    %2107 = vmatpush1.msra.mxu0 %v2062
    %2108 = vmatprep.subr.mxu0 0.0
    %2109 = vmatpush1.msra.mxu0 %v2061
    %2110 = vmatprep.subr.mxu0 0.0
    %2111 = vmatpush2.msra.mxu0 0.0
    %2112 = vmatprep.subr.mxu0 0.0
    %2113 = vmatpush2.msra.mxu0 0.0
    %2114 = vmatprep.subr.mxu0 0.0
    %2115 = vmatpush2.msra.mxu0 0.0
    %2116 = vmatprep.subr.mxu0 0.0
    %2117 = vmatpush2.msra.mxu0 0.0
    %2118 = vmatprep.subr.mxu0 0.0
    %2119 = vmatpush2.msra.mxu0 0.0
    %2120 = vmatprep.subr.mxu0 0.0
    %2121 = vmatpush2.msra.mxu0 0.0
    %2122 = vmatprep.subr.mxu0 0.0
    %2123 = vmatpush2.msra.mxu0 0.0
    %2124 = vmatprep.subr.mxu0 0.0
    %2125 = vmatpush2.msra.mxu0 0.0
    %2126 = vmatprep.subr.mxu0 0.0
    %2127 = vmatpush2.msra.mxu0 0.0
    %2128 = vmatprep.subr.mxu0 0.0
    %2129 = vmatpush2.msra.mxu0 0.0
    %2130 = vmatprep.subr.mxu0 0.0
    %2131 = vmatpush2.msra.mxu0 0.0
    %2132 = vmatprep.subr.mxu0 0.0
    %2133 = vmatpush2.msra.mxu0 0.0
    %2134 = vmatprep.subr.mxu0 0.0
    %2135 = vmatpush2.msra.mxu0 0.0
    %2136 = vmatprep.subr.mxu0 0.0
    %2137 = vmatpush2.msra.mxu0 0.0
    %2138 = vmatprep.subr.mxu0 0.0
    %2139 = vmatpush2.msra.mxu0 0.0
    %2140 = vmatprep.subr.mxu0 0.0
    %2141 = vmatpush2.msra.mxu0 0.0
    %2142 = vmatprep.mubr.f32.mxu0 0.0
    %2143 = vmatmul.mubr.f32.gmra.mxu0 %v2073
    %v2144 = vpop.f32.mrf.mxu0
    %v2145 = vadd.f32 %v2070, %v2144
    %v2146 = vpop.f32.mrf.mxu0
    %2147 = vmatprep.mubr.f32.mxu0 0.0
    %2148 = vmatmul.mubr.f32.gmra.mxu0 %v2076
    %v2149 = vpop.f32.mrf.mxu0
    %v2150 = vadd.f32 %v2070, %v2149
    %v2151 = vpop.f32.mrf.mxu0
    %2152 = vdwg.mxu0
    %v2153 = vld [vmem:[#allocation10] sm:$0xff]
    %v2154 = vld [vmem:[#allocation10 + $0x8] sm:$0xff]
    %v2155 = vld [vmem:[#allocation10 + $0x10] sm:$0xff]
    %v2156 = vld [vmem:[#allocation10 + $0x18] sm:$0xff]
    %v2157 = vld [vmem:[%s11] sm:$0x1]
    %v2159 = vlaneseq
    %v2160 = vshrl.u32 %v2159, 7
    %v2161 = vsub.s32 0, %v2160
    %v2162 = vrot.slane %v2157, %v2161
    %v2165 = vsel %vm197, %v169, 0
    %v2168 = vsel %vm197, %v170, 0
    %2170 = vmatprep.subr.mxu0 0.0
    %2171 = vmatpush1.msra.mxu0 0.0
    %2172 = vmatprep.subr.mxu0 0.0
    %2173 = vmatpush1.msra.mxu0 0.0
    %2174 = vmatprep.subr.mxu0 0.0
    %2175 = vmatpush1.msra.mxu0 0.0
    %2176 = vmatprep.subr.mxu0 0.0
    %2177 = vmatpush1.msra.mxu0 0.0
    %2178 = vmatprep.subr.mxu0 0.0
    %2179 = vmatpush1.msra.mxu0 0.0
    %2180 = vmatprep.subr.mxu0 0.0
    %2181 = vmatpush1.msra.mxu0 0.0
    %2182 = vmatprep.subr.mxu0 0.0
    %2183 = vmatpush1.msra.mxu0 0.0
    %2184 = vmatprep.subr.mxu0 0.0
    %2185 = vmatpush1.msra.mxu0 0.0
    %2186 = vmatprep.subr.mxu0 0.0
    %2187 = vmatpush1.msra.mxu0 0.0
    %2188 = vmatprep.subr.mxu0 0.0
    %2189 = vmatpush1.msra.mxu0 0.0
    %2190 = vmatprep.subr.mxu0 0.0
    %2191 = vmatpush1.msra.mxu0 0.0
    %2192 = vmatprep.subr.mxu0 0.0
    %2193 = vmatpush1.msra.mxu0 0.0
    %2194 = vmatprep.subr.mxu0 0.0
    %2195 = vmatpush1.msra.mxu0 %v2156
    %2196 = vmatprep.subr.mxu0 0.0
    %2197 = vmatpush1.msra.mxu0 %v2155
    %2198 = vmatprep.subr.mxu0 0.0
    %2199 = vmatpush1.msra.mxu0 %v2154
    %2200 = vmatprep.subr.mxu0 0.0
    %2201 = vmatpush1.msra.mxu0 %v2153
    %2202 = vmatprep.subr.mxu0 0.0
    %2203 = vmatpush2.msra.mxu0 0.0
    %2204 = vmatprep.subr.mxu0 0.0
    %2205 = vmatpush2.msra.mxu0 0.0
    %2206 = vmatprep.subr.mxu0 0.0
    %2207 = vmatpush2.msra.mxu0 0.0
    %2208 = vmatprep.subr.mxu0 0.0
    %2209 = vmatpush2.msra.mxu0 0.0
    %2210 = vmatprep.subr.mxu0 0.0
    %2211 = vmatpush2.msra.mxu0 0.0
    %2212 = vmatprep.subr.mxu0 0.0
    %2213 = vmatpush2.msra.mxu0 0.0
    %2214 = vmatprep.subr.mxu0 0.0
    %2215 = vmatpush2.msra.mxu0 0.0
    %2216 = vmatprep.subr.mxu0 0.0
    %2217 = vmatpush2.msra.mxu0 0.0
    %2218 = vmatprep.subr.mxu0 0.0
    %2219 = vmatpush2.msra.mxu0 0.0
    %2220 = vmatprep.subr.mxu0 0.0
    %2221 = vmatpush2.msra.mxu0 0.0
    %2222 = vmatprep.subr.mxu0 0.0
    %2223 = vmatpush2.msra.mxu0 0.0
    %2224 = vmatprep.subr.mxu0 0.0
    %2225 = vmatpush2.msra.mxu0 0.0
    %2226 = vmatprep.subr.mxu0 0.0
    %2227 = vmatpush2.msra.mxu0 0.0
    %2228 = vmatprep.subr.mxu0 0.0
    %2229 = vmatpush2.msra.mxu0 0.0
    %2230 = vmatprep.subr.mxu0 0.0
    %2231 = vmatpush2.msra.mxu0 0.0
    %2232 = vmatprep.subr.mxu0 0.0
    %2233 = vmatpush2.msra.mxu0 0.0
    %2234 = vmatprep.mubr.f32.mxu0 0.0
    %2235 = vmatmul.mubr.f32.gmra.mxu0 %v2165
    %v2236 = vpop.f32.mrf.mxu0
    %v2237 = vadd.f32 %v2162, %v2236
    %v2238 = vpop.f32.mrf.mxu0
    %2239 = vmatprep.mubr.f32.mxu0 0.0
    %2240 = vmatmul.mubr.f32.gmra.mxu0 %v2168
    %v2241 = vpop.f32.mrf.mxu0
    %v2242 = vadd.f32 %v2162, %v2241
    %v2243 = vpop.f32.mrf.mxu0
    %2244 = vdwg.mxu0
    %v2245 = vld [vmem:[#allocation11] sm:$0xff]
    %v2246 = vld [vmem:[#allocation11 + $0x8] sm:$0xff]
    %v2247 = vld [vmem:[#allocation11 + $0x10] sm:$0xff]
    %v2248 = vld [vmem:[#allocation11 + $0x18] sm:$0xff]
    %v2249 = vmul.f32 %v2145, 0.35355338
    %v2250 = vmul.f32 %v2150, 0.35355338
    %v2252 = vsel %vm352, %v2249, 0
    %v2255 = vsel %vm352, %v2237, 0
    %2257 = vmatprep.subr.mxu0 0.0
    %2258 = vmatpush1.xpose.msra.mxu0 0.0
    %2259 = vmatprep.subr.mxu0 0.0
    %2260 = vmatpush1.xpose.msra.mxu0 0.0
    %2261 = vmatprep.subr.mxu0 0.0
    %2262 = vmatpush1.xpose.msra.mxu0 0.0
    %2263 = vmatprep.subr.mxu0 0.0
    %2264 = vmatpush1.xpose.msra.mxu0 0.0
    %2265 = vmatprep.subr.mxu0 0.0
    %2266 = vmatpush1.xpose.msra.mxu0 0.0
    %2267 = vmatprep.subr.mxu0 0.0
    %2268 = vmatpush1.xpose.msra.mxu0 0.0
    %2269 = vmatprep.subr.mxu0 0.0
    %2270 = vmatpush1.xpose.msra.mxu0 0.0
    %2271 = vmatprep.subr.mxu0 0.0
    %2272 = vmatpush1.xpose.msra.mxu0 0.0
    %2273 = vmatprep.subr.mxu0 0.0
    %2274 = vmatpush1.xpose.msra.mxu0 0.0
    %2275 = vmatprep.subr.mxu0 0.0
    %2276 = vmatpush1.xpose.msra.mxu0 0.0
    %2277 = vmatprep.subr.mxu0 0.0
    %2278 = vmatpush1.xpose.msra.mxu0 0.0
    %2279 = vmatprep.subr.mxu0 0.0
    %2280 = vmatpush1.xpose.msra.mxu0 0.0
    %2281 = vmatprep.subr.mxu0 0.0
    %2282 = vmatpush1.xpose.msra.mxu0 0.0
    %2283 = vmatprep.subr.mxu0 0.0
    %2284 = vmatpush1.xpose.msra.mxu0 0.0
    %2285 = vmatprep.subr.mxu0 0.0
    %2286 = vmatpush1.xpose.msra.mxu0 0.0
    %2287 = vmatprep.subr.mxu0 0.0
    %2288 = vmatpush1.xpose.msra.mxu0 %v2255
    %2289 = vmatprep.subr.mxu0 0.0
    %2290 = vmatpush2.xpose.msra.mxu0 0.0
    %2291 = vmatprep.subr.mxu0 0.0
    %2292 = vmatpush2.xpose.msra.mxu0 0.0
    %2293 = vmatprep.subr.mxu0 0.0
    %2294 = vmatpush2.xpose.msra.mxu0 0.0
    %2295 = vmatprep.subr.mxu0 0.0
    %2296 = vmatpush2.xpose.msra.mxu0 0.0
    %2297 = vmatprep.subr.mxu0 0.0
    %2298 = vmatpush2.xpose.msra.mxu0 0.0
    %2299 = vmatprep.subr.mxu0 0.0
    %2300 = vmatpush2.xpose.msra.mxu0 0.0
    %2301 = vmatprep.subr.mxu0 0.0
    %2302 = vmatpush2.xpose.msra.mxu0 0.0
    %2303 = vmatprep.subr.mxu0 0.0
    %2304 = vmatpush2.xpose.msra.mxu0 0.0
    %2305 = vmatprep.subr.mxu0 0.0
    %2306 = vmatpush2.xpose.msra.mxu0 0.0
    %2307 = vmatprep.subr.mxu0 0.0
    %2308 = vmatpush2.xpose.msra.mxu0 0.0
    %2309 = vmatprep.subr.mxu0 0.0
    %2310 = vmatpush2.xpose.msra.mxu0 0.0
    %2311 = vmatprep.subr.mxu0 0.0
    %2312 = vmatpush2.xpose.msra.mxu0 0.0
    %2313 = vmatprep.subr.mxu0 0.0
    %2314 = vmatpush2.xpose.msra.mxu0 0.0
    %2315 = vmatprep.subr.mxu0 0.0
    %2316 = vmatpush2.xpose.msra.mxu0 0.0
    %2317 = vmatprep.subr.mxu0 0.0
    %2318 = vmatpush2.xpose.msra.mxu0 0.0
    %2319 = vmatprep.subr.mxu0 0.0
    %2320 = vmatpush2.xpose.msra.mxu0 0.0
    %2321 = vmatprep.mubr.f32.mxu0 0.0
    %2322 = vmatmul.mubr.f32.gmra.mxu0 %v2252
    %v2323 = vpop.f32.mrf.mxu0
    %v2324 = vadd.f32 %v193, %v2323
    %v2325 = vpop.f32.mrf.mxu0
    %2326 = vdwg.mxu0
    %v2328 = vsel %vm352, %v2250, 0
    %v2331 = vsel %vm352, %v2242, 0
    %2333 = vmatprep.subr.mxu0 0.0
    %2334 = vmatpush1.xpose.msra.mxu0 0.0
    %2335 = vmatprep.subr.mxu0 0.0
    %2336 = vmatpush1.xpose.msra.mxu0 0.0
    %2337 = vmatprep.subr.mxu0 0.0
    %2338 = vmatpush1.xpose.msra.mxu0 0.0
    %2339 = vmatprep.subr.mxu0 0.0
    %2340 = vmatpush1.xpose.msra.mxu0 0.0
    %2341 = vmatprep.subr.mxu0 0.0
    %2342 = vmatpush1.xpose.msra.mxu0 0.0
    %2343 = vmatprep.subr.mxu0 0.0
    %2344 = vmatpush1.xpose.msra.mxu0 0.0
    %2345 = vmatprep.subr.mxu0 0.0
    %2346 = vmatpush1.xpose.msra.mxu0 0.0
    %2347 = vmatprep.subr.mxu0 0.0
    %2348 = vmatpush1.xpose.msra.mxu0 0.0
    %2349 = vmatprep.subr.mxu0 0.0
    %2350 = vmatpush1.xpose.msra.mxu0 0.0
    %2351 = vmatprep.subr.mxu0 0.0
    %2352 = vmatpush1.xpose.msra.mxu0 0.0
    %2353 = vmatprep.subr.mxu0 0.0
    %2354 = vmatpush1.xpose.msra.mxu0 0.0
    %2355 = vmatprep.subr.mxu0 0.0
    %2356 = vmatpush1.xpose.msra.mxu0 0.0
    %2357 = vmatprep.subr.mxu0 0.0
    %2358 = vmatpush1.xpose.msra.mxu0 0.0
    %2359 = vmatprep.subr.mxu0 0.0
    %2360 = vmatpush1.xpose.msra.mxu0 0.0
    %2361 = vmatprep.subr.mxu0 0.0
    %2362 = vmatpush1.xpose.msra.mxu0 0.0
    %2363 = vmatprep.subr.mxu0 0.0
    %2364 = vmatpush1.xpose.msra.mxu0 %v2331
    %2365 = vmatprep.subr.mxu0 0.0
    %2366 = vmatpush2.xpose.msra.mxu0 0.0
    %2367 = vmatprep.subr.mxu0 0.0
    %2368 = vmatpush2.xpose.msra.mxu0 0.0
    %2369 = vmatprep.subr.mxu0 0.0
    %2370 = vmatpush2.xpose.msra.mxu0 0.0
    %2371 = vmatprep.subr.mxu0 0.0
    %2372 = vmatpush2.xpose.msra.mxu0 0.0
    %2373 = vmatprep.subr.mxu0 0.0
    %2374 = vmatpush2.xpose.msra.mxu0 0.0
    %2375 = vmatprep.subr.mxu0 0.0
    %2376 = vmatpush2.xpose.msra.mxu0 0.0
    %2377 = vmatprep.subr.mxu0 0.0
    %2378 = vmatpush2.xpose.msra.mxu0 0.0
    %2379 = vmatprep.subr.mxu0 0.0
    %2380 = vmatpush2.xpose.msra.mxu0 0.0
    %2381 = vmatprep.subr.mxu0 0.0
    %2382 = vmatpush2.xpose.msra.mxu0 0.0
    %2383 = vmatprep.subr.mxu0 0.0
    %2384 = vmatpush2.xpose.msra.mxu0 0.0
    %2385 = vmatprep.subr.mxu0 0.0
    %2386 = vmatpush2.xpose.msra.mxu0 0.0
    %2387 = vmatprep.subr.mxu0 0.0
    %2388 = vmatpush2.xpose.msra.mxu0 0.0
    %2389 = vmatprep.subr.mxu0 0.0
    %2390 = vmatpush2.xpose.msra.mxu0 0.0
    %2391 = vmatprep.subr.mxu0 0.0
    %2392 = vmatpush2.xpose.msra.mxu0 0.0
    %2393 = vmatprep.subr.mxu0 0.0
    %2394 = vmatpush2.xpose.msra.mxu0 0.0
    %2395 = vmatprep.subr.mxu0 0.0
    %2396 = vmatpush2.xpose.msra.mxu0 0.0
    %2397 = vmatprep.mubr.f32.mxu0 0.0
    %2398 = vmatmul.mubr.f32.gmra.mxu0 %v2328
    %v2399 = vpop.f32.mrf.mxu0
    %v2400 = vadd.f32 %v194, %v2399
    %v2401 = vpop.f32.mrf.mxu0
    %2402 = vdwg.mxu0
    %v2403 = vsel %vm352, %v2324, -inf
    %2404 = vmax.xlane.f32.xlu0 %v2403
    %v2405 = vpop.xlane.xlu0 %2404
    %v2406 = vsel %vm352, %v2400, -inf
    %2407 = vmax.xlane.f32.xlu0 %v2406
    %v2408 = vpop.xlane.xlu0 %2407
    %v2409 = vsub.f32 %v2324, %v2405
    %v2410 = vsub.f32 %v2400, %v2408
    %v2411 = vmul.f32 %v2409, 1.442695
    %v2412 = vpow.pop %v2411
    %v2413 = vmul.f32 %v2410, 1.442695
    %v2414 = vpow.pop %v2413
    %v2415 = vsel %vm352, %v2412, 0.0
    %2416 = vadd.xlane.f32.xlu0 %v2415
    %v2417 = vpop.xlane.xlu0 %2416
    %v2418 = vsel %vm352, %v2414, 0.0
    %2419 = vadd.xlane.f32.xlu0 %v2418
    %v2420 = vpop.xlane.xlu0 %2419
    %v2421 = vrcp.pop %v2417
    %v2422 = vrcp.pop %v2420
    %v2423 = vmul.f32 %v2412, %v2421
    %v2424 = vmul.f32 %v2414, %v2422
    %2425 = vrot.lane.b32.xlu0 %v2237, 96
    %v2426 = vpop.permute.xlu0 %2425
    %v2429 = vsel %vm352, %v2423, 0
    %2431 = vmatprep.subr.mxu0 0.0
    %2432 = vmatpush1.msra.mxu0 0.0
    %2433 = vmatprep.subr.mxu0 0.0
    %2434 = vmatpush1.msra.mxu0 0.0
    %2435 = vmatprep.subr.mxu0 0.0
    %2436 = vmatpush1.msra.mxu0 0.0
    %2437 = vmatprep.subr.mxu0 0.0
    %2438 = vmatpush1.msra.mxu0 0.0
    %2439 = vmatprep.subr.mxu0 0.0
    %2440 = vmatpush1.msra.mxu0 0.0
    %2441 = vmatprep.subr.mxu0 0.0
    %2442 = vmatpush1.msra.mxu0 0.0
    %2443 = vmatprep.subr.mxu0 0.0
    %2444 = vmatpush1.msra.mxu0 0.0
    %2445 = vmatprep.subr.mxu0 0.0
    %2446 = vmatpush1.msra.mxu0 0.0
    %2447 = vmatprep.subr.mxu0 0.0
    %2448 = vmatpush1.msra.mxu0 0.0
    %2449 = vmatprep.subr.mxu0 0.0
    %2450 = vmatpush1.msra.mxu0 0.0
    %2451 = vmatprep.subr.mxu0 0.0
    %2452 = vmatpush1.msra.mxu0 0.0
    %2453 = vmatprep.subr.mxu0 0.0
    %2454 = vmatpush1.msra.mxu0 0.0
    %2455 = vmatprep.subr.mxu0 0.0
    %2456 = vmatpush1.msra.mxu0 0.0
    %2457 = vmatprep.subr.mxu0 0.0
    %2458 = vmatpush1.msra.mxu0 0.0
    %2459 = vmatprep.subr.mxu0 0.0
    %2460 = vmatpush1.msra.mxu0 0.0
    %2461 = vmatprep.subr.mxu0 0.0
    %2462 = vmatpush1.msra.mxu0 %v2426
    %2463 = vmatprep.subr.mxu0 0.0
    %2464 = vmatpush2.msra.mxu0 0.0
    %2465 = vmatprep.subr.mxu0 0.0
    %2466 = vmatpush2.msra.mxu0 0.0
    %2467 = vmatprep.subr.mxu0 0.0
    %2468 = vmatpush2.msra.mxu0 0.0
    %2469 = vmatprep.subr.mxu0 0.0
    %2470 = vmatpush2.msra.mxu0 0.0
    %2471 = vmatprep.subr.mxu0 0.0
    %2472 = vmatpush2.msra.mxu0 0.0
    %2473 = vmatprep.subr.mxu0 0.0
    %2474 = vmatpush2.msra.mxu0 0.0
    %2475 = vmatprep.subr.mxu0 0.0
    %2476 = vmatpush2.msra.mxu0 0.0
    %2477 = vmatprep.subr.mxu0 0.0
    %2478 = vmatpush2.msra.mxu0 0.0
    %2479 = vmatprep.subr.mxu0 0.0
    %2480 = vmatpush2.msra.mxu0 0.0
    %2481 = vmatprep.subr.mxu0 0.0
    %2482 = vmatpush2.msra.mxu0 0.0
    %2483 = vmatprep.subr.mxu0 0.0
    %2484 = vmatpush2.msra.mxu0 0.0
    %2485 = vmatprep.subr.mxu0 0.0
    %2486 = vmatpush2.msra.mxu0 0.0
    %2487 = vmatprep.subr.mxu0 0.0
    %2488 = vmatpush2.msra.mxu0 0.0
    %2489 = vmatprep.subr.mxu0 0.0
    %2490 = vmatpush2.msra.mxu0 0.0
    %2491 = vmatprep.subr.mxu0 0.0
    %2492 = vmatpush2.msra.mxu0 0.0
    %2493 = vmatprep.subr.mxu0 0.0
    %2494 = vmatpush2.msra.mxu0 0.0
    %2495 = vmatprep.mubr.f32.mxu0 0.0
    %2496 = vmatmul.mubr.f32.gmra.mxu0 %v2429
    %v2497 = vpop.f32.mrf.mxu0
    %v2498 = vadd.f32 0.0, %v2497
    %v2499 = vpop.f32.mrf.mxu0
    %2500 = vdwg.mxu0
    %2501 = vrot.lane.b32.xlu0 %v2242, 96
    %v2502 = vpop.permute.xlu0 %2501
    %v2505 = vsel %vm352, %v2424, 0
    %2507 = vmatprep.subr.mxu0 0.0
    %2508 = vmatpush1.msra.mxu0 0.0
    %2509 = vmatprep.subr.mxu0 0.0
    %2510 = vmatpush1.msra.mxu0 0.0
    %2511 = vmatprep.subr.mxu0 0.0
    %2512 = vmatpush1.msra.mxu0 0.0
    %2513 = vmatprep.subr.mxu0 0.0
    %2514 = vmatpush1.msra.mxu0 0.0
    %2515 = vmatprep.subr.mxu0 0.0
    %2516 = vmatpush1.msra.mxu0 0.0
    %2517 = vmatprep.subr.mxu0 0.0
    %2518 = vmatpush1.msra.mxu0 0.0
    %2519 = vmatprep.subr.mxu0 0.0
    %2520 = vmatpush1.msra.mxu0 0.0
    %2521 = vmatprep.subr.mxu0 0.0
    %2522 = vmatpush1.msra.mxu0 0.0
    %2523 = vmatprep.subr.mxu0 0.0
    %2524 = vmatpush1.msra.mxu0 0.0
    %2525 = vmatprep.subr.mxu0 0.0
    %2526 = vmatpush1.msra.mxu0 0.0
    %2527 = vmatprep.subr.mxu0 0.0
    %2528 = vmatpush1.msra.mxu0 0.0
    %2529 = vmatprep.subr.mxu0 0.0
    %2530 = vmatpush1.msra.mxu0 0.0
    %2531 = vmatprep.subr.mxu0 0.0
    %2532 = vmatpush1.msra.mxu0 0.0
    %2533 = vmatprep.subr.mxu0 0.0
    %2534 = vmatpush1.msra.mxu0 0.0
    %2535 = vmatprep.subr.mxu0 0.0
    %2536 = vmatpush1.msra.mxu0 0.0
    %2537 = vmatprep.subr.mxu0 0.0
    %2538 = vmatpush1.msra.mxu0 %v2502
    %2539 = vmatprep.subr.mxu0 0.0
    %2540 = vmatpush2.msra.mxu0 0.0
    %2541 = vmatprep.subr.mxu0 0.0
    %2542 = vmatpush2.msra.mxu0 0.0
    %2543 = vmatprep.subr.mxu0 0.0
    %2544 = vmatpush2.msra.mxu0 0.0
    %2545 = vmatprep.subr.mxu0 0.0
    %2546 = vmatpush2.msra.mxu0 0.0
    %2547 = vmatprep.subr.mxu0 0.0
    %2548 = vmatpush2.msra.mxu0 0.0
    %2549 = vmatprep.subr.mxu0 0.0
    %2550 = vmatpush2.msra.mxu0 0.0
    %2551 = vmatprep.subr.mxu0 0.0
    %2552 = vmatpush2.msra.mxu0 0.0
    %2553 = vmatprep.subr.mxu0 0.0
    %2554 = vmatpush2.msra.mxu0 0.0
    %2555 = vmatprep.subr.mxu0 0.0
    %2556 = vmatpush2.msra.mxu0 0.0
    %2557 = vmatprep.subr.mxu0 0.0
    %2558 = vmatpush2.msra.mxu0 0.0
    %2559 = vmatprep.subr.mxu0 0.0
    %2560 = vmatpush2.msra.mxu0 0.0
    %2561 = vmatprep.subr.mxu0 0.0
    %2562 = vmatpush2.msra.mxu0 0.0
    %2563 = vmatprep.subr.mxu0 0.0
    %2564 = vmatpush2.msra.mxu0 0.0
    %2565 = vmatprep.subr.mxu0 0.0
    %2566 = vmatpush2.msra.mxu0 0.0
    %2567 = vmatprep.subr.mxu0 0.0
    %2568 = vmatpush2.msra.mxu0 0.0
    %2569 = vmatprep.subr.mxu0 0.0
    %2570 = vmatpush2.msra.mxu0 0.0
    %2571 = vmatprep.mubr.f32.mxu0 0.0
    %2572 = vmatmul.mubr.f32.gmra.mxu0 %v2505
    %v2573 = vpop.f32.mrf.mxu0
    %v2574 = vadd.f32 0.0, %v2573
    %v2575 = vpop.f32.mrf.mxu0
    %2576 = vdwg.mxu0
    %2577 = vrot.lane.b32.xlu0 %v2249, 120
    %v2578 = vpop.permute.xlu0 %2577
    %2579 = vrot.lane.b32.xlu0 %v2237, 120
    %v2580 = vpop.permute.xlu0 %2579
    %v2581 = vsel %vm352, %v2578, 0
    %v2583 = vsel %vm352, %v2580, 0
    %2585 = vmatprep.subr.mxu0 0.0
    %2586 = vmatpush1.xpose.msra.mxu0 0.0
    %2587 = vmatprep.subr.mxu0 0.0
    %2588 = vmatpush1.xpose.msra.mxu0 0.0
    %2589 = vmatprep.subr.mxu0 0.0
    %2590 = vmatpush1.xpose.msra.mxu0 0.0
    %2591 = vmatprep.subr.mxu0 0.0
    %2592 = vmatpush1.xpose.msra.mxu0 0.0
    %2593 = vmatprep.subr.mxu0 0.0
    %2594 = vmatpush1.xpose.msra.mxu0 0.0
    %2595 = vmatprep.subr.mxu0 0.0
    %2596 = vmatpush1.xpose.msra.mxu0 0.0
    %2597 = vmatprep.subr.mxu0 0.0
    %2598 = vmatpush1.xpose.msra.mxu0 0.0
    %2599 = vmatprep.subr.mxu0 0.0
    %2600 = vmatpush1.xpose.msra.mxu0 0.0
    %2601 = vmatprep.subr.mxu0 0.0
    %2602 = vmatpush1.xpose.msra.mxu0 0.0
    %2603 = vmatprep.subr.mxu0 0.0
    %2604 = vmatpush1.xpose.msra.mxu0 0.0
    %2605 = vmatprep.subr.mxu0 0.0
    %2606 = vmatpush1.xpose.msra.mxu0 0.0
    %2607 = vmatprep.subr.mxu0 0.0
    %2608 = vmatpush1.xpose.msra.mxu0 0.0
    %2609 = vmatprep.subr.mxu0 0.0
    %2610 = vmatpush1.xpose.msra.mxu0 0.0
    %2611 = vmatprep.subr.mxu0 0.0
    %2612 = vmatpush1.xpose.msra.mxu0 0.0
    %2613 = vmatprep.subr.mxu0 0.0
    %2614 = vmatpush1.xpose.msra.mxu0 0.0
    %2615 = vmatprep.subr.mxu0 0.0
    %2616 = vmatpush1.xpose.msra.mxu0 %v2583
    %2617 = vmatprep.subr.mxu0 0.0
    %2618 = vmatpush2.xpose.msra.mxu0 0.0
    %2619 = vmatprep.subr.mxu0 0.0
    %2620 = vmatpush2.xpose.msra.mxu0 0.0
    %2621 = vmatprep.subr.mxu0 0.0
    %2622 = vmatpush2.xpose.msra.mxu0 0.0
    %2623 = vmatprep.subr.mxu0 0.0
    %2624 = vmatpush2.xpose.msra.mxu0 0.0
    %2625 = vmatprep.subr.mxu0 0.0
    %2626 = vmatpush2.xpose.msra.mxu0 0.0
    %2627 = vmatprep.subr.mxu0 0.0
    %2628 = vmatpush2.xpose.msra.mxu0 0.0
    %2629 = vmatprep.subr.mxu0 0.0
    %2630 = vmatpush2.xpose.msra.mxu0 0.0
    %2631 = vmatprep.subr.mxu0 0.0
    %2632 = vmatpush2.xpose.msra.mxu0 0.0
    %2633 = vmatprep.subr.mxu0 0.0
    %2634 = vmatpush2.xpose.msra.mxu0 0.0
    %2635 = vmatprep.subr.mxu0 0.0
    %2636 = vmatpush2.xpose.msra.mxu0 0.0
    %2637 = vmatprep.subr.mxu0 0.0
    %2638 = vmatpush2.xpose.msra.mxu0 0.0
    %2639 = vmatprep.subr.mxu0 0.0
    %2640 = vmatpush2.xpose.msra.mxu0 0.0
    %2641 = vmatprep.subr.mxu0 0.0
    %2642 = vmatpush2.xpose.msra.mxu0 0.0
    %2643 = vmatprep.subr.mxu0 0.0
    %2644 = vmatpush2.xpose.msra.mxu0 0.0
    %2645 = vmatprep.subr.mxu0 0.0
    %2646 = vmatpush2.xpose.msra.mxu0 0.0
    %2647 = vmatprep.subr.mxu0 0.0
    %2648 = vmatpush2.xpose.msra.mxu0 0.0
    %2649 = vmatprep.mubr.f32.mxu0 0.0
    %2650 = vmatmul.mubr.f32.gmra.mxu0 %v2581
    %v2651 = vpop.f32.mrf.mxu0
    %v2652 = vadd.f32 %v193, %v2651
    %v2653 = vpop.f32.mrf.mxu0
    %2654 = vdwg.mxu0
    %2655 = vrot.lane.b32.xlu0 %v2250, 120
    %v2656 = vpop.permute.xlu0 %2655
    %2657 = vrot.lane.b32.xlu0 %v2242, 120
    %v2658 = vpop.permute.xlu0 %2657
    %v2659 = vsel %vm352, %v2656, 0
    %v2661 = vsel %vm352, %v2658, 0
    %2663 = vmatprep.subr.mxu0 0.0
    %2664 = vmatpush1.xpose.msra.mxu0 0.0
    %2665 = vmatprep.subr.mxu0 0.0
    %2666 = vmatpush1.xpose.msra.mxu0 0.0
    %2667 = vmatprep.subr.mxu0 0.0
    %2668 = vmatpush1.xpose.msra.mxu0 0.0
    %2669 = vmatprep.subr.mxu0 0.0
    %2670 = vmatpush1.xpose.msra.mxu0 0.0
    %2671 = vmatprep.subr.mxu0 0.0
    %2672 = vmatpush1.xpose.msra.mxu0 0.0
    %2673 = vmatprep.subr.mxu0 0.0
    %2674 = vmatpush1.xpose.msra.mxu0 0.0
    %2675 = vmatprep.subr.mxu0 0.0
    %2676 = vmatpush1.xpose.msra.mxu0 0.0
    %2677 = vmatprep.subr.mxu0 0.0
    %2678 = vmatpush1.xpose.msra.mxu0 0.0
    %2679 = vmatprep.subr.mxu0 0.0
    %2680 = vmatpush1.xpose.msra.mxu0 0.0
    %2681 = vmatprep.subr.mxu0 0.0
    %2682 = vmatpush1.xpose.msra.mxu0 0.0
    %2683 = vmatprep.subr.mxu0 0.0
    %2684 = vmatpush1.xpose.msra.mxu0 0.0
    %2685 = vmatprep.subr.mxu0 0.0
    %2686 = vmatpush1.xpose.msra.mxu0 0.0
    %2687 = vmatprep.subr.mxu0 0.0
    %2688 = vmatpush1.xpose.msra.mxu0 0.0
    %2689 = vmatprep.subr.mxu0 0.0
    %2690 = vmatpush1.xpose.msra.mxu0 0.0
    %2691 = vmatprep.subr.mxu0 0.0
    %2692 = vmatpush1.xpose.msra.mxu0 0.0
    %2693 = vmatprep.subr.mxu0 0.0
    %2694 = vmatpush1.xpose.msra.mxu0 %v2661
    %2695 = vmatprep.subr.mxu0 0.0
    %2696 = vmatpush2.xpose.msra.mxu0 0.0
    %2697 = vmatprep.subr.mxu0 0.0
    %2698 = vmatpush2.xpose.msra.mxu0 0.0
    %2699 = vmatprep.subr.mxu0 0.0
    %2700 = vmatpush2.xpose.msra.mxu0 0.0
    %2701 = vmatprep.subr.mxu0 0.0
    %2702 = vmatpush2.xpose.msra.mxu0 0.0
    %2703 = vmatprep.subr.mxu0 0.0
    %2704 = vmatpush2.xpose.msra.mxu0 0.0
    %2705 = vmatprep.subr.mxu0 0.0
    %2706 = vmatpush2.xpose.msra.mxu0 0.0
    %2707 = vmatprep.subr.mxu0 0.0
    %2708 = vmatpush2.xpose.msra.mxu0 0.0
    %2709 = vmatprep.subr.mxu0 0.0
    %2710 = vmatpush2.xpose.msra.mxu0 0.0
    %2711 = vmatprep.subr.mxu0 0.0
    %2712 = vmatpush2.xpose.msra.mxu0 0.0
    %2713 = vmatprep.subr.mxu0 0.0
    %2714 = vmatpush2.xpose.msra.mxu0 0.0
    %2715 = vmatprep.subr.mxu0 0.0
    %2716 = vmatpush2.xpose.msra.mxu0 0.0
    %2717 = vmatprep.subr.mxu0 0.0
    %2718 = vmatpush2.xpose.msra.mxu0 0.0
    %2719 = vmatprep.subr.mxu0 0.0
    %2720 = vmatpush2.xpose.msra.mxu0 0.0
    %2721 = vmatprep.subr.mxu0 0.0
    %2722 = vmatpush2.xpose.msra.mxu0 0.0
    %2723 = vmatprep.subr.mxu0 0.0
    %2724 = vmatpush2.xpose.msra.mxu0 0.0
    %2725 = vmatprep.subr.mxu0 0.0
    %2726 = vmatpush2.xpose.msra.mxu0 0.0
    %2727 = vmatprep.mubr.f32.mxu0 0.0
    %2728 = vmatmul.mubr.f32.gmra.mxu0 %v2659
    %v2729 = vpop.f32.mrf.mxu0
    %v2730 = vadd.f32 %v194, %v2729
    %v2731 = vpop.f32.mrf.mxu0
    %2732 = vdwg.mxu0
    %v2733 = vsel %vm352, %v2652, -inf
    %2734 = vmax.xlane.f32.xlu0 %v2733
    %v2735 = vpop.xlane.xlu0 %2734
    %v2736 = vsel %vm352, %v2730, -inf
    %2737 = vmax.xlane.f32.xlu0 %v2736
    %v2738 = vpop.xlane.xlu0 %2737
    %v2739 = vsub.f32 %v2652, %v2735
    %v2740 = vsub.f32 %v2730, %v2738
    %v2741 = vmul.f32 %v2739, 1.442695
    %v2742 = vpow.pop %v2741
    %v2743 = vmul.f32 %v2740, 1.442695
    %v2744 = vpow.pop %v2743
    %v2745 = vsel %vm352, %v2742, 0.0
    %2746 = vadd.xlane.f32.xlu0 %v2745
    %v2747 = vpop.xlane.xlu0 %2746
    %v2748 = vsel %vm352, %v2744, 0.0
    %2749 = vadd.xlane.f32.xlu0 %v2748
    %v2750 = vpop.xlane.xlu0 %2749
    %v2751 = vrcp.pop %v2747
    %v2752 = vrcp.pop %v2750
    %v2753 = vmul.f32 %v2742, %v2751
    %v2754 = vmul.f32 %v2744, %v2752
    %2755 = vrot.lane.b32.xlu0 %v2237, 88
    %v2756 = vpop.permute.xlu0 %2755
    %v2759 = vsel %vm352, %v2753, 0
    %2761 = vmatprep.subr.mxu0 0.0
    %2762 = vmatpush1.msra.mxu0 0.0
    %2763 = vmatprep.subr.mxu0 0.0
    %2764 = vmatpush1.msra.mxu0 0.0
    %2765 = vmatprep.subr.mxu0 0.0
    %2766 = vmatpush1.msra.mxu0 0.0
    %2767 = vmatprep.subr.mxu0 0.0
    %2768 = vmatpush1.msra.mxu0 0.0
    %2769 = vmatprep.subr.mxu0 0.0
    %2770 = vmatpush1.msra.mxu0 0.0
    %2771 = vmatprep.subr.mxu0 0.0
    %2772 = vmatpush1.msra.mxu0 0.0
    %2773 = vmatprep.subr.mxu0 0.0
    %2774 = vmatpush1.msra.mxu0 0.0
    %2775 = vmatprep.subr.mxu0 0.0
    %2776 = vmatpush1.msra.mxu0 0.0
    %2777 = vmatprep.subr.mxu0 0.0
    %2778 = vmatpush1.msra.mxu0 0.0
    %2779 = vmatprep.subr.mxu0 0.0
    %2780 = vmatpush1.msra.mxu0 0.0
    %2781 = vmatprep.subr.mxu0 0.0
    %2782 = vmatpush1.msra.mxu0 0.0
    %2783 = vmatprep.subr.mxu0 0.0
    %2784 = vmatpush1.msra.mxu0 0.0
    %2785 = vmatprep.subr.mxu0 0.0
    %2786 = vmatpush1.msra.mxu0 0.0
    %2787 = vmatprep.subr.mxu0 0.0
    %2788 = vmatpush1.msra.mxu0 0.0
    %2789 = vmatprep.subr.mxu0 0.0
    %2790 = vmatpush1.msra.mxu0 0.0
    %2791 = vmatprep.subr.mxu0 0.0
    %2792 = vmatpush1.msra.mxu0 %v2756
    %2793 = vmatprep.subr.mxu0 0.0
    %2794 = vmatpush2.msra.mxu0 0.0
    %2795 = vmatprep.subr.mxu0 0.0
    %2796 = vmatpush2.msra.mxu0 0.0
    %2797 = vmatprep.subr.mxu0 0.0
    %2798 = vmatpush2.msra.mxu0 0.0
    %2799 = vmatprep.subr.mxu0 0.0
    %2800 = vmatpush2.msra.mxu0 0.0
    %2801 = vmatprep.subr.mxu0 0.0
    %2802 = vmatpush2.msra.mxu0 0.0
    %2803 = vmatprep.subr.mxu0 0.0
    %2804 = vmatpush2.msra.mxu0 0.0
    %2805 = vmatprep.subr.mxu0 0.0
    %2806 = vmatpush2.msra.mxu0 0.0
    %2807 = vmatprep.subr.mxu0 0.0
    %2808 = vmatpush2.msra.mxu0 0.0
    %2809 = vmatprep.subr.mxu0 0.0
    %2810 = vmatpush2.msra.mxu0 0.0
    %2811 = vmatprep.subr.mxu0 0.0
    %2812 = vmatpush2.msra.mxu0 0.0
    %2813 = vmatprep.subr.mxu0 0.0
    %2814 = vmatpush2.msra.mxu0 0.0
    %2815 = vmatprep.subr.mxu0 0.0
    %2816 = vmatpush2.msra.mxu0 0.0
    %2817 = vmatprep.subr.mxu0 0.0
    %2818 = vmatpush2.msra.mxu0 0.0
    %2819 = vmatprep.subr.mxu0 0.0
    %2820 = vmatpush2.msra.mxu0 0.0
    %2821 = vmatprep.subr.mxu0 0.0
    %2822 = vmatpush2.msra.mxu0 0.0
    %2823 = vmatprep.subr.mxu0 0.0
    %2824 = vmatpush2.msra.mxu0 0.0
    %2825 = vmatprep.mubr.f32.mxu0 0.0
    %2826 = vmatmul.mubr.f32.gmra.mxu0 %v2759
    %v2827 = vpop.f32.mrf.mxu0
    %v2828 = vadd.f32 0.0, %v2827
    %v2829 = vpop.f32.mrf.mxu0
    %2830 = vdwg.mxu0
    %2831 = vrot.lane.b32.xlu0 %v2242, 88
    %v2832 = vpop.permute.xlu0 %2831
    %v2835 = vsel %vm352, %v2754, 0
    %2837 = vmatprep.subr.mxu0 0.0
    %2838 = vmatpush1.msra.mxu0 0.0
    %2839 = vmatprep.subr.mxu0 0.0
    %2840 = vmatpush1.msra.mxu0 0.0
    %2841 = vmatprep.subr.mxu0 0.0
    %2842 = vmatpush1.msra.mxu0 0.0
    %2843 = vmatprep.subr.mxu0 0.0
    %2844 = vmatpush1.msra.mxu0 0.0
    %2845 = vmatprep.subr.mxu0 0.0
    %2846 = vmatpush1.msra.mxu0 0.0
    %2847 = vmatprep.subr.mxu0 0.0
    %2848 = vmatpush1.msra.mxu0 0.0
    %2849 = vmatprep.subr.mxu0 0.0
    %2850 = vmatpush1.msra.mxu0 0.0
    %2851 = vmatprep.subr.mxu0 0.0
    %2852 = vmatpush1.msra.mxu0 0.0
    %2853 = vmatprep.subr.mxu0 0.0
    %2854 = vmatpush1.msra.mxu0 0.0
    %2855 = vmatprep.subr.mxu0 0.0
    %2856 = vmatpush1.msra.mxu0 0.0
    %2857 = vmatprep.subr.mxu0 0.0
    %2858 = vmatpush1.msra.mxu0 0.0
    %2859 = vmatprep.subr.mxu0 0.0
    %2860 = vmatpush1.msra.mxu0 0.0
    %2861 = vmatprep.subr.mxu0 0.0
    %2862 = vmatpush1.msra.mxu0 0.0
    %2863 = vmatprep.subr.mxu0 0.0
    %2864 = vmatpush1.msra.mxu0 0.0
    %2865 = vmatprep.subr.mxu0 0.0
    %2866 = vmatpush1.msra.mxu0 0.0
    %2867 = vmatprep.subr.mxu0 0.0
    %2868 = vmatpush1.msra.mxu0 %v2832
    %2869 = vmatprep.subr.mxu0 0.0
    %2870 = vmatpush2.msra.mxu0 0.0
    %2871 = vmatprep.subr.mxu0 0.0
    %2872 = vmatpush2.msra.mxu0 0.0
    %2873 = vmatprep.subr.mxu0 0.0
    %2874 = vmatpush2.msra.mxu0 0.0
    %2875 = vmatprep.subr.mxu0 0.0
    %2876 = vmatpush2.msra.mxu0 0.0
    %2877 = vmatprep.subr.mxu0 0.0
    %2878 = vmatpush2.msra.mxu0 0.0
    %2879 = vmatprep.subr.mxu0 0.0
    %2880 = vmatpush2.msra.mxu0 0.0
    %2881 = vmatprep.subr.mxu0 0.0
    %2882 = vmatpush2.msra.mxu0 0.0
    %2883 = vmatprep.subr.mxu0 0.0
    %2884 = vmatpush2.msra.mxu0 0.0
    %2885 = vmatprep.subr.mxu0 0.0
    %2886 = vmatpush2.msra.mxu0 0.0
    %2887 = vmatprep.subr.mxu0 0.0
    %2888 = vmatpush2.msra.mxu0 0.0
    %2889 = vmatprep.subr.mxu0 0.0
    %2890 = vmatpush2.msra.mxu0 0.0
    %2891 = vmatprep.subr.mxu0 0.0
    %2892 = vmatpush2.msra.mxu0 0.0
    %2893 = vmatprep.subr.mxu0 0.0
    %2894 = vmatpush2.msra.mxu0 0.0
    %2895 = vmatprep.subr.mxu0 0.0
    %2896 = vmatpush2.msra.mxu0 0.0
    %2897 = vmatprep.subr.mxu0 0.0
    %2898 = vmatpush2.msra.mxu0 0.0
    %2899 = vmatprep.subr.mxu0 0.0
    %2900 = vmatpush2.msra.mxu0 0.0
    %2901 = vmatprep.mubr.f32.mxu0 0.0
    %2902 = vmatmul.mubr.f32.gmra.mxu0 %v2835
    %v2903 = vpop.f32.mrf.mxu0
    %v2904 = vadd.f32 0.0, %v2903
    %v2905 = vpop.f32.mrf.mxu0
    %2906 = vdwg.mxu0
    %v2908 = vsel %vm352, %v2828, 0
    %v2911 = vsel %vm352, %v2904, 0
    %2913 = vmatprep.subr.mxu0 0.0
    %2914 = vmatpush1.msra.mxu0 0.0
    %2915 = vmatprep.subr.mxu0 0.0
    %2916 = vmatpush1.msra.mxu0 0.0
    %2917 = vmatprep.subr.mxu0 0.0
    %2918 = vmatpush1.msra.mxu0 0.0
    %2919 = vmatprep.subr.mxu0 0.0
    %2920 = vmatpush1.msra.mxu0 0.0
    %2921 = vmatprep.subr.mxu0 0.0
    %2922 = vmatpush1.msra.mxu0 0.0
    %2923 = vmatprep.subr.mxu0 0.0
    %2924 = vmatpush1.msra.mxu0 0.0
    %2925 = vmatprep.subr.mxu0 0.0
    %2926 = vmatpush1.msra.mxu0 0.0
    %2927 = vmatprep.subr.mxu0 0.0
    %2928 = vmatpush1.msra.mxu0 0.0
    %2929 = vmatprep.subr.mxu0 0.0
    %2930 = vmatpush1.msra.mxu0 0.0
    %2931 = vmatprep.subr.mxu0 0.0
    %2932 = vmatpush1.msra.mxu0 0.0
    %2933 = vmatprep.subr.mxu0 0.0
    %2934 = vmatpush1.msra.mxu0 0.0
    %2935 = vmatprep.subr.mxu0 0.0
    %2936 = vmatpush1.msra.mxu0 0.0
    %2937 = vmatprep.subr.mxu0 0.0
    %2938 = vmatpush1.msra.mxu0 0.0
    %2939 = vmatprep.subr.mxu0 0.0
    %2940 = vmatpush1.msra.mxu0 0.0
    %2941 = vmatprep.subr.mxu0 0.0
    %2942 = vmatpush1.msra.mxu0 0.0
    %2943 = vmatprep.subr.mxu0 0.0
    %2944 = vmatpush1.msra.mxu0 %v2246
    %2945 = vmatprep.subr.mxu0 0.0
    %2946 = vmatpush2.msra.mxu0 0.0
    %2947 = vmatprep.subr.mxu0 0.0
    %2948 = vmatpush2.msra.mxu0 0.0
    %2949 = vmatprep.subr.mxu0 0.0
    %2950 = vmatpush2.msra.mxu0 0.0
    %2951 = vmatprep.subr.mxu0 0.0
    %2952 = vmatpush2.msra.mxu0 0.0
    %2953 = vmatprep.subr.mxu0 0.0
    %2954 = vmatpush2.msra.mxu0 0.0
    %2955 = vmatprep.subr.mxu0 0.0
    %2956 = vmatpush2.msra.mxu0 0.0
    %2957 = vmatprep.subr.mxu0 0.0
    %2958 = vmatpush2.msra.mxu0 0.0
    %2959 = vmatprep.subr.mxu0 0.0
    %2960 = vmatpush2.msra.mxu0 0.0
    %2961 = vmatprep.subr.mxu0 0.0
    %2962 = vmatpush2.msra.mxu0 0.0
    %2963 = vmatprep.subr.mxu0 0.0
    %2964 = vmatpush2.msra.mxu0 0.0
    %2965 = vmatprep.subr.mxu0 0.0
    %2966 = vmatpush2.msra.mxu0 0.0
    %2967 = vmatprep.subr.mxu0 0.0
    %2968 = vmatpush2.msra.mxu0 0.0
    %2969 = vmatprep.subr.mxu0 0.0
    %2970 = vmatpush2.msra.mxu0 0.0
    %2971 = vmatprep.subr.mxu0 0.0
    %2972 = vmatpush2.msra.mxu0 0.0
    %2973 = vmatprep.subr.mxu0 0.0
    %2974 = vmatpush2.msra.mxu0 0.0
    %2975 = vmatprep.subr.mxu0 0.0
    %2976 = vmatpush2.msra.mxu0 0.0
    %2977 = vmatprep.mubr.f32.mxu0 0.0
    %2978 = vmatmul.mubr.f32.gmra.mxu0 %v2908
    %v2979 = vpop.f32.mrf.mxu0
    %v2980 = vadd.f32 0.0, %v2979
    %v2981 = vpop.f32.mrf.mxu0
    %2982 = vmatprep.mubr.f32.mxu0 0.0
    %2983 = vmatmul.mubr.f32.gmra.mxu0 %v2911
    %v2984 = vpop.f32.mrf.mxu0
    %v2985 = vadd.f32 0.0, %v2984
    %v2986 = vpop.f32.mrf.mxu0
    %2987 = vdwg.mxu0
    %v2989 = vsel %vm352, %v2498, 0
    %v2992 = vsel %vm352, %v2574, 0
    %2994 = vmatprep.subr.mxu0 0.0
    %2995 = vmatpush1.msra.mxu0 0.0
    %2996 = vmatprep.subr.mxu0 0.0
    %2997 = vmatpush1.msra.mxu0 0.0
    %2998 = vmatprep.subr.mxu0 0.0
    %2999 = vmatpush1.msra.mxu0 0.0
    %3000 = vmatprep.subr.mxu0 0.0
    %3001 = vmatpush1.msra.mxu0 0.0
    %3002 = vmatprep.subr.mxu0 0.0
    %3003 = vmatpush1.msra.mxu0 0.0
    %3004 = vmatprep.subr.mxu0 0.0
    %3005 = vmatpush1.msra.mxu0 0.0
    %3006 = vmatprep.subr.mxu0 0.0
    %3007 = vmatpush1.msra.mxu0 0.0
    %3008 = vmatprep.subr.mxu0 0.0
    %3009 = vmatpush1.msra.mxu0 0.0
    %3010 = vmatprep.subr.mxu0 0.0
    %3011 = vmatpush1.msra.mxu0 0.0
    %3012 = vmatprep.subr.mxu0 0.0
    %3013 = vmatpush1.msra.mxu0 0.0
    %3014 = vmatprep.subr.mxu0 0.0
    %3015 = vmatpush1.msra.mxu0 0.0
    %3016 = vmatprep.subr.mxu0 0.0
    %3017 = vmatpush1.msra.mxu0 0.0
    %3018 = vmatprep.subr.mxu0 0.0
    %3019 = vmatpush1.msra.mxu0 0.0
    %3020 = vmatprep.subr.mxu0 0.0
    %3021 = vmatpush1.msra.mxu0 0.0
    %3022 = vmatprep.subr.mxu0 0.0
    %3023 = vmatpush1.msra.mxu0 0.0
    %3024 = vmatprep.subr.mxu0 0.0
    %3025 = vmatpush1.msra.mxu0 %v2245
    %3026 = vmatprep.subr.mxu0 0.0
    %3027 = vmatpush2.msra.mxu0 0.0
    %3028 = vmatprep.subr.mxu0 0.0
    %3029 = vmatpush2.msra.mxu0 0.0
    %3030 = vmatprep.subr.mxu0 0.0
    %3031 = vmatpush2.msra.mxu0 0.0
    %3032 = vmatprep.subr.mxu0 0.0
    %3033 = vmatpush2.msra.mxu0 0.0
    %3034 = vmatprep.subr.mxu0 0.0
    %3035 = vmatpush2.msra.mxu0 0.0
    %3036 = vmatprep.subr.mxu0 0.0
    %3037 = vmatpush2.msra.mxu0 0.0
    %3038 = vmatprep.subr.mxu0 0.0
    %3039 = vmatpush2.msra.mxu0 0.0
    %3040 = vmatprep.subr.mxu0 0.0
    %3041 = vmatpush2.msra.mxu0 0.0
    %3042 = vmatprep.subr.mxu0 0.0
    %3043 = vmatpush2.msra.mxu0 0.0
    %3044 = vmatprep.subr.mxu0 0.0
    %3045 = vmatpush2.msra.mxu0 0.0
    %3046 = vmatprep.subr.mxu0 0.0
    %3047 = vmatpush2.msra.mxu0 0.0
    %3048 = vmatprep.subr.mxu0 0.0
    %3049 = vmatpush2.msra.mxu0 0.0
    %3050 = vmatprep.subr.mxu0 0.0
    %3051 = vmatpush2.msra.mxu0 0.0
    %3052 = vmatprep.subr.mxu0 0.0
    %3053 = vmatpush2.msra.mxu0 0.0
    %3054 = vmatprep.subr.mxu0 0.0
    %3055 = vmatpush2.msra.mxu0 0.0
    %3056 = vmatprep.subr.mxu0 0.0
    %3057 = vmatpush2.msra.mxu0 0.0
    %3058 = vmatprep.mubr.f32.mxu0 0.0
    %3059 = vmatmul.mubr.f32.gmra.mxu0 %v2989
    %v3060 = vpop.f32.mrf.mxu0
    %v3061 = vadd.f32 %v2980, %v3060
    %v3062 = vpop.f32.mrf.mxu0
    %3063 = vmatprep.mubr.f32.mxu0 0.0
    %3064 = vmatmul.mubr.f32.gmra.mxu0 %v2992
    %v3065 = vpop.f32.mrf.mxu0
    %v3066 = vadd.f32 %v2985, %v3065
    %v3067 = vpop.f32.mrf.mxu0
    %3068 = vdwg.mxu0
    %3069 = vrot.lane.b32.xlu0 %v2249, 112
    %v3070 = vpop.permute.xlu0 %3069
    %3071 = vrot.lane.b32.xlu0 %v2237, 112
    %v3072 = vpop.permute.xlu0 %3071
    %v3073 = vsel %vm352, %v3070, 0
    %v3075 = vsel %vm352, %v3072, 0
    %3077 = vmatprep.subr.mxu0 0.0
    %3078 = vmatpush1.xpose.msra.mxu0 0.0
    %3079 = vmatprep.subr.mxu0 0.0
    %3080 = vmatpush1.xpose.msra.mxu0 0.0
    %3081 = vmatprep.subr.mxu0 0.0
    %3082 = vmatpush1.xpose.msra.mxu0 0.0
    %3083 = vmatprep.subr.mxu0 0.0
    %3084 = vmatpush1.xpose.msra.mxu0 0.0
    %3085 = vmatprep.subr.mxu0 0.0
    %3086 = vmatpush1.xpose.msra.mxu0 0.0
    %3087 = vmatprep.subr.mxu0 0.0
    %3088 = vmatpush1.xpose.msra.mxu0 0.0
    %3089 = vmatprep.subr.mxu0 0.0
    %3090 = vmatpush1.xpose.msra.mxu0 0.0
    %3091 = vmatprep.subr.mxu0 0.0
    %3092 = vmatpush1.xpose.msra.mxu0 0.0
    %3093 = vmatprep.subr.mxu0 0.0
    %3094 = vmatpush1.xpose.msra.mxu0 0.0
    %3095 = vmatprep.subr.mxu0 0.0
    %3096 = vmatpush1.xpose.msra.mxu0 0.0
    %3097 = vmatprep.subr.mxu0 0.0
    %3098 = vmatpush1.xpose.msra.mxu0 0.0
    %3099 = vmatprep.subr.mxu0 0.0
    %3100 = vmatpush1.xpose.msra.mxu0 0.0
    %3101 = vmatprep.subr.mxu0 0.0
    %3102 = vmatpush1.xpose.msra.mxu0 0.0
    %3103 = vmatprep.subr.mxu0 0.0
    %3104 = vmatpush1.xpose.msra.mxu0 0.0
    %3105 = vmatprep.subr.mxu0 0.0
    %3106 = vmatpush1.xpose.msra.mxu0 0.0
    %3107 = vmatprep.subr.mxu0 0.0
    %3108 = vmatpush1.xpose.msra.mxu0 %v3075
    %3109 = vmatprep.subr.mxu0 0.0
    %3110 = vmatpush2.xpose.msra.mxu0 0.0
    %3111 = vmatprep.subr.mxu0 0.0
    %3112 = vmatpush2.xpose.msra.mxu0 0.0
    %3113 = vmatprep.subr.mxu0 0.0
    %3114 = vmatpush2.xpose.msra.mxu0 0.0
    %3115 = vmatprep.subr.mxu0 0.0
    %3116 = vmatpush2.xpose.msra.mxu0 0.0
    %3117 = vmatprep.subr.mxu0 0.0
    %3118 = vmatpush2.xpose.msra.mxu0 0.0
    %3119 = vmatprep.subr.mxu0 0.0
    %3120 = vmatpush2.xpose.msra.mxu0 0.0
    %3121 = vmatprep.subr.mxu0 0.0
    %3122 = vmatpush2.xpose.msra.mxu0 0.0
    %3123 = vmatprep.subr.mxu0 0.0
    %3124 = vmatpush2.xpose.msra.mxu0 0.0
    %3125 = vmatprep.subr.mxu0 0.0
    %3126 = vmatpush2.xpose.msra.mxu0 0.0
    %3127 = vmatprep.subr.mxu0 0.0
    %3128 = vmatpush2.xpose.msra.mxu0 0.0
    %3129 = vmatprep.subr.mxu0 0.0
    %3130 = vmatpush2.xpose.msra.mxu0 0.0
    %3131 = vmatprep.subr.mxu0 0.0
    %3132 = vmatpush2.xpose.msra.mxu0 0.0
    %3133 = vmatprep.subr.mxu0 0.0
    %3134 = vmatpush2.xpose.msra.mxu0 0.0
    %3135 = vmatprep.subr.mxu0 0.0
    %3136 = vmatpush2.xpose.msra.mxu0 0.0
    %3137 = vmatprep.subr.mxu0 0.0
    %3138 = vmatpush2.xpose.msra.mxu0 0.0
    %3139 = vmatprep.subr.mxu0 0.0
    %3140 = vmatpush2.xpose.msra.mxu0 0.0
    %3141 = vmatprep.mubr.f32.mxu0 0.0
    %3142 = vmatmul.mubr.f32.gmra.mxu0 %v3073
    %v3143 = vpop.f32.mrf.mxu0
    %v3144 = vadd.f32 %v193, %v3143
    %v3145 = vpop.f32.mrf.mxu0
    %3146 = vdwg.mxu0
    %3147 = vrot.lane.b32.xlu0 %v2250, 112
    %v3148 = vpop.permute.xlu0 %3147
    %3149 = vrot.lane.b32.xlu0 %v2242, 112
    %v3150 = vpop.permute.xlu0 %3149
    %v3151 = vsel %vm352, %v3148, 0
    %v3153 = vsel %vm352, %v3150, 0
    %3155 = vmatprep.subr.mxu0 0.0
    %3156 = vmatpush1.xpose.msra.mxu0 0.0
    %3157 = vmatprep.subr.mxu0 0.0
    %3158 = vmatpush1.xpose.msra.mxu0 0.0
    %3159 = vmatprep.subr.mxu0 0.0
    %3160 = vmatpush1.xpose.msra.mxu0 0.0
    %3161 = vmatprep.subr.mxu0 0.0
    %3162 = vmatpush1.xpose.msra.mxu0 0.0
    %3163 = vmatprep.subr.mxu0 0.0
    %3164 = vmatpush1.xpose.msra.mxu0 0.0
    %3165 = vmatprep.subr.mxu0 0.0
    %3166 = vmatpush1.xpose.msra.mxu0 0.0
    %3167 = vmatprep.subr.mxu0 0.0
    %3168 = vmatpush1.xpose.msra.mxu0 0.0
    %3169 = vmatprep.subr.mxu0 0.0
    %3170 = vmatpush1.xpose.msra.mxu0 0.0
    %3171 = vmatprep.subr.mxu0 0.0
    %3172 = vmatpush1.xpose.msra.mxu0 0.0
    %3173 = vmatprep.subr.mxu0 0.0
    %3174 = vmatpush1.xpose.msra.mxu0 0.0
    %3175 = vmatprep.subr.mxu0 0.0
    %3176 = vmatpush1.xpose.msra.mxu0 0.0
    %3177 = vmatprep.subr.mxu0 0.0
    %3178 = vmatpush1.xpose.msra.mxu0 0.0
    %3179 = vmatprep.subr.mxu0 0.0
    %3180 = vmatpush1.xpose.msra.mxu0 0.0
    %3181 = vmatprep.subr.mxu0 0.0
    %3182 = vmatpush1.xpose.msra.mxu0 0.0
    %3183 = vmatprep.subr.mxu0 0.0
    %3184 = vmatpush1.xpose.msra.mxu0 0.0
    %3185 = vmatprep.subr.mxu0 0.0
    %3186 = vmatpush1.xpose.msra.mxu0 %v3153
    %3187 = vmatprep.subr.mxu0 0.0
    %3188 = vmatpush2.xpose.msra.mxu0 0.0
    %3189 = vmatprep.subr.mxu0 0.0
    %3190 = vmatpush2.xpose.msra.mxu0 0.0
    %3191 = vmatprep.subr.mxu0 0.0
    %3192 = vmatpush2.xpose.msra.mxu0 0.0
    %3193 = vmatprep.subr.mxu0 0.0
    %3194 = vmatpush2.xpose.msra.mxu0 0.0
    %3195 = vmatprep.subr.mxu0 0.0
    %3196 = vmatpush2.xpose.msra.mxu0 0.0
    %3197 = vmatprep.subr.mxu0 0.0
    %3198 = vmatpush2.xpose.msra.mxu0 0.0
    %3199 = vmatprep.subr.mxu0 0.0
    %3200 = vmatpush2.xpose.msra.mxu0 0.0
    %3201 = vmatprep.subr.mxu0 0.0
    %3202 = vmatpush2.xpose.msra.mxu0 0.0
    %3203 = vmatprep.subr.mxu0 0.0
    %3204 = vmatpush2.xpose.msra.mxu0 0.0
    %3205 = vmatprep.subr.mxu0 0.0
    %3206 = vmatpush2.xpose.msra.mxu0 0.0
    %3207 = vmatprep.subr.mxu0 0.0
    %3208 = vmatpush2.xpose.msra.mxu0 0.0
    %3209 = vmatprep.subr.mxu0 0.0
    %3210 = vmatpush2.xpose.msra.mxu0 0.0
    %3211 = vmatprep.subr.mxu0 0.0
    %3212 = vmatpush2.xpose.msra.mxu0 0.0
    %3213 = vmatprep.subr.mxu0 0.0
    %3214 = vmatpush2.xpose.msra.mxu0 0.0
    %3215 = vmatprep.subr.mxu0 0.0
    %3216 = vmatpush2.xpose.msra.mxu0 0.0
    %3217 = vmatprep.subr.mxu0 0.0
    %3218 = vmatpush2.xpose.msra.mxu0 0.0
    %3219 = vmatprep.mubr.f32.mxu0 0.0
    %3220 = vmatmul.mubr.f32.gmra.mxu0 %v3151
    %v3221 = vpop.f32.mrf.mxu0
    %v3222 = vadd.f32 %v194, %v3221
    %v3223 = vpop.f32.mrf.mxu0
    %3224 = vdwg.mxu0
    %v3225 = vsel %vm352, %v3144, -inf
    %3226 = vmax.xlane.f32.xlu0 %v3225
    %v3227 = vpop.xlane.xlu0 %3226
    %v3228 = vsel %vm352, %v3222, -inf
    %3229 = vmax.xlane.f32.xlu0 %v3228
    %v3230 = vpop.xlane.xlu0 %3229
    %v3231 = vsub.f32 %v3144, %v3227
    %v3232 = vsub.f32 %v3222, %v3230
    %v3233 = vmul.f32 %v3231, 1.442695
    %v3234 = vpow.pop %v3233
    %v3235 = vmul.f32 %v3232, 1.442695
    %v3236 = vpow.pop %v3235
    %v3237 = vsel %vm352, %v3234, 0.0
    %3238 = vadd.xlane.f32.xlu0 %v3237
    %v3239 = vpop.xlane.xlu0 %3238
    %v3240 = vsel %vm352, %v3236, 0.0
    %3241 = vadd.xlane.f32.xlu0 %v3240
    %v3242 = vpop.xlane.xlu0 %3241
    %v3243 = vrcp.pop %v3239
    %v3244 = vrcp.pop %v3242
    %v3245 = vmul.f32 %v3234, %v3243
    %v3246 = vmul.f32 %v3236, %v3244
    %3247 = vrot.lane.b32.xlu0 %v2237, 80
    %v3248 = vpop.permute.xlu0 %3247
    %v3251 = vsel %vm352, %v3245, 0
    %3253 = vmatprep.subr.mxu0 0.0
    %3254 = vmatpush1.msra.mxu0 0.0
    %3255 = vmatprep.subr.mxu0 0.0
    %3256 = vmatpush1.msra.mxu0 0.0
    %3257 = vmatprep.subr.mxu0 0.0
    %3258 = vmatpush1.msra.mxu0 0.0
    %3259 = vmatprep.subr.mxu0 0.0
    %3260 = vmatpush1.msra.mxu0 0.0
    %3261 = vmatprep.subr.mxu0 0.0
    %3262 = vmatpush1.msra.mxu0 0.0
    %3263 = vmatprep.subr.mxu0 0.0
    %3264 = vmatpush1.msra.mxu0 0.0
    %3265 = vmatprep.subr.mxu0 0.0
    %3266 = vmatpush1.msra.mxu0 0.0
    %3267 = vmatprep.subr.mxu0 0.0
    %3268 = vmatpush1.msra.mxu0 0.0
    %3269 = vmatprep.subr.mxu0 0.0
    %3270 = vmatpush1.msra.mxu0 0.0
    %3271 = vmatprep.subr.mxu0 0.0
    %3272 = vmatpush1.msra.mxu0 0.0
    %3273 = vmatprep.subr.mxu0 0.0
    %3274 = vmatpush1.msra.mxu0 0.0
    %3275 = vmatprep.subr.mxu0 0.0
    %3276 = vmatpush1.msra.mxu0 0.0
    %3277 = vmatprep.subr.mxu0 0.0
    %3278 = vmatpush1.msra.mxu0 0.0
    %3279 = vmatprep.subr.mxu0 0.0
    %3280 = vmatpush1.msra.mxu0 0.0
    %3281 = vmatprep.subr.mxu0 0.0
    %3282 = vmatpush1.msra.mxu0 0.0
    %3283 = vmatprep.subr.mxu0 0.0
    %3284 = vmatpush1.msra.mxu0 %v3248
    %3285 = vmatprep.subr.mxu0 0.0
    %3286 = vmatpush2.msra.mxu0 0.0
    %3287 = vmatprep.subr.mxu0 0.0
    %3288 = vmatpush2.msra.mxu0 0.0
    %3289 = vmatprep.subr.mxu0 0.0
    %3290 = vmatpush2.msra.mxu0 0.0
    %3291 = vmatprep.subr.mxu0 0.0
    %3292 = vmatpush2.msra.mxu0 0.0
    %3293 = vmatprep.subr.mxu0 0.0
    %3294 = vmatpush2.msra.mxu0 0.0
    %3295 = vmatprep.subr.mxu0 0.0
    %3296 = vmatpush2.msra.mxu0 0.0
    %3297 = vmatprep.subr.mxu0 0.0
    %3298 = vmatpush2.msra.mxu0 0.0
    %3299 = vmatprep.subr.mxu0 0.0
    %3300 = vmatpush2.msra.mxu0 0.0
    %3301 = vmatprep.subr.mxu0 0.0
    %3302 = vmatpush2.msra.mxu0 0.0
    %3303 = vmatprep.subr.mxu0 0.0
    %3304 = vmatpush2.msra.mxu0 0.0
    %3305 = vmatprep.subr.mxu0 0.0
    %3306 = vmatpush2.msra.mxu0 0.0
    %3307 = vmatprep.subr.mxu0 0.0
    %3308 = vmatpush2.msra.mxu0 0.0
    %3309 = vmatprep.subr.mxu0 0.0
    %3310 = vmatpush2.msra.mxu0 0.0
    %3311 = vmatprep.subr.mxu0 0.0
    %3312 = vmatpush2.msra.mxu0 0.0
    %3313 = vmatprep.subr.mxu0 0.0
    %3314 = vmatpush2.msra.mxu0 0.0
    %3315 = vmatprep.subr.mxu0 0.0
    %3316 = vmatpush2.msra.mxu0 0.0
    %3317 = vmatprep.mubr.f32.mxu0 0.0
    %3318 = vmatmul.mubr.f32.gmra.mxu0 %v3251
    %v3319 = vpop.f32.mrf.mxu0
    %v3320 = vadd.f32 0.0, %v3319
    %v3321 = vpop.f32.mrf.mxu0
    %3322 = vdwg.mxu0
    %3323 = vrot.lane.b32.xlu0 %v2242, 80
    %v3324 = vpop.permute.xlu0 %3323
    %v3327 = vsel %vm352, %v3246, 0
    %3329 = vmatprep.subr.mxu0 0.0
    %3330 = vmatpush1.msra.mxu0 0.0
    %3331 = vmatprep.subr.mxu0 0.0
    %3332 = vmatpush1.msra.mxu0 0.0
    %3333 = vmatprep.subr.mxu0 0.0
    %3334 = vmatpush1.msra.mxu0 0.0
    %3335 = vmatprep.subr.mxu0 0.0
    %3336 = vmatpush1.msra.mxu0 0.0
    %3337 = vmatprep.subr.mxu0 0.0
    %3338 = vmatpush1.msra.mxu0 0.0
    %3339 = vmatprep.subr.mxu0 0.0
    %3340 = vmatpush1.msra.mxu0 0.0
    %3341 = vmatprep.subr.mxu0 0.0
    %3342 = vmatpush1.msra.mxu0 0.0
    %3343 = vmatprep.subr.mxu0 0.0
    %3344 = vmatpush1.msra.mxu0 0.0
    %3345 = vmatprep.subr.mxu0 0.0
    %3346 = vmatpush1.msra.mxu0 0.0
    %3347 = vmatprep.subr.mxu0 0.0
    %3348 = vmatpush1.msra.mxu0 0.0
    %3349 = vmatprep.subr.mxu0 0.0
    %3350 = vmatpush1.msra.mxu0 0.0
    %3351 = vmatprep.subr.mxu0 0.0
    %3352 = vmatpush1.msra.mxu0 0.0
    %3353 = vmatprep.subr.mxu0 0.0
    %3354 = vmatpush1.msra.mxu0 0.0
    %3355 = vmatprep.subr.mxu0 0.0
    %3356 = vmatpush1.msra.mxu0 0.0
    %3357 = vmatprep.subr.mxu0 0.0
    %3358 = vmatpush1.msra.mxu0 0.0
    %3359 = vmatprep.subr.mxu0 0.0
    %3360 = vmatpush1.msra.mxu0 %v3324
    %3361 = vmatprep.subr.mxu0 0.0
    %3362 = vmatpush2.msra.mxu0 0.0
    %3363 = vmatprep.subr.mxu0 0.0
    %3364 = vmatpush2.msra.mxu0 0.0
    %3365 = vmatprep.subr.mxu0 0.0
    %3366 = vmatpush2.msra.mxu0 0.0
    %3367 = vmatprep.subr.mxu0 0.0
    %3368 = vmatpush2.msra.mxu0 0.0
    %3369 = vmatprep.subr.mxu0 0.0
    %3370 = vmatpush2.msra.mxu0 0.0
    %3371 = vmatprep.subr.mxu0 0.0
    %3372 = vmatpush2.msra.mxu0 0.0
    %3373 = vmatprep.subr.mxu0 0.0
    %3374 = vmatpush2.msra.mxu0 0.0
    %3375 = vmatprep.subr.mxu0 0.0
    %3376 = vmatpush2.msra.mxu0 0.0
    %3377 = vmatprep.subr.mxu0 0.0
    %3378 = vmatpush2.msra.mxu0 0.0
    %3379 = vmatprep.subr.mxu0 0.0
    %3380 = vmatpush2.msra.mxu0 0.0
    %3381 = vmatprep.subr.mxu0 0.0
    %3382 = vmatpush2.msra.mxu0 0.0
    %3383 = vmatprep.subr.mxu0 0.0
    %3384 = vmatpush2.msra.mxu0 0.0
    %3385 = vmatprep.subr.mxu0 0.0
    %3386 = vmatpush2.msra.mxu0 0.0
    %3387 = vmatprep.subr.mxu0 0.0
    %3388 = vmatpush2.msra.mxu0 0.0
    %3389 = vmatprep.subr.mxu0 0.0
    %3390 = vmatpush2.msra.mxu0 0.0
    %3391 = vmatprep.subr.mxu0 0.0
    %3392 = vmatpush2.msra.mxu0 0.0
    %3393 = vmatprep.mubr.f32.mxu0 0.0
    %3394 = vmatmul.mubr.f32.gmra.mxu0 %v3327
    %v3395 = vpop.f32.mrf.mxu0
    %v3396 = vadd.f32 0.0, %v3395
    %v3397 = vpop.f32.mrf.mxu0
    %3398 = vdwg.mxu0
    %v3400 = vsel %vm352, %v3320, 0
    %v3403 = vsel %vm352, %v3396, 0
    %3405 = vmatprep.subr.mxu0 0.0
    %3406 = vmatpush1.msra.mxu0 0.0
    %3407 = vmatprep.subr.mxu0 0.0
    %3408 = vmatpush1.msra.mxu0 0.0
    %3409 = vmatprep.subr.mxu0 0.0
    %3410 = vmatpush1.msra.mxu0 0.0
    %3411 = vmatprep.subr.mxu0 0.0
    %3412 = vmatpush1.msra.mxu0 0.0
    %3413 = vmatprep.subr.mxu0 0.0
    %3414 = vmatpush1.msra.mxu0 0.0
    %3415 = vmatprep.subr.mxu0 0.0
    %3416 = vmatpush1.msra.mxu0 0.0
    %3417 = vmatprep.subr.mxu0 0.0
    %3418 = vmatpush1.msra.mxu0 0.0
    %3419 = vmatprep.subr.mxu0 0.0
    %3420 = vmatpush1.msra.mxu0 0.0
    %3421 = vmatprep.subr.mxu0 0.0
    %3422 = vmatpush1.msra.mxu0 0.0
    %3423 = vmatprep.subr.mxu0 0.0
    %3424 = vmatpush1.msra.mxu0 0.0
    %3425 = vmatprep.subr.mxu0 0.0
    %3426 = vmatpush1.msra.mxu0 0.0
    %3427 = vmatprep.subr.mxu0 0.0
    %3428 = vmatpush1.msra.mxu0 0.0
    %3429 = vmatprep.subr.mxu0 0.0
    %3430 = vmatpush1.msra.mxu0 0.0
    %3431 = vmatprep.subr.mxu0 0.0
    %3432 = vmatpush1.msra.mxu0 0.0
    %3433 = vmatprep.subr.mxu0 0.0
    %3434 = vmatpush1.msra.mxu0 0.0
    %3435 = vmatprep.subr.mxu0 0.0
    %3436 = vmatpush1.msra.mxu0 %v2247
    %3437 = vmatprep.subr.mxu0 0.0
    %3438 = vmatpush2.msra.mxu0 0.0
    %3439 = vmatprep.subr.mxu0 0.0
    %3440 = vmatpush2.msra.mxu0 0.0
    %3441 = vmatprep.subr.mxu0 0.0
    %3442 = vmatpush2.msra.mxu0 0.0
    %3443 = vmatprep.subr.mxu0 0.0
    %3444 = vmatpush2.msra.mxu0 0.0
    %3445 = vmatprep.subr.mxu0 0.0
    %3446 = vmatpush2.msra.mxu0 0.0
    %3447 = vmatprep.subr.mxu0 0.0
    %3448 = vmatpush2.msra.mxu0 0.0
    %3449 = vmatprep.subr.mxu0 0.0
    %3450 = vmatpush2.msra.mxu0 0.0
    %3451 = vmatprep.subr.mxu0 0.0
    %3452 = vmatpush2.msra.mxu0 0.0
    %3453 = vmatprep.subr.mxu0 0.0
    %3454 = vmatpush2.msra.mxu0 0.0
    %3455 = vmatprep.subr.mxu0 0.0
    %3456 = vmatpush2.msra.mxu0 0.0
    %3457 = vmatprep.subr.mxu0 0.0
    %3458 = vmatpush2.msra.mxu0 0.0
    %3459 = vmatprep.subr.mxu0 0.0
    %3460 = vmatpush2.msra.mxu0 0.0
    %3461 = vmatprep.subr.mxu0 0.0
    %3462 = vmatpush2.msra.mxu0 0.0
    %3463 = vmatprep.subr.mxu0 0.0
    %3464 = vmatpush2.msra.mxu0 0.0
    %3465 = vmatprep.subr.mxu0 0.0
    %3466 = vmatpush2.msra.mxu0 0.0
    %3467 = vmatprep.subr.mxu0 0.0
    %3468 = vmatpush2.msra.mxu0 0.0
    %3469 = vmatprep.mubr.f32.mxu0 0.0
    %3470 = vmatmul.mubr.f32.gmra.mxu0 %v3400
    %v3471 = vpop.f32.mrf.mxu0
    %v3472 = vadd.f32 0.0, %v3471
    %v3473 = vpop.f32.mrf.mxu0
    %3474 = vmatprep.mubr.f32.mxu0 0.0
    %3475 = vmatmul.mubr.f32.gmra.mxu0 %v3403
    %v3476 = vpop.f32.mrf.mxu0
    %v3477 = vadd.f32 0.0, %v3476
    %v3478 = vpop.f32.mrf.mxu0
    %3479 = vdwg.mxu0
    %v3480 = vadd.f32 %v3061, %v3472
    %v3481 = vadd.f32 %v3066, %v3477
    %3482 = vrot.lane.b32.xlu0 %v2249, 104
    %v3483 = vpop.permute.xlu0 %3482
    %3484 = vrot.lane.b32.xlu0 %v2237, 104
    %v3485 = vpop.permute.xlu0 %3484
    %v3486 = vsel %vm352, %v3483, 0
    %v3488 = vsel %vm352, %v3485, 0
    %3490 = vmatprep.subr.mxu0 0.0
    %3491 = vmatpush1.xpose.msra.mxu0 0.0
    %3492 = vmatprep.subr.mxu0 0.0
    %3493 = vmatpush1.xpose.msra.mxu0 0.0
    %3494 = vmatprep.subr.mxu0 0.0
    %3495 = vmatpush1.xpose.msra.mxu0 0.0
    %3496 = vmatprep.subr.mxu0 0.0
    %3497 = vmatpush1.xpose.msra.mxu0 0.0
    %3498 = vmatprep.subr.mxu0 0.0
    %3499 = vmatpush1.xpose.msra.mxu0 0.0
    %3500 = vmatprep.subr.mxu0 0.0
    %3501 = vmatpush1.xpose.msra.mxu0 0.0
    %3502 = vmatprep.subr.mxu0 0.0
    %3503 = vmatpush1.xpose.msra.mxu0 0.0
    %3504 = vmatprep.subr.mxu0 0.0
    %3505 = vmatpush1.xpose.msra.mxu0 0.0
    %3506 = vmatprep.subr.mxu0 0.0
    %3507 = vmatpush1.xpose.msra.mxu0 0.0
    %3508 = vmatprep.subr.mxu0 0.0
    %3509 = vmatpush1.xpose.msra.mxu0 0.0
    %3510 = vmatprep.subr.mxu0 0.0
    %3511 = vmatpush1.xpose.msra.mxu0 0.0
    %3512 = vmatprep.subr.mxu0 0.0
    %3513 = vmatpush1.xpose.msra.mxu0 0.0
    %3514 = vmatprep.subr.mxu0 0.0
    %3515 = vmatpush1.xpose.msra.mxu0 0.0
    %3516 = vmatprep.subr.mxu0 0.0
    %3517 = vmatpush1.xpose.msra.mxu0 0.0
    %3518 = vmatprep.subr.mxu0 0.0
    %3519 = vmatpush1.xpose.msra.mxu0 0.0
    %3520 = vmatprep.subr.mxu0 0.0
    %3521 = vmatpush1.xpose.msra.mxu0 %v3488
    %3522 = vmatprep.subr.mxu0 0.0
    %3523 = vmatpush2.xpose.msra.mxu0 0.0
    %3524 = vmatprep.subr.mxu0 0.0
    %3525 = vmatpush2.xpose.msra.mxu0 0.0
    %3526 = vmatprep.subr.mxu0 0.0
    %3527 = vmatpush2.xpose.msra.mxu0 0.0
    %3528 = vmatprep.subr.mxu0 0.0
    %3529 = vmatpush2.xpose.msra.mxu0 0.0
    %3530 = vmatprep.subr.mxu0 0.0
    %3531 = vmatpush2.xpose.msra.mxu0 0.0
    %3532 = vmatprep.subr.mxu0 0.0
    %3533 = vmatpush2.xpose.msra.mxu0 0.0
    %3534 = vmatprep.subr.mxu0 0.0
    %3535 = vmatpush2.xpose.msra.mxu0 0.0
    %3536 = vmatprep.subr.mxu0 0.0
    %3537 = vmatpush2.xpose.msra.mxu0 0.0
    %3538 = vmatprep.subr.mxu0 0.0
    %3539 = vmatpush2.xpose.msra.mxu0 0.0
    %3540 = vmatprep.subr.mxu0 0.0
    %3541 = vmatpush2.xpose.msra.mxu0 0.0
    %3542 = vmatprep.subr.mxu0 0.0
    %3543 = vmatpush2.xpose.msra.mxu0 0.0
    %3544 = vmatprep.subr.mxu0 0.0
    %3545 = vmatpush2.xpose.msra.mxu0 0.0
    %3546 = vmatprep.subr.mxu0 0.0
    %3547 = vmatpush2.xpose.msra.mxu0 0.0
    %3548 = vmatprep.subr.mxu0 0.0
    %3549 = vmatpush2.xpose.msra.mxu0 0.0
    %3550 = vmatprep.subr.mxu0 0.0
    %3551 = vmatpush2.xpose.msra.mxu0 0.0
    %3552 = vmatprep.subr.mxu0 0.0
    %3553 = vmatpush2.xpose.msra.mxu0 0.0
    %3554 = vmatprep.mubr.f32.mxu0 0.0
    %3555 = vmatmul.mubr.f32.gmra.mxu0 %v3486
    %v3556 = vpop.f32.mrf.mxu0
    %v3557 = vadd.f32 %v193, %v3556
    %v3558 = vpop.f32.mrf.mxu0
    %3559 = vdwg.mxu0
    %3560 = vrot.lane.b32.xlu0 %v2250, 104
    %v3561 = vpop.permute.xlu0 %3560
    %3562 = vrot.lane.b32.xlu0 %v2242, 104
    %v3563 = vpop.permute.xlu0 %3562
    %v3564 = vsel %vm352, %v3561, 0
    %v3566 = vsel %vm352, %v3563, 0
    %3568 = vmatprep.subr.mxu0 0.0
    %3569 = vmatpush1.xpose.msra.mxu0 0.0
    %3570 = vmatprep.subr.mxu0 0.0
    %3571 = vmatpush1.xpose.msra.mxu0 0.0
    %3572 = vmatprep.subr.mxu0 0.0
    %3573 = vmatpush1.xpose.msra.mxu0 0.0
    %3574 = vmatprep.subr.mxu0 0.0
    %3575 = vmatpush1.xpose.msra.mxu0 0.0
    %3576 = vmatprep.subr.mxu0 0.0
    %3577 = vmatpush1.xpose.msra.mxu0 0.0
    %3578 = vmatprep.subr.mxu0 0.0
    %3579 = vmatpush1.xpose.msra.mxu0 0.0
    %3580 = vmatprep.subr.mxu0 0.0
    %3581 = vmatpush1.xpose.msra.mxu0 0.0
    %3582 = vmatprep.subr.mxu0 0.0
    %3583 = vmatpush1.xpose.msra.mxu0 0.0
    %3584 = vmatprep.subr.mxu0 0.0
    %3585 = vmatpush1.xpose.msra.mxu0 0.0
    %3586 = vmatprep.subr.mxu0 0.0
    %3587 = vmatpush1.xpose.msra.mxu0 0.0
    %3588 = vmatprep.subr.mxu0 0.0
    %3589 = vmatpush1.xpose.msra.mxu0 0.0
    %3590 = vmatprep.subr.mxu0 0.0
    %3591 = vmatpush1.xpose.msra.mxu0 0.0
    %3592 = vmatprep.subr.mxu0 0.0
    %3593 = vmatpush1.xpose.msra.mxu0 0.0
    %3594 = vmatprep.subr.mxu0 0.0
    %3595 = vmatpush1.xpose.msra.mxu0 0.0
    %3596 = vmatprep.subr.mxu0 0.0
    %3597 = vmatpush1.xpose.msra.mxu0 0.0
    %3598 = vmatprep.subr.mxu0 0.0
    %3599 = vmatpush1.xpose.msra.mxu0 %v3566
    %3600 = vmatprep.subr.mxu0 0.0
    %3601 = vmatpush2.xpose.msra.mxu0 0.0
    %3602 = vmatprep.subr.mxu0 0.0
    %3603 = vmatpush2.xpose.msra.mxu0 0.0
    %3604 = vmatprep.subr.mxu0 0.0
    %3605 = vmatpush2.xpose.msra.mxu0 0.0
    %3606 = vmatprep.subr.mxu0 0.0
    %3607 = vmatpush2.xpose.msra.mxu0 0.0
    %3608 = vmatprep.subr.mxu0 0.0
    %3609 = vmatpush2.xpose.msra.mxu0 0.0
    %3610 = vmatprep.subr.mxu0 0.0
    %3611 = vmatpush2.xpose.msra.mxu0 0.0
    %3612 = vmatprep.subr.mxu0 0.0
    %3613 = vmatpush2.xpose.msra.mxu0 0.0
    %3614 = vmatprep.subr.mxu0 0.0
    %3615 = vmatpush2.xpose.msra.mxu0 0.0
    %3616 = vmatprep.subr.mxu0 0.0
    %3617 = vmatpush2.xpose.msra.mxu0 0.0
    %3618 = vmatprep.subr.mxu0 0.0
    %3619 = vmatpush2.xpose.msra.mxu0 0.0
    %3620 = vmatprep.subr.mxu0 0.0
    %3621 = vmatpush2.xpose.msra.mxu0 0.0
    %3622 = vmatprep.subr.mxu0 0.0
    %3623 = vmatpush2.xpose.msra.mxu0 0.0
    %3624 = vmatprep.subr.mxu0 0.0
    %3625 = vmatpush2.xpose.msra.mxu0 0.0
    %3626 = vmatprep.subr.mxu0 0.0
    %3627 = vmatpush2.xpose.msra.mxu0 0.0
    %3628 = vmatprep.subr.mxu0 0.0
    %3629 = vmatpush2.xpose.msra.mxu0 0.0
    %3630 = vmatprep.subr.mxu0 0.0
    %3631 = vmatpush2.xpose.msra.mxu0 0.0
    %3632 = vmatprep.mubr.f32.mxu0 0.0
    %3633 = vmatmul.mubr.f32.gmra.mxu0 %v3564
    %v3634 = vpop.f32.mrf.mxu0
    %v3635 = vadd.f32 %v194, %v3634
    %v3636 = vpop.f32.mrf.mxu0
    %3637 = vdwg.mxu0
    %v3638 = vsel %vm352, %v3557, -inf
    %3639 = vmax.xlane.f32.xlu0 %v3638
    %v3640 = vpop.xlane.xlu0 %3639
    %v3641 = vsel %vm352, %v3635, -inf
    %3642 = vmax.xlane.f32.xlu0 %v3641
    %v3643 = vpop.xlane.xlu0 %3642
    %v3644 = vsub.f32 %v3557, %v3640
    %v3645 = vsub.f32 %v3635, %v3643
    %v3646 = vmul.f32 %v3644, 1.442695
    %v3647 = vpow.pop %v3646
    %v3648 = vmul.f32 %v3645, 1.442695
    %v3649 = vpow.pop %v3648
    %v3650 = vsel %vm352, %v3647, 0.0
    %3651 = vadd.xlane.f32.xlu0 %v3650
    %v3652 = vpop.xlane.xlu0 %3651
    %v3653 = vsel %vm352, %v3649, 0.0
    %3654 = vadd.xlane.f32.xlu0 %v3653
    %v3655 = vpop.xlane.xlu0 %3654
    %v3656 = vrcp.pop %v3652
    %v3657 = vrcp.pop %v3655
    %v3658 = vmul.f32 %v3647, %v3656
    %v3659 = vmul.f32 %v3649, %v3657
    %3660 = vrot.lane.b32.xlu0 %v2237, 72
    %v3661 = vpop.permute.xlu0 %3660
    %v3664 = vsel %vm352, %v3658, 0
    %3666 = vmatprep.subr.mxu0 0.0
    %3667 = vmatpush1.msra.mxu0 0.0
    %3668 = vmatprep.subr.mxu0 0.0
    %3669 = vmatpush1.msra.mxu0 0.0
    %3670 = vmatprep.subr.mxu0 0.0
    %3671 = vmatpush1.msra.mxu0 0.0
    %3672 = vmatprep.subr.mxu0 0.0
    %3673 = vmatpush1.msra.mxu0 0.0
    %3674 = vmatprep.subr.mxu0 0.0
    %3675 = vmatpush1.msra.mxu0 0.0
    %3676 = vmatprep.subr.mxu0 0.0
    %3677 = vmatpush1.msra.mxu0 0.0
    %3678 = vmatprep.subr.mxu0 0.0
    %3679 = vmatpush1.msra.mxu0 0.0
    %3680 = vmatprep.subr.mxu0 0.0
    %3681 = vmatpush1.msra.mxu0 0.0
    %3682 = vmatprep.subr.mxu0 0.0
    %3683 = vmatpush1.msra.mxu0 0.0
    %3684 = vmatprep.subr.mxu0 0.0
    %3685 = vmatpush1.msra.mxu0 0.0
    %3686 = vmatprep.subr.mxu0 0.0
    %3687 = vmatpush1.msra.mxu0 0.0
    %3688 = vmatprep.subr.mxu0 0.0
    %3689 = vmatpush1.msra.mxu0 0.0
    %3690 = vmatprep.subr.mxu0 0.0
    %3691 = vmatpush1.msra.mxu0 0.0
    %3692 = vmatprep.subr.mxu0 0.0
    %3693 = vmatpush1.msra.mxu0 0.0
    %3694 = vmatprep.subr.mxu0 0.0
    %3695 = vmatpush1.msra.mxu0 0.0
    %3696 = vmatprep.subr.mxu0 0.0
    %3697 = vmatpush1.msra.mxu0 %v3661
    %3698 = vmatprep.subr.mxu0 0.0
    %3699 = vmatpush2.msra.mxu0 0.0
    %3700 = vmatprep.subr.mxu0 0.0
    %3701 = vmatpush2.msra.mxu0 0.0
    %3702 = vmatprep.subr.mxu0 0.0
    %3703 = vmatpush2.msra.mxu0 0.0
    %3704 = vmatprep.subr.mxu0 0.0
    %3705 = vmatpush2.msra.mxu0 0.0
    %3706 = vmatprep.subr.mxu0 0.0
    %3707 = vmatpush2.msra.mxu0 0.0
    %3708 = vmatprep.subr.mxu0 0.0
    %3709 = vmatpush2.msra.mxu0 0.0
    %3710 = vmatprep.subr.mxu0 0.0
    %3711 = vmatpush2.msra.mxu0 0.0
    %3712 = vmatprep.subr.mxu0 0.0
    %3713 = vmatpush2.msra.mxu0 0.0
    %3714 = vmatprep.subr.mxu0 0.0
    %3715 = vmatpush2.msra.mxu0 0.0
    %3716 = vmatprep.subr.mxu0 0.0
    %3717 = vmatpush2.msra.mxu0 0.0
    %3718 = vmatprep.subr.mxu0 0.0
    %3719 = vmatpush2.msra.mxu0 0.0
    %3720 = vmatprep.subr.mxu0 0.0
    %3721 = vmatpush2.msra.mxu0 0.0
    %3722 = vmatprep.subr.mxu0 0.0
    %3723 = vmatpush2.msra.mxu0 0.0
    %3724 = vmatprep.subr.mxu0 0.0
    %3725 = vmatpush2.msra.mxu0 0.0
    %3726 = vmatprep.subr.mxu0 0.0
    %3727 = vmatpush2.msra.mxu0 0.0
    %3728 = vmatprep.subr.mxu0 0.0
    %3729 = vmatpush2.msra.mxu0 0.0
    %3730 = vmatprep.mubr.f32.mxu0 0.0
    %3731 = vmatmul.mubr.f32.gmra.mxu0 %v3664
    %v3732 = vpop.f32.mrf.mxu0
    %v3733 = vadd.f32 0.0, %v3732
    %v3734 = vpop.f32.mrf.mxu0
    %3735 = vdwg.mxu0
    %3736 = vrot.lane.b32.xlu0 %v2242, 72
    %v3737 = vpop.permute.xlu0 %3736
    %v3740 = vsel %vm352, %v3659, 0
    %3742 = vmatprep.subr.mxu0 0.0
    %3743 = vmatpush1.msra.mxu0 0.0
    %3744 = vmatprep.subr.mxu0 0.0
    %3745 = vmatpush1.msra.mxu0 0.0
    %3746 = vmatprep.subr.mxu0 0.0
    %3747 = vmatpush1.msra.mxu0 0.0
    %3748 = vmatprep.subr.mxu0 0.0
    %3749 = vmatpush1.msra.mxu0 0.0
    %3750 = vmatprep.subr.mxu0 0.0
    %3751 = vmatpush1.msra.mxu0 0.0
    %3752 = vmatprep.subr.mxu0 0.0
    %3753 = vmatpush1.msra.mxu0 0.0
    %3754 = vmatprep.subr.mxu0 0.0
    %3755 = vmatpush1.msra.mxu0 0.0
    %3756 = vmatprep.subr.mxu0 0.0
    %3757 = vmatpush1.msra.mxu0 0.0
    %3758 = vmatprep.subr.mxu0 0.0
    %3759 = vmatpush1.msra.mxu0 0.0
    %3760 = vmatprep.subr.mxu0 0.0
    %3761 = vmatpush1.msra.mxu0 0.0
    %3762 = vmatprep.subr.mxu0 0.0
    %3763 = vmatpush1.msra.mxu0 0.0
    %3764 = vmatprep.subr.mxu0 0.0
    %3765 = vmatpush1.msra.mxu0 0.0
    %3766 = vmatprep.subr.mxu0 0.0
    %3767 = vmatpush1.msra.mxu0 0.0
    %3768 = vmatprep.subr.mxu0 0.0
    %3769 = vmatpush1.msra.mxu0 0.0
    %3770 = vmatprep.subr.mxu0 0.0
    %3771 = vmatpush1.msra.mxu0 0.0
    %3772 = vmatprep.subr.mxu0 0.0
    %3773 = vmatpush1.msra.mxu0 %v3737
    %3774 = vmatprep.subr.mxu0 0.0
    %3775 = vmatpush2.msra.mxu0 0.0
    %3776 = vmatprep.subr.mxu0 0.0
    %3777 = vmatpush2.msra.mxu0 0.0
    %3778 = vmatprep.subr.mxu0 0.0
    %3779 = vmatpush2.msra.mxu0 0.0
    %3780 = vmatprep.subr.mxu0 0.0
    %3781 = vmatpush2.msra.mxu0 0.0
    %3782 = vmatprep.subr.mxu0 0.0
    %3783 = vmatpush2.msra.mxu0 0.0
    %3784 = vmatprep.subr.mxu0 0.0
    %3785 = vmatpush2.msra.mxu0 0.0
    %3786 = vmatprep.subr.mxu0 0.0
    %3787 = vmatpush2.msra.mxu0 0.0
    %3788 = vmatprep.subr.mxu0 0.0
    %3789 = vmatpush2.msra.mxu0 0.0
    %3790 = vmatprep.subr.mxu0 0.0
    %3791 = vmatpush2.msra.mxu0 0.0
    %3792 = vmatprep.subr.mxu0 0.0
    %3793 = vmatpush2.msra.mxu0 0.0
    %3794 = vmatprep.subr.mxu0 0.0
    %3795 = vmatpush2.msra.mxu0 0.0
    %3796 = vmatprep.subr.mxu0 0.0
    %3797 = vmatpush2.msra.mxu0 0.0
    %3798 = vmatprep.subr.mxu0 0.0
    %3799 = vmatpush2.msra.mxu0 0.0
    %3800 = vmatprep.subr.mxu0 0.0
    %3801 = vmatpush2.msra.mxu0 0.0
    %3802 = vmatprep.subr.mxu0 0.0
    %3803 = vmatpush2.msra.mxu0 0.0
    %3804 = vmatprep.subr.mxu0 0.0
    %3805 = vmatpush2.msra.mxu0 0.0
    %3806 = vmatprep.mubr.f32.mxu0 0.0
    %3807 = vmatmul.mubr.f32.gmra.mxu0 %v3740
    %v3808 = vpop.f32.mrf.mxu0
    %v3809 = vadd.f32 0.0, %v3808
    %v3810 = vpop.f32.mrf.mxu0
    %3811 = vdwg.mxu0
    %v3813 = vsel %vm352, %v3733, 0
    %v3816 = vsel %vm352, %v3809, 0
    %3818 = vmatprep.subr.mxu0 0.0
    %3819 = vmatpush1.msra.mxu0 0.0
    %3820 = vmatprep.subr.mxu0 0.0
    %3821 = vmatpush1.msra.mxu0 0.0
    %3822 = vmatprep.subr.mxu0 0.0
    %3823 = vmatpush1.msra.mxu0 0.0
    %3824 = vmatprep.subr.mxu0 0.0
    %3825 = vmatpush1.msra.mxu0 0.0
    %3826 = vmatprep.subr.mxu0 0.0
    %3827 = vmatpush1.msra.mxu0 0.0
    %3828 = vmatprep.subr.mxu0 0.0
    %3829 = vmatpush1.msra.mxu0 0.0
    %3830 = vmatprep.subr.mxu0 0.0
    %3831 = vmatpush1.msra.mxu0 0.0
    %3832 = vmatprep.subr.mxu0 0.0
    %3833 = vmatpush1.msra.mxu0 0.0
    %3834 = vmatprep.subr.mxu0 0.0
    %3835 = vmatpush1.msra.mxu0 0.0
    %3836 = vmatprep.subr.mxu0 0.0
    %3837 = vmatpush1.msra.mxu0 0.0
    %3838 = vmatprep.subr.mxu0 0.0
    %3839 = vmatpush1.msra.mxu0 0.0
    %3840 = vmatprep.subr.mxu0 0.0
    %3841 = vmatpush1.msra.mxu0 0.0
    %3842 = vmatprep.subr.mxu0 0.0
    %3843 = vmatpush1.msra.mxu0 0.0
    %3844 = vmatprep.subr.mxu0 0.0
    %3845 = vmatpush1.msra.mxu0 0.0
    %3846 = vmatprep.subr.mxu0 0.0
    %3847 = vmatpush1.msra.mxu0 0.0
    %3848 = vmatprep.subr.mxu0 0.0
    %3849 = vmatpush1.msra.mxu0 %v2248
    %3850 = vmatprep.subr.mxu0 0.0
    %3851 = vmatpush2.msra.mxu0 0.0
    %3852 = vmatprep.subr.mxu0 0.0
    %3853 = vmatpush2.msra.mxu0 0.0
    %3854 = vmatprep.subr.mxu0 0.0
    %3855 = vmatpush2.msra.mxu0 0.0
    %3856 = vmatprep.subr.mxu0 0.0
    %3857 = vmatpush2.msra.mxu0 0.0
    %3858 = vmatprep.subr.mxu0 0.0
    %3859 = vmatpush2.msra.mxu0 0.0
    %3860 = vmatprep.subr.mxu0 0.0
    %3861 = vmatpush2.msra.mxu0 0.0
    %3862 = vmatprep.subr.mxu0 0.0
    %3863 = vmatpush2.msra.mxu0 0.0
    %3864 = vmatprep.subr.mxu0 0.0
    %3865 = vmatpush2.msra.mxu0 0.0
    %3866 = vmatprep.subr.mxu0 0.0
    %3867 = vmatpush2.msra.mxu0 0.0
    %3868 = vmatprep.subr.mxu0 0.0
    %3869 = vmatpush2.msra.mxu0 0.0
    %3870 = vmatprep.subr.mxu0 0.0
    %3871 = vmatpush2.msra.mxu0 0.0
    %3872 = vmatprep.subr.mxu0 0.0
    %3873 = vmatpush2.msra.mxu0 0.0
    %3874 = vmatprep.subr.mxu0 0.0
    %3875 = vmatpush2.msra.mxu0 0.0
    %3876 = vmatprep.subr.mxu0 0.0
    %3877 = vmatpush2.msra.mxu0 0.0
    %3878 = vmatprep.subr.mxu0 0.0
    %3879 = vmatpush2.msra.mxu0 0.0
    %3880 = vmatprep.subr.mxu0 0.0
    %3881 = vmatpush2.msra.mxu0 0.0
    %3882 = vmatprep.mubr.f32.mxu0 0.0
    %3883 = vmatmul.mubr.f32.gmra.mxu0 %v3813
    %v3884 = vpop.f32.mrf.mxu0
    %v3885 = vadd.f32 0.0, %v3884
    %v3886 = vpop.f32.mrf.mxu0
    %3887 = vmatprep.mubr.f32.mxu0 0.0
    %3888 = vmatmul.mubr.f32.gmra.mxu0 %v3816
    %v3889 = vpop.f32.mrf.mxu0
    %v3890 = vadd.f32 0.0, %v3889
    %v3891 = vpop.f32.mrf.mxu0
    %3892 = vdwg.mxu0
    %v3893 = vadd.f32 %v3480, %v3885
    %v3894 = vadd.f32 %v3481, %v3890
    %v3895 = vadd.f32 %v2007, %v3893
    %v3896 = vadd.f32 %v2008, %v3894
    %v3897 = vld [vmem:[%s13] sm:$0x1]
    %v3899 = vlaneseq
    %v3900 = vshrl.u32 %v3899, 7
    %v3901 = vsub.s32 0, %v3900
    %v3902 = vrot.slane %v3897, %v3901
    %v3904 = vadd.f32 %v3895, %v3902
    %v3905 = vadd.f32 %v3896, %v3902
    %v3906 = vsel %vm197, %v3904, 0.0
    %3907 = vadd.xlane.f32.xlu0 %v3906
    %v3908 = vpop.xlane.xlu0 %3907
    %v3909 = vsel %vm197, %v3905, 0.0
    %3910 = vadd.xlane.f32.xlu0 %v3909
    %v3911 = vpop.xlane.xlu0 %3910
    %v3912 = vmul.f32 %v3908, %v204
    %v3913 = vmul.f32 %v3911, %v204
    %v3914 = vsub.f32 %v3904, %v3912
    %v3915 = vsub.f32 %v3905, %v3913
    %v3916 = vmul.f32 %v3914, %v3914
    %v3917 = vmul.f32 %v3915, %v3915
    %v3918 = vsel %vm197, %v3916, 0.0
    %3919 = vadd.xlane.f32.xlu0 %v3918
    %v3920 = vpop.xlane.xlu0 %3919
    %v3921 = vsel %vm197, %v3917, 0.0
    %3922 = vadd.xlane.f32.xlu0 %v3921
    %v3923 = vpop.xlane.xlu0 %3922
    %v3924 = vmul.f32 %v3920, 0.032258064
    %v3925 = vmul.f32 %v3923, 0.032258064
    %v3926 = vrsqrt.pop %v3924
    %v3927 = vmul.f32 %v3924, %v3926
    %vm3928 = vcmp.eq.f32.partialorder %v3924, inf
    %v3929 = vsel %vm3928, %v3924, %v3927
    %vm3930 = vcmp.eq.f32.partialorder %v3924, 0.0
    %v3931 = vand.u32 %v3924, 2147483648
    %v3932 = vsel %vm3930, %v3931, %v3929
    %v3933 = vrsqrt.pop %v3925
    %v3934 = vmul.f32 %v3925, %v3933
    %vm3935 = vcmp.eq.f32.partialorder %v3925, inf
    %v3936 = vsel %vm3935, %v3925, %v3934
    %vm3937 = vcmp.eq.f32.partialorder %v3925, 0.0
    %v3938 = vand.u32 %v3925, 2147483648
    %v3939 = vsel %vm3937, %v3938, %v3936
    %v3940 = vadd.f32 %v3932, 1e-06
    %v3941 = vadd.f32 %v3939, 1e-06
    %v3942 = vrcp.pop %v3940
    %v3943 = vrcp.pop %v3941
    %v3944 = vlaneseq
    %v3945 = vshrl.u32 %v3944, 7
    %v3946 = vsub.s32 2, %v3945
    %v3947 = vrot.slane %v195, %v3946
    %v3948 = vmul.f32 %v3947, %v3914
    %v3949 = vmul.f32 %v3947, %v3915
    %v3950 = vmul.f32 %v3948, %v3942
    %v3951 = vmul.f32 %v3949, %v3943
    %v3952 = vlaneseq
    %v3953 = vshrl.u32 %v3952, 7
    %v3954 = vsub.s32 2, %v3953
    %v3955 = vrot.slane %v196, %v3954
    %v3956 = vadd.f32 %v3950, %v3955
    %v3957 = vadd.f32 %v3951, %v3955
    %v3958 = vld [vmem:[#allocation13] sm:$0xff]
    %v3959 = vld [vmem:[#allocation13 + $0x8] sm:$0xff]
    %v3960 = vld [vmem:[#allocation13 + $0x10] sm:$0xff]
    %v3961 = vld [vmem:[#allocation13 + $0x18] sm:$0xff]
    %v3962 = vld [vmem:[%s15] sm:$0x1]
    %v3964 = vlaneseq
    %v3965 = vshrl.u32 %v3964, 7
    %v3966 = vsub.s32 0, %v3965
    %v3967 = vrot.slane %v3962, %v3966
    %v3970 = vsel %vm197, %v3956, 0
    %v3973 = vsel %vm197, %v3957, 0
    %3975 = vmatprep.subr.mxu0 0.0
    %3976 = vmatpush1.msra.mxu0 0.0
    %3977 = vmatprep.subr.mxu0 0.0
    %3978 = vmatpush1.msra.mxu0 0.0
    %3979 = vmatprep.subr.mxu0 0.0
    %3980 = vmatpush1.msra.mxu0 0.0
    %3981 = vmatprep.subr.mxu0 0.0
    %3982 = vmatpush1.msra.mxu0 0.0
    %3983 = vmatprep.subr.mxu0 0.0
    %3984 = vmatpush1.msra.mxu0 0.0
    %3985 = vmatprep.subr.mxu0 0.0
    %3986 = vmatpush1.msra.mxu0 0.0
    %3987 = vmatprep.subr.mxu0 0.0
    %3988 = vmatpush1.msra.mxu0 0.0
    %3989 = vmatprep.subr.mxu0 0.0
    %3990 = vmatpush1.msra.mxu0 0.0
    %3991 = vmatprep.subr.mxu0 0.0
    %3992 = vmatpush1.msra.mxu0 0.0
    %3993 = vmatprep.subr.mxu0 0.0
    %3994 = vmatpush1.msra.mxu0 0.0
    %3995 = vmatprep.subr.mxu0 0.0
    %3996 = vmatpush1.msra.mxu0 0.0
    %3997 = vmatprep.subr.mxu0 0.0
    %3998 = vmatpush1.msra.mxu0 0.0
    %3999 = vmatprep.subr.mxu0 0.0
    %4000 = vmatpush1.msra.mxu0 %v3961
    %4001 = vmatprep.subr.mxu0 0.0
    %4002 = vmatpush1.msra.mxu0 %v3960
    %4003 = vmatprep.subr.mxu0 0.0
    %4004 = vmatpush1.msra.mxu0 %v3959
    %4005 = vmatprep.subr.mxu0 0.0
    %4006 = vmatpush1.msra.mxu0 %v3958
    %4007 = vmatprep.subr.mxu0 0.0
    %4008 = vmatpush2.msra.mxu0 0.0
    %4009 = vmatprep.subr.mxu0 0.0
    %4010 = vmatpush2.msra.mxu0 0.0
    %4011 = vmatprep.subr.mxu0 0.0
    %4012 = vmatpush2.msra.mxu0 0.0
    %4013 = vmatprep.subr.mxu0 0.0
    %4014 = vmatpush2.msra.mxu0 0.0
    %4015 = vmatprep.subr.mxu0 0.0
    %4016 = vmatpush2.msra.mxu0 0.0
    %4017 = vmatprep.subr.mxu0 0.0
    %4018 = vmatpush2.msra.mxu0 0.0
    %4019 = vmatprep.subr.mxu0 0.0
    %4020 = vmatpush2.msra.mxu0 0.0
    %4021 = vmatprep.subr.mxu0 0.0
    %4022 = vmatpush2.msra.mxu0 0.0
    %4023 = vmatprep.subr.mxu0 0.0
    %4024 = vmatpush2.msra.mxu0 0.0
    %4025 = vmatprep.subr.mxu0 0.0
    %4026 = vmatpush2.msra.mxu0 0.0
    %4027 = vmatprep.subr.mxu0 0.0
    %4028 = vmatpush2.msra.mxu0 0.0
    %4029 = vmatprep.subr.mxu0 0.0
    %4030 = vmatpush2.msra.mxu0 0.0
    %4031 = vmatprep.subr.mxu0 0.0
    %4032 = vmatpush2.msra.mxu0 0.0
    %4033 = vmatprep.subr.mxu0 0.0
    %4034 = vmatpush2.msra.mxu0 0.0
    %4035 = vmatprep.subr.mxu0 0.0
    %4036 = vmatpush2.msra.mxu0 0.0
    %4037 = vmatprep.subr.mxu0 0.0
    %4038 = vmatpush2.msra.mxu0 0.0
    %4039 = vmatprep.mubr.f32.mxu0 0.0
    %4040 = vmatmul.mubr.f32.gmra.mxu0 %v3970
    %v4041 = vpop.f32.mrf.mxu0
    %v4042 = vadd.f32 %v3967, %v4041
    %v4043 = vpop.f32.mrf.mxu0
    %4044 = vmatprep.mubr.f32.mxu0 0.0
    %4045 = vmatmul.mubr.f32.gmra.mxu0 %v3973
    %v4046 = vpop.f32.mrf.mxu0
    %v4047 = vadd.f32 %v3967, %v4046
    %v4048 = vpop.f32.mrf.mxu0
    %4049 = vdwg.mxu0
    %v4050 = vmax.f32 %v4042, 0.0
    %v4051 = vmax.f32 %v4047, 0.0
    %v4052 = vld [vmem:[%s16] sm:$0xff]
    %v4053 = vld [vmem:[%s16 + $0x8] sm:$0xff]
    %v4054 = vld [vmem:[%s16 + $0x10] sm:$0xff]
    %v4055 = vld [vmem:[%s16 + $0x18] sm:$0xff]
    %v4056 = vld [vmem:[%s16 + $0x20] sm:$0xff]
    %v4057 = vld [vmem:[%s16 + $0x28] sm:$0xff]
    %v4058 = vld [vmem:[%s16 + $0x30] sm:$0xff]
    %v4059 = vld [vmem:[%s16 + $0x38] sm:$0xff]
    %vm4060 = vcmask 523264
    %v4062 = vsel %vm4060, %v4050, 0
    %v4065 = vsel %vm4060, %v4051, 0
    %4067 = vmatprep.subr.mxu0 0.0
    %4068 = vmatpush1.msra.mxu0 0.0
    %4069 = vmatprep.subr.mxu0 0.0
    %4070 = vmatpush1.msra.mxu0 0.0
    %4071 = vmatprep.subr.mxu0 0.0
    %4072 = vmatpush1.msra.mxu0 0.0
    %4073 = vmatprep.subr.mxu0 0.0
    %4074 = vmatpush1.msra.mxu0 0.0
    %4075 = vmatprep.subr.mxu0 0.0
    %4076 = vmatpush1.msra.mxu0 0.0
    %4077 = vmatprep.subr.mxu0 0.0
    %4078 = vmatpush1.msra.mxu0 0.0
    %4079 = vmatprep.subr.mxu0 0.0
    %4080 = vmatpush1.msra.mxu0 0.0
    %4081 = vmatprep.subr.mxu0 0.0
    %4082 = vmatpush1.msra.mxu0 0.0
    %4083 = vmatprep.subr.mxu0 0.0
    %4084 = vmatpush1.msra.mxu0 %v4059
    %4085 = vmatprep.subr.mxu0 0.0
    %4086 = vmatpush1.msra.mxu0 %v4058
    %4087 = vmatprep.subr.mxu0 0.0
    %4088 = vmatpush1.msra.mxu0 %v4057
    %4089 = vmatprep.subr.mxu0 0.0
    %4090 = vmatpush1.msra.mxu0 %v4056
    %4091 = vmatprep.subr.mxu0 0.0
    %4092 = vmatpush1.msra.mxu0 %v4055
    %4093 = vmatprep.subr.mxu0 0.0
    %4094 = vmatpush1.msra.mxu0 %v4054
    %4095 = vmatprep.subr.mxu0 0.0
    %4096 = vmatpush1.msra.mxu0 %v4053
    %4097 = vmatprep.subr.mxu0 0.0
    %4098 = vmatpush1.msra.mxu0 %v4052
    %4099 = vmatprep.subr.mxu0 0.0
    %4100 = vmatpush2.msra.mxu0 0.0
    %4101 = vmatprep.subr.mxu0 0.0
    %4102 = vmatpush2.msra.mxu0 0.0
    %4103 = vmatprep.subr.mxu0 0.0
    %4104 = vmatpush2.msra.mxu0 0.0
    %4105 = vmatprep.subr.mxu0 0.0
    %4106 = vmatpush2.msra.mxu0 0.0
    %4107 = vmatprep.subr.mxu0 0.0
    %4108 = vmatpush2.msra.mxu0 0.0
    %4109 = vmatprep.subr.mxu0 0.0
    %4110 = vmatpush2.msra.mxu0 0.0
    %4111 = vmatprep.subr.mxu0 0.0
    %4112 = vmatpush2.msra.mxu0 0.0
    %4113 = vmatprep.subr.mxu0 0.0
    %4114 = vmatpush2.msra.mxu0 0.0
    %4115 = vmatprep.subr.mxu0 0.0
    %4116 = vmatpush2.msra.mxu0 0.0
    %4117 = vmatprep.subr.mxu0 0.0
    %4118 = vmatpush2.msra.mxu0 0.0
    %4119 = vmatprep.subr.mxu0 0.0
    %4120 = vmatpush2.msra.mxu0 0.0
    %4121 = vmatprep.subr.mxu0 0.0
    %4122 = vmatpush2.msra.mxu0 0.0
    %4123 = vmatprep.subr.mxu0 0.0
    %4124 = vmatpush2.msra.mxu0 0.0
    %4125 = vmatprep.subr.mxu0 0.0
    %4126 = vmatpush2.msra.mxu0 0.0
    %4127 = vmatprep.subr.mxu0 0.0
    %4128 = vmatpush2.msra.mxu0 0.0
    %4129 = vmatprep.subr.mxu0 0.0
    %4130 = vmatpush2.msra.mxu0 0.0
    %4131 = vmatprep.mubr.f32.mxu0 0.0
    %4132 = vmatmul.mubr.f32.gmra.mxu0 %v4062
    %v4133 = vpop.f32.mrf.mxu0
    %v4134 = vadd.f32 0.0, %v4133
    %v4135 = vpop.f32.mrf.mxu0
    %4136 = vmatprep.mubr.f32.mxu0 0.0
    %4137 = vmatmul.mubr.f32.gmra.mxu0 %v4065
    %v4138 = vpop.f32.mrf.mxu0
    %v4139 = vadd.f32 0.0, %v4138
    %v4140 = vpop.f32.mrf.mxu0
    %4141 = vdwg.mxu0
    %v4142 = vadd.f32 %v3904, %v4134
    %v4143 = vadd.f32 %v3905, %v4139
    %v4144 = vld [vmem:[%s17] sm:$0x1]
    %v4146 = vlaneseq
    %v4147 = vshrl.u32 %v4146, 7
    %v4148 = vsub.s32 0, %v4147
    %v4149 = vrot.slane %v4144, %v4148
    %v4151 = vadd.f32 %v4142, %v4149
    %v4152 = vadd.f32 %v4143, %v4149
    %s4153 = scalar_lea.vmem %s18, 4
    %v4154 = vld [vmem:[%s4153] sm:$0x7]
    %s4155 = scalar_lea.vmem %s19, 4
    %v4156 = vld [vmem:[%s4155] sm:$0x7]
    %v4157 = vsel %vm197, %v4151, 0.0
    %4158 = vadd.xlane.f32.xlu0 %v4157
    %v4159 = vpop.xlane.xlu0 %4158
    %v4160 = vsel %vm197, %v4152, 0.0
    %4161 = vadd.xlane.f32.xlu0 %v4160
    %v4162 = vpop.xlane.xlu0 %4161
    %v4163 = vmul.f32 %v4159, %v204
    %v4164 = vmul.f32 %v4162, %v204
    %v4165 = vsub.f32 %v4151, %v4163
    %v4166 = vsub.f32 %v4152, %v4164
    %v4167 = vmul.f32 %v4165, %v4165
    %v4168 = vmul.f32 %v4166, %v4166
    %v4169 = vsel %vm197, %v4167, 0.0
    %4170 = vadd.xlane.f32.xlu0 %v4169
    %v4171 = vpop.xlane.xlu0 %4170
    %v4172 = vsel %vm197, %v4168, 0.0
    %4173 = vadd.xlane.f32.xlu0 %v4172
    %v4174 = vpop.xlane.xlu0 %4173
    %v4175 = vmul.f32 %v4171, 0.032258064
    %v4176 = vmul.f32 %v4174, 0.032258064
    %v4177 = vrsqrt.pop %v4175
    %v4178 = vmul.f32 %v4175, %v4177
    %vm4179 = vcmp.eq.f32.partialorder %v4175, inf
    %v4180 = vsel %vm4179, %v4175, %v4178
    %vm4181 = vcmp.eq.f32.partialorder %v4175, 0.0
    %v4182 = vand.u32 %v4175, 2147483648
    %v4183 = vsel %vm4181, %v4182, %v4180
    %v4184 = vrsqrt.pop %v4176
    %v4185 = vmul.f32 %v4176, %v4184
    %vm4186 = vcmp.eq.f32.partialorder %v4176, inf
    %v4187 = vsel %vm4186, %v4176, %v4185
    %vm4188 = vcmp.eq.f32.partialorder %v4176, 0.0
    %v4189 = vand.u32 %v4176, 2147483648
    %v4190 = vsel %vm4188, %v4189, %v4187
    %v4191 = vadd.f32 %v4183, 1e-06
    %v4192 = vadd.f32 %v4190, 1e-06
    %v4193 = vrcp.pop %v4191
    %v4194 = vrcp.pop %v4192
    %v4195 = vlaneseq
    %v4196 = vshrl.u32 %v4195, 7
    %v4197 = vsub.s32 0, %v4196
    %v4198 = vrot.slane %v4154, %v4197
    %v4199 = vmul.f32 %v4198, %v4165
    %v4200 = vmul.f32 %v4198, %v4166
    %v4201 = vmul.f32 %v4199, %v4193
    %v4202 = vmul.f32 %v4200, %v4194
    %v4203 = vlaneseq
    %v4204 = vshrl.u32 %v4203, 7
    %v4205 = vsub.s32 0, %v4204
    %v4206 = vrot.slane %v4156, %v4205
    %v4207 = vadd.f32 %v4201, %v4206
    %v4208 = vadd.f32 %v4202, %v4206
    %s4209 = scalar_lea.vmem %s4, 32
    %v4210 = vld [vmem:[%s4209] sm:$0xff]
    %v4211 = vld [vmem:[%s4209 + $0x8] sm:$0xff]
    %v4212 = vld [vmem:[%s4209 + $0x10] sm:$0xff]
    %v4213 = vld [vmem:[%s4209 + $0x18] sm:$0xff]
    %s4214 = scalar_lea.vmem [#allocation7], 1
    %v4215 = vld [vmem:[%s4214] sm:$0x1]
    %v4217 = vlaneseq
    %v4218 = vshrl.u32 %v4217, 7
    %v4219 = vsub.s32 0, %v4218
    %v4220 = vrot.slane %v4215, %v4219
    %v4223 = vsel %vm197, %v4207, 0
    %v4226 = vsel %vm197, %v4208, 0
    %4228 = vmatprep.subr.mxu0 0.0
    %4229 = vmatpush1.msra.mxu0 0.0
    %4230 = vmatprep.subr.mxu0 0.0
    %4231 = vmatpush1.msra.mxu0 0.0
    %4232 = vmatprep.subr.mxu0 0.0
    %4233 = vmatpush1.msra.mxu0 0.0
    %4234 = vmatprep.subr.mxu0 0.0
    %4235 = vmatpush1.msra.mxu0 0.0
    %4236 = vmatprep.subr.mxu0 0.0
    %4237 = vmatpush1.msra.mxu0 0.0
    %4238 = vmatprep.subr.mxu0 0.0
    %4239 = vmatpush1.msra.mxu0 0.0
    %4240 = vmatprep.subr.mxu0 0.0
    %4241 = vmatpush1.msra.mxu0 0.0
    %4242 = vmatprep.subr.mxu0 0.0
    %4243 = vmatpush1.msra.mxu0 0.0
    %4244 = vmatprep.subr.mxu0 0.0
    %4245 = vmatpush1.msra.mxu0 0.0
    %4246 = vmatprep.subr.mxu0 0.0
    %4247 = vmatpush1.msra.mxu0 0.0
    %4248 = vmatprep.subr.mxu0 0.0
    %4249 = vmatpush1.msra.mxu0 0.0
    %4250 = vmatprep.subr.mxu0 0.0
    %4251 = vmatpush1.msra.mxu0 0.0
    %4252 = vmatprep.subr.mxu0 0.0
    %4253 = vmatpush1.msra.mxu0 %v4213
    %4254 = vmatprep.subr.mxu0 0.0
    %4255 = vmatpush1.msra.mxu0 %v4212
    %4256 = vmatprep.subr.mxu0 0.0
    %4257 = vmatpush1.msra.mxu0 %v4211
    %4258 = vmatprep.subr.mxu0 0.0
    %4259 = vmatpush1.msra.mxu0 %v4210
    %4260 = vmatprep.subr.mxu0 0.0
    %4261 = vmatpush2.msra.mxu0 0.0
    %4262 = vmatprep.subr.mxu0 0.0
    %4263 = vmatpush2.msra.mxu0 0.0
    %4264 = vmatprep.subr.mxu0 0.0
    %4265 = vmatpush2.msra.mxu0 0.0
    %4266 = vmatprep.subr.mxu0 0.0
    %4267 = vmatpush2.msra.mxu0 0.0
    %4268 = vmatprep.subr.mxu0 0.0
    %4269 = vmatpush2.msra.mxu0 0.0
    %4270 = vmatprep.subr.mxu0 0.0
    %4271 = vmatpush2.msra.mxu0 0.0
    %4272 = vmatprep.subr.mxu0 0.0
    %4273 = vmatpush2.msra.mxu0 0.0
    %4274 = vmatprep.subr.mxu0 0.0
    %4275 = vmatpush2.msra.mxu0 0.0
    %4276 = vmatprep.subr.mxu0 0.0
    %4277 = vmatpush2.msra.mxu0 0.0
    %4278 = vmatprep.subr.mxu0 0.0
    %4279 = vmatpush2.msra.mxu0 0.0
    %4280 = vmatprep.subr.mxu0 0.0
    %4281 = vmatpush2.msra.mxu0 0.0
    %4282 = vmatprep.subr.mxu0 0.0
    %4283 = vmatpush2.msra.mxu0 0.0
    %4284 = vmatprep.subr.mxu0 0.0
    %4285 = vmatpush2.msra.mxu0 0.0
    %4286 = vmatprep.subr.mxu0 0.0
    %4287 = vmatpush2.msra.mxu0 0.0
    %4288 = vmatprep.subr.mxu0 0.0
    %4289 = vmatpush2.msra.mxu0 0.0
    %4290 = vmatprep.subr.mxu0 0.0
    %4291 = vmatpush2.msra.mxu0 0.0
    %4292 = vmatprep.mubr.f32.mxu0 0.0
    %4293 = vmatmul.mubr.f32.gmra.mxu0 %v4223
    %v4294 = vpop.f32.mrf.mxu0
    %v4295 = vadd.f32 %v4220, %v4294
    %v4296 = vpop.f32.mrf.mxu0
    %4297 = vmatprep.mubr.f32.mxu0 0.0
    %4298 = vmatmul.mubr.f32.gmra.mxu0 %v4226
    %v4299 = vpop.f32.mrf.mxu0
    %v4300 = vadd.f32 %v4220, %v4299
    %v4301 = vpop.f32.mrf.mxu0
    %4302 = vdwg.mxu0
    %s4303 = scalar_lea.vmem %s6, 32
    %v4304 = vld [vmem:[%s4303] sm:$0xff]
    %v4305 = vld [vmem:[%s4303 + $0x8] sm:$0xff]
    %v4306 = vld [vmem:[%s4303 + $0x10] sm:$0xff]
    %v4307 = vld [vmem:[%s4303 + $0x18] sm:$0xff]
    %v4308 = vmul.f32 %v4295, 0.35355338
    %v4309 = vmul.f32 %v4300, 0.35355338
    %4311 = vrot.lane.b32.xlu0 %v4295, 96
    %v4312 = vpop.permute.xlu0 %4311
    %v4314 = vsel %vm352, %v4308, 0
    %v4316 = vsel %vm352, %v4312, 0
    %4318 = vmatprep.subr.mxu0 0.0
    %4319 = vmatpush1.xpose.msra.mxu0 0.0
    %4320 = vmatprep.subr.mxu0 0.0
    %4321 = vmatpush1.xpose.msra.mxu0 0.0
    %4322 = vmatprep.subr.mxu0 0.0
    %4323 = vmatpush1.xpose.msra.mxu0 0.0
    %4324 = vmatprep.subr.mxu0 0.0
    %4325 = vmatpush1.xpose.msra.mxu0 0.0
    %4326 = vmatprep.subr.mxu0 0.0
    %4327 = vmatpush1.xpose.msra.mxu0 0.0
    %4328 = vmatprep.subr.mxu0 0.0
    %4329 = vmatpush1.xpose.msra.mxu0 0.0
    %4330 = vmatprep.subr.mxu0 0.0
    %4331 = vmatpush1.xpose.msra.mxu0 0.0
    %4332 = vmatprep.subr.mxu0 0.0
    %4333 = vmatpush1.xpose.msra.mxu0 0.0
    %4334 = vmatprep.subr.mxu0 0.0
    %4335 = vmatpush1.xpose.msra.mxu0 0.0
    %4336 = vmatprep.subr.mxu0 0.0
    %4337 = vmatpush1.xpose.msra.mxu0 0.0
    %4338 = vmatprep.subr.mxu0 0.0
    %4339 = vmatpush1.xpose.msra.mxu0 0.0
    %4340 = vmatprep.subr.mxu0 0.0
    %4341 = vmatpush1.xpose.msra.mxu0 0.0
    %4342 = vmatprep.subr.mxu0 0.0
    %4343 = vmatpush1.xpose.msra.mxu0 0.0
    %4344 = vmatprep.subr.mxu0 0.0
    %4345 = vmatpush1.xpose.msra.mxu0 0.0
    %4346 = vmatprep.subr.mxu0 0.0
    %4347 = vmatpush1.xpose.msra.mxu0 0.0
    %4348 = vmatprep.subr.mxu0 0.0
    %4349 = vmatpush1.xpose.msra.mxu0 %v4316
    %4350 = vmatprep.subr.mxu0 0.0
    %4351 = vmatpush2.xpose.msra.mxu0 0.0
    %4352 = vmatprep.subr.mxu0 0.0
    %4353 = vmatpush2.xpose.msra.mxu0 0.0
    %4354 = vmatprep.subr.mxu0 0.0
    %4355 = vmatpush2.xpose.msra.mxu0 0.0
    %4356 = vmatprep.subr.mxu0 0.0
    %4357 = vmatpush2.xpose.msra.mxu0 0.0
    %4358 = vmatprep.subr.mxu0 0.0
    %4359 = vmatpush2.xpose.msra.mxu0 0.0
    %4360 = vmatprep.subr.mxu0 0.0
    %4361 = vmatpush2.xpose.msra.mxu0 0.0
    %4362 = vmatprep.subr.mxu0 0.0
    %4363 = vmatpush2.xpose.msra.mxu0 0.0
    %4364 = vmatprep.subr.mxu0 0.0
    %4365 = vmatpush2.xpose.msra.mxu0 0.0
    %4366 = vmatprep.subr.mxu0 0.0
    %4367 = vmatpush2.xpose.msra.mxu0 0.0
    %4368 = vmatprep.subr.mxu0 0.0
    %4369 = vmatpush2.xpose.msra.mxu0 0.0
    %4370 = vmatprep.subr.mxu0 0.0
    %4371 = vmatpush2.xpose.msra.mxu0 0.0
    %4372 = vmatprep.subr.mxu0 0.0
    %4373 = vmatpush2.xpose.msra.mxu0 0.0
    %4374 = vmatprep.subr.mxu0 0.0
    %4375 = vmatpush2.xpose.msra.mxu0 0.0
    %4376 = vmatprep.subr.mxu0 0.0
    %4377 = vmatpush2.xpose.msra.mxu0 0.0
    %4378 = vmatprep.subr.mxu0 0.0
    %4379 = vmatpush2.xpose.msra.mxu0 0.0
    %4380 = vmatprep.subr.mxu0 0.0
    %4381 = vmatpush2.xpose.msra.mxu0 0.0
    %4382 = vmatprep.mubr.f32.mxu0 0.0
    %4383 = vmatmul.mubr.f32.gmra.mxu0 %v4314
    %v4384 = vpop.f32.mrf.mxu0
    %v4385 = vadd.f32 %v175, %v4384
    %v4386 = vpop.f32.mrf.mxu0
    %4387 = vdwg.mxu0
    %4389 = vrot.lane.b32.xlu0 %v4300, 96
    %v4390 = vpop.permute.xlu0 %4389
    %v4392 = vsel %vm352, %v4309, 0
    %v4394 = vsel %vm352, %v4390, 0
    %4396 = vmatprep.subr.mxu0 0.0
    %4397 = vmatpush1.xpose.msra.mxu0 0.0
    %4398 = vmatprep.subr.mxu0 0.0
    %4399 = vmatpush1.xpose.msra.mxu0 0.0
    %4400 = vmatprep.subr.mxu0 0.0
    %4401 = vmatpush1.xpose.msra.mxu0 0.0
    %4402 = vmatprep.subr.mxu0 0.0
    %4403 = vmatpush1.xpose.msra.mxu0 0.0
    %4404 = vmatprep.subr.mxu0 0.0
    %4405 = vmatpush1.xpose.msra.mxu0 0.0
    %4406 = vmatprep.subr.mxu0 0.0
    %4407 = vmatpush1.xpose.msra.mxu0 0.0
    %4408 = vmatprep.subr.mxu0 0.0
    %4409 = vmatpush1.xpose.msra.mxu0 0.0
    %4410 = vmatprep.subr.mxu0 0.0
    %4411 = vmatpush1.xpose.msra.mxu0 0.0
    %4412 = vmatprep.subr.mxu0 0.0
    %4413 = vmatpush1.xpose.msra.mxu0 0.0
    %4414 = vmatprep.subr.mxu0 0.0
    %4415 = vmatpush1.xpose.msra.mxu0 0.0
    %4416 = vmatprep.subr.mxu0 0.0
    %4417 = vmatpush1.xpose.msra.mxu0 0.0
    %4418 = vmatprep.subr.mxu0 0.0
    %4419 = vmatpush1.xpose.msra.mxu0 0.0
    %4420 = vmatprep.subr.mxu0 0.0
    %4421 = vmatpush1.xpose.msra.mxu0 0.0
    %4422 = vmatprep.subr.mxu0 0.0
    %4423 = vmatpush1.xpose.msra.mxu0 0.0
    %4424 = vmatprep.subr.mxu0 0.0
    %4425 = vmatpush1.xpose.msra.mxu0 0.0
    %4426 = vmatprep.subr.mxu0 0.0
    %4427 = vmatpush1.xpose.msra.mxu0 %v4394
    %4428 = vmatprep.subr.mxu0 0.0
    %4429 = vmatpush2.xpose.msra.mxu0 0.0
    %4430 = vmatprep.subr.mxu0 0.0
    %4431 = vmatpush2.xpose.msra.mxu0 0.0
    %4432 = vmatprep.subr.mxu0 0.0
    %4433 = vmatpush2.xpose.msra.mxu0 0.0
    %4434 = vmatprep.subr.mxu0 0.0
    %4435 = vmatpush2.xpose.msra.mxu0 0.0
    %4436 = vmatprep.subr.mxu0 0.0
    %4437 = vmatpush2.xpose.msra.mxu0 0.0
    %4438 = vmatprep.subr.mxu0 0.0
    %4439 = vmatpush2.xpose.msra.mxu0 0.0
    %4440 = vmatprep.subr.mxu0 0.0
    %4441 = vmatpush2.xpose.msra.mxu0 0.0
    %4442 = vmatprep.subr.mxu0 0.0
    %4443 = vmatpush2.xpose.msra.mxu0 0.0
    %4444 = vmatprep.subr.mxu0 0.0
    %4445 = vmatpush2.xpose.msra.mxu0 0.0
    %4446 = vmatprep.subr.mxu0 0.0
    %4447 = vmatpush2.xpose.msra.mxu0 0.0
    %4448 = vmatprep.subr.mxu0 0.0
    %4449 = vmatpush2.xpose.msra.mxu0 0.0
    %4450 = vmatprep.subr.mxu0 0.0
    %4451 = vmatpush2.xpose.msra.mxu0 0.0
    %4452 = vmatprep.subr.mxu0 0.0
    %4453 = vmatpush2.xpose.msra.mxu0 0.0
    %4454 = vmatprep.subr.mxu0 0.0
    %4455 = vmatpush2.xpose.msra.mxu0 0.0
    %4456 = vmatprep.subr.mxu0 0.0
    %4457 = vmatpush2.xpose.msra.mxu0 0.0
    %4458 = vmatprep.subr.mxu0 0.0
    %4459 = vmatpush2.xpose.msra.mxu0 0.0
    %4460 = vmatprep.mubr.f32.mxu0 0.0
    %4461 = vmatmul.mubr.f32.gmra.mxu0 %v4392
    %v4462 = vpop.f32.mrf.mxu0
    %v4463 = vadd.f32 %v176, %v4462
    %v4464 = vpop.f32.mrf.mxu0
    %4465 = vdwg.mxu0
    %v4466 = vsel %vm352, %v4385, -inf
    %4467 = vmax.xlane.f32.xlu0 %v4466
    %v4468 = vpop.xlane.xlu0 %4467
    %v4469 = vsel %vm352, %v4463, -inf
    %4470 = vmax.xlane.f32.xlu0 %v4469
    %v4471 = vpop.xlane.xlu0 %4470
    %v4472 = vsub.f32 %v4385, %v4468
    %v4473 = vsub.f32 %v4463, %v4471
    %v4474 = vmul.f32 %v4472, 1.442695
    %v4475 = vpow.pop %v4474
    %v4476 = vmul.f32 %v4473, 1.442695
    %v4477 = vpow.pop %v4476
    %v4478 = vsel %vm352, %v4475, 0.0
    %4479 = vadd.xlane.f32.xlu0 %v4478
    %v4480 = vpop.xlane.xlu0 %4479
    %v4481 = vsel %vm352, %v4477, 0.0
    %4482 = vadd.xlane.f32.xlu0 %v4481
    %v4483 = vpop.xlane.xlu0 %4482
    %v4484 = vrcp.pop %v4480
    %v4485 = vrcp.pop %v4483
    %v4486 = vmul.f32 %v4475, %v4484
    %v4487 = vmul.f32 %v4477, %v4485
    %4488 = vrot.lane.b32.xlu0 %v4295, 64
    %v4489 = vpop.permute.xlu0 %4488
    %v4492 = vsel %vm352, %v4486, 0
    %4494 = vmatprep.subr.mxu0 0.0
    %4495 = vmatpush1.msra.mxu0 0.0
    %4496 = vmatprep.subr.mxu0 0.0
    %4497 = vmatpush1.msra.mxu0 0.0
    %4498 = vmatprep.subr.mxu0 0.0
    %4499 = vmatpush1.msra.mxu0 0.0
    %4500 = vmatprep.subr.mxu0 0.0
    %4501 = vmatpush1.msra.mxu0 0.0
    %4502 = vmatprep.subr.mxu0 0.0
    %4503 = vmatpush1.msra.mxu0 0.0
    %4504 = vmatprep.subr.mxu0 0.0
    %4505 = vmatpush1.msra.mxu0 0.0
    %4506 = vmatprep.subr.mxu0 0.0
    %4507 = vmatpush1.msra.mxu0 0.0
    %4508 = vmatprep.subr.mxu0 0.0
    %4509 = vmatpush1.msra.mxu0 0.0
    %4510 = vmatprep.subr.mxu0 0.0
    %4511 = vmatpush1.msra.mxu0 0.0
    %4512 = vmatprep.subr.mxu0 0.0
    %4513 = vmatpush1.msra.mxu0 0.0
    %4514 = vmatprep.subr.mxu0 0.0
    %4515 = vmatpush1.msra.mxu0 0.0
    %4516 = vmatprep.subr.mxu0 0.0
    %4517 = vmatpush1.msra.mxu0 0.0
    %4518 = vmatprep.subr.mxu0 0.0
    %4519 = vmatpush1.msra.mxu0 0.0
    %4520 = vmatprep.subr.mxu0 0.0
    %4521 = vmatpush1.msra.mxu0 0.0
    %4522 = vmatprep.subr.mxu0 0.0
    %4523 = vmatpush1.msra.mxu0 0.0
    %4524 = vmatprep.subr.mxu0 0.0
    %4525 = vmatpush1.msra.mxu0 %v4489
    %4526 = vmatprep.subr.mxu0 0.0
    %4527 = vmatpush2.msra.mxu0 0.0
    %4528 = vmatprep.subr.mxu0 0.0
    %4529 = vmatpush2.msra.mxu0 0.0
    %4530 = vmatprep.subr.mxu0 0.0
    %4531 = vmatpush2.msra.mxu0 0.0
    %4532 = vmatprep.subr.mxu0 0.0
    %4533 = vmatpush2.msra.mxu0 0.0
    %4534 = vmatprep.subr.mxu0 0.0
    %4535 = vmatpush2.msra.mxu0 0.0
    %4536 = vmatprep.subr.mxu0 0.0
    %4537 = vmatpush2.msra.mxu0 0.0
    %4538 = vmatprep.subr.mxu0 0.0
    %4539 = vmatpush2.msra.mxu0 0.0
    %4540 = vmatprep.subr.mxu0 0.0
    %4541 = vmatpush2.msra.mxu0 0.0
    %4542 = vmatprep.subr.mxu0 0.0
    %4543 = vmatpush2.msra.mxu0 0.0
    %4544 = vmatprep.subr.mxu0 0.0
    %4545 = vmatpush2.msra.mxu0 0.0
    %4546 = vmatprep.subr.mxu0 0.0
    %4547 = vmatpush2.msra.mxu0 0.0
    %4548 = vmatprep.subr.mxu0 0.0
    %4549 = vmatpush2.msra.mxu0 0.0
    %4550 = vmatprep.subr.mxu0 0.0
    %4551 = vmatpush2.msra.mxu0 0.0
    %4552 = vmatprep.subr.mxu0 0.0
    %4553 = vmatpush2.msra.mxu0 0.0
    %4554 = vmatprep.subr.mxu0 0.0
    %4555 = vmatpush2.msra.mxu0 0.0
    %4556 = vmatprep.subr.mxu0 0.0
    %4557 = vmatpush2.msra.mxu0 0.0
    %4558 = vmatprep.mubr.f32.mxu0 0.0
    %4559 = vmatmul.mubr.f32.gmra.mxu0 %v4492
    %v4560 = vpop.f32.mrf.mxu0
    %v4561 = vadd.f32 0.0, %v4560
    %v4562 = vpop.f32.mrf.mxu0
    %4563 = vdwg.mxu0
    %4564 = vrot.lane.b32.xlu0 %v4300, 64
    %v4565 = vpop.permute.xlu0 %4564
    %v4568 = vsel %vm352, %v4487, 0
    %4570 = vmatprep.subr.mxu0 0.0
    %4571 = vmatpush1.msra.mxu0 0.0
    %4572 = vmatprep.subr.mxu0 0.0
    %4573 = vmatpush1.msra.mxu0 0.0
    %4574 = vmatprep.subr.mxu0 0.0
    %4575 = vmatpush1.msra.mxu0 0.0
    %4576 = vmatprep.subr.mxu0 0.0
    %4577 = vmatpush1.msra.mxu0 0.0
    %4578 = vmatprep.subr.mxu0 0.0
    %4579 = vmatpush1.msra.mxu0 0.0
    %4580 = vmatprep.subr.mxu0 0.0
    %4581 = vmatpush1.msra.mxu0 0.0
    %4582 = vmatprep.subr.mxu0 0.0
    %4583 = vmatpush1.msra.mxu0 0.0
    %4584 = vmatprep.subr.mxu0 0.0
    %4585 = vmatpush1.msra.mxu0 0.0
    %4586 = vmatprep.subr.mxu0 0.0
    %4587 = vmatpush1.msra.mxu0 0.0
    %4588 = vmatprep.subr.mxu0 0.0
    %4589 = vmatpush1.msra.mxu0 0.0
    %4590 = vmatprep.subr.mxu0 0.0
    %4591 = vmatpush1.msra.mxu0 0.0
    %4592 = vmatprep.subr.mxu0 0.0
    %4593 = vmatpush1.msra.mxu0 0.0
    %4594 = vmatprep.subr.mxu0 0.0
    %4595 = vmatpush1.msra.mxu0 0.0
    %4596 = vmatprep.subr.mxu0 0.0
    %4597 = vmatpush1.msra.mxu0 0.0
    %4598 = vmatprep.subr.mxu0 0.0
    %4599 = vmatpush1.msra.mxu0 0.0
    %4600 = vmatprep.subr.mxu0 0.0
    %4601 = vmatpush1.msra.mxu0 %v4565
    %4602 = vmatprep.subr.mxu0 0.0
    %4603 = vmatpush2.msra.mxu0 0.0
    %4604 = vmatprep.subr.mxu0 0.0
    %4605 = vmatpush2.msra.mxu0 0.0
    %4606 = vmatprep.subr.mxu0 0.0
    %4607 = vmatpush2.msra.mxu0 0.0
    %4608 = vmatprep.subr.mxu0 0.0
    %4609 = vmatpush2.msra.mxu0 0.0
    %4610 = vmatprep.subr.mxu0 0.0
    %4611 = vmatpush2.msra.mxu0 0.0
    %4612 = vmatprep.subr.mxu0 0.0
    %4613 = vmatpush2.msra.mxu0 0.0
    %4614 = vmatprep.subr.mxu0 0.0
    %4615 = vmatpush2.msra.mxu0 0.0
    %4616 = vmatprep.subr.mxu0 0.0
    %4617 = vmatpush2.msra.mxu0 0.0
    %4618 = vmatprep.subr.mxu0 0.0
    %4619 = vmatpush2.msra.mxu0 0.0
    %4620 = vmatprep.subr.mxu0 0.0
    %4621 = vmatpush2.msra.mxu0 0.0
    %4622 = vmatprep.subr.mxu0 0.0
    %4623 = vmatpush2.msra.mxu0 0.0
    %4624 = vmatprep.subr.mxu0 0.0
    %4625 = vmatpush2.msra.mxu0 0.0
    %4626 = vmatprep.subr.mxu0 0.0
    %4627 = vmatpush2.msra.mxu0 0.0
    %4628 = vmatprep.subr.mxu0 0.0
    %4629 = vmatpush2.msra.mxu0 0.0
    %4630 = vmatprep.subr.mxu0 0.0
    %4631 = vmatpush2.msra.mxu0 0.0
    %4632 = vmatprep.subr.mxu0 0.0
    %4633 = vmatpush2.msra.mxu0 0.0
    %4634 = vmatprep.mubr.f32.mxu0 0.0
    %4635 = vmatmul.mubr.f32.gmra.mxu0 %v4568
    %v4636 = vpop.f32.mrf.mxu0
    %v4637 = vadd.f32 0.0, %v4636
    %v4638 = vpop.f32.mrf.mxu0
    %4639 = vdwg.mxu0
    %4640 = vrot.lane.b32.xlu0 %v4308, 120
    %v4641 = vpop.permute.xlu0 %4640
    %4642 = vrot.lane.b32.xlu0 %v4295, 88
    %v4643 = vpop.permute.xlu0 %4642
    %v4644 = vsel %vm352, %v4641, 0
    %v4646 = vsel %vm352, %v4643, 0
    %4648 = vmatprep.subr.mxu0 0.0
    %4649 = vmatpush1.xpose.msra.mxu0 0.0
    %4650 = vmatprep.subr.mxu0 0.0
    %4651 = vmatpush1.xpose.msra.mxu0 0.0
    %4652 = vmatprep.subr.mxu0 0.0
    %4653 = vmatpush1.xpose.msra.mxu0 0.0
    %4654 = vmatprep.subr.mxu0 0.0
    %4655 = vmatpush1.xpose.msra.mxu0 0.0
    %4656 = vmatprep.subr.mxu0 0.0
    %4657 = vmatpush1.xpose.msra.mxu0 0.0
    %4658 = vmatprep.subr.mxu0 0.0
    %4659 = vmatpush1.xpose.msra.mxu0 0.0
    %4660 = vmatprep.subr.mxu0 0.0
    %4661 = vmatpush1.xpose.msra.mxu0 0.0
    %4662 = vmatprep.subr.mxu0 0.0
    %4663 = vmatpush1.xpose.msra.mxu0 0.0
    %4664 = vmatprep.subr.mxu0 0.0
    %4665 = vmatpush1.xpose.msra.mxu0 0.0
    %4666 = vmatprep.subr.mxu0 0.0
    %4667 = vmatpush1.xpose.msra.mxu0 0.0
    %4668 = vmatprep.subr.mxu0 0.0
    %4669 = vmatpush1.xpose.msra.mxu0 0.0
    %4670 = vmatprep.subr.mxu0 0.0
    %4671 = vmatpush1.xpose.msra.mxu0 0.0
    %4672 = vmatprep.subr.mxu0 0.0
    %4673 = vmatpush1.xpose.msra.mxu0 0.0
    %4674 = vmatprep.subr.mxu0 0.0
    %4675 = vmatpush1.xpose.msra.mxu0 0.0
    %4676 = vmatprep.subr.mxu0 0.0
    %4677 = vmatpush1.xpose.msra.mxu0 0.0
    %4678 = vmatprep.subr.mxu0 0.0
    %4679 = vmatpush1.xpose.msra.mxu0 %v4646
    %4680 = vmatprep.subr.mxu0 0.0
    %4681 = vmatpush2.xpose.msra.mxu0 0.0
    %4682 = vmatprep.subr.mxu0 0.0
    %4683 = vmatpush2.xpose.msra.mxu0 0.0
    %4684 = vmatprep.subr.mxu0 0.0
    %4685 = vmatpush2.xpose.msra.mxu0 0.0
    %4686 = vmatprep.subr.mxu0 0.0
    %4687 = vmatpush2.xpose.msra.mxu0 0.0
    %4688 = vmatprep.subr.mxu0 0.0
    %4689 = vmatpush2.xpose.msra.mxu0 0.0
    %4690 = vmatprep.subr.mxu0 0.0
    %4691 = vmatpush2.xpose.msra.mxu0 0.0
    %4692 = vmatprep.subr.mxu0 0.0
    %4693 = vmatpush2.xpose.msra.mxu0 0.0
    %4694 = vmatprep.subr.mxu0 0.0
    %4695 = vmatpush2.xpose.msra.mxu0 0.0
    %4696 = vmatprep.subr.mxu0 0.0
    %4697 = vmatpush2.xpose.msra.mxu0 0.0
    %4698 = vmatprep.subr.mxu0 0.0
    %4699 = vmatpush2.xpose.msra.mxu0 0.0
    %4700 = vmatprep.subr.mxu0 0.0
    %4701 = vmatpush2.xpose.msra.mxu0 0.0
    %4702 = vmatprep.subr.mxu0 0.0
    %4703 = vmatpush2.xpose.msra.mxu0 0.0
    %4704 = vmatprep.subr.mxu0 0.0
    %4705 = vmatpush2.xpose.msra.mxu0 0.0
    %4706 = vmatprep.subr.mxu0 0.0
    %4707 = vmatpush2.xpose.msra.mxu0 0.0
    %4708 = vmatprep.subr.mxu0 0.0
    %4709 = vmatpush2.xpose.msra.mxu0 0.0
    %4710 = vmatprep.subr.mxu0 0.0
    %4711 = vmatpush2.xpose.msra.mxu0 0.0
    %4712 = vmatprep.mubr.f32.mxu0 0.0
    %4713 = vmatmul.mubr.f32.gmra.mxu0 %v4644
    %v4714 = vpop.f32.mrf.mxu0
    %v4715 = vadd.f32 %v175, %v4714
    %v4716 = vpop.f32.mrf.mxu0
    %4717 = vdwg.mxu0
    %4718 = vrot.lane.b32.xlu0 %v4309, 120
    %v4719 = vpop.permute.xlu0 %4718
    %4720 = vrot.lane.b32.xlu0 %v4300, 88
    %v4721 = vpop.permute.xlu0 %4720
    %v4722 = vsel %vm352, %v4719, 0
    %v4724 = vsel %vm352, %v4721, 0
    %4726 = vmatprep.subr.mxu0 0.0
    %4727 = vmatpush1.xpose.msra.mxu0 0.0
    %4728 = vmatprep.subr.mxu0 0.0
    %4729 = vmatpush1.xpose.msra.mxu0 0.0
    %4730 = vmatprep.subr.mxu0 0.0
    %4731 = vmatpush1.xpose.msra.mxu0 0.0
    %4732 = vmatprep.subr.mxu0 0.0
    %4733 = vmatpush1.xpose.msra.mxu0 0.0
    %4734 = vmatprep.subr.mxu0 0.0
    %4735 = vmatpush1.xpose.msra.mxu0 0.0
    %4736 = vmatprep.subr.mxu0 0.0
    %4737 = vmatpush1.xpose.msra.mxu0 0.0
    %4738 = vmatprep.subr.mxu0 0.0
    %4739 = vmatpush1.xpose.msra.mxu0 0.0
    %4740 = vmatprep.subr.mxu0 0.0
    %4741 = vmatpush1.xpose.msra.mxu0 0.0
    %4742 = vmatprep.subr.mxu0 0.0
    %4743 = vmatpush1.xpose.msra.mxu0 0.0
    %4744 = vmatprep.subr.mxu0 0.0
    %4745 = vmatpush1.xpose.msra.mxu0 0.0
    %4746 = vmatprep.subr.mxu0 0.0
    %4747 = vmatpush1.xpose.msra.mxu0 0.0
    %4748 = vmatprep.subr.mxu0 0.0
    %4749 = vmatpush1.xpose.msra.mxu0 0.0
    %4750 = vmatprep.subr.mxu0 0.0
    %4751 = vmatpush1.xpose.msra.mxu0 0.0
    %4752 = vmatprep.subr.mxu0 0.0
    %4753 = vmatpush1.xpose.msra.mxu0 0.0
    %4754 = vmatprep.subr.mxu0 0.0
    %4755 = vmatpush1.xpose.msra.mxu0 0.0
    %4756 = vmatprep.subr.mxu0 0.0
    %4757 = vmatpush1.xpose.msra.mxu0 %v4724
    %4758 = vmatprep.subr.mxu0 0.0
    %4759 = vmatpush2.xpose.msra.mxu0 0.0
    %4760 = vmatprep.subr.mxu0 0.0
    %4761 = vmatpush2.xpose.msra.mxu0 0.0
    %4762 = vmatprep.subr.mxu0 0.0
    %4763 = vmatpush2.xpose.msra.mxu0 0.0
    %4764 = vmatprep.subr.mxu0 0.0
    %4765 = vmatpush2.xpose.msra.mxu0 0.0
    %4766 = vmatprep.subr.mxu0 0.0
    %4767 = vmatpush2.xpose.msra.mxu0 0.0
    %4768 = vmatprep.subr.mxu0 0.0
    %4769 = vmatpush2.xpose.msra.mxu0 0.0
    %4770 = vmatprep.subr.mxu0 0.0
    %4771 = vmatpush2.xpose.msra.mxu0 0.0
    %4772 = vmatprep.subr.mxu0 0.0
    %4773 = vmatpush2.xpose.msra.mxu0 0.0
    %4774 = vmatprep.subr.mxu0 0.0
    %4775 = vmatpush2.xpose.msra.mxu0 0.0
    %4776 = vmatprep.subr.mxu0 0.0
    %4777 = vmatpush2.xpose.msra.mxu0 0.0
    %4778 = vmatprep.subr.mxu0 0.0
    %4779 = vmatpush2.xpose.msra.mxu0 0.0
    %4780 = vmatprep.subr.mxu0 0.0
    %4781 = vmatpush2.xpose.msra.mxu0 0.0
    %4782 = vmatprep.subr.mxu0 0.0
    %4783 = vmatpush2.xpose.msra.mxu0 0.0
    %4784 = vmatprep.subr.mxu0 0.0
    %4785 = vmatpush2.xpose.msra.mxu0 0.0
    %4786 = vmatprep.subr.mxu0 0.0
    %4787 = vmatpush2.xpose.msra.mxu0 0.0
    %4788 = vmatprep.subr.mxu0 0.0
    %4789 = vmatpush2.xpose.msra.mxu0 0.0
    %4790 = vmatprep.mubr.f32.mxu0 0.0
    %4791 = vmatmul.mubr.f32.gmra.mxu0 %v4722
    %v4792 = vpop.f32.mrf.mxu0
    %v4793 = vadd.f32 %v176, %v4792
    %v4794 = vpop.f32.mrf.mxu0
    %4795 = vdwg.mxu0
    %v4796 = vsel %vm352, %v4715, -inf
    %4797 = vmax.xlane.f32.xlu0 %v4796
    %v4798 = vpop.xlane.xlu0 %4797
    %v4799 = vsel %vm352, %v4793, -inf
    %4800 = vmax.xlane.f32.xlu0 %v4799
    %v4801 = vpop.xlane.xlu0 %4800
    %v4802 = vsub.f32 %v4715, %v4798
    %v4803 = vsub.f32 %v4793, %v4801
    %v4804 = vmul.f32 %v4802, 1.442695
    %v4805 = vpow.pop %v4804
    %v4806 = vmul.f32 %v4803, 1.442695
    %v4807 = vpow.pop %v4806
    %v4808 = vsel %vm352, %v4805, 0.0
    %4809 = vadd.xlane.f32.xlu0 %v4808
    %v4810 = vpop.xlane.xlu0 %4809
    %v4811 = vsel %vm352, %v4807, 0.0
    %4812 = vadd.xlane.f32.xlu0 %v4811
    %v4813 = vpop.xlane.xlu0 %4812
    %v4814 = vrcp.pop %v4810
    %v4815 = vrcp.pop %v4813
    %v4816 = vmul.f32 %v4805, %v4814
    %v4817 = vmul.f32 %v4807, %v4815
    %4818 = vrot.lane.b32.xlu0 %v4295, 56
    %v4819 = vpop.permute.xlu0 %4818
    %v4822 = vsel %vm352, %v4816, 0
    %4824 = vmatprep.subr.mxu0 0.0
    %4825 = vmatpush1.msra.mxu0 0.0
    %4826 = vmatprep.subr.mxu0 0.0
    %4827 = vmatpush1.msra.mxu0 0.0
    %4828 = vmatprep.subr.mxu0 0.0
    %4829 = vmatpush1.msra.mxu0 0.0
    %4830 = vmatprep.subr.mxu0 0.0
    %4831 = vmatpush1.msra.mxu0 0.0
    %4832 = vmatprep.subr.mxu0 0.0
    %4833 = vmatpush1.msra.mxu0 0.0
    %4834 = vmatprep.subr.mxu0 0.0
    %4835 = vmatpush1.msra.mxu0 0.0
    %4836 = vmatprep.subr.mxu0 0.0
    %4837 = vmatpush1.msra.mxu0 0.0
    %4838 = vmatprep.subr.mxu0 0.0
    %4839 = vmatpush1.msra.mxu0 0.0
    %4840 = vmatprep.subr.mxu0 0.0
    %4841 = vmatpush1.msra.mxu0 0.0
    %4842 = vmatprep.subr.mxu0 0.0
    %4843 = vmatpush1.msra.mxu0 0.0
    %4844 = vmatprep.subr.mxu0 0.0
    %4845 = vmatpush1.msra.mxu0 0.0
    %4846 = vmatprep.subr.mxu0 0.0
    %4847 = vmatpush1.msra.mxu0 0.0
    %4848 = vmatprep.subr.mxu0 0.0
    %4849 = vmatpush1.msra.mxu0 0.0
    %4850 = vmatprep.subr.mxu0 0.0
    %4851 = vmatpush1.msra.mxu0 0.0
    %4852 = vmatprep.subr.mxu0 0.0
    %4853 = vmatpush1.msra.mxu0 0.0
    %4854 = vmatprep.subr.mxu0 0.0
    %4855 = vmatpush1.msra.mxu0 %v4819
    %4856 = vmatprep.subr.mxu0 0.0
    %4857 = vmatpush2.msra.mxu0 0.0
    %4858 = vmatprep.subr.mxu0 0.0
    %4859 = vmatpush2.msra.mxu0 0.0
    %4860 = vmatprep.subr.mxu0 0.0
    %4861 = vmatpush2.msra.mxu0 0.0
    %4862 = vmatprep.subr.mxu0 0.0
    %4863 = vmatpush2.msra.mxu0 0.0
    %4864 = vmatprep.subr.mxu0 0.0
    %4865 = vmatpush2.msra.mxu0 0.0
    %4866 = vmatprep.subr.mxu0 0.0
    %4867 = vmatpush2.msra.mxu0 0.0
    %4868 = vmatprep.subr.mxu0 0.0
    %4869 = vmatpush2.msra.mxu0 0.0
    %4870 = vmatprep.subr.mxu0 0.0
    %4871 = vmatpush2.msra.mxu0 0.0
    %4872 = vmatprep.subr.mxu0 0.0
    %4873 = vmatpush2.msra.mxu0 0.0
    %4874 = vmatprep.subr.mxu0 0.0
    %4875 = vmatpush2.msra.mxu0 0.0
    %4876 = vmatprep.subr.mxu0 0.0
    %4877 = vmatpush2.msra.mxu0 0.0
    %4878 = vmatprep.subr.mxu0 0.0
    %4879 = vmatpush2.msra.mxu0 0.0
    %4880 = vmatprep.subr.mxu0 0.0
    %4881 = vmatpush2.msra.mxu0 0.0
    %4882 = vmatprep.subr.mxu0 0.0
    %4883 = vmatpush2.msra.mxu0 0.0
    %4884 = vmatprep.subr.mxu0 0.0
    %4885 = vmatpush2.msra.mxu0 0.0
    %4886 = vmatprep.subr.mxu0 0.0
    %4887 = vmatpush2.msra.mxu0 0.0
    %4888 = vmatprep.mubr.f32.mxu0 0.0
    %4889 = vmatmul.mubr.f32.gmra.mxu0 %v4822
    %v4890 = vpop.f32.mrf.mxu0
    %v4891 = vadd.f32 0.0, %v4890
    %v4892 = vpop.f32.mrf.mxu0
    %4893 = vdwg.mxu0
    %4894 = vrot.lane.b32.xlu0 %v4300, 56
    %v4895 = vpop.permute.xlu0 %4894
    %v4898 = vsel %vm352, %v4817, 0
    %4900 = vmatprep.subr.mxu0 0.0
    %4901 = vmatpush1.msra.mxu0 0.0
    %4902 = vmatprep.subr.mxu0 0.0
    %4903 = vmatpush1.msra.mxu0 0.0
    %4904 = vmatprep.subr.mxu0 0.0
    %4905 = vmatpush1.msra.mxu0 0.0
    %4906 = vmatprep.subr.mxu0 0.0
    %4907 = vmatpush1.msra.mxu0 0.0
    %4908 = vmatprep.subr.mxu0 0.0
    %4909 = vmatpush1.msra.mxu0 0.0
    %4910 = vmatprep.subr.mxu0 0.0
    %4911 = vmatpush1.msra.mxu0 0.0
    %4912 = vmatprep.subr.mxu0 0.0
    %4913 = vmatpush1.msra.mxu0 0.0
    %4914 = vmatprep.subr.mxu0 0.0
    %4915 = vmatpush1.msra.mxu0 0.0
    %4916 = vmatprep.subr.mxu0 0.0
    %4917 = vmatpush1.msra.mxu0 0.0
    %4918 = vmatprep.subr.mxu0 0.0
    %4919 = vmatpush1.msra.mxu0 0.0
    %4920 = vmatprep.subr.mxu0 0.0
    %4921 = vmatpush1.msra.mxu0 0.0
    %4922 = vmatprep.subr.mxu0 0.0
    %4923 = vmatpush1.msra.mxu0 0.0
    %4924 = vmatprep.subr.mxu0 0.0
    %4925 = vmatpush1.msra.mxu0 0.0
    %4926 = vmatprep.subr.mxu0 0.0
    %4927 = vmatpush1.msra.mxu0 0.0
    %4928 = vmatprep.subr.mxu0 0.0
    %4929 = vmatpush1.msra.mxu0 0.0
    %4930 = vmatprep.subr.mxu0 0.0
    %4931 = vmatpush1.msra.mxu0 %v4895
    %4932 = vmatprep.subr.mxu0 0.0
    %4933 = vmatpush2.msra.mxu0 0.0
    %4934 = vmatprep.subr.mxu0 0.0
    %4935 = vmatpush2.msra.mxu0 0.0
    %4936 = vmatprep.subr.mxu0 0.0
    %4937 = vmatpush2.msra.mxu0 0.0
    %4938 = vmatprep.subr.mxu0 0.0
    %4939 = vmatpush2.msra.mxu0 0.0
    %4940 = vmatprep.subr.mxu0 0.0
    %4941 = vmatpush2.msra.mxu0 0.0
    %4942 = vmatprep.subr.mxu0 0.0
    %4943 = vmatpush2.msra.mxu0 0.0
    %4944 = vmatprep.subr.mxu0 0.0
    %4945 = vmatpush2.msra.mxu0 0.0
    %4946 = vmatprep.subr.mxu0 0.0
    %4947 = vmatpush2.msra.mxu0 0.0
    %4948 = vmatprep.subr.mxu0 0.0
    %4949 = vmatpush2.msra.mxu0 0.0
    %4950 = vmatprep.subr.mxu0 0.0
    %4951 = vmatpush2.msra.mxu0 0.0
    %4952 = vmatprep.subr.mxu0 0.0
    %4953 = vmatpush2.msra.mxu0 0.0
    %4954 = vmatprep.subr.mxu0 0.0
    %4955 = vmatpush2.msra.mxu0 0.0
    %4956 = vmatprep.subr.mxu0 0.0
    %4957 = vmatpush2.msra.mxu0 0.0
    %4958 = vmatprep.subr.mxu0 0.0
    %4959 = vmatpush2.msra.mxu0 0.0
    %4960 = vmatprep.subr.mxu0 0.0
    %4961 = vmatpush2.msra.mxu0 0.0
    %4962 = vmatprep.subr.mxu0 0.0
    %4963 = vmatpush2.msra.mxu0 0.0
    %4964 = vmatprep.mubr.f32.mxu0 0.0
    %4965 = vmatmul.mubr.f32.gmra.mxu0 %v4898
    %v4966 = vpop.f32.mrf.mxu0
    %v4967 = vadd.f32 0.0, %v4966
    %v4968 = vpop.f32.mrf.mxu0
    %4969 = vdwg.mxu0
    %v4971 = vsel %vm352, %v4891, 0
    %v4974 = vsel %vm352, %v4967, 0
    %4976 = vmatprep.subr.mxu0 0.0
    %4977 = vmatpush1.msra.mxu0 0.0
    %4978 = vmatprep.subr.mxu0 0.0
    %4979 = vmatpush1.msra.mxu0 0.0
    %4980 = vmatprep.subr.mxu0 0.0
    %4981 = vmatpush1.msra.mxu0 0.0
    %4982 = vmatprep.subr.mxu0 0.0
    %4983 = vmatpush1.msra.mxu0 0.0
    %4984 = vmatprep.subr.mxu0 0.0
    %4985 = vmatpush1.msra.mxu0 0.0
    %4986 = vmatprep.subr.mxu0 0.0
    %4987 = vmatpush1.msra.mxu0 0.0
    %4988 = vmatprep.subr.mxu0 0.0
    %4989 = vmatpush1.msra.mxu0 0.0
    %4990 = vmatprep.subr.mxu0 0.0
    %4991 = vmatpush1.msra.mxu0 0.0
    %4992 = vmatprep.subr.mxu0 0.0
    %4993 = vmatpush1.msra.mxu0 0.0
    %4994 = vmatprep.subr.mxu0 0.0
    %4995 = vmatpush1.msra.mxu0 0.0
    %4996 = vmatprep.subr.mxu0 0.0
    %4997 = vmatpush1.msra.mxu0 0.0
    %4998 = vmatprep.subr.mxu0 0.0
    %4999 = vmatpush1.msra.mxu0 0.0
    %5000 = vmatprep.subr.mxu0 0.0
    %5001 = vmatpush1.msra.mxu0 0.0
    %5002 = vmatprep.subr.mxu0 0.0
    %5003 = vmatpush1.msra.mxu0 0.0
    %5004 = vmatprep.subr.mxu0 0.0
    %5005 = vmatpush1.msra.mxu0 0.0
    %5006 = vmatprep.subr.mxu0 0.0
    %5007 = vmatpush1.msra.mxu0 %v4305
    %5008 = vmatprep.subr.mxu0 0.0
    %5009 = vmatpush2.msra.mxu0 0.0
    %5010 = vmatprep.subr.mxu0 0.0
    %5011 = vmatpush2.msra.mxu0 0.0
    %5012 = vmatprep.subr.mxu0 0.0
    %5013 = vmatpush2.msra.mxu0 0.0
    %5014 = vmatprep.subr.mxu0 0.0
    %5015 = vmatpush2.msra.mxu0 0.0
    %5016 = vmatprep.subr.mxu0 0.0
    %5017 = vmatpush2.msra.mxu0 0.0
    %5018 = vmatprep.subr.mxu0 0.0
    %5019 = vmatpush2.msra.mxu0 0.0
    %5020 = vmatprep.subr.mxu0 0.0
    %5021 = vmatpush2.msra.mxu0 0.0
    %5022 = vmatprep.subr.mxu0 0.0
    %5023 = vmatpush2.msra.mxu0 0.0
    %5024 = vmatprep.subr.mxu0 0.0
    %5025 = vmatpush2.msra.mxu0 0.0
    %5026 = vmatprep.subr.mxu0 0.0
    %5027 = vmatpush2.msra.mxu0 0.0
    %5028 = vmatprep.subr.mxu0 0.0
    %5029 = vmatpush2.msra.mxu0 0.0
    %5030 = vmatprep.subr.mxu0 0.0
    %5031 = vmatpush2.msra.mxu0 0.0
    %5032 = vmatprep.subr.mxu0 0.0
    %5033 = vmatpush2.msra.mxu0 0.0
    %5034 = vmatprep.subr.mxu0 0.0
    %5035 = vmatpush2.msra.mxu0 0.0
    %5036 = vmatprep.subr.mxu0 0.0
    %5037 = vmatpush2.msra.mxu0 0.0
    %5038 = vmatprep.subr.mxu0 0.0
    %5039 = vmatpush2.msra.mxu0 0.0
    %5040 = vmatprep.mubr.f32.mxu0 0.0
    %5041 = vmatmul.mubr.f32.gmra.mxu0 %v4971
    %v5042 = vpop.f32.mrf.mxu0
    %v5043 = vadd.f32 0.0, %v5042
    %v5044 = vpop.f32.mrf.mxu0
    %5045 = vmatprep.mubr.f32.mxu0 0.0
    %5046 = vmatmul.mubr.f32.gmra.mxu0 %v4974
    %v5047 = vpop.f32.mrf.mxu0
    %v5048 = vadd.f32 0.0, %v5047
    %v5049 = vpop.f32.mrf.mxu0
    %5050 = vdwg.mxu0
    %v5052 = vsel %vm352, %v4561, 0
    %v5055 = vsel %vm352, %v4637, 0
    %5057 = vmatprep.subr.mxu0 0.0
    %5058 = vmatpush1.msra.mxu0 0.0
    %5059 = vmatprep.subr.mxu0 0.0
    %5060 = vmatpush1.msra.mxu0 0.0
    %5061 = vmatprep.subr.mxu0 0.0
    %5062 = vmatpush1.msra.mxu0 0.0
    %5063 = vmatprep.subr.mxu0 0.0
    %5064 = vmatpush1.msra.mxu0 0.0
    %5065 = vmatprep.subr.mxu0 0.0
    %5066 = vmatpush1.msra.mxu0 0.0
    %5067 = vmatprep.subr.mxu0 0.0
    %5068 = vmatpush1.msra.mxu0 0.0
    %5069 = vmatprep.subr.mxu0 0.0
    %5070 = vmatpush1.msra.mxu0 0.0
    %5071 = vmatprep.subr.mxu0 0.0
    %5072 = vmatpush1.msra.mxu0 0.0
    %5073 = vmatprep.subr.mxu0 0.0
    %5074 = vmatpush1.msra.mxu0 0.0
    %5075 = vmatprep.subr.mxu0 0.0
    %5076 = vmatpush1.msra.mxu0 0.0
    %5077 = vmatprep.subr.mxu0 0.0
    %5078 = vmatpush1.msra.mxu0 0.0
    %5079 = vmatprep.subr.mxu0 0.0
    %5080 = vmatpush1.msra.mxu0 0.0
    %5081 = vmatprep.subr.mxu0 0.0
    %5082 = vmatpush1.msra.mxu0 0.0
    %5083 = vmatprep.subr.mxu0 0.0
    %5084 = vmatpush1.msra.mxu0 0.0
    %5085 = vmatprep.subr.mxu0 0.0
    %5086 = vmatpush1.msra.mxu0 0.0
    %5087 = vmatprep.subr.mxu0 0.0
    %5088 = vmatpush1.msra.mxu0 %v4304
    %5089 = vmatprep.subr.mxu0 0.0
    %5090 = vmatpush2.msra.mxu0 0.0
    %5091 = vmatprep.subr.mxu0 0.0
    %5092 = vmatpush2.msra.mxu0 0.0
    %5093 = vmatprep.subr.mxu0 0.0
    %5094 = vmatpush2.msra.mxu0 0.0
    %5095 = vmatprep.subr.mxu0 0.0
    %5096 = vmatpush2.msra.mxu0 0.0
    %5097 = vmatprep.subr.mxu0 0.0
    %5098 = vmatpush2.msra.mxu0 0.0
    %5099 = vmatprep.subr.mxu0 0.0
    %5100 = vmatpush2.msra.mxu0 0.0
    %5101 = vmatprep.subr.mxu0 0.0
    %5102 = vmatpush2.msra.mxu0 0.0
    %5103 = vmatprep.subr.mxu0 0.0
    %5104 = vmatpush2.msra.mxu0 0.0
    %5105 = vmatprep.subr.mxu0 0.0
    %5106 = vmatpush2.msra.mxu0 0.0
    %5107 = vmatprep.subr.mxu0 0.0
    %5108 = vmatpush2.msra.mxu0 0.0
    %5109 = vmatprep.subr.mxu0 0.0
    %5110 = vmatpush2.msra.mxu0 0.0
    %5111 = vmatprep.subr.mxu0 0.0
    %5112 = vmatpush2.msra.mxu0 0.0
    %5113 = vmatprep.subr.mxu0 0.0
    %5114 = vmatpush2.msra.mxu0 0.0
    %5115 = vmatprep.subr.mxu0 0.0
    %5116 = vmatpush2.msra.mxu0 0.0
    %5117 = vmatprep.subr.mxu0 0.0
    %5118 = vmatpush2.msra.mxu0 0.0
    %5119 = vmatprep.subr.mxu0 0.0
    %5120 = vmatpush2.msra.mxu0 0.0
    %5121 = vmatprep.mubr.f32.mxu0 0.0
    %5122 = vmatmul.mubr.f32.gmra.mxu0 %v5052
    %v5123 = vpop.f32.mrf.mxu0
    %v5124 = vadd.f32 %v5043, %v5123
    %v5125 = vpop.f32.mrf.mxu0
    %5126 = vmatprep.mubr.f32.mxu0 0.0
    %5127 = vmatmul.mubr.f32.gmra.mxu0 %v5055
    %v5128 = vpop.f32.mrf.mxu0
    %v5129 = vadd.f32 %v5048, %v5128
    %v5130 = vpop.f32.mrf.mxu0
    %5131 = vdwg.mxu0
    %5132 = vrot.lane.b32.xlu0 %v4308, 112
    %v5133 = vpop.permute.xlu0 %5132
    %5134 = vrot.lane.b32.xlu0 %v4295, 80
    %v5135 = vpop.permute.xlu0 %5134
    %v5136 = vsel %vm352, %v5133, 0
    %v5138 = vsel %vm352, %v5135, 0
    %5140 = vmatprep.subr.mxu0 0.0
    %5141 = vmatpush1.xpose.msra.mxu0 0.0
    %5142 = vmatprep.subr.mxu0 0.0
    %5143 = vmatpush1.xpose.msra.mxu0 0.0
    %5144 = vmatprep.subr.mxu0 0.0
    %5145 = vmatpush1.xpose.msra.mxu0 0.0
    %5146 = vmatprep.subr.mxu0 0.0
    %5147 = vmatpush1.xpose.msra.mxu0 0.0
    %5148 = vmatprep.subr.mxu0 0.0
    %5149 = vmatpush1.xpose.msra.mxu0 0.0
    %5150 = vmatprep.subr.mxu0 0.0
    %5151 = vmatpush1.xpose.msra.mxu0 0.0
    %5152 = vmatprep.subr.mxu0 0.0
    %5153 = vmatpush1.xpose.msra.mxu0 0.0
    %5154 = vmatprep.subr.mxu0 0.0
    %5155 = vmatpush1.xpose.msra.mxu0 0.0
    %5156 = vmatprep.subr.mxu0 0.0
    %5157 = vmatpush1.xpose.msra.mxu0 0.0
    %5158 = vmatprep.subr.mxu0 0.0
    %5159 = vmatpush1.xpose.msra.mxu0 0.0
    %5160 = vmatprep.subr.mxu0 0.0
    %5161 = vmatpush1.xpose.msra.mxu0 0.0
    %5162 = vmatprep.subr.mxu0 0.0
    %5163 = vmatpush1.xpose.msra.mxu0 0.0
    %5164 = vmatprep.subr.mxu0 0.0
    %5165 = vmatpush1.xpose.msra.mxu0 0.0
    %5166 = vmatprep.subr.mxu0 0.0
    %5167 = vmatpush1.xpose.msra.mxu0 0.0
    %5168 = vmatprep.subr.mxu0 0.0
    %5169 = vmatpush1.xpose.msra.mxu0 0.0
    %5170 = vmatprep.subr.mxu0 0.0
    %5171 = vmatpush1.xpose.msra.mxu0 %v5138
    %5172 = vmatprep.subr.mxu0 0.0
    %5173 = vmatpush2.xpose.msra.mxu0 0.0
    %5174 = vmatprep.subr.mxu0 0.0
    %5175 = vmatpush2.xpose.msra.mxu0 0.0
    %5176 = vmatprep.subr.mxu0 0.0
    %5177 = vmatpush2.xpose.msra.mxu0 0.0
    %5178 = vmatprep.subr.mxu0 0.0
    %5179 = vmatpush2.xpose.msra.mxu0 0.0
    %5180 = vmatprep.subr.mxu0 0.0
    %5181 = vmatpush2.xpose.msra.mxu0 0.0
    %5182 = vmatprep.subr.mxu0 0.0
    %5183 = vmatpush2.xpose.msra.mxu0 0.0
    %5184 = vmatprep.subr.mxu0 0.0
    %5185 = vmatpush2.xpose.msra.mxu0 0.0
    %5186 = vmatprep.subr.mxu0 0.0
    %5187 = vmatpush2.xpose.msra.mxu0 0.0
    %5188 = vmatprep.subr.mxu0 0.0
    %5189 = vmatpush2.xpose.msra.mxu0 0.0
    %5190 = vmatprep.subr.mxu0 0.0
    %5191 = vmatpush2.xpose.msra.mxu0 0.0
    %5192 = vmatprep.subr.mxu0 0.0
    %5193 = vmatpush2.xpose.msra.mxu0 0.0
    %5194 = vmatprep.subr.mxu0 0.0
    %5195 = vmatpush2.xpose.msra.mxu0 0.0
    %5196 = vmatprep.subr.mxu0 0.0
    %5197 = vmatpush2.xpose.msra.mxu0 0.0
    %5198 = vmatprep.subr.mxu0 0.0
    %5199 = vmatpush2.xpose.msra.mxu0 0.0
    %5200 = vmatprep.subr.mxu0 0.0
    %5201 = vmatpush2.xpose.msra.mxu0 0.0
    %5202 = vmatprep.subr.mxu0 0.0
    %5203 = vmatpush2.xpose.msra.mxu0 0.0
    %5204 = vmatprep.mubr.f32.mxu0 0.0
    %5205 = vmatmul.mubr.f32.gmra.mxu0 %v5136
    %v5206 = vpop.f32.mrf.mxu0
    %v5207 = vadd.f32 %v175, %v5206
    %v5208 = vpop.f32.mrf.mxu0
    %5209 = vdwg.mxu0
    %5210 = vrot.lane.b32.xlu0 %v4309, 112
    %v5211 = vpop.permute.xlu0 %5210
    %5212 = vrot.lane.b32.xlu0 %v4300, 80
    %v5213 = vpop.permute.xlu0 %5212
    %v5214 = vsel %vm352, %v5211, 0
    %v5216 = vsel %vm352, %v5213, 0
    %5218 = vmatprep.subr.mxu0 0.0
    %5219 = vmatpush1.xpose.msra.mxu0 0.0
    %5220 = vmatprep.subr.mxu0 0.0
    %5221 = vmatpush1.xpose.msra.mxu0 0.0
    %5222 = vmatprep.subr.mxu0 0.0
    %5223 = vmatpush1.xpose.msra.mxu0 0.0
    %5224 = vmatprep.subr.mxu0 0.0
    %5225 = vmatpush1.xpose.msra.mxu0 0.0
    %5226 = vmatprep.subr.mxu0 0.0
    %5227 = vmatpush1.xpose.msra.mxu0 0.0
    %5228 = vmatprep.subr.mxu0 0.0
    %5229 = vmatpush1.xpose.msra.mxu0 0.0
    %5230 = vmatprep.subr.mxu0 0.0
    %5231 = vmatpush1.xpose.msra.mxu0 0.0
    %5232 = vmatprep.subr.mxu0 0.0
    %5233 = vmatpush1.xpose.msra.mxu0 0.0
    %5234 = vmatprep.subr.mxu0 0.0
    %5235 = vmatpush1.xpose.msra.mxu0 0.0
    %5236 = vmatprep.subr.mxu0 0.0
    %5237 = vmatpush1.xpose.msra.mxu0 0.0
    %5238 = vmatprep.subr.mxu0 0.0
    %5239 = vmatpush1.xpose.msra.mxu0 0.0
    %5240 = vmatprep.subr.mxu0 0.0
    %5241 = vmatpush1.xpose.msra.mxu0 0.0
    %5242 = vmatprep.subr.mxu0 0.0
    %5243 = vmatpush1.xpose.msra.mxu0 0.0
    %5244 = vmatprep.subr.mxu0 0.0
    %5245 = vmatpush1.xpose.msra.mxu0 0.0
    %5246 = vmatprep.subr.mxu0 0.0
    %5247 = vmatpush1.xpose.msra.mxu0 0.0
    %5248 = vmatprep.subr.mxu0 0.0
    %5249 = vmatpush1.xpose.msra.mxu0 %v5216
    %5250 = vmatprep.subr.mxu0 0.0
    %5251 = vmatpush2.xpose.msra.mxu0 0.0
    %5252 = vmatprep.subr.mxu0 0.0
    %5253 = vmatpush2.xpose.msra.mxu0 0.0
    %5254 = vmatprep.subr.mxu0 0.0
    %5255 = vmatpush2.xpose.msra.mxu0 0.0
    %5256 = vmatprep.subr.mxu0 0.0
    %5257 = vmatpush2.xpose.msra.mxu0 0.0
    %5258 = vmatprep.subr.mxu0 0.0
    %5259 = vmatpush2.xpose.msra.mxu0 0.0
    %5260 = vmatprep.subr.mxu0 0.0
    %5261 = vmatpush2.xpose.msra.mxu0 0.0
    %5262 = vmatprep.subr.mxu0 0.0
    %5263 = vmatpush2.xpose.msra.mxu0 0.0
    %5264 = vmatprep.subr.mxu0 0.0
    %5265 = vmatpush2.xpose.msra.mxu0 0.0
    %5266 = vmatprep.subr.mxu0 0.0
    %5267 = vmatpush2.xpose.msra.mxu0 0.0
    %5268 = vmatprep.subr.mxu0 0.0
    %5269 = vmatpush2.xpose.msra.mxu0 0.0
    %5270 = vmatprep.subr.mxu0 0.0
    %5271 = vmatpush2.xpose.msra.mxu0 0.0
    %5272 = vmatprep.subr.mxu0 0.0
    %5273 = vmatpush2.xpose.msra.mxu0 0.0
    %5274 = vmatprep.subr.mxu0 0.0
    %5275 = vmatpush2.xpose.msra.mxu0 0.0
    %5276 = vmatprep.subr.mxu0 0.0
    %5277 = vmatpush2.xpose.msra.mxu0 0.0
    %5278 = vmatprep.subr.mxu0 0.0
    %5279 = vmatpush2.xpose.msra.mxu0 0.0
    %5280 = vmatprep.subr.mxu0 0.0
    %5281 = vmatpush2.xpose.msra.mxu0 0.0
    %5282 = vmatprep.mubr.f32.mxu0 0.0
    %5283 = vmatmul.mubr.f32.gmra.mxu0 %v5214
    %v5284 = vpop.f32.mrf.mxu0
    %v5285 = vadd.f32 %v176, %v5284
    %v5286 = vpop.f32.mrf.mxu0
    %5287 = vdwg.mxu0
    %v5288 = vsel %vm352, %v5207, -inf
    %5289 = vmax.xlane.f32.xlu0 %v5288
    %v5290 = vpop.xlane.xlu0 %5289
    %v5291 = vsel %vm352, %v5285, -inf
    %5292 = vmax.xlane.f32.xlu0 %v5291
    %v5293 = vpop.xlane.xlu0 %5292
    %v5294 = vsub.f32 %v5207, %v5290
    %v5295 = vsub.f32 %v5285, %v5293
    %v5296 = vmul.f32 %v5294, 1.442695
    %v5297 = vpow.pop %v5296
    %v5298 = vmul.f32 %v5295, 1.442695
    %v5299 = vpow.pop %v5298
    %v5300 = vsel %vm352, %v5297, 0.0
    %5301 = vadd.xlane.f32.xlu0 %v5300
    %v5302 = vpop.xlane.xlu0 %5301
    %v5303 = vsel %vm352, %v5299, 0.0
    %5304 = vadd.xlane.f32.xlu0 %v5303
    %v5305 = vpop.xlane.xlu0 %5304
    %v5306 = vrcp.pop %v5302
    %v5307 = vrcp.pop %v5305
    %v5308 = vmul.f32 %v5297, %v5306
    %v5309 = vmul.f32 %v5299, %v5307
    %5310 = vrot.lane.b32.xlu0 %v4295, 48
    %v5311 = vpop.permute.xlu0 %5310
    %v5314 = vsel %vm352, %v5308, 0
    %5316 = vmatprep.subr.mxu0 0.0
    %5317 = vmatpush1.msra.mxu0 0.0
    %5318 = vmatprep.subr.mxu0 0.0
    %5319 = vmatpush1.msra.mxu0 0.0
    %5320 = vmatprep.subr.mxu0 0.0
    %5321 = vmatpush1.msra.mxu0 0.0
    %5322 = vmatprep.subr.mxu0 0.0
    %5323 = vmatpush1.msra.mxu0 0.0
    %5324 = vmatprep.subr.mxu0 0.0
    %5325 = vmatpush1.msra.mxu0 0.0
    %5326 = vmatprep.subr.mxu0 0.0
    %5327 = vmatpush1.msra.mxu0 0.0
    %5328 = vmatprep.subr.mxu0 0.0
    %5329 = vmatpush1.msra.mxu0 0.0
    %5330 = vmatprep.subr.mxu0 0.0
    %5331 = vmatpush1.msra.mxu0 0.0
    %5332 = vmatprep.subr.mxu0 0.0
    %5333 = vmatpush1.msra.mxu0 0.0
    %5334 = vmatprep.subr.mxu0 0.0
    %5335 = vmatpush1.msra.mxu0 0.0
    %5336 = vmatprep.subr.mxu0 0.0
    %5337 = vmatpush1.msra.mxu0 0.0
    %5338 = vmatprep.subr.mxu0 0.0
    %5339 = vmatpush1.msra.mxu0 0.0
    %5340 = vmatprep.subr.mxu0 0.0
    %5341 = vmatpush1.msra.mxu0 0.0
    %5342 = vmatprep.subr.mxu0 0.0
    %5343 = vmatpush1.msra.mxu0 0.0
    %5344 = vmatprep.subr.mxu0 0.0
    %5345 = vmatpush1.msra.mxu0 0.0
    %5346 = vmatprep.subr.mxu0 0.0
    %5347 = vmatpush1.msra.mxu0 %v5311
    %5348 = vmatprep.subr.mxu0 0.0
    %5349 = vmatpush2.msra.mxu0 0.0
    %5350 = vmatprep.subr.mxu0 0.0
    %5351 = vmatpush2.msra.mxu0 0.0
    %5352 = vmatprep.subr.mxu0 0.0
    %5353 = vmatpush2.msra.mxu0 0.0
    %5354 = vmatprep.subr.mxu0 0.0
    %5355 = vmatpush2.msra.mxu0 0.0
    %5356 = vmatprep.subr.mxu0 0.0
    %5357 = vmatpush2.msra.mxu0 0.0
    %5358 = vmatprep.subr.mxu0 0.0
    %5359 = vmatpush2.msra.mxu0 0.0
    %5360 = vmatprep.subr.mxu0 0.0
    %5361 = vmatpush2.msra.mxu0 0.0
    %5362 = vmatprep.subr.mxu0 0.0
    %5363 = vmatpush2.msra.mxu0 0.0
    %5364 = vmatprep.subr.mxu0 0.0
    %5365 = vmatpush2.msra.mxu0 0.0
    %5366 = vmatprep.subr.mxu0 0.0
    %5367 = vmatpush2.msra.mxu0 0.0
    %5368 = vmatprep.subr.mxu0 0.0
    %5369 = vmatpush2.msra.mxu0 0.0
    %5370 = vmatprep.subr.mxu0 0.0
    %5371 = vmatpush2.msra.mxu0 0.0
    %5372 = vmatprep.subr.mxu0 0.0
    %5373 = vmatpush2.msra.mxu0 0.0
    %5374 = vmatprep.subr.mxu0 0.0
    %5375 = vmatpush2.msra.mxu0 0.0
    %5376 = vmatprep.subr.mxu0 0.0
    %5377 = vmatpush2.msra.mxu0 0.0
    %5378 = vmatprep.subr.mxu0 0.0
    %5379 = vmatpush2.msra.mxu0 0.0
    %5380 = vmatprep.mubr.f32.mxu0 0.0
    %5381 = vmatmul.mubr.f32.gmra.mxu0 %v5314
    %v5382 = vpop.f32.mrf.mxu0
    %v5383 = vadd.f32 0.0, %v5382
    %v5384 = vpop.f32.mrf.mxu0
    %5385 = vdwg.mxu0
    %5386 = vrot.lane.b32.xlu0 %v4300, 48
    %v5387 = vpop.permute.xlu0 %5386
    %v5390 = vsel %vm352, %v5309, 0
    %5392 = vmatprep.subr.mxu0 0.0
    %5393 = vmatpush1.msra.mxu0 0.0
    %5394 = vmatprep.subr.mxu0 0.0
    %5395 = vmatpush1.msra.mxu0 0.0
    %5396 = vmatprep.subr.mxu0 0.0
    %5397 = vmatpush1.msra.mxu0 0.0
    %5398 = vmatprep.subr.mxu0 0.0
    %5399 = vmatpush1.msra.mxu0 0.0
    %5400 = vmatprep.subr.mxu0 0.0
    %5401 = vmatpush1.msra.mxu0 0.0
    %5402 = vmatprep.subr.mxu0 0.0
    %5403 = vmatpush1.msra.mxu0 0.0
    %5404 = vmatprep.subr.mxu0 0.0
    %5405 = vmatpush1.msra.mxu0 0.0
    %5406 = vmatprep.subr.mxu0 0.0
    %5407 = vmatpush1.msra.mxu0 0.0
    %5408 = vmatprep.subr.mxu0 0.0
    %5409 = vmatpush1.msra.mxu0 0.0
    %5410 = vmatprep.subr.mxu0 0.0
    %5411 = vmatpush1.msra.mxu0 0.0
    %5412 = vmatprep.subr.mxu0 0.0
    %5413 = vmatpush1.msra.mxu0 0.0
    %5414 = vmatprep.subr.mxu0 0.0
    %5415 = vmatpush1.msra.mxu0 0.0
    %5416 = vmatprep.subr.mxu0 0.0
    %5417 = vmatpush1.msra.mxu0 0.0
    %5418 = vmatprep.subr.mxu0 0.0
    %5419 = vmatpush1.msra.mxu0 0.0
    %5420 = vmatprep.subr.mxu0 0.0
    %5421 = vmatpush1.msra.mxu0 0.0
    %5422 = vmatprep.subr.mxu0 0.0
    %5423 = vmatpush1.msra.mxu0 %v5387
    %5424 = vmatprep.subr.mxu0 0.0
    %5425 = vmatpush2.msra.mxu0 0.0
    %5426 = vmatprep.subr.mxu0 0.0
    %5427 = vmatpush2.msra.mxu0 0.0
    %5428 = vmatprep.subr.mxu0 0.0
    %5429 = vmatpush2.msra.mxu0 0.0
    %5430 = vmatprep.subr.mxu0 0.0
    %5431 = vmatpush2.msra.mxu0 0.0
    %5432 = vmatprep.subr.mxu0 0.0
    %5433 = vmatpush2.msra.mxu0 0.0
    %5434 = vmatprep.subr.mxu0 0.0
    %5435 = vmatpush2.msra.mxu0 0.0
    %5436 = vmatprep.subr.mxu0 0.0
    %5437 = vmatpush2.msra.mxu0 0.0
    %5438 = vmatprep.subr.mxu0 0.0
    %5439 = vmatpush2.msra.mxu0 0.0
    %5440 = vmatprep.subr.mxu0 0.0
    %5441 = vmatpush2.msra.mxu0 0.0
    %5442 = vmatprep.subr.mxu0 0.0
    %5443 = vmatpush2.msra.mxu0 0.0
    %5444 = vmatprep.subr.mxu0 0.0
    %5445 = vmatpush2.msra.mxu0 0.0
    %5446 = vmatprep.subr.mxu0 0.0
    %5447 = vmatpush2.msra.mxu0 0.0
    %5448 = vmatprep.subr.mxu0 0.0
    %5449 = vmatpush2.msra.mxu0 0.0
    %5450 = vmatprep.subr.mxu0 0.0
    %5451 = vmatpush2.msra.mxu0 0.0
    %5452 = vmatprep.subr.mxu0 0.0
    %5453 = vmatpush2.msra.mxu0 0.0
    %5454 = vmatprep.subr.mxu0 0.0
    %5455 = vmatpush2.msra.mxu0 0.0
    %5456 = vmatprep.mubr.f32.mxu0 0.0
    %5457 = vmatmul.mubr.f32.gmra.mxu0 %v5390
    %v5458 = vpop.f32.mrf.mxu0
    %v5459 = vadd.f32 0.0, %v5458
    %v5460 = vpop.f32.mrf.mxu0
    %5461 = vdwg.mxu0
    %v5463 = vsel %vm352, %v5383, 0
    %v5466 = vsel %vm352, %v5459, 0
    %5468 = vmatprep.subr.mxu0 0.0
    %5469 = vmatpush1.msra.mxu0 0.0
    %5470 = vmatprep.subr.mxu0 0.0
    %5471 = vmatpush1.msra.mxu0 0.0
    %5472 = vmatprep.subr.mxu0 0.0
    %5473 = vmatpush1.msra.mxu0 0.0
    %5474 = vmatprep.subr.mxu0 0.0
    %5475 = vmatpush1.msra.mxu0 0.0
    %5476 = vmatprep.subr.mxu0 0.0
    %5477 = vmatpush1.msra.mxu0 0.0
    %5478 = vmatprep.subr.mxu0 0.0
    %5479 = vmatpush1.msra.mxu0 0.0
    %5480 = vmatprep.subr.mxu0 0.0
    %5481 = vmatpush1.msra.mxu0 0.0
    %5482 = vmatprep.subr.mxu0 0.0
    %5483 = vmatpush1.msra.mxu0 0.0
    %5484 = vmatprep.subr.mxu0 0.0
    %5485 = vmatpush1.msra.mxu0 0.0
    %5486 = vmatprep.subr.mxu0 0.0
    %5487 = vmatpush1.msra.mxu0 0.0
    %5488 = vmatprep.subr.mxu0 0.0
    %5489 = vmatpush1.msra.mxu0 0.0
    %5490 = vmatprep.subr.mxu0 0.0
    %5491 = vmatpush1.msra.mxu0 0.0
    %5492 = vmatprep.subr.mxu0 0.0
    %5493 = vmatpush1.msra.mxu0 0.0
    %5494 = vmatprep.subr.mxu0 0.0
    %5495 = vmatpush1.msra.mxu0 0.0
    %5496 = vmatprep.subr.mxu0 0.0
    %5497 = vmatpush1.msra.mxu0 0.0
    %5498 = vmatprep.subr.mxu0 0.0
    %5499 = vmatpush1.msra.mxu0 %v4306
    %5500 = vmatprep.subr.mxu0 0.0
    %5501 = vmatpush2.msra.mxu0 0.0
    %5502 = vmatprep.subr.mxu0 0.0
    %5503 = vmatpush2.msra.mxu0 0.0
    %5504 = vmatprep.subr.mxu0 0.0
    %5505 = vmatpush2.msra.mxu0 0.0
    %5506 = vmatprep.subr.mxu0 0.0
    %5507 = vmatpush2.msra.mxu0 0.0
    %5508 = vmatprep.subr.mxu0 0.0
    %5509 = vmatpush2.msra.mxu0 0.0
    %5510 = vmatprep.subr.mxu0 0.0
    %5511 = vmatpush2.msra.mxu0 0.0
    %5512 = vmatprep.subr.mxu0 0.0
    %5513 = vmatpush2.msra.mxu0 0.0
    %5514 = vmatprep.subr.mxu0 0.0
    %5515 = vmatpush2.msra.mxu0 0.0
    %5516 = vmatprep.subr.mxu0 0.0
    %5517 = vmatpush2.msra.mxu0 0.0
    %5518 = vmatprep.subr.mxu0 0.0
    %5519 = vmatpush2.msra.mxu0 0.0
    %5520 = vmatprep.subr.mxu0 0.0
    %5521 = vmatpush2.msra.mxu0 0.0
    %5522 = vmatprep.subr.mxu0 0.0
    %5523 = vmatpush2.msra.mxu0 0.0
    %5524 = vmatprep.subr.mxu0 0.0
    %5525 = vmatpush2.msra.mxu0 0.0
    %5526 = vmatprep.subr.mxu0 0.0
    %5527 = vmatpush2.msra.mxu0 0.0
    %5528 = vmatprep.subr.mxu0 0.0
    %5529 = vmatpush2.msra.mxu0 0.0
    %5530 = vmatprep.subr.mxu0 0.0
    %5531 = vmatpush2.msra.mxu0 0.0
    %5532 = vmatprep.mubr.f32.mxu0 0.0
    %5533 = vmatmul.mubr.f32.gmra.mxu0 %v5463
    %v5534 = vpop.f32.mrf.mxu0
    %v5535 = vadd.f32 0.0, %v5534
    %v5536 = vpop.f32.mrf.mxu0
    %5537 = vmatprep.mubr.f32.mxu0 0.0
    %5538 = vmatmul.mubr.f32.gmra.mxu0 %v5466
    %v5539 = vpop.f32.mrf.mxu0
    %v5540 = vadd.f32 0.0, %v5539
    %v5541 = vpop.f32.mrf.mxu0
    %5542 = vdwg.mxu0
    %v5543 = vadd.f32 %v5124, %v5535
    %v5544 = vadd.f32 %v5129, %v5540
    %5545 = vrot.lane.b32.xlu0 %v4308, 104
    %v5546 = vpop.permute.xlu0 %5545
    %5547 = vrot.lane.b32.xlu0 %v4295, 72
    %v5548 = vpop.permute.xlu0 %5547
    %v5549 = vsel %vm352, %v5546, 0
    %v5551 = vsel %vm352, %v5548, 0
    %5553 = vmatprep.subr.mxu0 0.0
    %5554 = vmatpush1.xpose.msra.mxu0 0.0
    %5555 = vmatprep.subr.mxu0 0.0
    %5556 = vmatpush1.xpose.msra.mxu0 0.0
    %5557 = vmatprep.subr.mxu0 0.0
    %5558 = vmatpush1.xpose.msra.mxu0 0.0
    %5559 = vmatprep.subr.mxu0 0.0
    %5560 = vmatpush1.xpose.msra.mxu0 0.0
    %5561 = vmatprep.subr.mxu0 0.0
    %5562 = vmatpush1.xpose.msra.mxu0 0.0
    %5563 = vmatprep.subr.mxu0 0.0
    %5564 = vmatpush1.xpose.msra.mxu0 0.0
    %5565 = vmatprep.subr.mxu0 0.0
    %5566 = vmatpush1.xpose.msra.mxu0 0.0
    %5567 = vmatprep.subr.mxu0 0.0
    %5568 = vmatpush1.xpose.msra.mxu0 0.0
    %5569 = vmatprep.subr.mxu0 0.0
    %5570 = vmatpush1.xpose.msra.mxu0 0.0
    %5571 = vmatprep.subr.mxu0 0.0
    %5572 = vmatpush1.xpose.msra.mxu0 0.0
    %5573 = vmatprep.subr.mxu0 0.0
    %5574 = vmatpush1.xpose.msra.mxu0 0.0
    %5575 = vmatprep.subr.mxu0 0.0
    %5576 = vmatpush1.xpose.msra.mxu0 0.0
    %5577 = vmatprep.subr.mxu0 0.0
    %5578 = vmatpush1.xpose.msra.mxu0 0.0
    %5579 = vmatprep.subr.mxu0 0.0
    %5580 = vmatpush1.xpose.msra.mxu0 0.0
    %5581 = vmatprep.subr.mxu0 0.0
    %5582 = vmatpush1.xpose.msra.mxu0 0.0
    %5583 = vmatprep.subr.mxu0 0.0
    %5584 = vmatpush1.xpose.msra.mxu0 %v5551
    %5585 = vmatprep.subr.mxu0 0.0
    %5586 = vmatpush2.xpose.msra.mxu0 0.0
    %5587 = vmatprep.subr.mxu0 0.0
    %5588 = vmatpush2.xpose.msra.mxu0 0.0
    %5589 = vmatprep.subr.mxu0 0.0
    %5590 = vmatpush2.xpose.msra.mxu0 0.0
    %5591 = vmatprep.subr.mxu0 0.0
    %5592 = vmatpush2.xpose.msra.mxu0 0.0
    %5593 = vmatprep.subr.mxu0 0.0
    %5594 = vmatpush2.xpose.msra.mxu0 0.0
    %5595 = vmatprep.subr.mxu0 0.0
    %5596 = vmatpush2.xpose.msra.mxu0 0.0
    %5597 = vmatprep.subr.mxu0 0.0
    %5598 = vmatpush2.xpose.msra.mxu0 0.0
    %5599 = vmatprep.subr.mxu0 0.0
    %5600 = vmatpush2.xpose.msra.mxu0 0.0
    %5601 = vmatprep.subr.mxu0 0.0
    %5602 = vmatpush2.xpose.msra.mxu0 0.0
    %5603 = vmatprep.subr.mxu0 0.0
    %5604 = vmatpush2.xpose.msra.mxu0 0.0
    %5605 = vmatprep.subr.mxu0 0.0
    %5606 = vmatpush2.xpose.msra.mxu0 0.0
    %5607 = vmatprep.subr.mxu0 0.0
    %5608 = vmatpush2.xpose.msra.mxu0 0.0
    %5609 = vmatprep.subr.mxu0 0.0
    %5610 = vmatpush2.xpose.msra.mxu0 0.0
    %5611 = vmatprep.subr.mxu0 0.0
    %5612 = vmatpush2.xpose.msra.mxu0 0.0
    %5613 = vmatprep.subr.mxu0 0.0
    %5614 = vmatpush2.xpose.msra.mxu0 0.0
    %5615 = vmatprep.subr.mxu0 0.0
    %5616 = vmatpush2.xpose.msra.mxu0 0.0
    %5617 = vmatprep.mubr.f32.mxu0 0.0
    %5618 = vmatmul.mubr.f32.gmra.mxu0 %v5549
    %v5619 = vpop.f32.mrf.mxu0
    %v5620 = vadd.f32 %v175, %v5619
    %v5621 = vpop.f32.mrf.mxu0
    %5622 = vdwg.mxu0
    %5623 = vrot.lane.b32.xlu0 %v4309, 104
    %v5624 = vpop.permute.xlu0 %5623
    %5625 = vrot.lane.b32.xlu0 %v4300, 72
    %v5626 = vpop.permute.xlu0 %5625
    %v5627 = vsel %vm352, %v5624, 0
    %v5629 = vsel %vm352, %v5626, 0
    %5631 = vmatprep.subr.mxu0 0.0
    %5632 = vmatpush1.xpose.msra.mxu0 0.0
    %5633 = vmatprep.subr.mxu0 0.0
    %5634 = vmatpush1.xpose.msra.mxu0 0.0
    %5635 = vmatprep.subr.mxu0 0.0
    %5636 = vmatpush1.xpose.msra.mxu0 0.0
    %5637 = vmatprep.subr.mxu0 0.0
    %5638 = vmatpush1.xpose.msra.mxu0 0.0
    %5639 = vmatprep.subr.mxu0 0.0
    %5640 = vmatpush1.xpose.msra.mxu0 0.0
    %5641 = vmatprep.subr.mxu0 0.0
    %5642 = vmatpush1.xpose.msra.mxu0 0.0
    %5643 = vmatprep.subr.mxu0 0.0
    %5644 = vmatpush1.xpose.msra.mxu0 0.0
    %5645 = vmatprep.subr.mxu0 0.0
    %5646 = vmatpush1.xpose.msra.mxu0 0.0
    %5647 = vmatprep.subr.mxu0 0.0
    %5648 = vmatpush1.xpose.msra.mxu0 0.0
    %5649 = vmatprep.subr.mxu0 0.0
    %5650 = vmatpush1.xpose.msra.mxu0 0.0
    %5651 = vmatprep.subr.mxu0 0.0
    %5652 = vmatpush1.xpose.msra.mxu0 0.0
    %5653 = vmatprep.subr.mxu0 0.0
    %5654 = vmatpush1.xpose.msra.mxu0 0.0
    %5655 = vmatprep.subr.mxu0 0.0
    %5656 = vmatpush1.xpose.msra.mxu0 0.0
    %5657 = vmatprep.subr.mxu0 0.0
    %5658 = vmatpush1.xpose.msra.mxu0 0.0
    %5659 = vmatprep.subr.mxu0 0.0
    %5660 = vmatpush1.xpose.msra.mxu0 0.0
    %5661 = vmatprep.subr.mxu0 0.0
    %5662 = vmatpush1.xpose.msra.mxu0 %v5629
    %5663 = vmatprep.subr.mxu0 0.0
    %5664 = vmatpush2.xpose.msra.mxu0 0.0
    %5665 = vmatprep.subr.mxu0 0.0
    %5666 = vmatpush2.xpose.msra.mxu0 0.0
    %5667 = vmatprep.subr.mxu0 0.0
    %5668 = vmatpush2.xpose.msra.mxu0 0.0
    %5669 = vmatprep.subr.mxu0 0.0
    %5670 = vmatpush2.xpose.msra.mxu0 0.0
    %5671 = vmatprep.subr.mxu0 0.0
    %5672 = vmatpush2.xpose.msra.mxu0 0.0
    %5673 = vmatprep.subr.mxu0 0.0
    %5674 = vmatpush2.xpose.msra.mxu0 0.0
    %5675 = vmatprep.subr.mxu0 0.0
    %5676 = vmatpush2.xpose.msra.mxu0 0.0
    %5677 = vmatprep.subr.mxu0 0.0
    %5678 = vmatpush2.xpose.msra.mxu0 0.0
    %5679 = vmatprep.subr.mxu0 0.0
    %5680 = vmatpush2.xpose.msra.mxu0 0.0
    %5681 = vmatprep.subr.mxu0 0.0
    %5682 = vmatpush2.xpose.msra.mxu0 0.0
    %5683 = vmatprep.subr.mxu0 0.0
    %5684 = vmatpush2.xpose.msra.mxu0 0.0
    %5685 = vmatprep.subr.mxu0 0.0
    %5686 = vmatpush2.xpose.msra.mxu0 0.0
    %5687 = vmatprep.subr.mxu0 0.0
    %5688 = vmatpush2.xpose.msra.mxu0 0.0
    %5689 = vmatprep.subr.mxu0 0.0
    %5690 = vmatpush2.xpose.msra.mxu0 0.0
    %5691 = vmatprep.subr.mxu0 0.0
    %5692 = vmatpush2.xpose.msra.mxu0 0.0
    %5693 = vmatprep.subr.mxu0 0.0
    %5694 = vmatpush2.xpose.msra.mxu0 0.0
    %5695 = vmatprep.mubr.f32.mxu0 0.0
    %5696 = vmatmul.mubr.f32.gmra.mxu0 %v5627
    %v5697 = vpop.f32.mrf.mxu0
    %v5698 = vadd.f32 %v176, %v5697
    %v5699 = vpop.f32.mrf.mxu0
    %5700 = vdwg.mxu0
    %v5701 = vsel %vm352, %v5620, -inf
    %5702 = vmax.xlane.f32.xlu0 %v5701
    %v5703 = vpop.xlane.xlu0 %5702
    %v5704 = vsel %vm352, %v5698, -inf
    %5705 = vmax.xlane.f32.xlu0 %v5704
    %v5706 = vpop.xlane.xlu0 %5705
    %v5707 = vsub.f32 %v5620, %v5703
    %v5708 = vsub.f32 %v5698, %v5706
    %v5709 = vmul.f32 %v5707, 1.442695
    %v5710 = vpow.pop %v5709
    %v5711 = vmul.f32 %v5708, 1.442695
    %v5712 = vpow.pop %v5711
    %v5713 = vsel %vm352, %v5710, 0.0
    %5714 = vadd.xlane.f32.xlu0 %v5713
    %v5715 = vpop.xlane.xlu0 %5714
    %v5716 = vsel %vm352, %v5712, 0.0
    %5717 = vadd.xlane.f32.xlu0 %v5716
    %v5718 = vpop.xlane.xlu0 %5717
    %v5719 = vrcp.pop %v5715
    %v5720 = vrcp.pop %v5718
    %v5721 = vmul.f32 %v5710, %v5719
    %v5722 = vmul.f32 %v5712, %v5720
    %5723 = vrot.lane.b32.xlu0 %v4295, 40
    %v5724 = vpop.permute.xlu0 %5723
    %v5727 = vsel %vm352, %v5721, 0
    %5729 = vmatprep.subr.mxu0 0.0
    %5730 = vmatpush1.msra.mxu0 0.0
    %5731 = vmatprep.subr.mxu0 0.0
    %5732 = vmatpush1.msra.mxu0 0.0
    %5733 = vmatprep.subr.mxu0 0.0
    %5734 = vmatpush1.msra.mxu0 0.0
    %5735 = vmatprep.subr.mxu0 0.0
    %5736 = vmatpush1.msra.mxu0 0.0
    %5737 = vmatprep.subr.mxu0 0.0
    %5738 = vmatpush1.msra.mxu0 0.0
    %5739 = vmatprep.subr.mxu0 0.0
    %5740 = vmatpush1.msra.mxu0 0.0
    %5741 = vmatprep.subr.mxu0 0.0
    %5742 = vmatpush1.msra.mxu0 0.0
    %5743 = vmatprep.subr.mxu0 0.0
    %5744 = vmatpush1.msra.mxu0 0.0
    %5745 = vmatprep.subr.mxu0 0.0
    %5746 = vmatpush1.msra.mxu0 0.0
    %5747 = vmatprep.subr.mxu0 0.0
    %5748 = vmatpush1.msra.mxu0 0.0
    %5749 = vmatprep.subr.mxu0 0.0
    %5750 = vmatpush1.msra.mxu0 0.0
    %5751 = vmatprep.subr.mxu0 0.0
    %5752 = vmatpush1.msra.mxu0 0.0
    %5753 = vmatprep.subr.mxu0 0.0
    %5754 = vmatpush1.msra.mxu0 0.0
    %5755 = vmatprep.subr.mxu0 0.0
    %5756 = vmatpush1.msra.mxu0 0.0
    %5757 = vmatprep.subr.mxu0 0.0
    %5758 = vmatpush1.msra.mxu0 0.0
    %5759 = vmatprep.subr.mxu0 0.0
    %5760 = vmatpush1.msra.mxu0 %v5724
    %5761 = vmatprep.subr.mxu0 0.0
    %5762 = vmatpush2.msra.mxu0 0.0
    %5763 = vmatprep.subr.mxu0 0.0
    %5764 = vmatpush2.msra.mxu0 0.0
    %5765 = vmatprep.subr.mxu0 0.0
    %5766 = vmatpush2.msra.mxu0 0.0
    %5767 = vmatprep.subr.mxu0 0.0
    %5768 = vmatpush2.msra.mxu0 0.0
    %5769 = vmatprep.subr.mxu0 0.0
    %5770 = vmatpush2.msra.mxu0 0.0
    %5771 = vmatprep.subr.mxu0 0.0
    %5772 = vmatpush2.msra.mxu0 0.0
    %5773 = vmatprep.subr.mxu0 0.0
    %5774 = vmatpush2.msra.mxu0 0.0
    %5775 = vmatprep.subr.mxu0 0.0
    %5776 = vmatpush2.msra.mxu0 0.0
    %5777 = vmatprep.subr.mxu0 0.0
    %5778 = vmatpush2.msra.mxu0 0.0
    %5779 = vmatprep.subr.mxu0 0.0
    %5780 = vmatpush2.msra.mxu0 0.0
    %5781 = vmatprep.subr.mxu0 0.0
    %5782 = vmatpush2.msra.mxu0 0.0
    %5783 = vmatprep.subr.mxu0 0.0
    %5784 = vmatpush2.msra.mxu0 0.0
    %5785 = vmatprep.subr.mxu0 0.0
    %5786 = vmatpush2.msra.mxu0 0.0
    %5787 = vmatprep.subr.mxu0 0.0
    %5788 = vmatpush2.msra.mxu0 0.0
    %5789 = vmatprep.subr.mxu0 0.0
    %5790 = vmatpush2.msra.mxu0 0.0
    %5791 = vmatprep.subr.mxu0 0.0
    %5792 = vmatpush2.msra.mxu0 0.0
    %5793 = vmatprep.mubr.f32.mxu0 0.0
    %5794 = vmatmul.mubr.f32.gmra.mxu0 %v5727
    %v5795 = vpop.f32.mrf.mxu0
    %v5796 = vadd.f32 0.0, %v5795
    %v5797 = vpop.f32.mrf.mxu0
    %5798 = vdwg.mxu0
    %5799 = vrot.lane.b32.xlu0 %v4300, 40
    %v5800 = vpop.permute.xlu0 %5799
    %v5803 = vsel %vm352, %v5722, 0
    %5805 = vmatprep.subr.mxu0 0.0
    %5806 = vmatpush1.msra.mxu0 0.0
    %5807 = vmatprep.subr.mxu0 0.0
    %5808 = vmatpush1.msra.mxu0 0.0
    %5809 = vmatprep.subr.mxu0 0.0
    %5810 = vmatpush1.msra.mxu0 0.0
    %5811 = vmatprep.subr.mxu0 0.0
    %5812 = vmatpush1.msra.mxu0 0.0
    %5813 = vmatprep.subr.mxu0 0.0
    %5814 = vmatpush1.msra.mxu0 0.0
    %5815 = vmatprep.subr.mxu0 0.0
    %5816 = vmatpush1.msra.mxu0 0.0
    %5817 = vmatprep.subr.mxu0 0.0
    %5818 = vmatpush1.msra.mxu0 0.0
    %5819 = vmatprep.subr.mxu0 0.0
    %5820 = vmatpush1.msra.mxu0 0.0
    %5821 = vmatprep.subr.mxu0 0.0
    %5822 = vmatpush1.msra.mxu0 0.0
    %5823 = vmatprep.subr.mxu0 0.0
    %5824 = vmatpush1.msra.mxu0 0.0
    %5825 = vmatprep.subr.mxu0 0.0
    %5826 = vmatpush1.msra.mxu0 0.0
    %5827 = vmatprep.subr.mxu0 0.0
    %5828 = vmatpush1.msra.mxu0 0.0
    %5829 = vmatprep.subr.mxu0 0.0
    %5830 = vmatpush1.msra.mxu0 0.0
    %5831 = vmatprep.subr.mxu0 0.0
    %5832 = vmatpush1.msra.mxu0 0.0
    %5833 = vmatprep.subr.mxu0 0.0
    %5834 = vmatpush1.msra.mxu0 0.0
    %5835 = vmatprep.subr.mxu0 0.0
    %5836 = vmatpush1.msra.mxu0 %v5800
    %5837 = vmatprep.subr.mxu0 0.0
    %5838 = vmatpush2.msra.mxu0 0.0
    %5839 = vmatprep.subr.mxu0 0.0
    %5840 = vmatpush2.msra.mxu0 0.0
    %5841 = vmatprep.subr.mxu0 0.0
    %5842 = vmatpush2.msra.mxu0 0.0
    %5843 = vmatprep.subr.mxu0 0.0
    %5844 = vmatpush2.msra.mxu0 0.0
    %5845 = vmatprep.subr.mxu0 0.0
    %5846 = vmatpush2.msra.mxu0 0.0
    %5847 = vmatprep.subr.mxu0 0.0
    %5848 = vmatpush2.msra.mxu0 0.0
    %5849 = vmatprep.subr.mxu0 0.0
    %5850 = vmatpush2.msra.mxu0 0.0
    %5851 = vmatprep.subr.mxu0 0.0
    %5852 = vmatpush2.msra.mxu0 0.0
    %5853 = vmatprep.subr.mxu0 0.0
    %5854 = vmatpush2.msra.mxu0 0.0
    %5855 = vmatprep.subr.mxu0 0.0
    %5856 = vmatpush2.msra.mxu0 0.0
    %5857 = vmatprep.subr.mxu0 0.0
    %5858 = vmatpush2.msra.mxu0 0.0
    %5859 = vmatprep.subr.mxu0 0.0
    %5860 = vmatpush2.msra.mxu0 0.0
    %5861 = vmatprep.subr.mxu0 0.0
    %5862 = vmatpush2.msra.mxu0 0.0
    %5863 = vmatprep.subr.mxu0 0.0
    %5864 = vmatpush2.msra.mxu0 0.0
    %5865 = vmatprep.subr.mxu0 0.0
    %5866 = vmatpush2.msra.mxu0 0.0
    %5867 = vmatprep.subr.mxu0 0.0
    %5868 = vmatpush2.msra.mxu0 0.0
    %5869 = vmatprep.mubr.f32.mxu0 0.0
    %5870 = vmatmul.mubr.f32.gmra.mxu0 %v5803
    %v5871 = vpop.f32.mrf.mxu0
    %v5872 = vadd.f32 0.0, %v5871
    %v5873 = vpop.f32.mrf.mxu0
    %5874 = vdwg.mxu0
    %v5876 = vsel %vm352, %v5796, 0
    %v5879 = vsel %vm352, %v5872, 0
    %5881 = vmatprep.subr.mxu0 0.0
    %5882 = vmatpush1.msra.mxu0 0.0
    %5883 = vmatprep.subr.mxu0 0.0
    %5884 = vmatpush1.msra.mxu0 0.0
    %5885 = vmatprep.subr.mxu0 0.0
    %5886 = vmatpush1.msra.mxu0 0.0
    %5887 = vmatprep.subr.mxu0 0.0
    %5888 = vmatpush1.msra.mxu0 0.0
    %5889 = vmatprep.subr.mxu0 0.0
    %5890 = vmatpush1.msra.mxu0 0.0
    %5891 = vmatprep.subr.mxu0 0.0
    %5892 = vmatpush1.msra.mxu0 0.0
    %5893 = vmatprep.subr.mxu0 0.0
    %5894 = vmatpush1.msra.mxu0 0.0
    %5895 = vmatprep.subr.mxu0 0.0
    %5896 = vmatpush1.msra.mxu0 0.0
    %5897 = vmatprep.subr.mxu0 0.0
    %5898 = vmatpush1.msra.mxu0 0.0
    %5899 = vmatprep.subr.mxu0 0.0
    %5900 = vmatpush1.msra.mxu0 0.0
    %5901 = vmatprep.subr.mxu0 0.0
    %5902 = vmatpush1.msra.mxu0 0.0
    %5903 = vmatprep.subr.mxu0 0.0
    %5904 = vmatpush1.msra.mxu0 0.0
    %5905 = vmatprep.subr.mxu0 0.0
    %5906 = vmatpush1.msra.mxu0 0.0
    %5907 = vmatprep.subr.mxu0 0.0
    %5908 = vmatpush1.msra.mxu0 0.0
    %5909 = vmatprep.subr.mxu0 0.0
    %5910 = vmatpush1.msra.mxu0 0.0
    %5911 = vmatprep.subr.mxu0 0.0
    %5912 = vmatpush1.msra.mxu0 %v4307
    %5913 = vmatprep.subr.mxu0 0.0
    %5914 = vmatpush2.msra.mxu0 0.0
    %5915 = vmatprep.subr.mxu0 0.0
    %5916 = vmatpush2.msra.mxu0 0.0
    %5917 = vmatprep.subr.mxu0 0.0
    %5918 = vmatpush2.msra.mxu0 0.0
    %5919 = vmatprep.subr.mxu0 0.0
    %5920 = vmatpush2.msra.mxu0 0.0
    %5921 = vmatprep.subr.mxu0 0.0
    %5922 = vmatpush2.msra.mxu0 0.0
    %5923 = vmatprep.subr.mxu0 0.0
    %5924 = vmatpush2.msra.mxu0 0.0
    %5925 = vmatprep.subr.mxu0 0.0
    %5926 = vmatpush2.msra.mxu0 0.0
    %5927 = vmatprep.subr.mxu0 0.0
    %5928 = vmatpush2.msra.mxu0 0.0
    %5929 = vmatprep.subr.mxu0 0.0
    %5930 = vmatpush2.msra.mxu0 0.0
    %5931 = vmatprep.subr.mxu0 0.0
    %5932 = vmatpush2.msra.mxu0 0.0
    %5933 = vmatprep.subr.mxu0 0.0
    %5934 = vmatpush2.msra.mxu0 0.0
    %5935 = vmatprep.subr.mxu0 0.0
    %5936 = vmatpush2.msra.mxu0 0.0
    %5937 = vmatprep.subr.mxu0 0.0
    %5938 = vmatpush2.msra.mxu0 0.0
    %5939 = vmatprep.subr.mxu0 0.0
    %5940 = vmatpush2.msra.mxu0 0.0
    %5941 = vmatprep.subr.mxu0 0.0
    %5942 = vmatpush2.msra.mxu0 0.0
    %5943 = vmatprep.subr.mxu0 0.0
    %5944 = vmatpush2.msra.mxu0 0.0
    %5945 = vmatprep.mubr.f32.mxu0 0.0
    %5946 = vmatmul.mubr.f32.gmra.mxu0 %v5876
    %v5947 = vpop.f32.mrf.mxu0
    %v5948 = vadd.f32 0.0, %v5947
    %v5949 = vpop.f32.mrf.mxu0
    %5950 = vmatprep.mubr.f32.mxu0 0.0
    %5951 = vmatmul.mubr.f32.gmra.mxu0 %v5879
    %v5952 = vpop.f32.mrf.mxu0
    %v5953 = vadd.f32 0.0, %v5952
    %v5954 = vpop.f32.mrf.mxu0
    %5955 = vdwg.mxu0
    %v5956 = vadd.f32 %v5543, %v5948
    %v5957 = vadd.f32 %v5544, %v5953
    %v5958 = vadd.f32 %v4151, %v5956
    %v5959 = vadd.f32 %v4152, %v5957
    %s5960 = scalar_lea.vmem [#allocation8], 1
    %v5961 = vld [vmem:[%s5960] sm:$0x1]
    %v5963 = vlaneseq
    %v5964 = vshrl.u32 %v5963, 7
    %v5965 = vsub.s32 0, %v5964
    %v5966 = vrot.slane %v5961, %v5965
    %v5968 = vadd.f32 %v5958, %v5966
    %v5969 = vadd.f32 %v5959, %v5966
    %v5970 = vsel %vm197, %v5968, 0.0
    %5971 = vadd.xlane.f32.xlu0 %v5970
    %v5972 = vpop.xlane.xlu0 %5971
    %v5973 = vsel %vm197, %v5969, 0.0
    %5974 = vadd.xlane.f32.xlu0 %v5973
    %v5975 = vpop.xlane.xlu0 %5974
    %v5976 = vmul.f32 %v5972, %v204
    %v5977 = vmul.f32 %v5975, %v204
    %v5978 = vsub.f32 %v5968, %v5976
    %v5979 = vsub.f32 %v5969, %v5977
    %v5980 = vmul.f32 %v5978, %v5978
    %v5981 = vmul.f32 %v5979, %v5979
    %v5982 = vsel %vm197, %v5980, 0.0
    %5983 = vadd.xlane.f32.xlu0 %v5982
    %v5984 = vpop.xlane.xlu0 %5983
    %v5985 = vsel %vm197, %v5981, 0.0
    %5986 = vadd.xlane.f32.xlu0 %v5985
    %v5987 = vpop.xlane.xlu0 %5986
    %v5988 = vmul.f32 %v5984, 0.032258064
    %v5989 = vmul.f32 %v5987, 0.032258064
    %v5990 = vrsqrt.pop %v5988
    %v5991 = vmul.f32 %v5988, %v5990
    %vm5992 = vcmp.eq.f32.partialorder %v5988, inf
    %v5993 = vsel %vm5992, %v5988, %v5991
    %vm5994 = vcmp.eq.f32.partialorder %v5988, 0.0
    %v5995 = vand.u32 %v5988, 2147483648
    %v5996 = vsel %vm5994, %v5995, %v5993
    %v5997 = vrsqrt.pop %v5989
    %v5998 = vmul.f32 %v5989, %v5997
    %vm5999 = vcmp.eq.f32.partialorder %v5989, inf
    %v6000 = vsel %vm5999, %v5989, %v5998
    %vm6001 = vcmp.eq.f32.partialorder %v5989, 0.0
    %v6002 = vand.u32 %v5989, 2147483648
    %v6003 = vsel %vm6001, %v6002, %v6000
    %v6004 = vadd.f32 %v5996, 1e-06
    %v6005 = vadd.f32 %v6003, 1e-06
    %v6006 = vrcp.pop %v6004
    %v6007 = vrcp.pop %v6005
    %v6008 = vlaneseq
    %v6009 = vshrl.u32 %v6008, 7
    %v6010 = vsub.s32 1, %v6009
    %v6011 = vrot.slane %v4154, %v6010
    %v6012 = vmul.f32 %v6011, %v5978
    %v6013 = vmul.f32 %v6011, %v5979
    %v6014 = vmul.f32 %v6012, %v6006
    %v6015 = vmul.f32 %v6013, %v6007
    %v6016 = vlaneseq
    %v6017 = vshrl.u32 %v6016, 7
    %v6018 = vsub.s32 1, %v6017
    %v6019 = vrot.slane %v4156, %v6018
    %v6020 = vadd.f32 %v6014, %v6019
    %v6021 = vadd.f32 %v6015, %v6019
    %s6022 = scalar_lea.vmem %s8, 32
    %v6023 = vld [vmem:[%s6022] sm:$0xff]
    %v6024 = vld [vmem:[%s6022 + $0x8] sm:$0xff]
    %v6025 = vld [vmem:[%s6022 + $0x10] sm:$0xff]
    %v6026 = vld [vmem:[%s6022 + $0x18] sm:$0xff]
    %s6027 = scalar_lea.vmem %s9, 1
    %v6028 = vld [vmem:[%s6027] sm:$0x1]
    %v6030 = vlaneseq
    %v6031 = vshrl.u32 %v6030, 7
    %v6032 = vsub.s32 0, %v6031
    %v6033 = vrot.slane %v6028, %v6032
    %v6036 = vsel %vm197, %v6020, 0
    %v6039 = vsel %vm197, %v6021, 0
    %6041 = vmatprep.subr.mxu0 0.0
    %6042 = vmatpush1.msra.mxu0 0.0
    %6043 = vmatprep.subr.mxu0 0.0
    %6044 = vmatpush1.msra.mxu0 0.0
    %6045 = vmatprep.subr.mxu0 0.0
    %6046 = vmatpush1.msra.mxu0 0.0
    %6047 = vmatprep.subr.mxu0 0.0
    %6048 = vmatpush1.msra.mxu0 0.0
    %6049 = vmatprep.subr.mxu0 0.0
    %6050 = vmatpush1.msra.mxu0 0.0
    %6051 = vmatprep.subr.mxu0 0.0
    %6052 = vmatpush1.msra.mxu0 0.0
    %6053 = vmatprep.subr.mxu0 0.0
    %6054 = vmatpush1.msra.mxu0 0.0
    %6055 = vmatprep.subr.mxu0 0.0
    %6056 = vmatpush1.msra.mxu0 0.0
    %6057 = vmatprep.subr.mxu0 0.0
    %6058 = vmatpush1.msra.mxu0 0.0
    %6059 = vmatprep.subr.mxu0 0.0
    %6060 = vmatpush1.msra.mxu0 0.0
    %6061 = vmatprep.subr.mxu0 0.0
    %6062 = vmatpush1.msra.mxu0 0.0
    %6063 = vmatprep.subr.mxu0 0.0
    %6064 = vmatpush1.msra.mxu0 0.0
    %6065 = vmatprep.subr.mxu0 0.0
    %6066 = vmatpush1.msra.mxu0 %v6026
    %6067 = vmatprep.subr.mxu0 0.0
    %6068 = vmatpush1.msra.mxu0 %v6025
    %6069 = vmatprep.subr.mxu0 0.0
    %6070 = vmatpush1.msra.mxu0 %v6024
    %6071 = vmatprep.subr.mxu0 0.0
    %6072 = vmatpush1.msra.mxu0 %v6023
    %6073 = vmatprep.subr.mxu0 0.0
    %6074 = vmatpush2.msra.mxu0 0.0
    %6075 = vmatprep.subr.mxu0 0.0
    %6076 = vmatpush2.msra.mxu0 0.0
    %6077 = vmatprep.subr.mxu0 0.0
    %6078 = vmatpush2.msra.mxu0 0.0
    %6079 = vmatprep.subr.mxu0 0.0
    %6080 = vmatpush2.msra.mxu0 0.0
    %6081 = vmatprep.subr.mxu0 0.0
    %6082 = vmatpush2.msra.mxu0 0.0
    %6083 = vmatprep.subr.mxu0 0.0
    %6084 = vmatpush2.msra.mxu0 0.0
    %6085 = vmatprep.subr.mxu0 0.0
    %6086 = vmatpush2.msra.mxu0 0.0
    %6087 = vmatprep.subr.mxu0 0.0
    %6088 = vmatpush2.msra.mxu0 0.0
    %6089 = vmatprep.subr.mxu0 0.0
    %6090 = vmatpush2.msra.mxu0 0.0
    %6091 = vmatprep.subr.mxu0 0.0
    %6092 = vmatpush2.msra.mxu0 0.0
    %6093 = vmatprep.subr.mxu0 0.0
    %6094 = vmatpush2.msra.mxu0 0.0
    %6095 = vmatprep.subr.mxu0 0.0
    %6096 = vmatpush2.msra.mxu0 0.0
    %6097 = vmatprep.subr.mxu0 0.0
    %6098 = vmatpush2.msra.mxu0 0.0
    %6099 = vmatprep.subr.mxu0 0.0
    %6100 = vmatpush2.msra.mxu0 0.0
    %6101 = vmatprep.subr.mxu0 0.0
    %6102 = vmatpush2.msra.mxu0 0.0
    %6103 = vmatprep.subr.mxu0 0.0
    %6104 = vmatpush2.msra.mxu0 0.0
    %6105 = vmatprep.mubr.f32.mxu0 0.0
    %6106 = vmatmul.mubr.f32.gmra.mxu0 %v6036
    %v6107 = vpop.f32.mrf.mxu0
    %v6108 = vadd.f32 %v6033, %v6107
    %v6109 = vpop.f32.mrf.mxu0
    %6110 = vmatprep.mubr.f32.mxu0 0.0
    %6111 = vmatmul.mubr.f32.gmra.mxu0 %v6039
    %v6112 = vpop.f32.mrf.mxu0
    %v6113 = vadd.f32 %v6033, %v6112
    %v6114 = vpop.f32.mrf.mxu0
    %6115 = vdwg.mxu0
    %s6116 = scalar_lea.vmem [#allocation10], 32
    %v6117 = vld [vmem:[%s6116] sm:$0xff]
    %v6118 = vld [vmem:[%s6116 + $0x8] sm:$0xff]
    %v6119 = vld [vmem:[%s6116 + $0x10] sm:$0xff]
    %v6120 = vld [vmem:[%s6116 + $0x18] sm:$0xff]
    %s6121 = scalar_lea.vmem %s11, 1
    %v6122 = vld [vmem:[%s6121] sm:$0x1]
    %v6124 = vlaneseq
    %v6125 = vshrl.u32 %v6124, 7
    %v6126 = vsub.s32 0, %v6125
    %v6127 = vrot.slane %v6122, %v6126
    %6129 = vmatprep.subr.mxu0 0.0
    %6130 = vmatpush1.msra.mxu0 0.0
    %6131 = vmatprep.subr.mxu0 0.0
    %6132 = vmatpush1.msra.mxu0 0.0
    %6133 = vmatprep.subr.mxu0 0.0
    %6134 = vmatpush1.msra.mxu0 0.0
    %6135 = vmatprep.subr.mxu0 0.0
    %6136 = vmatpush1.msra.mxu0 0.0
    %6137 = vmatprep.subr.mxu0 0.0
    %6138 = vmatpush1.msra.mxu0 0.0
    %6139 = vmatprep.subr.mxu0 0.0
    %6140 = vmatpush1.msra.mxu0 0.0
    %6141 = vmatprep.subr.mxu0 0.0
    %6142 = vmatpush1.msra.mxu0 0.0
    %6143 = vmatprep.subr.mxu0 0.0
    %6144 = vmatpush1.msra.mxu0 0.0
    %6145 = vmatprep.subr.mxu0 0.0
    %6146 = vmatpush1.msra.mxu0 0.0
    %6147 = vmatprep.subr.mxu0 0.0
    %6148 = vmatpush1.msra.mxu0 0.0
    %6149 = vmatprep.subr.mxu0 0.0
    %6150 = vmatpush1.msra.mxu0 0.0
    %6151 = vmatprep.subr.mxu0 0.0
    %6152 = vmatpush1.msra.mxu0 0.0
    %6153 = vmatprep.subr.mxu0 0.0
    %6154 = vmatpush1.msra.mxu0 %v6120
    %6155 = vmatprep.subr.mxu0 0.0
    %6156 = vmatpush1.msra.mxu0 %v6119
    %6157 = vmatprep.subr.mxu0 0.0
    %6158 = vmatpush1.msra.mxu0 %v6118
    %6159 = vmatprep.subr.mxu0 0.0
    %6160 = vmatpush1.msra.mxu0 %v6117
    %6161 = vmatprep.subr.mxu0 0.0
    %6162 = vmatpush2.msra.mxu0 0.0
    %6163 = vmatprep.subr.mxu0 0.0
    %6164 = vmatpush2.msra.mxu0 0.0
    %6165 = vmatprep.subr.mxu0 0.0
    %6166 = vmatpush2.msra.mxu0 0.0
    %6167 = vmatprep.subr.mxu0 0.0
    %6168 = vmatpush2.msra.mxu0 0.0
    %6169 = vmatprep.subr.mxu0 0.0
    %6170 = vmatpush2.msra.mxu0 0.0
    %6171 = vmatprep.subr.mxu0 0.0
    %6172 = vmatpush2.msra.mxu0 0.0
    %6173 = vmatprep.subr.mxu0 0.0
    %6174 = vmatpush2.msra.mxu0 0.0
    %6175 = vmatprep.subr.mxu0 0.0
    %6176 = vmatpush2.msra.mxu0 0.0
    %6177 = vmatprep.subr.mxu0 0.0
    %6178 = vmatpush2.msra.mxu0 0.0
    %6179 = vmatprep.subr.mxu0 0.0
    %6180 = vmatpush2.msra.mxu0 0.0
    %6181 = vmatprep.subr.mxu0 0.0
    %6182 = vmatpush2.msra.mxu0 0.0
    %6183 = vmatprep.subr.mxu0 0.0
    %6184 = vmatpush2.msra.mxu0 0.0
    %6185 = vmatprep.subr.mxu0 0.0
    %6186 = vmatpush2.msra.mxu0 0.0
    %6187 = vmatprep.subr.mxu0 0.0
    %6188 = vmatpush2.msra.mxu0 0.0
    %6189 = vmatprep.subr.mxu0 0.0
    %6190 = vmatpush2.msra.mxu0 0.0
    %6191 = vmatprep.subr.mxu0 0.0
    %6192 = vmatpush2.msra.mxu0 0.0
    %6193 = vmatprep.mubr.f32.mxu0 0.0
    %6194 = vmatmul.mubr.f32.gmra.mxu0 %v2165
    %v6195 = vpop.f32.mrf.mxu0
    %v6196 = vadd.f32 %v6127, %v6195
    %v6197 = vpop.f32.mrf.mxu0
    %6198 = vmatprep.mubr.f32.mxu0 0.0
    %6199 = vmatmul.mubr.f32.gmra.mxu0 %v2168
    %v6200 = vpop.f32.mrf.mxu0
    %v6201 = vadd.f32 %v6127, %v6200
    %v6202 = vpop.f32.mrf.mxu0
    %6203 = vdwg.mxu0
    %s6204 = scalar_lea.vmem [#allocation11], 32
    %v6205 = vld [vmem:[%s6204] sm:$0xff]
    %v6206 = vld [vmem:[%s6204 + $0x8] sm:$0xff]
    %v6207 = vld [vmem:[%s6204 + $0x10] sm:$0xff]
    %v6208 = vld [vmem:[%s6204 + $0x18] sm:$0xff]
    %v6209 = vmul.f32 %v6108, 0.35355338
    %v6210 = vmul.f32 %v6113, 0.35355338
    %v6212 = vsel %vm352, %v6209, 0
    %v6215 = vsel %vm352, %v6196, 0
    %6217 = vmatprep.subr.mxu0 0.0
    %6218 = vmatpush1.xpose.msra.mxu0 0.0
    %6219 = vmatprep.subr.mxu0 0.0
    %6220 = vmatpush1.xpose.msra.mxu0 0.0
    %6221 = vmatprep.subr.mxu0 0.0
    %6222 = vmatpush1.xpose.msra.mxu0 0.0
    %6223 = vmatprep.subr.mxu0 0.0
    %6224 = vmatpush1.xpose.msra.mxu0 0.0
    %6225 = vmatprep.subr.mxu0 0.0
    %6226 = vmatpush1.xpose.msra.mxu0 0.0
    %6227 = vmatprep.subr.mxu0 0.0
    %6228 = vmatpush1.xpose.msra.mxu0 0.0
    %6229 = vmatprep.subr.mxu0 0.0
    %6230 = vmatpush1.xpose.msra.mxu0 0.0
    %6231 = vmatprep.subr.mxu0 0.0
    %6232 = vmatpush1.xpose.msra.mxu0 0.0
    %6233 = vmatprep.subr.mxu0 0.0
    %6234 = vmatpush1.xpose.msra.mxu0 0.0
    %6235 = vmatprep.subr.mxu0 0.0
    %6236 = vmatpush1.xpose.msra.mxu0 0.0
    %6237 = vmatprep.subr.mxu0 0.0
    %6238 = vmatpush1.xpose.msra.mxu0 0.0
    %6239 = vmatprep.subr.mxu0 0.0
    %6240 = vmatpush1.xpose.msra.mxu0 0.0
    %6241 = vmatprep.subr.mxu0 0.0
    %6242 = vmatpush1.xpose.msra.mxu0 0.0
    %6243 = vmatprep.subr.mxu0 0.0
    %6244 = vmatpush1.xpose.msra.mxu0 0.0
    %6245 = vmatprep.subr.mxu0 0.0
    %6246 = vmatpush1.xpose.msra.mxu0 0.0
    %6247 = vmatprep.subr.mxu0 0.0
    %6248 = vmatpush1.xpose.msra.mxu0 %v6215
    %6249 = vmatprep.subr.mxu0 0.0
    %6250 = vmatpush2.xpose.msra.mxu0 0.0
    %6251 = vmatprep.subr.mxu0 0.0
    %6252 = vmatpush2.xpose.msra.mxu0 0.0
    %6253 = vmatprep.subr.mxu0 0.0
    %6254 = vmatpush2.xpose.msra.mxu0 0.0
    %6255 = vmatprep.subr.mxu0 0.0
    %6256 = vmatpush2.xpose.msra.mxu0 0.0
    %6257 = vmatprep.subr.mxu0 0.0
    %6258 = vmatpush2.xpose.msra.mxu0 0.0
    %6259 = vmatprep.subr.mxu0 0.0
    %6260 = vmatpush2.xpose.msra.mxu0 0.0
    %6261 = vmatprep.subr.mxu0 0.0
    %6262 = vmatpush2.xpose.msra.mxu0 0.0
    %6263 = vmatprep.subr.mxu0 0.0
    %6264 = vmatpush2.xpose.msra.mxu0 0.0
    %6265 = vmatprep.subr.mxu0 0.0
    %6266 = vmatpush2.xpose.msra.mxu0 0.0
    %6267 = vmatprep.subr.mxu0 0.0
    %6268 = vmatpush2.xpose.msra.mxu0 0.0
    %6269 = vmatprep.subr.mxu0 0.0
    %6270 = vmatpush2.xpose.msra.mxu0 0.0
    %6271 = vmatprep.subr.mxu0 0.0
    %6272 = vmatpush2.xpose.msra.mxu0 0.0
    %6273 = vmatprep.subr.mxu0 0.0
    %6274 = vmatpush2.xpose.msra.mxu0 0.0
    %6275 = vmatprep.subr.mxu0 0.0
    %6276 = vmatpush2.xpose.msra.mxu0 0.0
    %6277 = vmatprep.subr.mxu0 0.0
    %6278 = vmatpush2.xpose.msra.mxu0 0.0
    %6279 = vmatprep.subr.mxu0 0.0
    %6280 = vmatpush2.xpose.msra.mxu0 0.0
    %6281 = vmatprep.mubr.f32.mxu0 0.0
    %6282 = vmatmul.mubr.f32.gmra.mxu0 %v6212
    %v6283 = vpop.f32.mrf.mxu0
    %v6284 = vadd.f32 %v193, %v6283
    %v6285 = vpop.f32.mrf.mxu0
    %6286 = vdwg.mxu0
    %v6288 = vsel %vm352, %v6210, 0
    %v6291 = vsel %vm352, %v6201, 0
    %6293 = vmatprep.subr.mxu0 0.0
    %6294 = vmatpush1.xpose.msra.mxu0 0.0
    %6295 = vmatprep.subr.mxu0 0.0
    %6296 = vmatpush1.xpose.msra.mxu0 0.0
    %6297 = vmatprep.subr.mxu0 0.0
    %6298 = vmatpush1.xpose.msra.mxu0 0.0
    %6299 = vmatprep.subr.mxu0 0.0
    %6300 = vmatpush1.xpose.msra.mxu0 0.0
    %6301 = vmatprep.subr.mxu0 0.0
    %6302 = vmatpush1.xpose.msra.mxu0 0.0
    %6303 = vmatprep.subr.mxu0 0.0
    %6304 = vmatpush1.xpose.msra.mxu0 0.0
    %6305 = vmatprep.subr.mxu0 0.0
    %6306 = vmatpush1.xpose.msra.mxu0 0.0
    %6307 = vmatprep.subr.mxu0 0.0
    %6308 = vmatpush1.xpose.msra.mxu0 0.0
    %6309 = vmatprep.subr.mxu0 0.0
    %6310 = vmatpush1.xpose.msra.mxu0 0.0
    %6311 = vmatprep.subr.mxu0 0.0
    %6312 = vmatpush1.xpose.msra.mxu0 0.0
    %6313 = vmatprep.subr.mxu0 0.0
    %6314 = vmatpush1.xpose.msra.mxu0 0.0
    %6315 = vmatprep.subr.mxu0 0.0
    %6316 = vmatpush1.xpose.msra.mxu0 0.0
    %6317 = vmatprep.subr.mxu0 0.0
    %6318 = vmatpush1.xpose.msra.mxu0 0.0
    %6319 = vmatprep.subr.mxu0 0.0
    %6320 = vmatpush1.xpose.msra.mxu0 0.0
    %6321 = vmatprep.subr.mxu0 0.0
    %6322 = vmatpush1.xpose.msra.mxu0 0.0
    %6323 = vmatprep.subr.mxu0 0.0
    %6324 = vmatpush1.xpose.msra.mxu0 %v6291
    %6325 = vmatprep.subr.mxu0 0.0
    %6326 = vmatpush2.xpose.msra.mxu0 0.0
    %6327 = vmatprep.subr.mxu0 0.0
    %6328 = vmatpush2.xpose.msra.mxu0 0.0
    %6329 = vmatprep.subr.mxu0 0.0
    %6330 = vmatpush2.xpose.msra.mxu0 0.0
    %6331 = vmatprep.subr.mxu0 0.0
    %6332 = vmatpush2.xpose.msra.mxu0 0.0
    %6333 = vmatprep.subr.mxu0 0.0
    %6334 = vmatpush2.xpose.msra.mxu0 0.0
    %6335 = vmatprep.subr.mxu0 0.0
    %6336 = vmatpush2.xpose.msra.mxu0 0.0
    %6337 = vmatprep.subr.mxu0 0.0
    %6338 = vmatpush2.xpose.msra.mxu0 0.0
    %6339 = vmatprep.subr.mxu0 0.0
    %6340 = vmatpush2.xpose.msra.mxu0 0.0
    %6341 = vmatprep.subr.mxu0 0.0
    %6342 = vmatpush2.xpose.msra.mxu0 0.0
    %6343 = vmatprep.subr.mxu0 0.0
    %6344 = vmatpush2.xpose.msra.mxu0 0.0
    %6345 = vmatprep.subr.mxu0 0.0
    %6346 = vmatpush2.xpose.msra.mxu0 0.0
    %6347 = vmatprep.subr.mxu0 0.0
    %6348 = vmatpush2.xpose.msra.mxu0 0.0
    %6349 = vmatprep.subr.mxu0 0.0
    %6350 = vmatpush2.xpose.msra.mxu0 0.0
    %6351 = vmatprep.subr.mxu0 0.0
    %6352 = vmatpush2.xpose.msra.mxu0 0.0
    %6353 = vmatprep.subr.mxu0 0.0
    %6354 = vmatpush2.xpose.msra.mxu0 0.0
    %6355 = vmatprep.subr.mxu0 0.0
    %6356 = vmatpush2.xpose.msra.mxu0 0.0
    %6357 = vmatprep.mubr.f32.mxu0 0.0
    %6358 = vmatmul.mubr.f32.gmra.mxu0 %v6288
    %v6359 = vpop.f32.mrf.mxu0
    %v6360 = vadd.f32 %v194, %v6359
    %v6361 = vpop.f32.mrf.mxu0
    %6362 = vdwg.mxu0
    %v6363 = vsel %vm352, %v6284, -inf
    %6364 = vmax.xlane.f32.xlu0 %v6363
    %v6365 = vpop.xlane.xlu0 %6364
    %v6366 = vsel %vm352, %v6360, -inf
    %6367 = vmax.xlane.f32.xlu0 %v6366
    %v6368 = vpop.xlane.xlu0 %6367
    %v6369 = vsub.f32 %v6284, %v6365
    %v6370 = vsub.f32 %v6360, %v6368
    %v6371 = vmul.f32 %v6369, 1.442695
    %v6372 = vpow.pop %v6371
    %v6373 = vmul.f32 %v6370, 1.442695
    %v6374 = vpow.pop %v6373
    %v6375 = vsel %vm352, %v6372, 0.0
    %6376 = vadd.xlane.f32.xlu0 %v6375
    %v6377 = vpop.xlane.xlu0 %6376
    %v6378 = vsel %vm352, %v6374, 0.0
    %6379 = vadd.xlane.f32.xlu0 %v6378
    %v6380 = vpop.xlane.xlu0 %6379
    %v6381 = vrcp.pop %v6377
    %v6382 = vrcp.pop %v6380
    %v6383 = vmul.f32 %v6372, %v6381
    %v6384 = vmul.f32 %v6374, %v6382
    %6385 = vrot.lane.b32.xlu0 %v6196, 96
    %v6386 = vpop.permute.xlu0 %6385
    %v6389 = vsel %vm352, %v6383, 0
    %6391 = vmatprep.subr.mxu0 0.0
    %6392 = vmatpush1.msra.mxu0 0.0
    %6393 = vmatprep.subr.mxu0 0.0
    %6394 = vmatpush1.msra.mxu0 0.0
    %6395 = vmatprep.subr.mxu0 0.0
    %6396 = vmatpush1.msra.mxu0 0.0
    %6397 = vmatprep.subr.mxu0 0.0
    %6398 = vmatpush1.msra.mxu0 0.0
    %6399 = vmatprep.subr.mxu0 0.0
    %6400 = vmatpush1.msra.mxu0 0.0
    %6401 = vmatprep.subr.mxu0 0.0
    %6402 = vmatpush1.msra.mxu0 0.0
    %6403 = vmatprep.subr.mxu0 0.0
    %6404 = vmatpush1.msra.mxu0 0.0
    %6405 = vmatprep.subr.mxu0 0.0
    %6406 = vmatpush1.msra.mxu0 0.0
    %6407 = vmatprep.subr.mxu0 0.0
    %6408 = vmatpush1.msra.mxu0 0.0
    %6409 = vmatprep.subr.mxu0 0.0
    %6410 = vmatpush1.msra.mxu0 0.0
    %6411 = vmatprep.subr.mxu0 0.0
    %6412 = vmatpush1.msra.mxu0 0.0
    %6413 = vmatprep.subr.mxu0 0.0
    %6414 = vmatpush1.msra.mxu0 0.0
    %6415 = vmatprep.subr.mxu0 0.0
    %6416 = vmatpush1.msra.mxu0 0.0
    %6417 = vmatprep.subr.mxu0 0.0
    %6418 = vmatpush1.msra.mxu0 0.0
    %6419 = vmatprep.subr.mxu0 0.0
    %6420 = vmatpush1.msra.mxu0 0.0
    %6421 = vmatprep.subr.mxu0 0.0
    %6422 = vmatpush1.msra.mxu0 %v6386
    %6423 = vmatprep.subr.mxu0 0.0
    %6424 = vmatpush2.msra.mxu0 0.0
    %6425 = vmatprep.subr.mxu0 0.0
    %6426 = vmatpush2.msra.mxu0 0.0
    %6427 = vmatprep.subr.mxu0 0.0
    %6428 = vmatpush2.msra.mxu0 0.0
    %6429 = vmatprep.subr.mxu0 0.0
    %6430 = vmatpush2.msra.mxu0 0.0
    %6431 = vmatprep.subr.mxu0 0.0
    %6432 = vmatpush2.msra.mxu0 0.0
    %6433 = vmatprep.subr.mxu0 0.0
    %6434 = vmatpush2.msra.mxu0 0.0
    %6435 = vmatprep.subr.mxu0 0.0
    %6436 = vmatpush2.msra.mxu0 0.0
    %6437 = vmatprep.subr.mxu0 0.0
    %6438 = vmatpush2.msra.mxu0 0.0
    %6439 = vmatprep.subr.mxu0 0.0
    %6440 = vmatpush2.msra.mxu0 0.0
    %6441 = vmatprep.subr.mxu0 0.0
    %6442 = vmatpush2.msra.mxu0 0.0
    %6443 = vmatprep.subr.mxu0 0.0
    %6444 = vmatpush2.msra.mxu0 0.0
    %6445 = vmatprep.subr.mxu0 0.0
    %6446 = vmatpush2.msra.mxu0 0.0
    %6447 = vmatprep.subr.mxu0 0.0
    %6448 = vmatpush2.msra.mxu0 0.0
    %6449 = vmatprep.subr.mxu0 0.0
    %6450 = vmatpush2.msra.mxu0 0.0
    %6451 = vmatprep.subr.mxu0 0.0
    %6452 = vmatpush2.msra.mxu0 0.0
    %6453 = vmatprep.subr.mxu0 0.0
    %6454 = vmatpush2.msra.mxu0 0.0
    %6455 = vmatprep.mubr.f32.mxu0 0.0
    %6456 = vmatmul.mubr.f32.gmra.mxu0 %v6389
    %v6457 = vpop.f32.mrf.mxu0
    %v6458 = vadd.f32 0.0, %v6457
    %v6459 = vpop.f32.mrf.mxu0
    %6460 = vdwg.mxu0
    %6461 = vrot.lane.b32.xlu0 %v6201, 96
    %v6462 = vpop.permute.xlu0 %6461
    %v6465 = vsel %vm352, %v6384, 0
    %6467 = vmatprep.subr.mxu0 0.0
    %6468 = vmatpush1.msra.mxu0 0.0
    %6469 = vmatprep.subr.mxu0 0.0
    %6470 = vmatpush1.msra.mxu0 0.0
    %6471 = vmatprep.subr.mxu0 0.0
    %6472 = vmatpush1.msra.mxu0 0.0
    %6473 = vmatprep.subr.mxu0 0.0
    %6474 = vmatpush1.msra.mxu0 0.0
    %6475 = vmatprep.subr.mxu0 0.0
    %6476 = vmatpush1.msra.mxu0 0.0
    %6477 = vmatprep.subr.mxu0 0.0
    %6478 = vmatpush1.msra.mxu0 0.0
    %6479 = vmatprep.subr.mxu0 0.0
    %6480 = vmatpush1.msra.mxu0 0.0
    %6481 = vmatprep.subr.mxu0 0.0
    %6482 = vmatpush1.msra.mxu0 0.0
    %6483 = vmatprep.subr.mxu0 0.0
    %6484 = vmatpush1.msra.mxu0 0.0
    %6485 = vmatprep.subr.mxu0 0.0
    %6486 = vmatpush1.msra.mxu0 0.0
    %6487 = vmatprep.subr.mxu0 0.0
    %6488 = vmatpush1.msra.mxu0 0.0
    %6489 = vmatprep.subr.mxu0 0.0
    %6490 = vmatpush1.msra.mxu0 0.0
    %6491 = vmatprep.subr.mxu0 0.0
    %6492 = vmatpush1.msra.mxu0 0.0
    %6493 = vmatprep.subr.mxu0 0.0
    %6494 = vmatpush1.msra.mxu0 0.0
    %6495 = vmatprep.subr.mxu0 0.0
    %6496 = vmatpush1.msra.mxu0 0.0
    %6497 = vmatprep.subr.mxu0 0.0
    %6498 = vmatpush1.msra.mxu0 %v6462
    %6499 = vmatprep.subr.mxu0 0.0
    %6500 = vmatpush2.msra.mxu0 0.0
    %6501 = vmatprep.subr.mxu0 0.0
    %6502 = vmatpush2.msra.mxu0 0.0
    %6503 = vmatprep.subr.mxu0 0.0
    %6504 = vmatpush2.msra.mxu0 0.0
    %6505 = vmatprep.subr.mxu0 0.0
    %6506 = vmatpush2.msra.mxu0 0.0
    %6507 = vmatprep.subr.mxu0 0.0
    %6508 = vmatpush2.msra.mxu0 0.0
    %6509 = vmatprep.subr.mxu0 0.0
    %6510 = vmatpush2.msra.mxu0 0.0
    %6511 = vmatprep.subr.mxu0 0.0
    %6512 = vmatpush2.msra.mxu0 0.0
    %6513 = vmatprep.subr.mxu0 0.0
    %6514 = vmatpush2.msra.mxu0 0.0
    %6515 = vmatprep.subr.mxu0 0.0
    %6516 = vmatpush2.msra.mxu0 0.0
    %6517 = vmatprep.subr.mxu0 0.0
    %6518 = vmatpush2.msra.mxu0 0.0
    %6519 = vmatprep.subr.mxu0 0.0
    %6520 = vmatpush2.msra.mxu0 0.0
    %6521 = vmatprep.subr.mxu0 0.0
    %6522 = vmatpush2.msra.mxu0 0.0
    %6523 = vmatprep.subr.mxu0 0.0
    %6524 = vmatpush2.msra.mxu0 0.0
    %6525 = vmatprep.subr.mxu0 0.0
    %6526 = vmatpush2.msra.mxu0 0.0
    %6527 = vmatprep.subr.mxu0 0.0
    %6528 = vmatpush2.msra.mxu0 0.0
    %6529 = vmatprep.subr.mxu0 0.0
    %6530 = vmatpush2.msra.mxu0 0.0
    %6531 = vmatprep.mubr.f32.mxu0 0.0
    %6532 = vmatmul.mubr.f32.gmra.mxu0 %v6465
    %v6533 = vpop.f32.mrf.mxu0
    %v6534 = vadd.f32 0.0, %v6533
    %v6535 = vpop.f32.mrf.mxu0
    %6536 = vdwg.mxu0
    %6537 = vrot.lane.b32.xlu0 %v6209, 120
    %v6538 = vpop.permute.xlu0 %6537
    %6539 = vrot.lane.b32.xlu0 %v6196, 120
    %v6540 = vpop.permute.xlu0 %6539
    %v6541 = vsel %vm352, %v6538, 0
    %v6543 = vsel %vm352, %v6540, 0
    %6545 = vmatprep.subr.mxu0 0.0
    %6546 = vmatpush1.xpose.msra.mxu0 0.0
    %6547 = vmatprep.subr.mxu0 0.0
    %6548 = vmatpush1.xpose.msra.mxu0 0.0
    %6549 = vmatprep.subr.mxu0 0.0
    %6550 = vmatpush1.xpose.msra.mxu0 0.0
    %6551 = vmatprep.subr.mxu0 0.0
    %6552 = vmatpush1.xpose.msra.mxu0 0.0
    %6553 = vmatprep.subr.mxu0 0.0
    %6554 = vmatpush1.xpose.msra.mxu0 0.0
    %6555 = vmatprep.subr.mxu0 0.0
    %6556 = vmatpush1.xpose.msra.mxu0 0.0
    %6557 = vmatprep.subr.mxu0 0.0
    %6558 = vmatpush1.xpose.msra.mxu0 0.0
    %6559 = vmatprep.subr.mxu0 0.0
    %6560 = vmatpush1.xpose.msra.mxu0 0.0
    %6561 = vmatprep.subr.mxu0 0.0
    %6562 = vmatpush1.xpose.msra.mxu0 0.0
    %6563 = vmatprep.subr.mxu0 0.0
    %6564 = vmatpush1.xpose.msra.mxu0 0.0
    %6565 = vmatprep.subr.mxu0 0.0
    %6566 = vmatpush1.xpose.msra.mxu0 0.0
    %6567 = vmatprep.subr.mxu0 0.0
    %6568 = vmatpush1.xpose.msra.mxu0 0.0
    %6569 = vmatprep.subr.mxu0 0.0
    %6570 = vmatpush1.xpose.msra.mxu0 0.0
    %6571 = vmatprep.subr.mxu0 0.0
    %6572 = vmatpush1.xpose.msra.mxu0 0.0
    %6573 = vmatprep.subr.mxu0 0.0
    %6574 = vmatpush1.xpose.msra.mxu0 0.0
    %6575 = vmatprep.subr.mxu0 0.0
    %6576 = vmatpush1.xpose.msra.mxu0 %v6543
    %6577 = vmatprep.subr.mxu0 0.0
    %6578 = vmatpush2.xpose.msra.mxu0 0.0
    %6579 = vmatprep.subr.mxu0 0.0
    %6580 = vmatpush2.xpose.msra.mxu0 0.0
    %6581 = vmatprep.subr.mxu0 0.0
    %6582 = vmatpush2.xpose.msra.mxu0 0.0
    %6583 = vmatprep.subr.mxu0 0.0
    %6584 = vmatpush2.xpose.msra.mxu0 0.0
    %6585 = vmatprep.subr.mxu0 0.0
    %6586 = vmatpush2.xpose.msra.mxu0 0.0
    %6587 = vmatprep.subr.mxu0 0.0
    %6588 = vmatpush2.xpose.msra.mxu0 0.0
    %6589 = vmatprep.subr.mxu0 0.0
    %6590 = vmatpush2.xpose.msra.mxu0 0.0
    %6591 = vmatprep.subr.mxu0 0.0
    %6592 = vmatpush2.xpose.msra.mxu0 0.0
    %6593 = vmatprep.subr.mxu0 0.0
    %6594 = vmatpush2.xpose.msra.mxu0 0.0
    %6595 = vmatprep.subr.mxu0 0.0
    %6596 = vmatpush2.xpose.msra.mxu0 0.0
    %6597 = vmatprep.subr.mxu0 0.0
    %6598 = vmatpush2.xpose.msra.mxu0 0.0
    %6599 = vmatprep.subr.mxu0 0.0
    %6600 = vmatpush2.xpose.msra.mxu0 0.0
    %6601 = vmatprep.subr.mxu0 0.0
    %6602 = vmatpush2.xpose.msra.mxu0 0.0
    %6603 = vmatprep.subr.mxu0 0.0
    %6604 = vmatpush2.xpose.msra.mxu0 0.0
    %6605 = vmatprep.subr.mxu0 0.0
    %6606 = vmatpush2.xpose.msra.mxu0 0.0
    %6607 = vmatprep.subr.mxu0 0.0
    %6608 = vmatpush2.xpose.msra.mxu0 0.0
    %6609 = vmatprep.mubr.f32.mxu0 0.0
    %6610 = vmatmul.mubr.f32.gmra.mxu0 %v6541
    %v6611 = vpop.f32.mrf.mxu0
    %v6612 = vadd.f32 %v193, %v6611
    %v6613 = vpop.f32.mrf.mxu0
    %6614 = vdwg.mxu0
    %6615 = vrot.lane.b32.xlu0 %v6210, 120
    %v6616 = vpop.permute.xlu0 %6615
    %6617 = vrot.lane.b32.xlu0 %v6201, 120
    %v6618 = vpop.permute.xlu0 %6617
    %v6619 = vsel %vm352, %v6616, 0
    %v6621 = vsel %vm352, %v6618, 0
    %6623 = vmatprep.subr.mxu0 0.0
    %6624 = vmatpush1.xpose.msra.mxu0 0.0
    %6625 = vmatprep.subr.mxu0 0.0
    %6626 = vmatpush1.xpose.msra.mxu0 0.0
    %6627 = vmatprep.subr.mxu0 0.0
    %6628 = vmatpush1.xpose.msra.mxu0 0.0
    %6629 = vmatprep.subr.mxu0 0.0
    %6630 = vmatpush1.xpose.msra.mxu0 0.0
    %6631 = vmatprep.subr.mxu0 0.0
    %6632 = vmatpush1.xpose.msra.mxu0 0.0
    %6633 = vmatprep.subr.mxu0 0.0
    %6634 = vmatpush1.xpose.msra.mxu0 0.0
    %6635 = vmatprep.subr.mxu0 0.0
    %6636 = vmatpush1.xpose.msra.mxu0 0.0
    %6637 = vmatprep.subr.mxu0 0.0
    %6638 = vmatpush1.xpose.msra.mxu0 0.0
    %6639 = vmatprep.subr.mxu0 0.0
    %6640 = vmatpush1.xpose.msra.mxu0 0.0
    %6641 = vmatprep.subr.mxu0 0.0
    %6642 = vmatpush1.xpose.msra.mxu0 0.0
    %6643 = vmatprep.subr.mxu0 0.0
    %6644 = vmatpush1.xpose.msra.mxu0 0.0
    %6645 = vmatprep.subr.mxu0 0.0
    %6646 = vmatpush1.xpose.msra.mxu0 0.0
    %6647 = vmatprep.subr.mxu0 0.0
    %6648 = vmatpush1.xpose.msra.mxu0 0.0
    %6649 = vmatprep.subr.mxu0 0.0
    %6650 = vmatpush1.xpose.msra.mxu0 0.0
    %6651 = vmatprep.subr.mxu0 0.0
    %6652 = vmatpush1.xpose.msra.mxu0 0.0
    %6653 = vmatprep.subr.mxu0 0.0
    %6654 = vmatpush1.xpose.msra.mxu0 %v6621
    %6655 = vmatprep.subr.mxu0 0.0
    %6656 = vmatpush2.xpose.msra.mxu0 0.0
    %6657 = vmatprep.subr.mxu0 0.0
    %6658 = vmatpush2.xpose.msra.mxu0 0.0
    %6659 = vmatprep.subr.mxu0 0.0
    %6660 = vmatpush2.xpose.msra.mxu0 0.0
    %6661 = vmatprep.subr.mxu0 0.0
    %6662 = vmatpush2.xpose.msra.mxu0 0.0
    %6663 = vmatprep.subr.mxu0 0.0
    %6664 = vmatpush2.xpose.msra.mxu0 0.0
    %6665 = vmatprep.subr.mxu0 0.0
    %6666 = vmatpush2.xpose.msra.mxu0 0.0
    %6667 = vmatprep.subr.mxu0 0.0
    %6668 = vmatpush2.xpose.msra.mxu0 0.0
    %6669 = vmatprep.subr.mxu0 0.0
    %6670 = vmatpush2.xpose.msra.mxu0 0.0
    %6671 = vmatprep.subr.mxu0 0.0
    %6672 = vmatpush2.xpose.msra.mxu0 0.0
    %6673 = vmatprep.subr.mxu0 0.0
    %6674 = vmatpush2.xpose.msra.mxu0 0.0
    %6675 = vmatprep.subr.mxu0 0.0
    %6676 = vmatpush2.xpose.msra.mxu0 0.0
    %6677 = vmatprep.subr.mxu0 0.0
    %6678 = vmatpush2.xpose.msra.mxu0 0.0
    %6679 = vmatprep.subr.mxu0 0.0
    %6680 = vmatpush2.xpose.msra.mxu0 0.0
    %6681 = vmatprep.subr.mxu0 0.0
    %6682 = vmatpush2.xpose.msra.mxu0 0.0
    %6683 = vmatprep.subr.mxu0 0.0
    %6684 = vmatpush2.xpose.msra.mxu0 0.0
    %6685 = vmatprep.subr.mxu0 0.0
    %6686 = vmatpush2.xpose.msra.mxu0 0.0
    %6687 = vmatprep.mubr.f32.mxu0 0.0
    %6688 = vmatmul.mubr.f32.gmra.mxu0 %v6619
    %v6689 = vpop.f32.mrf.mxu0
    %v6690 = vadd.f32 %v194, %v6689
    %v6691 = vpop.f32.mrf.mxu0
    %6692 = vdwg.mxu0
    %v6693 = vsel %vm352, %v6612, -inf
    %6694 = vmax.xlane.f32.xlu0 %v6693
    %v6695 = vpop.xlane.xlu0 %6694
    %v6696 = vsel %vm352, %v6690, -inf
    %6697 = vmax.xlane.f32.xlu0 %v6696
    %v6698 = vpop.xlane.xlu0 %6697
    %v6699 = vsub.f32 %v6612, %v6695
    %v6700 = vsub.f32 %v6690, %v6698
    %v6701 = vmul.f32 %v6699, 1.442695
    %v6702 = vpow.pop %v6701
    %v6703 = vmul.f32 %v6700, 1.442695
    %v6704 = vpow.pop %v6703
    %v6705 = vsel %vm352, %v6702, 0.0
    %6706 = vadd.xlane.f32.xlu0 %v6705
    %v6707 = vpop.xlane.xlu0 %6706
    %v6708 = vsel %vm352, %v6704, 0.0
    %6709 = vadd.xlane.f32.xlu0 %v6708
    %v6710 = vpop.xlane.xlu0 %6709
    %v6711 = vrcp.pop %v6707
    %v6712 = vrcp.pop %v6710
    %v6713 = vmul.f32 %v6702, %v6711
    %v6714 = vmul.f32 %v6704, %v6712
    %6715 = vrot.lane.b32.xlu0 %v6196, 88
    %v6716 = vpop.permute.xlu0 %6715
    %v6719 = vsel %vm352, %v6713, 0
    %6721 = vmatprep.subr.mxu0 0.0
    %6722 = vmatpush1.msra.mxu0 0.0
    %6723 = vmatprep.subr.mxu0 0.0
    %6724 = vmatpush1.msra.mxu0 0.0
    %6725 = vmatprep.subr.mxu0 0.0
    %6726 = vmatpush1.msra.mxu0 0.0
    %6727 = vmatprep.subr.mxu0 0.0
    %6728 = vmatpush1.msra.mxu0 0.0
    %6729 = vmatprep.subr.mxu0 0.0
    %6730 = vmatpush1.msra.mxu0 0.0
    %6731 = vmatprep.subr.mxu0 0.0
    %6732 = vmatpush1.msra.mxu0 0.0
    %6733 = vmatprep.subr.mxu0 0.0
    %6734 = vmatpush1.msra.mxu0 0.0
    %6735 = vmatprep.subr.mxu0 0.0
    %6736 = vmatpush1.msra.mxu0 0.0
    %6737 = vmatprep.subr.mxu0 0.0
    %6738 = vmatpush1.msra.mxu0 0.0
    %6739 = vmatprep.subr.mxu0 0.0
    %6740 = vmatpush1.msra.mxu0 0.0
    %6741 = vmatprep.subr.mxu0 0.0
    %6742 = vmatpush1.msra.mxu0 0.0
    %6743 = vmatprep.subr.mxu0 0.0
    %6744 = vmatpush1.msra.mxu0 0.0
    %6745 = vmatprep.subr.mxu0 0.0
    %6746 = vmatpush1.msra.mxu0 0.0
    %6747 = vmatprep.subr.mxu0 0.0
    %6748 = vmatpush1.msra.mxu0 0.0
    %6749 = vmatprep.subr.mxu0 0.0
    %6750 = vmatpush1.msra.mxu0 0.0
    %6751 = vmatprep.subr.mxu0 0.0
    %6752 = vmatpush1.msra.mxu0 %v6716
    %6753 = vmatprep.subr.mxu0 0.0
    %6754 = vmatpush2.msra.mxu0 0.0
    %6755 = vmatprep.subr.mxu0 0.0
    %6756 = vmatpush2.msra.mxu0 0.0
    %6757 = vmatprep.subr.mxu0 0.0
    %6758 = vmatpush2.msra.mxu0 0.0
    %6759 = vmatprep.subr.mxu0 0.0
    %6760 = vmatpush2.msra.mxu0 0.0
    %6761 = vmatprep.subr.mxu0 0.0
    %6762 = vmatpush2.msra.mxu0 0.0
    %6763 = vmatprep.subr.mxu0 0.0
    %6764 = vmatpush2.msra.mxu0 0.0
    %6765 = vmatprep.subr.mxu0 0.0
    %6766 = vmatpush2.msra.mxu0 0.0
    %6767 = vmatprep.subr.mxu0 0.0
    %6768 = vmatpush2.msra.mxu0 0.0
    %6769 = vmatprep.subr.mxu0 0.0
    %6770 = vmatpush2.msra.mxu0 0.0
    %6771 = vmatprep.subr.mxu0 0.0
    %6772 = vmatpush2.msra.mxu0 0.0
    %6773 = vmatprep.subr.mxu0 0.0
    %6774 = vmatpush2.msra.mxu0 0.0
    %6775 = vmatprep.subr.mxu0 0.0
    %6776 = vmatpush2.msra.mxu0 0.0
    %6777 = vmatprep.subr.mxu0 0.0
    %6778 = vmatpush2.msra.mxu0 0.0
    %6779 = vmatprep.subr.mxu0 0.0
    %6780 = vmatpush2.msra.mxu0 0.0
    %6781 = vmatprep.subr.mxu0 0.0
    %6782 = vmatpush2.msra.mxu0 0.0
    %6783 = vmatprep.subr.mxu0 0.0
    %6784 = vmatpush2.msra.mxu0 0.0
    %6785 = vmatprep.mubr.f32.mxu0 0.0
    %6786 = vmatmul.mubr.f32.gmra.mxu0 %v6719
    %v6787 = vpop.f32.mrf.mxu0
    %v6788 = vadd.f32 0.0, %v6787
    %v6789 = vpop.f32.mrf.mxu0
    %6790 = vdwg.mxu0
    %6791 = vrot.lane.b32.xlu0 %v6201, 88
    %v6792 = vpop.permute.xlu0 %6791
    %v6795 = vsel %vm352, %v6714, 0
    %6797 = vmatprep.subr.mxu0 0.0
    %6798 = vmatpush1.msra.mxu0 0.0
    %6799 = vmatprep.subr.mxu0 0.0
    %6800 = vmatpush1.msra.mxu0 0.0
    %6801 = vmatprep.subr.mxu0 0.0
    %6802 = vmatpush1.msra.mxu0 0.0
    %6803 = vmatprep.subr.mxu0 0.0
    %6804 = vmatpush1.msra.mxu0 0.0
    %6805 = vmatprep.subr.mxu0 0.0
    %6806 = vmatpush1.msra.mxu0 0.0
    %6807 = vmatprep.subr.mxu0 0.0
    %6808 = vmatpush1.msra.mxu0 0.0
    %6809 = vmatprep.subr.mxu0 0.0
    %6810 = vmatpush1.msra.mxu0 0.0
    %6811 = vmatprep.subr.mxu0 0.0
    %6812 = vmatpush1.msra.mxu0 0.0
    %6813 = vmatprep.subr.mxu0 0.0
    %6814 = vmatpush1.msra.mxu0 0.0
    %6815 = vmatprep.subr.mxu0 0.0
    %6816 = vmatpush1.msra.mxu0 0.0
    %6817 = vmatprep.subr.mxu0 0.0
    %6818 = vmatpush1.msra.mxu0 0.0
    %6819 = vmatprep.subr.mxu0 0.0
    %6820 = vmatpush1.msra.mxu0 0.0
    %6821 = vmatprep.subr.mxu0 0.0
    %6822 = vmatpush1.msra.mxu0 0.0
    %6823 = vmatprep.subr.mxu0 0.0
    %6824 = vmatpush1.msra.mxu0 0.0
    %6825 = vmatprep.subr.mxu0 0.0
    %6826 = vmatpush1.msra.mxu0 0.0
    %6827 = vmatprep.subr.mxu0 0.0
    %6828 = vmatpush1.msra.mxu0 %v6792
    %6829 = vmatprep.subr.mxu0 0.0
    %6830 = vmatpush2.msra.mxu0 0.0
    %6831 = vmatprep.subr.mxu0 0.0
    %6832 = vmatpush2.msra.mxu0 0.0
    %6833 = vmatprep.subr.mxu0 0.0
    %6834 = vmatpush2.msra.mxu0 0.0
    %6835 = vmatprep.subr.mxu0 0.0
    %6836 = vmatpush2.msra.mxu0 0.0
    %6837 = vmatprep.subr.mxu0 0.0
    %6838 = vmatpush2.msra.mxu0 0.0
    %6839 = vmatprep.subr.mxu0 0.0
    %6840 = vmatpush2.msra.mxu0 0.0
    %6841 = vmatprep.subr.mxu0 0.0
    %6842 = vmatpush2.msra.mxu0 0.0
    %6843 = vmatprep.subr.mxu0 0.0
    %6844 = vmatpush2.msra.mxu0 0.0
    %6845 = vmatprep.subr.mxu0 0.0
    %6846 = vmatpush2.msra.mxu0 0.0
    %6847 = vmatprep.subr.mxu0 0.0
    %6848 = vmatpush2.msra.mxu0 0.0
    %6849 = vmatprep.subr.mxu0 0.0
    %6850 = vmatpush2.msra.mxu0 0.0
    %6851 = vmatprep.subr.mxu0 0.0
    %6852 = vmatpush2.msra.mxu0 0.0
    %6853 = vmatprep.subr.mxu0 0.0
    %6854 = vmatpush2.msra.mxu0 0.0
    %6855 = vmatprep.subr.mxu0 0.0
    %6856 = vmatpush2.msra.mxu0 0.0
    %6857 = vmatprep.subr.mxu0 0.0
    %6858 = vmatpush2.msra.mxu0 0.0
    %6859 = vmatprep.subr.mxu0 0.0
    %6860 = vmatpush2.msra.mxu0 0.0
    %6861 = vmatprep.mubr.f32.mxu0 0.0
    %6862 = vmatmul.mubr.f32.gmra.mxu0 %v6795
    %v6863 = vpop.f32.mrf.mxu0
    %v6864 = vadd.f32 0.0, %v6863
    %v6865 = vpop.f32.mrf.mxu0
    %6866 = vdwg.mxu0
    %v6868 = vsel %vm352, %v6788, 0
    %v6871 = vsel %vm352, %v6864, 0
    %6873 = vmatprep.subr.mxu0 0.0
    %6874 = vmatpush1.msra.mxu0 0.0
    %6875 = vmatprep.subr.mxu0 0.0
    %6876 = vmatpush1.msra.mxu0 0.0
    %6877 = vmatprep.subr.mxu0 0.0
    %6878 = vmatpush1.msra.mxu0 0.0
    %6879 = vmatprep.subr.mxu0 0.0
    %6880 = vmatpush1.msra.mxu0 0.0
    %6881 = vmatprep.subr.mxu0 0.0
    %6882 = vmatpush1.msra.mxu0 0.0
    %6883 = vmatprep.subr.mxu0 0.0
    %6884 = vmatpush1.msra.mxu0 0.0
    %6885 = vmatprep.subr.mxu0 0.0
    %6886 = vmatpush1.msra.mxu0 0.0
    %6887 = vmatprep.subr.mxu0 0.0
    %6888 = vmatpush1.msra.mxu0 0.0
    %6889 = vmatprep.subr.mxu0 0.0
    %6890 = vmatpush1.msra.mxu0 0.0
    %6891 = vmatprep.subr.mxu0 0.0
    %6892 = vmatpush1.msra.mxu0 0.0
    %6893 = vmatprep.subr.mxu0 0.0
    %6894 = vmatpush1.msra.mxu0 0.0
    %6895 = vmatprep.subr.mxu0 0.0
    %6896 = vmatpush1.msra.mxu0 0.0
    %6897 = vmatprep.subr.mxu0 0.0
    %6898 = vmatpush1.msra.mxu0 0.0
    %6899 = vmatprep.subr.mxu0 0.0
    %6900 = vmatpush1.msra.mxu0 0.0
    %6901 = vmatprep.subr.mxu0 0.0
    %6902 = vmatpush1.msra.mxu0 0.0
    %6903 = vmatprep.subr.mxu0 0.0
    %6904 = vmatpush1.msra.mxu0 %v6206
    %6905 = vmatprep.subr.mxu0 0.0
    %6906 = vmatpush2.msra.mxu0 0.0
    %6907 = vmatprep.subr.mxu0 0.0
    %6908 = vmatpush2.msra.mxu0 0.0
    %6909 = vmatprep.subr.mxu0 0.0
    %6910 = vmatpush2.msra.mxu0 0.0
    %6911 = vmatprep.subr.mxu0 0.0
    %6912 = vmatpush2.msra.mxu0 0.0
    %6913 = vmatprep.subr.mxu0 0.0
    %6914 = vmatpush2.msra.mxu0 0.0
    %6915 = vmatprep.subr.mxu0 0.0
    %6916 = vmatpush2.msra.mxu0 0.0
    %6917 = vmatprep.subr.mxu0 0.0
    %6918 = vmatpush2.msra.mxu0 0.0
    %6919 = vmatprep.subr.mxu0 0.0
    %6920 = vmatpush2.msra.mxu0 0.0
    %6921 = vmatprep.subr.mxu0 0.0
    %6922 = vmatpush2.msra.mxu0 0.0
    %6923 = vmatprep.subr.mxu0 0.0
    %6924 = vmatpush2.msra.mxu0 0.0
    %6925 = vmatprep.subr.mxu0 0.0
    %6926 = vmatpush2.msra.mxu0 0.0
    %6927 = vmatprep.subr.mxu0 0.0
    %6928 = vmatpush2.msra.mxu0 0.0
    %6929 = vmatprep.subr.mxu0 0.0
    %6930 = vmatpush2.msra.mxu0 0.0
    %6931 = vmatprep.subr.mxu0 0.0
    %6932 = vmatpush2.msra.mxu0 0.0
    %6933 = vmatprep.subr.mxu0 0.0
    %6934 = vmatpush2.msra.mxu0 0.0
    %6935 = vmatprep.subr.mxu0 0.0
    %6936 = vmatpush2.msra.mxu0 0.0
    %6937 = vmatprep.mubr.f32.mxu0 0.0
    %6938 = vmatmul.mubr.f32.gmra.mxu0 %v6868
    %v6939 = vpop.f32.mrf.mxu0
    %v6940 = vadd.f32 0.0, %v6939
    %v6941 = vpop.f32.mrf.mxu0
    %6942 = vmatprep.mubr.f32.mxu0 0.0
    %6943 = vmatmul.mubr.f32.gmra.mxu0 %v6871
    %v6944 = vpop.f32.mrf.mxu0
    %v6945 = vadd.f32 0.0, %v6944
    %v6946 = vpop.f32.mrf.mxu0
    %6947 = vdwg.mxu0
    %v6949 = vsel %vm352, %v6458, 0
    %v6952 = vsel %vm352, %v6534, 0
    %6954 = vmatprep.subr.mxu0 0.0
    %6955 = vmatpush1.msra.mxu0 0.0
    %6956 = vmatprep.subr.mxu0 0.0
    %6957 = vmatpush1.msra.mxu0 0.0
    %6958 = vmatprep.subr.mxu0 0.0
    %6959 = vmatpush1.msra.mxu0 0.0
    %6960 = vmatprep.subr.mxu0 0.0
    %6961 = vmatpush1.msra.mxu0 0.0
    %6962 = vmatprep.subr.mxu0 0.0
    %6963 = vmatpush1.msra.mxu0 0.0
    %6964 = vmatprep.subr.mxu0 0.0
    %6965 = vmatpush1.msra.mxu0 0.0
    %6966 = vmatprep.subr.mxu0 0.0
    %6967 = vmatpush1.msra.mxu0 0.0
    %6968 = vmatprep.subr.mxu0 0.0
    %6969 = vmatpush1.msra.mxu0 0.0
    %6970 = vmatprep.subr.mxu0 0.0
    %6971 = vmatpush1.msra.mxu0 0.0
    %6972 = vmatprep.subr.mxu0 0.0
    %6973 = vmatpush1.msra.mxu0 0.0
    %6974 = vmatprep.subr.mxu0 0.0
    %6975 = vmatpush1.msra.mxu0 0.0
    %6976 = vmatprep.subr.mxu0 0.0
    %6977 = vmatpush1.msra.mxu0 0.0
    %6978 = vmatprep.subr.mxu0 0.0
    %6979 = vmatpush1.msra.mxu0 0.0
    %6980 = vmatprep.subr.mxu0 0.0
    %6981 = vmatpush1.msra.mxu0 0.0
    %6982 = vmatprep.subr.mxu0 0.0
    %6983 = vmatpush1.msra.mxu0 0.0
    %6984 = vmatprep.subr.mxu0 0.0
    %6985 = vmatpush1.msra.mxu0 %v6205
    %6986 = vmatprep.subr.mxu0 0.0
    %6987 = vmatpush2.msra.mxu0 0.0
    %6988 = vmatprep.subr.mxu0 0.0
    %6989 = vmatpush2.msra.mxu0 0.0
    %6990 = vmatprep.subr.mxu0 0.0
    %6991 = vmatpush2.msra.mxu0 0.0
    %6992 = vmatprep.subr.mxu0 0.0
    %6993 = vmatpush2.msra.mxu0 0.0
    %6994 = vmatprep.subr.mxu0 0.0
    %6995 = vmatpush2.msra.mxu0 0.0
    %6996 = vmatprep.subr.mxu0 0.0
    %6997 = vmatpush2.msra.mxu0 0.0
    %6998 = vmatprep.subr.mxu0 0.0
    %6999 = vmatpush2.msra.mxu0 0.0
    %7000 = vmatprep.subr.mxu0 0.0
    %7001 = vmatpush2.msra.mxu0 0.0
    %7002 = vmatprep.subr.mxu0 0.0
    %7003 = vmatpush2.msra.mxu0 0.0
    %7004 = vmatprep.subr.mxu0 0.0
    %7005 = vmatpush2.msra.mxu0 0.0
    %7006 = vmatprep.subr.mxu0 0.0
    %7007 = vmatpush2.msra.mxu0 0.0
    %7008 = vmatprep.subr.mxu0 0.0
    %7009 = vmatpush2.msra.mxu0 0.0
    %7010 = vmatprep.subr.mxu0 0.0
    %7011 = vmatpush2.msra.mxu0 0.0
    %7012 = vmatprep.subr.mxu0 0.0
    %7013 = vmatpush2.msra.mxu0 0.0
    %7014 = vmatprep.subr.mxu0 0.0
    %7015 = vmatpush2.msra.mxu0 0.0
    %7016 = vmatprep.subr.mxu0 0.0
    %7017 = vmatpush2.msra.mxu0 0.0
    %7018 = vmatprep.mubr.f32.mxu0 0.0
    %7019 = vmatmul.mubr.f32.gmra.mxu0 %v6949
    %v7020 = vpop.f32.mrf.mxu0
    %v7021 = vadd.f32 %v6940, %v7020
    %v7022 = vpop.f32.mrf.mxu0
    %7023 = vmatprep.mubr.f32.mxu0 0.0
    %7024 = vmatmul.mubr.f32.gmra.mxu0 %v6952
    %v7025 = vpop.f32.mrf.mxu0
    %v7026 = vadd.f32 %v6945, %v7025
    %v7027 = vpop.f32.mrf.mxu0
    %7028 = vdwg.mxu0
    %7029 = vrot.lane.b32.xlu0 %v6209, 112
    %v7030 = vpop.permute.xlu0 %7029
    %7031 = vrot.lane.b32.xlu0 %v6196, 112
    %v7032 = vpop.permute.xlu0 %7031
    %v7033 = vsel %vm352, %v7030, 0
    %v7035 = vsel %vm352, %v7032, 0
    %7037 = vmatprep.subr.mxu0 0.0
    %7038 = vmatpush1.xpose.msra.mxu0 0.0
    %7039 = vmatprep.subr.mxu0 0.0
    %7040 = vmatpush1.xpose.msra.mxu0 0.0
    %7041 = vmatprep.subr.mxu0 0.0
    %7042 = vmatpush1.xpose.msra.mxu0 0.0
    %7043 = vmatprep.subr.mxu0 0.0
    %7044 = vmatpush1.xpose.msra.mxu0 0.0
    %7045 = vmatprep.subr.mxu0 0.0
    %7046 = vmatpush1.xpose.msra.mxu0 0.0
    %7047 = vmatprep.subr.mxu0 0.0
    %7048 = vmatpush1.xpose.msra.mxu0 0.0
    %7049 = vmatprep.subr.mxu0 0.0
    %7050 = vmatpush1.xpose.msra.mxu0 0.0
    %7051 = vmatprep.subr.mxu0 0.0
    %7052 = vmatpush1.xpose.msra.mxu0 0.0
    %7053 = vmatprep.subr.mxu0 0.0
    %7054 = vmatpush1.xpose.msra.mxu0 0.0
    %7055 = vmatprep.subr.mxu0 0.0
    %7056 = vmatpush1.xpose.msra.mxu0 0.0
    %7057 = vmatprep.subr.mxu0 0.0
    %7058 = vmatpush1.xpose.msra.mxu0 0.0
    %7059 = vmatprep.subr.mxu0 0.0
    %7060 = vmatpush1.xpose.msra.mxu0 0.0
    %7061 = vmatprep.subr.mxu0 0.0
    %7062 = vmatpush1.xpose.msra.mxu0 0.0
    %7063 = vmatprep.subr.mxu0 0.0
    %7064 = vmatpush1.xpose.msra.mxu0 0.0
    %7065 = vmatprep.subr.mxu0 0.0
    %7066 = vmatpush1.xpose.msra.mxu0 0.0
    %7067 = vmatprep.subr.mxu0 0.0
    %7068 = vmatpush1.xpose.msra.mxu0 %v7035
    %7069 = vmatprep.subr.mxu0 0.0
    %7070 = vmatpush2.xpose.msra.mxu0 0.0
    %7071 = vmatprep.subr.mxu0 0.0
    %7072 = vmatpush2.xpose.msra.mxu0 0.0
    %7073 = vmatprep.subr.mxu0 0.0
    %7074 = vmatpush2.xpose.msra.mxu0 0.0
    %7075 = vmatprep.subr.mxu0 0.0
    %7076 = vmatpush2.xpose.msra.mxu0 0.0
    %7077 = vmatprep.subr.mxu0 0.0
    %7078 = vmatpush2.xpose.msra.mxu0 0.0
    %7079 = vmatprep.subr.mxu0 0.0
    %7080 = vmatpush2.xpose.msra.mxu0 0.0
    %7081 = vmatprep.subr.mxu0 0.0
    %7082 = vmatpush2.xpose.msra.mxu0 0.0
    %7083 = vmatprep.subr.mxu0 0.0
    %7084 = vmatpush2.xpose.msra.mxu0 0.0
    %7085 = vmatprep.subr.mxu0 0.0
    %7086 = vmatpush2.xpose.msra.mxu0 0.0
    %7087 = vmatprep.subr.mxu0 0.0
    %7088 = vmatpush2.xpose.msra.mxu0 0.0
    %7089 = vmatprep.subr.mxu0 0.0
    %7090 = vmatpush2.xpose.msra.mxu0 0.0
    %7091 = vmatprep.subr.mxu0 0.0
    %7092 = vmatpush2.xpose.msra.mxu0 0.0
    %7093 = vmatprep.subr.mxu0 0.0
    %7094 = vmatpush2.xpose.msra.mxu0 0.0
    %7095 = vmatprep.subr.mxu0 0.0
    %7096 = vmatpush2.xpose.msra.mxu0 0.0
    %7097 = vmatprep.subr.mxu0 0.0
    %7098 = vmatpush2.xpose.msra.mxu0 0.0
    %7099 = vmatprep.subr.mxu0 0.0
    %7100 = vmatpush2.xpose.msra.mxu0 0.0
    %7101 = vmatprep.mubr.f32.mxu0 0.0
    %7102 = vmatmul.mubr.f32.gmra.mxu0 %v7033
    %v7103 = vpop.f32.mrf.mxu0
    %v7104 = vadd.f32 %v193, %v7103
    %v7105 = vpop.f32.mrf.mxu0
    %7106 = vdwg.mxu0
    %7107 = vrot.lane.b32.xlu0 %v6210, 112
    %v7108 = vpop.permute.xlu0 %7107
    %7109 = vrot.lane.b32.xlu0 %v6201, 112
    %v7110 = vpop.permute.xlu0 %7109
    %v7111 = vsel %vm352, %v7108, 0
    %v7113 = vsel %vm352, %v7110, 0
    %7115 = vmatprep.subr.mxu0 0.0
    %7116 = vmatpush1.xpose.msra.mxu0 0.0
    %7117 = vmatprep.subr.mxu0 0.0
    %7118 = vmatpush1.xpose.msra.mxu0 0.0
    %7119 = vmatprep.subr.mxu0 0.0
    %7120 = vmatpush1.xpose.msra.mxu0 0.0
    %7121 = vmatprep.subr.mxu0 0.0
    %7122 = vmatpush1.xpose.msra.mxu0 0.0
    %7123 = vmatprep.subr.mxu0 0.0
    %7124 = vmatpush1.xpose.msra.mxu0 0.0
    %7125 = vmatprep.subr.mxu0 0.0
    %7126 = vmatpush1.xpose.msra.mxu0 0.0
    %7127 = vmatprep.subr.mxu0 0.0
    %7128 = vmatpush1.xpose.msra.mxu0 0.0
    %7129 = vmatprep.subr.mxu0 0.0
    %7130 = vmatpush1.xpose.msra.mxu0 0.0
    %7131 = vmatprep.subr.mxu0 0.0
    %7132 = vmatpush1.xpose.msra.mxu0 0.0
    %7133 = vmatprep.subr.mxu0 0.0
    %7134 = vmatpush1.xpose.msra.mxu0 0.0
    %7135 = vmatprep.subr.mxu0 0.0
    %7136 = vmatpush1.xpose.msra.mxu0 0.0
    %7137 = vmatprep.subr.mxu0 0.0
    %7138 = vmatpush1.xpose.msra.mxu0 0.0
    %7139 = vmatprep.subr.mxu0 0.0
    %7140 = vmatpush1.xpose.msra.mxu0 0.0
    %7141 = vmatprep.subr.mxu0 0.0
    %7142 = vmatpush1.xpose.msra.mxu0 0.0
    %7143 = vmatprep.subr.mxu0 0.0
    %7144 = vmatpush1.xpose.msra.mxu0 0.0
    %7145 = vmatprep.subr.mxu0 0.0
    %7146 = vmatpush1.xpose.msra.mxu0 %v7113
    %7147 = vmatprep.subr.mxu0 0.0
    %7148 = vmatpush2.xpose.msra.mxu0 0.0
    %7149 = vmatprep.subr.mxu0 0.0
    %7150 = vmatpush2.xpose.msra.mxu0 0.0
    %7151 = vmatprep.subr.mxu0 0.0
    %7152 = vmatpush2.xpose.msra.mxu0 0.0
    %7153 = vmatprep.subr.mxu0 0.0
    %7154 = vmatpush2.xpose.msra.mxu0 0.0
    %7155 = vmatprep.subr.mxu0 0.0
    %7156 = vmatpush2.xpose.msra.mxu0 0.0
    %7157 = vmatprep.subr.mxu0 0.0
    %7158 = vmatpush2.xpose.msra.mxu0 0.0
    %7159 = vmatprep.subr.mxu0 0.0
    %7160 = vmatpush2.xpose.msra.mxu0 0.0
    %7161 = vmatprep.subr.mxu0 0.0
    %7162 = vmatpush2.xpose.msra.mxu0 0.0
    %7163 = vmatprep.subr.mxu0 0.0
    %7164 = vmatpush2.xpose.msra.mxu0 0.0
    %7165 = vmatprep.subr.mxu0 0.0
    %7166 = vmatpush2.xpose.msra.mxu0 0.0
    %7167 = vmatprep.subr.mxu0 0.0
    %7168 = vmatpush2.xpose.msra.mxu0 0.0
    %7169 = vmatprep.subr.mxu0 0.0
    %7170 = vmatpush2.xpose.msra.mxu0 0.0
    %7171 = vmatprep.subr.mxu0 0.0
    %7172 = vmatpush2.xpose.msra.mxu0 0.0
    %7173 = vmatprep.subr.mxu0 0.0
    %7174 = vmatpush2.xpose.msra.mxu0 0.0
    %7175 = vmatprep.subr.mxu0 0.0
    %7176 = vmatpush2.xpose.msra.mxu0 0.0
    %7177 = vmatprep.subr.mxu0 0.0
    %7178 = vmatpush2.xpose.msra.mxu0 0.0
    %7179 = vmatprep.mubr.f32.mxu0 0.0
    %7180 = vmatmul.mubr.f32.gmra.mxu0 %v7111
    %v7181 = vpop.f32.mrf.mxu0
    %v7182 = vadd.f32 %v194, %v7181
    %v7183 = vpop.f32.mrf.mxu0
    %7184 = vdwg.mxu0
    %v7185 = vsel %vm352, %v7104, -inf
    %7186 = vmax.xlane.f32.xlu0 %v7185
    %v7187 = vpop.xlane.xlu0 %7186
    %v7188 = vsel %vm352, %v7182, -inf
    %7189 = vmax.xlane.f32.xlu0 %v7188
    %v7190 = vpop.xlane.xlu0 %7189
    %v7191 = vsub.f32 %v7104, %v7187
    %v7192 = vsub.f32 %v7182, %v7190
    %v7193 = vmul.f32 %v7191, 1.442695
    %v7194 = vpow.pop %v7193
    %v7195 = vmul.f32 %v7192, 1.442695
    %v7196 = vpow.pop %v7195
    %v7197 = vsel %vm352, %v7194, 0.0
    %7198 = vadd.xlane.f32.xlu0 %v7197
    %v7199 = vpop.xlane.xlu0 %7198
    %v7200 = vsel %vm352, %v7196, 0.0
    %7201 = vadd.xlane.f32.xlu0 %v7200
    %v7202 = vpop.xlane.xlu0 %7201
    %v7203 = vrcp.pop %v7199
    %v7204 = vrcp.pop %v7202
    %v7205 = vmul.f32 %v7194, %v7203
    %v7206 = vmul.f32 %v7196, %v7204
    %7207 = vrot.lane.b32.xlu0 %v6196, 80
    %v7208 = vpop.permute.xlu0 %7207
    %v7211 = vsel %vm352, %v7205, 0
    %7213 = vmatprep.subr.mxu0 0.0
    %7214 = vmatpush1.msra.mxu0 0.0
    %7215 = vmatprep.subr.mxu0 0.0
    %7216 = vmatpush1.msra.mxu0 0.0
    %7217 = vmatprep.subr.mxu0 0.0
    %7218 = vmatpush1.msra.mxu0 0.0
    %7219 = vmatprep.subr.mxu0 0.0
    %7220 = vmatpush1.msra.mxu0 0.0
    %7221 = vmatprep.subr.mxu0 0.0
    %7222 = vmatpush1.msra.mxu0 0.0
    %7223 = vmatprep.subr.mxu0 0.0
    %7224 = vmatpush1.msra.mxu0 0.0
    %7225 = vmatprep.subr.mxu0 0.0
    %7226 = vmatpush1.msra.mxu0 0.0
    %7227 = vmatprep.subr.mxu0 0.0
    %7228 = vmatpush1.msra.mxu0 0.0
    %7229 = vmatprep.subr.mxu0 0.0
    %7230 = vmatpush1.msra.mxu0 0.0
    %7231 = vmatprep.subr.mxu0 0.0
    %7232 = vmatpush1.msra.mxu0 0.0
    %7233 = vmatprep.subr.mxu0 0.0
    %7234 = vmatpush1.msra.mxu0 0.0
    %7235 = vmatprep.subr.mxu0 0.0
    %7236 = vmatpush1.msra.mxu0 0.0
    %7237 = vmatprep.subr.mxu0 0.0
    %7238 = vmatpush1.msra.mxu0 0.0
    %7239 = vmatprep.subr.mxu0 0.0
    %7240 = vmatpush1.msra.mxu0 0.0
    %7241 = vmatprep.subr.mxu0 0.0
    %7242 = vmatpush1.msra.mxu0 0.0
    %7243 = vmatprep.subr.mxu0 0.0
    %7244 = vmatpush1.msra.mxu0 %v7208
    %7245 = vmatprep.subr.mxu0 0.0
    %7246 = vmatpush2.msra.mxu0 0.0
    %7247 = vmatprep.subr.mxu0 0.0
    %7248 = vmatpush2.msra.mxu0 0.0
    %7249 = vmatprep.subr.mxu0 0.0
    %7250 = vmatpush2.msra.mxu0 0.0
    %7251 = vmatprep.subr.mxu0 0.0
    %7252 = vmatpush2.msra.mxu0 0.0
    %7253 = vmatprep.subr.mxu0 0.0
    %7254 = vmatpush2.msra.mxu0 0.0
    %7255 = vmatprep.subr.mxu0 0.0
    %7256 = vmatpush2.msra.mxu0 0.0
    %7257 = vmatprep.subr.mxu0 0.0
    %7258 = vmatpush2.msra.mxu0 0.0
    %7259 = vmatprep.subr.mxu0 0.0
    %7260 = vmatpush2.msra.mxu0 0.0
    %7261 = vmatprep.subr.mxu0 0.0
    %7262 = vmatpush2.msra.mxu0 0.0
    %7263 = vmatprep.subr.mxu0 0.0
    %7264 = vmatpush2.msra.mxu0 0.0
    %7265 = vmatprep.subr.mxu0 0.0
    %7266 = vmatpush2.msra.mxu0 0.0
    %7267 = vmatprep.subr.mxu0 0.0
    %7268 = vmatpush2.msra.mxu0 0.0
    %7269 = vmatprep.subr.mxu0 0.0
    %7270 = vmatpush2.msra.mxu0 0.0
    %7271 = vmatprep.subr.mxu0 0.0
    %7272 = vmatpush2.msra.mxu0 0.0
    %7273 = vmatprep.subr.mxu0 0.0
    %7274 = vmatpush2.msra.mxu0 0.0
    %7275 = vmatprep.subr.mxu0 0.0
    %7276 = vmatpush2.msra.mxu0 0.0
    %7277 = vmatprep.mubr.f32.mxu0 0.0
    %7278 = vmatmul.mubr.f32.gmra.mxu0 %v7211
    %v7279 = vpop.f32.mrf.mxu0
    %v7280 = vadd.f32 0.0, %v7279
    %v7281 = vpop.f32.mrf.mxu0
    %7282 = vdwg.mxu0
    %7283 = vrot.lane.b32.xlu0 %v6201, 80
    %v7284 = vpop.permute.xlu0 %7283
    %v7287 = vsel %vm352, %v7206, 0
    %7289 = vmatprep.subr.mxu0 0.0
    %7290 = vmatpush1.msra.mxu0 0.0
    %7291 = vmatprep.subr.mxu0 0.0
    %7292 = vmatpush1.msra.mxu0 0.0
    %7293 = vmatprep.subr.mxu0 0.0
    %7294 = vmatpush1.msra.mxu0 0.0
    %7295 = vmatprep.subr.mxu0 0.0
    %7296 = vmatpush1.msra.mxu0 0.0
    %7297 = vmatprep.subr.mxu0 0.0
    %7298 = vmatpush1.msra.mxu0 0.0
    %7299 = vmatprep.subr.mxu0 0.0
    %7300 = vmatpush1.msra.mxu0 0.0
    %7301 = vmatprep.subr.mxu0 0.0
    %7302 = vmatpush1.msra.mxu0 0.0
    %7303 = vmatprep.subr.mxu0 0.0
    %7304 = vmatpush1.msra.mxu0 0.0
    %7305 = vmatprep.subr.mxu0 0.0
    %7306 = vmatpush1.msra.mxu0 0.0
    %7307 = vmatprep.subr.mxu0 0.0
    %7308 = vmatpush1.msra.mxu0 0.0
    %7309 = vmatprep.subr.mxu0 0.0
    %7310 = vmatpush1.msra.mxu0 0.0
    %7311 = vmatprep.subr.mxu0 0.0
    %7312 = vmatpush1.msra.mxu0 0.0
    %7313 = vmatprep.subr.mxu0 0.0
    %7314 = vmatpush1.msra.mxu0 0.0
    %7315 = vmatprep.subr.mxu0 0.0
    %7316 = vmatpush1.msra.mxu0 0.0
    %7317 = vmatprep.subr.mxu0 0.0
    %7318 = vmatpush1.msra.mxu0 0.0
    %7319 = vmatprep.subr.mxu0 0.0
    %7320 = vmatpush1.msra.mxu0 %v7284
    %7321 = vmatprep.subr.mxu0 0.0
    %7322 = vmatpush2.msra.mxu0 0.0
    %7323 = vmatprep.subr.mxu0 0.0
    %7324 = vmatpush2.msra.mxu0 0.0
    %7325 = vmatprep.subr.mxu0 0.0
    %7326 = vmatpush2.msra.mxu0 0.0
    %7327 = vmatprep.subr.mxu0 0.0
    %7328 = vmatpush2.msra.mxu0 0.0
    %7329 = vmatprep.subr.mxu0 0.0
    %7330 = vmatpush2.msra.mxu0 0.0
    %7331 = vmatprep.subr.mxu0 0.0
    %7332 = vmatpush2.msra.mxu0 0.0
    %7333 = vmatprep.subr.mxu0 0.0
    %7334 = vmatpush2.msra.mxu0 0.0
    %7335 = vmatprep.subr.mxu0 0.0
    %7336 = vmatpush2.msra.mxu0 0.0
    %7337 = vmatprep.subr.mxu0 0.0
    %7338 = vmatpush2.msra.mxu0 0.0
    %7339 = vmatprep.subr.mxu0 0.0
    %7340 = vmatpush2.msra.mxu0 0.0
    %7341 = vmatprep.subr.mxu0 0.0
    %7342 = vmatpush2.msra.mxu0 0.0
    %7343 = vmatprep.subr.mxu0 0.0
    %7344 = vmatpush2.msra.mxu0 0.0
    %7345 = vmatprep.subr.mxu0 0.0
    %7346 = vmatpush2.msra.mxu0 0.0
    %7347 = vmatprep.subr.mxu0 0.0
    %7348 = vmatpush2.msra.mxu0 0.0
    %7349 = vmatprep.subr.mxu0 0.0
    %7350 = vmatpush2.msra.mxu0 0.0
    %7351 = vmatprep.subr.mxu0 0.0
    %7352 = vmatpush2.msra.mxu0 0.0
    %7353 = vmatprep.mubr.f32.mxu0 0.0
    %7354 = vmatmul.mubr.f32.gmra.mxu0 %v7287
    %v7355 = vpop.f32.mrf.mxu0
    %v7356 = vadd.f32 0.0, %v7355
    %v7357 = vpop.f32.mrf.mxu0
    %7358 = vdwg.mxu0
    %v7360 = vsel %vm352, %v7280, 0
    %v7363 = vsel %vm352, %v7356, 0
    %7365 = vmatprep.subr.mxu0 0.0
    %7366 = vmatpush1.msra.mxu0 0.0
    %7367 = vmatprep.subr.mxu0 0.0
    %7368 = vmatpush1.msra.mxu0 0.0
    %7369 = vmatprep.subr.mxu0 0.0
    %7370 = vmatpush1.msra.mxu0 0.0
    %7371 = vmatprep.subr.mxu0 0.0
    %7372 = vmatpush1.msra.mxu0 0.0
    %7373 = vmatprep.subr.mxu0 0.0
    %7374 = vmatpush1.msra.mxu0 0.0
    %7375 = vmatprep.subr.mxu0 0.0
    %7376 = vmatpush1.msra.mxu0 0.0
    %7377 = vmatprep.subr.mxu0 0.0
    %7378 = vmatpush1.msra.mxu0 0.0
    %7379 = vmatprep.subr.mxu0 0.0
    %7380 = vmatpush1.msra.mxu0 0.0
    %7381 = vmatprep.subr.mxu0 0.0
    %7382 = vmatpush1.msra.mxu0 0.0
    %7383 = vmatprep.subr.mxu0 0.0
    %7384 = vmatpush1.msra.mxu0 0.0
    %7385 = vmatprep.subr.mxu0 0.0
    %7386 = vmatpush1.msra.mxu0 0.0
    %7387 = vmatprep.subr.mxu0 0.0
    %7388 = vmatpush1.msra.mxu0 0.0
    %7389 = vmatprep.subr.mxu0 0.0
    %7390 = vmatpush1.msra.mxu0 0.0
    %7391 = vmatprep.subr.mxu0 0.0
    %7392 = vmatpush1.msra.mxu0 0.0
    %7393 = vmatprep.subr.mxu0 0.0
    %7394 = vmatpush1.msra.mxu0 0.0
    %7395 = vmatprep.subr.mxu0 0.0
    %7396 = vmatpush1.msra.mxu0 %v6207
    %7397 = vmatprep.subr.mxu0 0.0
    %7398 = vmatpush2.msra.mxu0 0.0
    %7399 = vmatprep.subr.mxu0 0.0
    %7400 = vmatpush2.msra.mxu0 0.0
    %7401 = vmatprep.subr.mxu0 0.0
    %7402 = vmatpush2.msra.mxu0 0.0
    %7403 = vmatprep.subr.mxu0 0.0
    %7404 = vmatpush2.msra.mxu0 0.0
    %7405 = vmatprep.subr.mxu0 0.0
    %7406 = vmatpush2.msra.mxu0 0.0
    %7407 = vmatprep.subr.mxu0 0.0
    %7408 = vmatpush2.msra.mxu0 0.0
    %7409 = vmatprep.subr.mxu0 0.0
    %7410 = vmatpush2.msra.mxu0 0.0
    %7411 = vmatprep.subr.mxu0 0.0
    %7412 = vmatpush2.msra.mxu0 0.0
    %7413 = vmatprep.subr.mxu0 0.0
    %7414 = vmatpush2.msra.mxu0 0.0
    %7415 = vmatprep.subr.mxu0 0.0
    %7416 = vmatpush2.msra.mxu0 0.0
    %7417 = vmatprep.subr.mxu0 0.0
    %7418 = vmatpush2.msra.mxu0 0.0
    %7419 = vmatprep.subr.mxu0 0.0
    %7420 = vmatpush2.msra.mxu0 0.0
    %7421 = vmatprep.subr.mxu0 0.0
    %7422 = vmatpush2.msra.mxu0 0.0
    %7423 = vmatprep.subr.mxu0 0.0
    %7424 = vmatpush2.msra.mxu0 0.0
    %7425 = vmatprep.subr.mxu0 0.0
    %7426 = vmatpush2.msra.mxu0 0.0
    %7427 = vmatprep.subr.mxu0 0.0
    %7428 = vmatpush2.msra.mxu0 0.0
    %7429 = vmatprep.mubr.f32.mxu0 0.0
    %7430 = vmatmul.mubr.f32.gmra.mxu0 %v7360
    %v7431 = vpop.f32.mrf.mxu0
    %v7432 = vadd.f32 0.0, %v7431
    %v7433 = vpop.f32.mrf.mxu0
    %7434 = vmatprep.mubr.f32.mxu0 0.0
    %7435 = vmatmul.mubr.f32.gmra.mxu0 %v7363
    %v7436 = vpop.f32.mrf.mxu0
    %v7437 = vadd.f32 0.0, %v7436
    %v7438 = vpop.f32.mrf.mxu0
    %7439 = vdwg.mxu0
    %v7440 = vadd.f32 %v7021, %v7432
    %v7441 = vadd.f32 %v7026, %v7437
    %7442 = vrot.lane.b32.xlu0 %v6209, 104
    %v7443 = vpop.permute.xlu0 %7442
    %7444 = vrot.lane.b32.xlu0 %v6196, 104
    %v7445 = vpop.permute.xlu0 %7444
    %v7446 = vsel %vm352, %v7443, 0
    %v7448 = vsel %vm352, %v7445, 0
    %7450 = vmatprep.subr.mxu0 0.0
    %7451 = vmatpush1.xpose.msra.mxu0 0.0
    %7452 = vmatprep.subr.mxu0 0.0
    %7453 = vmatpush1.xpose.msra.mxu0 0.0
    %7454 = vmatprep.subr.mxu0 0.0
    %7455 = vmatpush1.xpose.msra.mxu0 0.0
    %7456 = vmatprep.subr.mxu0 0.0
    %7457 = vmatpush1.xpose.msra.mxu0 0.0
    %7458 = vmatprep.subr.mxu0 0.0
    %7459 = vmatpush1.xpose.msra.mxu0 0.0
    %7460 = vmatprep.subr.mxu0 0.0
    %7461 = vmatpush1.xpose.msra.mxu0 0.0
    %7462 = vmatprep.subr.mxu0 0.0
    %7463 = vmatpush1.xpose.msra.mxu0 0.0
    %7464 = vmatprep.subr.mxu0 0.0
    %7465 = vmatpush1.xpose.msra.mxu0 0.0
    %7466 = vmatprep.subr.mxu0 0.0
    %7467 = vmatpush1.xpose.msra.mxu0 0.0
    %7468 = vmatprep.subr.mxu0 0.0
    %7469 = vmatpush1.xpose.msra.mxu0 0.0
    %7470 = vmatprep.subr.mxu0 0.0
    %7471 = vmatpush1.xpose.msra.mxu0 0.0
    %7472 = vmatprep.subr.mxu0 0.0
    %7473 = vmatpush1.xpose.msra.mxu0 0.0
    %7474 = vmatprep.subr.mxu0 0.0
    %7475 = vmatpush1.xpose.msra.mxu0 0.0
    %7476 = vmatprep.subr.mxu0 0.0
    %7477 = vmatpush1.xpose.msra.mxu0 0.0
    %7478 = vmatprep.subr.mxu0 0.0
    %7479 = vmatpush1.xpose.msra.mxu0 0.0
    %7480 = vmatprep.subr.mxu0 0.0
    %7481 = vmatpush1.xpose.msra.mxu0 %v7448
    %7482 = vmatprep.subr.mxu0 0.0
    %7483 = vmatpush2.xpose.msra.mxu0 0.0
    %7484 = vmatprep.subr.mxu0 0.0
    %7485 = vmatpush2.xpose.msra.mxu0 0.0
    %7486 = vmatprep.subr.mxu0 0.0
    %7487 = vmatpush2.xpose.msra.mxu0 0.0
    %7488 = vmatprep.subr.mxu0 0.0
    %7489 = vmatpush2.xpose.msra.mxu0 0.0
    %7490 = vmatprep.subr.mxu0 0.0
    %7491 = vmatpush2.xpose.msra.mxu0 0.0
    %7492 = vmatprep.subr.mxu0 0.0
    %7493 = vmatpush2.xpose.msra.mxu0 0.0
    %7494 = vmatprep.subr.mxu0 0.0
    %7495 = vmatpush2.xpose.msra.mxu0 0.0
    %7496 = vmatprep.subr.mxu0 0.0
    %7497 = vmatpush2.xpose.msra.mxu0 0.0
    %7498 = vmatprep.subr.mxu0 0.0
    %7499 = vmatpush2.xpose.msra.mxu0 0.0
    %7500 = vmatprep.subr.mxu0 0.0
    %7501 = vmatpush2.xpose.msra.mxu0 0.0
    %7502 = vmatprep.subr.mxu0 0.0
    %7503 = vmatpush2.xpose.msra.mxu0 0.0
    %7504 = vmatprep.subr.mxu0 0.0
    %7505 = vmatpush2.xpose.msra.mxu0 0.0
    %7506 = vmatprep.subr.mxu0 0.0
    %7507 = vmatpush2.xpose.msra.mxu0 0.0
    %7508 = vmatprep.subr.mxu0 0.0
    %7509 = vmatpush2.xpose.msra.mxu0 0.0
    %7510 = vmatprep.subr.mxu0 0.0
    %7511 = vmatpush2.xpose.msra.mxu0 0.0
    %7512 = vmatprep.subr.mxu0 0.0
    %7513 = vmatpush2.xpose.msra.mxu0 0.0
    %7514 = vmatprep.mubr.f32.mxu0 0.0
    %7515 = vmatmul.mubr.f32.gmra.mxu0 %v7446
    %v7516 = vpop.f32.mrf.mxu0
    %v7517 = vadd.f32 %v193, %v7516
    %v7518 = vpop.f32.mrf.mxu0
    %7519 = vdwg.mxu0
    %7520 = vrot.lane.b32.xlu0 %v6210, 104
    %v7521 = vpop.permute.xlu0 %7520
    %7522 = vrot.lane.b32.xlu0 %v6201, 104
    %v7523 = vpop.permute.xlu0 %7522
    %v7524 = vsel %vm352, %v7521, 0
    %v7526 = vsel %vm352, %v7523, 0
    %7528 = vmatprep.subr.mxu0 0.0
    %7529 = vmatpush1.xpose.msra.mxu0 0.0
    %7530 = vmatprep.subr.mxu0 0.0
    %7531 = vmatpush1.xpose.msra.mxu0 0.0
    %7532 = vmatprep.subr.mxu0 0.0
    %7533 = vmatpush1.xpose.msra.mxu0 0.0
    %7534 = vmatprep.subr.mxu0 0.0
    %7535 = vmatpush1.xpose.msra.mxu0 0.0
    %7536 = vmatprep.subr.mxu0 0.0
    %7537 = vmatpush1.xpose.msra.mxu0 0.0
    %7538 = vmatprep.subr.mxu0 0.0
    %7539 = vmatpush1.xpose.msra.mxu0 0.0
    %7540 = vmatprep.subr.mxu0 0.0
    %7541 = vmatpush1.xpose.msra.mxu0 0.0
    %7542 = vmatprep.subr.mxu0 0.0
    %7543 = vmatpush1.xpose.msra.mxu0 0.0
    %7544 = vmatprep.subr.mxu0 0.0
    %7545 = vmatpush1.xpose.msra.mxu0 0.0
    %7546 = vmatprep.subr.mxu0 0.0
    %7547 = vmatpush1.xpose.msra.mxu0 0.0
    %7548 = vmatprep.subr.mxu0 0.0
    %7549 = vmatpush1.xpose.msra.mxu0 0.0
    %7550 = vmatprep.subr.mxu0 0.0
    %7551 = vmatpush1.xpose.msra.mxu0 0.0
    %7552 = vmatprep.subr.mxu0 0.0
    %7553 = vmatpush1.xpose.msra.mxu0 0.0
    %7554 = vmatprep.subr.mxu0 0.0
    %7555 = vmatpush1.xpose.msra.mxu0 0.0
    %7556 = vmatprep.subr.mxu0 0.0
    %7557 = vmatpush1.xpose.msra.mxu0 0.0
    %7558 = vmatprep.subr.mxu0 0.0
    %7559 = vmatpush1.xpose.msra.mxu0 %v7526
    %7560 = vmatprep.subr.mxu0 0.0
    %7561 = vmatpush2.xpose.msra.mxu0 0.0
    %7562 = vmatprep.subr.mxu0 0.0
    %7563 = vmatpush2.xpose.msra.mxu0 0.0
    %7564 = vmatprep.subr.mxu0 0.0
    %7565 = vmatpush2.xpose.msra.mxu0 0.0
    %7566 = vmatprep.subr.mxu0 0.0
    %7567 = vmatpush2.xpose.msra.mxu0 0.0
    %7568 = vmatprep.subr.mxu0 0.0
    %7569 = vmatpush2.xpose.msra.mxu0 0.0
    %7570 = vmatprep.subr.mxu0 0.0
    %7571 = vmatpush2.xpose.msra.mxu0 0.0
    %7572 = vmatprep.subr.mxu0 0.0
    %7573 = vmatpush2.xpose.msra.mxu0 0.0
    %7574 = vmatprep.subr.mxu0 0.0
    %7575 = vmatpush2.xpose.msra.mxu0 0.0
    %7576 = vmatprep.subr.mxu0 0.0
    %7577 = vmatpush2.xpose.msra.mxu0 0.0
    %7578 = vmatprep.subr.mxu0 0.0
    %7579 = vmatpush2.xpose.msra.mxu0 0.0
    %7580 = vmatprep.subr.mxu0 0.0
    %7581 = vmatpush2.xpose.msra.mxu0 0.0
    %7582 = vmatprep.subr.mxu0 0.0
    %7583 = vmatpush2.xpose.msra.mxu0 0.0
    %7584 = vmatprep.subr.mxu0 0.0
    %7585 = vmatpush2.xpose.msra.mxu0 0.0
    %7586 = vmatprep.subr.mxu0 0.0
    %7587 = vmatpush2.xpose.msra.mxu0 0.0
    %7588 = vmatprep.subr.mxu0 0.0
    %7589 = vmatpush2.xpose.msra.mxu0 0.0
    %7590 = vmatprep.subr.mxu0 0.0
    %7591 = vmatpush2.xpose.msra.mxu0 0.0
    %7592 = vmatprep.mubr.f32.mxu0 0.0
    %7593 = vmatmul.mubr.f32.gmra.mxu0 %v7524
    %v7594 = vpop.f32.mrf.mxu0
    %v7595 = vadd.f32 %v194, %v7594
    %v7596 = vpop.f32.mrf.mxu0
    %7597 = vdwg.mxu0
    %v7598 = vsel %vm352, %v7517, -inf
    %7599 = vmax.xlane.f32.xlu0 %v7598
    %v7600 = vpop.xlane.xlu0 %7599
    %v7601 = vsel %vm352, %v7595, -inf
    %7602 = vmax.xlane.f32.xlu0 %v7601
    %v7603 = vpop.xlane.xlu0 %7602
    %v7604 = vsub.f32 %v7517, %v7600
    %v7605 = vsub.f32 %v7595, %v7603
    %v7606 = vmul.f32 %v7604, 1.442695
    %v7607 = vpow.pop %v7606
    %v7608 = vmul.f32 %v7605, 1.442695
    %v7609 = vpow.pop %v7608
    %v7610 = vsel %vm352, %v7607, 0.0
    %7611 = vadd.xlane.f32.xlu0 %v7610
    %v7612 = vpop.xlane.xlu0 %7611
    %v7613 = vsel %vm352, %v7609, 0.0
    %7614 = vadd.xlane.f32.xlu0 %v7613
    %v7615 = vpop.xlane.xlu0 %7614
    %v7616 = vrcp.pop %v7612
    %v7617 = vrcp.pop %v7615
    %v7618 = vmul.f32 %v7607, %v7616
    %v7619 = vmul.f32 %v7609, %v7617
    %7620 = vrot.lane.b32.xlu0 %v6196, 72
    %v7621 = vpop.permute.xlu0 %7620
    %v7624 = vsel %vm352, %v7618, 0
    %7626 = vmatprep.subr.mxu0 0.0
    %7627 = vmatpush1.msra.mxu0 0.0
    %7628 = vmatprep.subr.mxu0 0.0
    %7629 = vmatpush1.msra.mxu0 0.0
    %7630 = vmatprep.subr.mxu0 0.0
    %7631 = vmatpush1.msra.mxu0 0.0
    %7632 = vmatprep.subr.mxu0 0.0
    %7633 = vmatpush1.msra.mxu0 0.0
    %7634 = vmatprep.subr.mxu0 0.0
    %7635 = vmatpush1.msra.mxu0 0.0
    %7636 = vmatprep.subr.mxu0 0.0
    %7637 = vmatpush1.msra.mxu0 0.0
    %7638 = vmatprep.subr.mxu0 0.0
    %7639 = vmatpush1.msra.mxu0 0.0
    %7640 = vmatprep.subr.mxu0 0.0
    %7641 = vmatpush1.msra.mxu0 0.0
    %7642 = vmatprep.subr.mxu0 0.0
    %7643 = vmatpush1.msra.mxu0 0.0
    %7644 = vmatprep.subr.mxu0 0.0
    %7645 = vmatpush1.msra.mxu0 0.0
    %7646 = vmatprep.subr.mxu0 0.0
    %7647 = vmatpush1.msra.mxu0 0.0
    %7648 = vmatprep.subr.mxu0 0.0
    %7649 = vmatpush1.msra.mxu0 0.0
    %7650 = vmatprep.subr.mxu0 0.0
    %7651 = vmatpush1.msra.mxu0 0.0
    %7652 = vmatprep.subr.mxu0 0.0
    %7653 = vmatpush1.msra.mxu0 0.0
    %7654 = vmatprep.subr.mxu0 0.0
    %7655 = vmatpush1.msra.mxu0 0.0
    %7656 = vmatprep.subr.mxu0 0.0
    %7657 = vmatpush1.msra.mxu0 %v7621
    %7658 = vmatprep.subr.mxu0 0.0
    %7659 = vmatpush2.msra.mxu0 0.0
    %7660 = vmatprep.subr.mxu0 0.0
    %7661 = vmatpush2.msra.mxu0 0.0
    %7662 = vmatprep.subr.mxu0 0.0
    %7663 = vmatpush2.msra.mxu0 0.0
    %7664 = vmatprep.subr.mxu0 0.0
    %7665 = vmatpush2.msra.mxu0 0.0
    %7666 = vmatprep.subr.mxu0 0.0
    %7667 = vmatpush2.msra.mxu0 0.0
    %7668 = vmatprep.subr.mxu0 0.0
    %7669 = vmatpush2.msra.mxu0 0.0
    %7670 = vmatprep.subr.mxu0 0.0
    %7671 = vmatpush2.msra.mxu0 0.0
    %7672 = vmatprep.subr.mxu0 0.0
    %7673 = vmatpush2.msra.mxu0 0.0
    %7674 = vmatprep.subr.mxu0 0.0
    %7675 = vmatpush2.msra.mxu0 0.0
    %7676 = vmatprep.subr.mxu0 0.0
    %7677 = vmatpush2.msra.mxu0 0.0
    %7678 = vmatprep.subr.mxu0 0.0
    %7679 = vmatpush2.msra.mxu0 0.0
    %7680 = vmatprep.subr.mxu0 0.0
    %7681 = vmatpush2.msra.mxu0 0.0
    %7682 = vmatprep.subr.mxu0 0.0
    %7683 = vmatpush2.msra.mxu0 0.0
    %7684 = vmatprep.subr.mxu0 0.0
    %7685 = vmatpush2.msra.mxu0 0.0
    %7686 = vmatprep.subr.mxu0 0.0
    %7687 = vmatpush2.msra.mxu0 0.0
    %7688 = vmatprep.subr.mxu0 0.0
    %7689 = vmatpush2.msra.mxu0 0.0
    %7690 = vmatprep.mubr.f32.mxu0 0.0
    %7691 = vmatmul.mubr.f32.gmra.mxu0 %v7624
    %v7692 = vpop.f32.mrf.mxu0
    %v7693 = vadd.f32 0.0, %v7692
    %v7694 = vpop.f32.mrf.mxu0
    %7695 = vdwg.mxu0
    %7696 = vrot.lane.b32.xlu0 %v6201, 72
    %v7697 = vpop.permute.xlu0 %7696
    %v7700 = vsel %vm352, %v7619, 0
    %7702 = vmatprep.subr.mxu0 0.0
    %7703 = vmatpush1.msra.mxu0 0.0
    %7704 = vmatprep.subr.mxu0 0.0
    %7705 = vmatpush1.msra.mxu0 0.0
    %7706 = vmatprep.subr.mxu0 0.0
    %7707 = vmatpush1.msra.mxu0 0.0
    %7708 = vmatprep.subr.mxu0 0.0
    %7709 = vmatpush1.msra.mxu0 0.0
    %7710 = vmatprep.subr.mxu0 0.0
    %7711 = vmatpush1.msra.mxu0 0.0
    %7712 = vmatprep.subr.mxu0 0.0
    %7713 = vmatpush1.msra.mxu0 0.0
    %7714 = vmatprep.subr.mxu0 0.0
    %7715 = vmatpush1.msra.mxu0 0.0
    %7716 = vmatprep.subr.mxu0 0.0
    %7717 = vmatpush1.msra.mxu0 0.0
    %7718 = vmatprep.subr.mxu0 0.0
    %7719 = vmatpush1.msra.mxu0 0.0
    %7720 = vmatprep.subr.mxu0 0.0
    %7721 = vmatpush1.msra.mxu0 0.0
    %7722 = vmatprep.subr.mxu0 0.0
    %7723 = vmatpush1.msra.mxu0 0.0
    %7724 = vmatprep.subr.mxu0 0.0
    %7725 = vmatpush1.msra.mxu0 0.0
    %7726 = vmatprep.subr.mxu0 0.0
    %7727 = vmatpush1.msra.mxu0 0.0
    %7728 = vmatprep.subr.mxu0 0.0
    %7729 = vmatpush1.msra.mxu0 0.0
    %7730 = vmatprep.subr.mxu0 0.0
    %7731 = vmatpush1.msra.mxu0 0.0
    %7732 = vmatprep.subr.mxu0 0.0
    %7733 = vmatpush1.msra.mxu0 %v7697
    %7734 = vmatprep.subr.mxu0 0.0
    %7735 = vmatpush2.msra.mxu0 0.0
    %7736 = vmatprep.subr.mxu0 0.0
    %7737 = vmatpush2.msra.mxu0 0.0
    %7738 = vmatprep.subr.mxu0 0.0
    %7739 = vmatpush2.msra.mxu0 0.0
    %7740 = vmatprep.subr.mxu0 0.0
    %7741 = vmatpush2.msra.mxu0 0.0
    %7742 = vmatprep.subr.mxu0 0.0
    %7743 = vmatpush2.msra.mxu0 0.0
    %7744 = vmatprep.subr.mxu0 0.0
    %7745 = vmatpush2.msra.mxu0 0.0
    %7746 = vmatprep.subr.mxu0 0.0
    %7747 = vmatpush2.msra.mxu0 0.0
    %7748 = vmatprep.subr.mxu0 0.0
    %7749 = vmatpush2.msra.mxu0 0.0
    %7750 = vmatprep.subr.mxu0 0.0
    %7751 = vmatpush2.msra.mxu0 0.0
    %7752 = vmatprep.subr.mxu0 0.0
    %7753 = vmatpush2.msra.mxu0 0.0
    %7754 = vmatprep.subr.mxu0 0.0
    %7755 = vmatpush2.msra.mxu0 0.0
    %7756 = vmatprep.subr.mxu0 0.0
    %7757 = vmatpush2.msra.mxu0 0.0
    %7758 = vmatprep.subr.mxu0 0.0
    %7759 = vmatpush2.msra.mxu0 0.0
    %7760 = vmatprep.subr.mxu0 0.0
    %7761 = vmatpush2.msra.mxu0 0.0
    %7762 = vmatprep.subr.mxu0 0.0
    %7763 = vmatpush2.msra.mxu0 0.0
    %7764 = vmatprep.subr.mxu0 0.0
    %7765 = vmatpush2.msra.mxu0 0.0
    %7766 = vmatprep.mubr.f32.mxu0 0.0
    %7767 = vmatmul.mubr.f32.gmra.mxu0 %v7700
    %v7768 = vpop.f32.mrf.mxu0
    %v7769 = vadd.f32 0.0, %v7768
    %v7770 = vpop.f32.mrf.mxu0
    %7771 = vdwg.mxu0
    %v7773 = vsel %vm352, %v7693, 0
    %v7776 = vsel %vm352, %v7769, 0
    %7778 = vmatprep.subr.mxu0 0.0
    %7779 = vmatpush1.msra.mxu0 0.0
    %7780 = vmatprep.subr.mxu0 0.0
    %7781 = vmatpush1.msra.mxu0 0.0
    %7782 = vmatprep.subr.mxu0 0.0
    %7783 = vmatpush1.msra.mxu0 0.0
    %7784 = vmatprep.subr.mxu0 0.0
    %7785 = vmatpush1.msra.mxu0 0.0
    %7786 = vmatprep.subr.mxu0 0.0
    %7787 = vmatpush1.msra.mxu0 0.0
    %7788 = vmatprep.subr.mxu0 0.0
    %7789 = vmatpush1.msra.mxu0 0.0
    %7790 = vmatprep.subr.mxu0 0.0
    %7791 = vmatpush1.msra.mxu0 0.0
    %7792 = vmatprep.subr.mxu0 0.0
    %7793 = vmatpush1.msra.mxu0 0.0
    %7794 = vmatprep.subr.mxu0 0.0
    %7795 = vmatpush1.msra.mxu0 0.0
    %7796 = vmatprep.subr.mxu0 0.0
    %7797 = vmatpush1.msra.mxu0 0.0
    %7798 = vmatprep.subr.mxu0 0.0
    %7799 = vmatpush1.msra.mxu0 0.0
    %7800 = vmatprep.subr.mxu0 0.0
    %7801 = vmatpush1.msra.mxu0 0.0
    %7802 = vmatprep.subr.mxu0 0.0
    %7803 = vmatpush1.msra.mxu0 0.0
    %7804 = vmatprep.subr.mxu0 0.0
    %7805 = vmatpush1.msra.mxu0 0.0
    %7806 = vmatprep.subr.mxu0 0.0
    %7807 = vmatpush1.msra.mxu0 0.0
    %7808 = vmatprep.subr.mxu0 0.0
    %7809 = vmatpush1.msra.mxu0 %v6208
    %7810 = vmatprep.subr.mxu0 0.0
    %7811 = vmatpush2.msra.mxu0 0.0
    %7812 = vmatprep.subr.mxu0 0.0
    %7813 = vmatpush2.msra.mxu0 0.0
    %7814 = vmatprep.subr.mxu0 0.0
    %7815 = vmatpush2.msra.mxu0 0.0
    %7816 = vmatprep.subr.mxu0 0.0
    %7817 = vmatpush2.msra.mxu0 0.0
    %7818 = vmatprep.subr.mxu0 0.0
    %7819 = vmatpush2.msra.mxu0 0.0
    %7820 = vmatprep.subr.mxu0 0.0
    %7821 = vmatpush2.msra.mxu0 0.0
    %7822 = vmatprep.subr.mxu0 0.0
    %7823 = vmatpush2.msra.mxu0 0.0
    %7824 = vmatprep.subr.mxu0 0.0
    %7825 = vmatpush2.msra.mxu0 0.0
    %7826 = vmatprep.subr.mxu0 0.0
    %7827 = vmatpush2.msra.mxu0 0.0
    %7828 = vmatprep.subr.mxu0 0.0
    %7829 = vmatpush2.msra.mxu0 0.0
    %7830 = vmatprep.subr.mxu0 0.0
    %7831 = vmatpush2.msra.mxu0 0.0
    %7832 = vmatprep.subr.mxu0 0.0
    %7833 = vmatpush2.msra.mxu0 0.0
    %7834 = vmatprep.subr.mxu0 0.0
    %7835 = vmatpush2.msra.mxu0 0.0
    %7836 = vmatprep.subr.mxu0 0.0
    %7837 = vmatpush2.msra.mxu0 0.0
    %7838 = vmatprep.subr.mxu0 0.0
    %7839 = vmatpush2.msra.mxu0 0.0
    %7840 = vmatprep.subr.mxu0 0.0
    %7841 = vmatpush2.msra.mxu0 0.0
    %7842 = vmatprep.mubr.f32.mxu0 0.0
    %7843 = vmatmul.mubr.f32.gmra.mxu0 %v7773
    %v7844 = vpop.f32.mrf.mxu0
    %v7845 = vadd.f32 0.0, %v7844
    %v7846 = vpop.f32.mrf.mxu0
    %7847 = vmatprep.mubr.f32.mxu0 0.0
    %7848 = vmatmul.mubr.f32.gmra.mxu0 %v7776
    %v7849 = vpop.f32.mrf.mxu0
    %v7850 = vadd.f32 0.0, %v7849
    %v7851 = vpop.f32.mrf.mxu0
    %7852 = vdwg.mxu0
    %v7853 = vadd.f32 %v7440, %v7845
    %v7854 = vadd.f32 %v7441, %v7850
    %v7855 = vadd.f32 %v5968, %v7853
    %v7856 = vadd.f32 %v5969, %v7854
    %s7857 = scalar_lea.vmem %s13, 1
    %v7858 = vld [vmem:[%s7857] sm:$0x1]
    %v7860 = vlaneseq
    %v7861 = vshrl.u32 %v7860, 7
    %v7862 = vsub.s32 0, %v7861
    %v7863 = vrot.slane %v7858, %v7862
    %v7865 = vadd.f32 %v7855, %v7863
    %v7866 = vadd.f32 %v7856, %v7863
    %v7867 = vsel %vm197, %v7865, 0.0
    %7868 = vadd.xlane.f32.xlu0 %v7867
    %v7869 = vpop.xlane.xlu0 %7868
    %v7870 = vsel %vm197, %v7866, 0.0
    %7871 = vadd.xlane.f32.xlu0 %v7870
    %v7872 = vpop.xlane.xlu0 %7871
    %v7873 = vmul.f32 %v7869, %v204
    %v7874 = vmul.f32 %v7872, %v204
    %v7875 = vsub.f32 %v7865, %v7873
    %v7876 = vsub.f32 %v7866, %v7874
    %v7877 = vmul.f32 %v7875, %v7875
    %v7878 = vmul.f32 %v7876, %v7876
    %v7879 = vsel %vm197, %v7877, 0.0
    %7880 = vadd.xlane.f32.xlu0 %v7879
    %v7881 = vpop.xlane.xlu0 %7880
    %v7882 = vsel %vm197, %v7878, 0.0
    %7883 = vadd.xlane.f32.xlu0 %v7882
    %v7884 = vpop.xlane.xlu0 %7883
    %v7885 = vmul.f32 %v7881, 0.032258064
    %v7886 = vmul.f32 %v7884, 0.032258064
    %v7887 = vrsqrt.pop %v7885
    %v7888 = vmul.f32 %v7885, %v7887
    %vm7889 = vcmp.eq.f32.partialorder %v7885, inf
    %v7890 = vsel %vm7889, %v7885, %v7888
    %vm7891 = vcmp.eq.f32.partialorder %v7885, 0.0
    %v7892 = vand.u32 %v7885, 2147483648
    %v7893 = vsel %vm7891, %v7892, %v7890
    %v7894 = vrsqrt.pop %v7886
    %v7895 = vmul.f32 %v7886, %v7894
    %vm7896 = vcmp.eq.f32.partialorder %v7886, inf
    %v7897 = vsel %vm7896, %v7886, %v7895
    %vm7898 = vcmp.eq.f32.partialorder %v7886, 0.0
    %v7899 = vand.u32 %v7886, 2147483648
    %v7900 = vsel %vm7898, %v7899, %v7897
    %v7901 = vadd.f32 %v7893, 1e-06
    %v7902 = vadd.f32 %v7900, 1e-06
    %v7903 = vrcp.pop %v7901
    %v7904 = vrcp.pop %v7902
    %v7905 = vlaneseq
    %v7906 = vshrl.u32 %v7905, 7
    %v7907 = vsub.s32 2, %v7906
    %v7908 = vrot.slane %v4154, %v7907
    %v7909 = vmul.f32 %v7908, %v7875
    %v7910 = vmul.f32 %v7908, %v7876
    %v7911 = vmul.f32 %v7909, %v7903
    %v7912 = vmul.f32 %v7910, %v7904
    %v7913 = vlaneseq
    %v7914 = vshrl.u32 %v7913, 7
    %v7915 = vsub.s32 2, %v7914
    %v7916 = vrot.slane %v4156, %v7915
    %v7917 = vadd.f32 %v7911, %v7916
    %v7918 = vadd.f32 %v7912, %v7916
    %s7919 = scalar_lea.vmem [#allocation13], 32
    %v7920 = vld [vmem:[%s7919] sm:$0xff]
    %v7921 = vld [vmem:[%s7919 + $0x8] sm:$0xff]
    %v7922 = vld [vmem:[%s7919 + $0x10] sm:$0xff]
    %v7923 = vld [vmem:[%s7919 + $0x18] sm:$0xff]
    %s7924 = scalar_lea.vmem %s15, 1
    %v7925 = vld [vmem:[%s7924] sm:$0x1]
    %v7927 = vlaneseq
    %v7928 = vshrl.u32 %v7927, 7
    %v7929 = vsub.s32 0, %v7928
    %v7930 = vrot.slane %v7925, %v7929
    %v7933 = vsel %vm197, %v7917, 0
    %v7936 = vsel %vm197, %v7918, 0
    %7938 = vmatprep.subr.mxu0 0.0
    %7939 = vmatpush1.msra.mxu0 0.0
    %7940 = vmatprep.subr.mxu0 0.0
    %7941 = vmatpush1.msra.mxu0 0.0
    %7942 = vmatprep.subr.mxu0 0.0
    %7943 = vmatpush1.msra.mxu0 0.0
    %7944 = vmatprep.subr.mxu0 0.0
    %7945 = vmatpush1.msra.mxu0 0.0
    %7946 = vmatprep.subr.mxu0 0.0
    %7947 = vmatpush1.msra.mxu0 0.0
    %7948 = vmatprep.subr.mxu0 0.0
    %7949 = vmatpush1.msra.mxu0 0.0
    %7950 = vmatprep.subr.mxu0 0.0
    %7951 = vmatpush1.msra.mxu0 0.0
    %7952 = vmatprep.subr.mxu0 0.0
    %7953 = vmatpush1.msra.mxu0 0.0
    %7954 = vmatprep.subr.mxu0 0.0
    %7955 = vmatpush1.msra.mxu0 0.0
    %7956 = vmatprep.subr.mxu0 0.0
    %7957 = vmatpush1.msra.mxu0 0.0
    %7958 = vmatprep.subr.mxu0 0.0
    %7959 = vmatpush1.msra.mxu0 0.0
    %7960 = vmatprep.subr.mxu0 0.0
    %7961 = vmatpush1.msra.mxu0 0.0
    %7962 = vmatprep.subr.mxu0 0.0
    %7963 = vmatpush1.msra.mxu0 %v7923
    %7964 = vmatprep.subr.mxu0 0.0
    %7965 = vmatpush1.msra.mxu0 %v7922
    %7966 = vmatprep.subr.mxu0 0.0
    %7967 = vmatpush1.msra.mxu0 %v7921
    %7968 = vmatprep.subr.mxu0 0.0
    %7969 = vmatpush1.msra.mxu0 %v7920
    %7970 = vmatprep.subr.mxu0 0.0
    %7971 = vmatpush2.msra.mxu0 0.0
    %7972 = vmatprep.subr.mxu0 0.0
    %7973 = vmatpush2.msra.mxu0 0.0
    %7974 = vmatprep.subr.mxu0 0.0
    %7975 = vmatpush2.msra.mxu0 0.0
    %7976 = vmatprep.subr.mxu0 0.0
    %7977 = vmatpush2.msra.mxu0 0.0
    %7978 = vmatprep.subr.mxu0 0.0
    %7979 = vmatpush2.msra.mxu0 0.0
    %7980 = vmatprep.subr.mxu0 0.0
    %7981 = vmatpush2.msra.mxu0 0.0
    %7982 = vmatprep.subr.mxu0 0.0
    %7983 = vmatpush2.msra.mxu0 0.0
    %7984 = vmatprep.subr.mxu0 0.0
    %7985 = vmatpush2.msra.mxu0 0.0
    %7986 = vmatprep.subr.mxu0 0.0
    %7987 = vmatpush2.msra.mxu0 0.0
    %7988 = vmatprep.subr.mxu0 0.0
    %7989 = vmatpush2.msra.mxu0 0.0
    %7990 = vmatprep.subr.mxu0 0.0
    %7991 = vmatpush2.msra.mxu0 0.0
    %7992 = vmatprep.subr.mxu0 0.0
    %7993 = vmatpush2.msra.mxu0 0.0
    %7994 = vmatprep.subr.mxu0 0.0
    %7995 = vmatpush2.msra.mxu0 0.0
    %7996 = vmatprep.subr.mxu0 0.0
    %7997 = vmatpush2.msra.mxu0 0.0
    %7998 = vmatprep.subr.mxu0 0.0
    %7999 = vmatpush2.msra.mxu0 0.0
    %8000 = vmatprep.subr.mxu0 0.0
    %8001 = vmatpush2.msra.mxu0 0.0
    %8002 = vmatprep.mubr.f32.mxu0 0.0
    %8003 = vmatmul.mubr.f32.gmra.mxu0 %v7933
    %v8004 = vpop.f32.mrf.mxu0
    %v8005 = vadd.f32 %v7930, %v8004
    %v8006 = vpop.f32.mrf.mxu0
    %8007 = vmatprep.mubr.f32.mxu0 0.0
    %8008 = vmatmul.mubr.f32.gmra.mxu0 %v7936
    %v8009 = vpop.f32.mrf.mxu0
    %v8010 = vadd.f32 %v7930, %v8009
    %v8011 = vpop.f32.mrf.mxu0
    %8012 = vdwg.mxu0
    %v8013 = vmax.f32 %v8005, 0.0
    %v8014 = vmax.f32 %v8010, 0.0
    %s8015 = scalar_lea.vmem %s16, 64
    %v8016 = vld [vmem:[%s8015] sm:$0xff]
    %v8017 = vld [vmem:[%s8015 + $0x8] sm:$0xff]
    %v8018 = vld [vmem:[%s8015 + $0x10] sm:$0xff]
    %v8019 = vld [vmem:[%s8015 + $0x18] sm:$0xff]
    %v8020 = vld [vmem:[%s8015 + $0x20] sm:$0xff]
    %v8021 = vld [vmem:[%s8015 + $0x28] sm:$0xff]
    %v8022 = vld [vmem:[%s8015 + $0x30] sm:$0xff]
    %v8023 = vld [vmem:[%s8015 + $0x38] sm:$0xff]
    %v8025 = vsel %vm4060, %v8013, 0
    %v8028 = vsel %vm4060, %v8014, 0
    %8030 = vmatprep.subr.mxu0 0.0
    %8031 = vmatpush1.msra.mxu0 0.0
    %8032 = vmatprep.subr.mxu0 0.0
    %8033 = vmatpush1.msra.mxu0 0.0
    %8034 = vmatprep.subr.mxu0 0.0
    %8035 = vmatpush1.msra.mxu0 0.0
    %8036 = vmatprep.subr.mxu0 0.0
    %8037 = vmatpush1.msra.mxu0 0.0
    %8038 = vmatprep.subr.mxu0 0.0
    %8039 = vmatpush1.msra.mxu0 0.0
    %8040 = vmatprep.subr.mxu0 0.0
    %8041 = vmatpush1.msra.mxu0 0.0
    %8042 = vmatprep.subr.mxu0 0.0
    %8043 = vmatpush1.msra.mxu0 0.0
    %8044 = vmatprep.subr.mxu0 0.0
    %8045 = vmatpush1.msra.mxu0 0.0
    %8046 = vmatprep.subr.mxu0 0.0
    %8047 = vmatpush1.msra.mxu0 %v8023
    %8048 = vmatprep.subr.mxu0 0.0
    %8049 = vmatpush1.msra.mxu0 %v8022
    %8050 = vmatprep.subr.mxu0 0.0
    %8051 = vmatpush1.msra.mxu0 %v8021
    %8052 = vmatprep.subr.mxu0 0.0
    %8053 = vmatpush1.msra.mxu0 %v8020
    %8054 = vmatprep.subr.mxu0 0.0
    %8055 = vmatpush1.msra.mxu0 %v8019
    %8056 = vmatprep.subr.mxu0 0.0
    %8057 = vmatpush1.msra.mxu0 %v8018
    %8058 = vmatprep.subr.mxu0 0.0
    %8059 = vmatpush1.msra.mxu0 %v8017
    %8060 = vmatprep.subr.mxu0 0.0
    %8061 = vmatpush1.msra.mxu0 %v8016
    %8062 = vmatprep.subr.mxu0 0.0
    %8063 = vmatpush2.msra.mxu0 0.0
    %8064 = vmatprep.subr.mxu0 0.0
    %8065 = vmatpush2.msra.mxu0 0.0
    %8066 = vmatprep.subr.mxu0 0.0
    %8067 = vmatpush2.msra.mxu0 0.0
    %8068 = vmatprep.subr.mxu0 0.0
    %8069 = vmatpush2.msra.mxu0 0.0
    %8070 = vmatprep.subr.mxu0 0.0
    %8071 = vmatpush2.msra.mxu0 0.0
    %8072 = vmatprep.subr.mxu0 0.0
    %8073 = vmatpush2.msra.mxu0 0.0
    %8074 = vmatprep.subr.mxu0 0.0
    %8075 = vmatpush2.msra.mxu0 0.0
    %8076 = vmatprep.subr.mxu0 0.0
    %8077 = vmatpush2.msra.mxu0 0.0
    %8078 = vmatprep.subr.mxu0 0.0
    %8079 = vmatpush2.msra.mxu0 0.0
    %8080 = vmatprep.subr.mxu0 0.0
    %8081 = vmatpush2.msra.mxu0 0.0
    %8082 = vmatprep.subr.mxu0 0.0
    %8083 = vmatpush2.msra.mxu0 0.0
    %8084 = vmatprep.subr.mxu0 0.0
    %8085 = vmatpush2.msra.mxu0 0.0
    %8086 = vmatprep.subr.mxu0 0.0
    %8087 = vmatpush2.msra.mxu0 0.0
    %8088 = vmatprep.subr.mxu0 0.0
    %8089 = vmatpush2.msra.mxu0 0.0
    %8090 = vmatprep.subr.mxu0 0.0
    %8091 = vmatpush2.msra.mxu0 0.0
    %8092 = vmatprep.subr.mxu0 0.0
    %8093 = vmatpush2.msra.mxu0 0.0
    %8094 = vmatprep.mubr.f32.mxu0 0.0
    %8095 = vmatmul.mubr.f32.gmra.mxu0 %v8025
    %v8096 = vpop.f32.mrf.mxu0
    %v8097 = vadd.f32 0.0, %v8096
    %v8098 = vpop.f32.mrf.mxu0
    %8099 = vmatprep.mubr.f32.mxu0 0.0
    %8100 = vmatmul.mubr.f32.gmra.mxu0 %v8028
    %v8101 = vpop.f32.mrf.mxu0
    %v8102 = vadd.f32 0.0, %v8101
    %v8103 = vpop.f32.mrf.mxu0
    %8104 = vdwg.mxu0
    %v8105 = vadd.f32 %v7865, %v8097
    %v8106 = vadd.f32 %v7866, %v8102
    %s8107 = scalar_lea.vmem %s17, 1
    %v8108 = vld [vmem:[%s8107] sm:$0x1]
    %v8110 = vlaneseq
    %v8111 = vshrl.u32 %v8110, 7
    %v8112 = vsub.s32 0, %v8111
    %v8113 = vrot.slane %v8108, %v8112
    %v8115 = vadd.f32 %v8105, %v8113
    %v8116 = vadd.f32 %v8106, %v8113
    %v8117 = vld [vmem:[%s20] sm:$0x1]
    %v8118 = vld [vmem:[%s21] sm:$0x1]
    %v8119 = vsel %vm197, %v8115, 0.0
    %8120 = vadd.xlane.f32.xlu0 %v8119
    %v8121 = vpop.xlane.xlu0 %8120
    %v8122 = vsel %vm197, %v8116, 0.0
    %8123 = vadd.xlane.f32.xlu0 %v8122
    %v8124 = vpop.xlane.xlu0 %8123
    %v8125 = vmul.f32 %v8121, %v204
    %v8126 = vmul.f32 %v8124, %v204
    %v8127 = vsub.f32 %v8115, %v8125
    %v8128 = vsub.f32 %v8116, %v8126
    %v8129 = vmul.f32 %v8127, %v8127
    %v8130 = vmul.f32 %v8128, %v8128
    %v8131 = vsel %vm197, %v8129, 0.0
    %8132 = vadd.xlane.f32.xlu0 %v8131
    %v8133 = vpop.xlane.xlu0 %8132
    %v8134 = vsel %vm197, %v8130, 0.0
    %8135 = vadd.xlane.f32.xlu0 %v8134
    %v8136 = vpop.xlane.xlu0 %8135
    %v8137 = vmul.f32 %v8133, 0.032258064
    %v8138 = vmul.f32 %v8136, 0.032258064
    %v8139 = vrsqrt.pop %v8137
    %v8140 = vmul.f32 %v8137, %v8139
    %vm8141 = vcmp.eq.f32.partialorder %v8137, inf
    %v8142 = vsel %vm8141, %v8137, %v8140
    %vm8143 = vcmp.eq.f32.partialorder %v8137, 0.0
    %v8144 = vand.u32 %v8137, 2147483648
    %v8145 = vsel %vm8143, %v8144, %v8142
    %v8146 = vrsqrt.pop %v8138
    %v8147 = vmul.f32 %v8138, %v8146
    %vm8148 = vcmp.eq.f32.partialorder %v8138, inf
    %v8149 = vsel %vm8148, %v8138, %v8147
    %vm8150 = vcmp.eq.f32.partialorder %v8138, 0.0
    %v8151 = vand.u32 %v8138, 2147483648
    %v8152 = vsel %vm8150, %v8151, %v8149
    %v8153 = vadd.f32 %v8145, 1e-06
    %v8154 = vadd.f32 %v8152, 1e-06
    %v8155 = vrcp.pop %v8153
    %v8156 = vrcp.pop %v8154
    %v8158 = vlaneseq
    %v8159 = vshrl.u32 %v8158, 7
    %v8160 = vsub.s32 0, %v8159
    %v8161 = vrot.slane %v8117, %v8160
    %v8163 = vmul.f32 %v8161, %v8127
    %v8164 = vmul.f32 %v8161, %v8128
    %v8165 = vmul.f32 %v8163, %v8155
    %v8166 = vmul.f32 %v8164, %v8156
    %v8168 = vlaneseq
    %v8169 = vshrl.u32 %v8168, 7
    %v8170 = vsub.s32 0, %v8169
    %v8171 = vrot.slane %v8118, %v8170
    %v8173 = vadd.f32 %v8165, %v8171
    %v8174 = vadd.f32 %v8166, %v8171
    %8175 = vst.msk [vmem:[#allocation14] sm:$0xff] %vm197, %v8173
    %8176 = vst.msk [vmem:[#allocation14 + $0x8] sm:$0xff] %vm197, %v8174
    // Predicated region
    $region118: #{decoder_forward.1} parent=1 // pred_check
      _
    $region119: #{decoder_forward.1} parent=1 // pred_check_branch
      %8178 = sbr.rel (0) target = $region121
    $region120: #{decoder_forward.1} parent=1 // pred_region
      %s8180 = ssub.s32 256, 256
      %8181 = vsyncadd [#allocation4], %s8180
      %s8182 = sshll.u32 [#allocation14], 4
      %s8183 = int_to_ptr.vmem [resolvable:$true] %s8182
      %8188 = dma.vmem_to_hbm [thread:$0]  %s8183, 256, %s22, [#allocation4], 128, 128, 8
    $region121: #{decoder_forward.1} parent=1 // pred_fallthru
      _
    // Predicated region
    $region122: #{decoder_forward.1} parent=1 // pred_check
      _
    $region123: #{decoder_forward.1} parent=1 // pred_check_branch
      %8190 = sbr.rel (0) target = $region125
    $region124: #{decoder_forward.1} parent=1 // pred_region
      %8191 = dma.done [#allocation4], 256
    $region125: #{decoder_forward.1} parent=1 // pred_fallthru
      _
    %8192 = vsyncpa [#allocation3], 1
    %8193 = vsyncpa [#allocation6], 1
    %8194 = vsyncpa [#allocation9], 1
    %8195 = vsyncpa [#allocation12], 1
    %8196 = vsyncpa [#allocation4], 1

</llo_original>
